<compile_context>
chip_gen: v6e
topology: v6e:2x2x1
jax: 0.10.0
libtpu: 0.0.40
codegen_flags: <defaults>
</compile_context>

<pallas_src>
import numpy as np

import jax
import jax.numpy as jnp
from jax import lax
from jax.experimental import pallas as pl
from jax.experimental.pallas import tpu as pltpu


# ----------------------------------------------------------------------------
# Constant one-hot gather matrices for a 3x3 / stride-2 / pad-1 conv.
# Rows are TAP-MAJOR: row (t*Ho*Wo + o) selects the flat input pixel feeding
# tap t of output position o; out-of-bounds (padding) taps are all-zero rows
# => exact zero padding.  Exact in bf16 (entries are 0/1).
# ----------------------------------------------------------------------------
def _build_selection(H, W, Ho, Wo):
    S = np.zeros((9, Ho * Wo, H * W), np.float32)
    for di in range(3):
        for dj in range(3):
            t = di * 3 + dj
            for ho in range(Ho):
                hi = 2 * ho + di - 1
                if not (0 <= hi < H):
                    continue
                for wo in range(Wo):
                    wi = 2 * wo + dj - 1
                    if 0 <= wi < W:
                        S[t, ho * Wo + wo, hi * W + wi] = 1.0
    return S.reshape(9 * Ho * Wo, H * W)


# ----------------------------------------------------------------------------
# The fused whole-network kernel.  One grid step == TB images.
# Activations are 2-D [TB*HW, C] matrices (row = image-major raveled spatial,
# col = channel), so everything is plain 2-D matmul / bias add / ReLU.
# ----------------------------------------------------------------------------
def _convnet_kernel(patches_ref, perm_ref, s2_ref, s3_ref,
                    w1_ref, b1_ref, w2_ref, b2_ref, w3_ref, b3_ref,
                    wl1_ref, bl1_ref, wl2_ref, bl2_ref, out_ref):
    f32, bf16 = jnp.float32, jnp.bfloat16
    tb = out_ref.shape[0]                                # images in this tile

    # ---- conv1 + ReLU (im2col'ed patches, K padded 27->32), M = tb*256 -----
    x = patches_ref[...]                                               # bf16
    a1 = jnp.dot(x, w1_ref[...], preferred_element_type=f32) + b1_ref[...]
    a1 = jnp.maximum(a1, 0.0).astype(bf16)                   # [tb*256, 32]

    # ---- conv2 + ReLU -------------------------------------------------------
    # Per-image patch gather via the selection matmul (K=256 fills the MXU),
    # then 9 tap dots with M batched over the tile (M = tb*64).
    s2 = s2_ref[...]
    g2 = [jnp.dot(s2, a1[b * 256:(b + 1) * 256, :],
                  preferred_element_type=f32).astype(bf16)   # [576, 32] each
          for b in range(tb)]
    acc2 = jnp.zeros((tb * 64, 64), f32)
    for t in range(9):
        slab = jnp.concatenate(
            [g2[b][t * 64:(t + 1) * 64, :] for b in range(tb)], axis=0)
        acc2 = acc2 + jnp.dot(slab, w2_ref[t], preferred_element_type=f32)
    a2 = jnp.maximum(acc2 + b2_ref[...], 0.0).astype(bf16)   # [tb*64, 64]

    # ---- conv3 + ReLU -------------------------------------------------------
    s3 = s3_ref[...]
    g3 = [jnp.dot(s3, a2[b * 64:(b + 1) * 64, :],
                  preferred_element_type=f32).astype(bf16)   # [144, 64] each
          for b in range(tb)]
    acc3 = jnp.zeros((tb * 16, 128), f32)
    for t in range(9):
        slab = jnp.concatenate(
            [g3[b][t * 16:(t + 1) * 16, :] for b in range(tb)], axis=0)
        acc3 = acc3 + jnp.dot(slab, w3_ref[t], preferred_element_type=f32)
    a3 = jnp.maximum(acc3 + b3_ref[...], 0.0).astype(bf16)   # [tb*16, 128]

    # Dropout2d(0.5): identity at inference (eval mode).
    # TODO(synk): training-mode Dropout2d (per-channel RNG masking) not implemented.

    # ---- Flatten + Linear(2048->40) + ReLU ----------------------------------
    # A tiny constant permutation matmul reorders rows from image-major (b,p)
    # to position-major (p,b); each position dot is then [tb,128]x[128,40]
    # (no M=1 dots).  wl1 is pre-permuted offline so no transpose is needed.
    a3_pm = jnp.dot(perm_ref[...], a3, preferred_element_type=f32).astype(bf16)
    h = jnp.zeros((tb, 40), f32)
    for p in range(16):
        h = h + jnp.dot(a3_pm[p * tb:(p + 1) * tb, :], wl1_ref[p],
                        preferred_element_type=f32)
    h = jnp.maximum(h + bl1_ref[...], 0.0).astype(bf16)       # [tb, 40]

    # ---- Linear(40->10), zero-padded to 128 lanes => dense vst --------------
    y = jnp.dot(h, wl2_ref[...], preferred_element_type=f32) + bl2_ref[...]
    out_ref[...] = y.astype(out_ref.dtype)                    # [tb, 128]


# ----------------------------------------------------------------------------
# Forward pass: conv1 im2col in plain JAX (raw input, tiny), then one fused
# Pallas kernel for the entire network, batch-tiled over the grid.
# ----------------------------------------------------------------------------
@jax.jit
def example_convnet_forward(x_nchw, kp):
    B, C, H, W = x_nchw.shape
    assert (C, H, W) == (3, 32, 32), "ExampleConvnet expects [B, 3, 32, 32]"

    TB = min(8, B)                                   # images per grid step
    B_pad = ((B + TB - 1) // TB) * TB
    n_tiles = B_pad // TB

    # conv1 im2col on the raw input (stride 2, pad 1, k=3), NHWC tap order;
    # K padded 27 -> 32; cast to bf16 (halves per-image input DMA bytes).
    x = jnp.transpose(x_nchw.astype(jnp.float32), (0, 2, 3, 1))      # [B,32,32,3]
    xp = jnp.pad(x, ((0, 0), (1, 1), (1, 1), (0, 0)))                # [B,34,34,3]
    pieces = [xp[:, di:di + 32:2, dj:dj + 32:2, :]
              for di in range(3) for dj in range(3)]                 # 9x[B,16,16,3]
    patches = jnp.stack(pieces, axis=3).reshape(B, 256, 27)
    patches = jnp.pad(patches, ((0, 0), (0, 0), (0, 5)))             # K 27 -> 32
    patches = patches.astype(jnp.bfloat16)
    if B_pad != B:
        patches = jnp.pad(patches, ((0, B_pad - B), (0, 0), (0, 0)))
    patches = patches.reshape(B_pad * 256, 32)       # 2-D: no in-kernel reshape

    # Row permutation (image-major -> position-major) used by the linear1 stage.
    idx = np.arange(TB * 16)
    perm_np = np.zeros((TB * 16, TB * 16), np.float32)
    perm_np[idx, (idx % TB) * 16 + idx // TB] = 1.0
    perm = jnp.asarray(perm_np, jnp.bfloat16)

    def whole(a):
        nd = a.ndim
        return pl.BlockSpec(a.shape, lambda i, _nd=nd: (0,) * _nd)

    in_arrays = (patches, perm, kp["s2"], kp["s3"],
                 kp["w1"], kp["b1"], kp["w2"], kp["b2"], kp["w3"], kp["b3"],
                 kp["wl1"], kp["bl1"], kp["wl2"], kp["bl2"])
    in_specs = ([pl.BlockSpec((TB * 256, 32), lambda i: (i, 0))]
                + [whole(a) for a in in_arrays[1:]])

    # Advisory cost estimate (per call).
    flops_per_img = 2 * (256 * 32 * 32 + 576 * 256 * 32 + 9 * 64 * 32 * 64
                         + 144 * 64 * 64 + 9 * 16 * 64 * 128
                         + TB * 16 * 16 * 128 + 16 * 128 * 40 + 40 * 128)
    cost = pl.CostEstimate(
        flops=int(flops_per_img) * B_pad,
        transcendentals=0,
        bytes_accessed=B_pad * (256 * 32 * 2 + 128 * 4) + 750_000)

    out = pl.pallas_call(
        _convnet_kernel,
        out_shape=jax.ShapeDtypeStruct((B_pad, 128), jnp.float32),
        grid=(n_tiles,),
        in_specs=in_specs,
        out_specs=pl.BlockSpec((TB, 128), lambda i: (i, 0)),
        compiler_params=pltpu.CompilerParams(
            dimension_semantics=("parallel",)),
        cost_estimate=cost,
    )(*in_arrays)

    return out[:B, :10]


# ----------------------------------------------------------------------------
# Parameters.  Stored in PyTorch layout, converted once at param-prep time.
# ----------------------------------------------------------------------------
def init_torch_layout_params(key):
    ks = jax.random.split(key, 10)

    def w(k, shape, fan_in):
        return jax.random.normal(k, shape, jnp.float32) / np.sqrt(fan_in)

    def b(k, shape):
        return 0.1 * jax.random.normal(k, shape, jnp.float32)

    return {
        "c1_w": w(ks[0], (32, 3, 3, 3), 27),    "c1_b": b(ks[1], (32,)),
        "c2_w": w(ks[2], (64, 32, 3, 3), 288),  "c2_b": b(ks[3], (64,)),
        "c3_w": w(ks[4], (128, 64, 3, 3), 576), "c3_b": b(ks[5], (128,)),
        "l1_w": w(ks[6], (40, 2048), 2048),     "l1_b": b(ks[7], (40,)),
        "l2_w": w(ks[8], (10, 40), 40),         "l2_b": b(ks[9], (10,)),
    }


def prepare_kernel_params(p):
    """Offline layout plumbing (zero runtime cost): conv weights to tap-major
    [9, Cin, Cout] bf16, linear1 rows permuted from PyTorch (c,h,w) flatten
    order to the kernel's (hw-position, c) order, linear2 zero-padded to 128
    output lanes, and the conv2/conv3 gather matrices.  Biases stay f32."""
    bf16 = jnp.bfloat16
    w1 = jnp.transpose(p["c1_w"], (2, 3, 1, 0)).reshape(27, 32)
    w1 = jnp.pad(w1, ((0, 5), (0, 0)))                                # K 27->32
    w2 = jnp.transpose(p["c2_w"], (2, 3, 1, 0)).reshape(9, 32, 64)
    w3 = jnp.transpose(p["c3_w"], (2, 3, 1, 0)).reshape(9, 64, 128)
    # l1_w: [40, 2048] with feature f = c*16 + hw  ->  [hw, c, 40]
    wl1 = jnp.transpose(p["l1_w"].T.reshape(128, 16, 40), (1, 0, 2))
    wl2 = jnp.pad(p["l2_w"].T, ((0, 0), (0, 118)))                    # [40,128]
    bl2 = jnp.pad(p["l2_b"].reshape(1, 10), ((0, 0), (0, 118)))       # [1,128]
    return {
        "s2": jnp.asarray(_build_selection(16, 16, 8, 8), bf16),      # [576,256]
        "s3": jnp.asarray(_build_selection(8, 8, 4, 4), bf16),        # [144, 64]
        "w1": w1.astype(bf16), "b1": p["c1_b"].reshape(1, 32),
        "w2": w2.astype(bf16), "b2": p["c2_b"].reshape(1, 64),
        "w3": w3.astype(bf16), "b3": p["c3_b"].reshape(1, 128),
        "wl1": wl1.astype(bf16), "bl1": p["l1_b"].reshape(1, 40),
        "wl2": wl2.astype(bf16), "bl2": bl2,
    }


# ----------------------------------------------------------------------------
# Pure-JAX reference (mirrors the PyTorch module exactly, f32 HIGHEST).
# ----------------------------------------------------------------------------
def reference_forward(x_nchw, p):
    prec = lax.Precision.HIGHEST

    def conv(x, w, b):
        y = lax.conv_general_dilated(
            x, w, window_strides=(2, 2), padding=((1, 1), (1, 1)),
            dimension_numbers=("NCHW", "OIHW", "NCHW"), precision=prec)
        return y + b[None, :, None, None]

    x = x_nchw.astype(jnp.float32)
    x = jnp.maximum(conv(x, p["c1_w"], p["c1_b"]), 0.0)
    x = jnp.maximum(conv(x, p["c2_w"], p["c2_b"]), 0.0)
    x = jnp.maximum(conv(x, p["c3_w"], p["c3_b"]), 0.0)
    x = x.reshape(x.shape[0], -1)                                    # (c,h,w) order
    x = jnp.maximum(jnp.dot(x, p["l1_w"].T, precision=prec) + p["l1_b"], 0.0)
    return jnp.dot(x, p["l2_w"].T, precision=prec) + p["l2_b"]


if __name__ == "__main__":
    key = jax.random.PRNGKey(0)
    k_params, k_x = jax.random.split(key)

    torch_params = init_torch_layout_params(k_params)
    kernel_params = prepare_kernel_params(torch_params)

    # Deterministic small input, NCHW like PyTorch: [batch=2, 3, 32, 32].
    x = jax.random.normal(k_x, (2, 3, 32, 32), jnp.float32)

    out = jax.block_until_ready(example_convnet_forward(x, kernel_params))
    ref = jax.block_until_ready(reference_forward(x, torch_params))

    assert out.shape == (2, 10), out.shape
    assert out.dtype == jnp.float32, out.dtype
    assert bool(jnp.all(jnp.isfinite(out)))
    max_err = float(jnp.max(jnp.abs(out - ref)))
    # bf16 MXU operands (f32 accumulation) vs f32-HIGHEST reference.
    assert max_err < 5e-2, f"mismatch vs XLA reference: max abs err = {max_err}"
    print("KERNEL_OK")
</pallas_src>

<mosaic_0001>
module attributes {stable_mosaic.version = 11 : i64} {
  func.func @_convnet_kernel(%arg0: i32, %arg1: memref<512x32xbf16, #tpu.memory_space<vmem>>, %arg2: memref<32x32xbf16, #tpu.memory_space<vmem>>, %arg3: memref<576x256xbf16, #tpu.memory_space<vmem>>, %arg4: memref<144x64xbf16, #tpu.memory_space<vmem>>, %arg5: memref<32x32xbf16, #tpu.memory_space<vmem>>, %arg6: memref<1x32xf32, #tpu.memory_space<vmem>>, %arg7: memref<9x32x64xbf16, #tpu.memory_space<vmem>>, %arg8: memref<1x64xf32, #tpu.memory_space<vmem>>, %arg9: memref<9x64x128xbf16, #tpu.memory_space<vmem>>, %arg10: memref<1x128xf32, #tpu.memory_space<vmem>>, %arg11: memref<16x128x40xbf16, #tpu.memory_space<vmem>>, %arg12: memref<1x40xf32, #tpu.memory_space<vmem>>, %arg13: memref<40x128xbf16, #tpu.memory_space<vmem>>, %arg14: memref<1x128xf32, #tpu.memory_space<vmem>>, %arg15: memref<2x128xf32, #tpu.memory_space<vmem>>) attributes {dimension_semantics = [#tpu.dimension_semantics<parallel>], iteration_bounds = array<i64: 1>, scalar_prefetch = 0 : i64, scratch_operands = 0 : i64, tpu.core_type = #tpu.core_type<tc>, window_params = [{transform_indices = @transform_0, window_bounds = array<i64: 512, 32>}, {pipeline_mode = #tpu.pipeline_mode<synchronous>, transform_indices = @transform_1, window_bounds = array<i64: 32, 32>}, {pipeline_mode = #tpu.pipeline_mode<synchronous>, transform_indices = @transform_2, window_bounds = array<i64: 576, 256>}, {pipeline_mode = #tpu.pipeline_mode<synchronous>, transform_indices = @transform_3, window_bounds = array<i64: 144, 64>}, {pipeline_mode = #tpu.pipeline_mode<synchronous>, transform_indices = @transform_4, window_bounds = array<i64: 32, 32>}, {pipeline_mode = #tpu.pipeline_mode<synchronous>, transform_indices = @transform_5, window_bounds = array<i64: 1, 32>}, {pipeline_mode = #tpu.pipeline_mode<synchronous>, transform_indices = @transform_6, window_bounds = array<i64: 9, 32, 64>}, {pipeline_mode = #tpu.pipeline_mode<synchronous>, transform_indices = @transform_7, window_bounds = array<i64: 1, 64>}, {pipeline_mode = #tpu.pipeline_mode<synchronous>, transform_indices = @transform_8, window_bounds = array<i64: 9, 64, 128>}, {pipeline_mode = #tpu.pipeline_mode<synchronous>, transform_indices = @transform_9, window_bounds = array<i64: 1, 128>}, {pipeline_mode = #tpu.pipeline_mode<synchronous>, transform_indices = @transform_10, window_bounds = array<i64: 16, 128, 40>}, {pipeline_mode = #tpu.pipeline_mode<synchronous>, transform_indices = @transform_11, window_bounds = array<i64: 1, 40>}, {pipeline_mode = #tpu.pipeline_mode<synchronous>, transform_indices = @transform_12, window_bounds = array<i64: 40, 128>}, {pipeline_mode = #tpu.pipeline_mode<synchronous>, transform_indices = @transform_13, window_bounds = array<i64: 1, 128>}, {transform_indices = @transform_14, window_bounds = array<i64: 2, 128>}]} {
    %c0 = arith.constant 0 : index
    %c0_0 = arith.constant 0 : index
    %0 = vector.load %arg1[%c0, %c0_0] : memref<512x32xbf16, #tpu.memory_space<vmem>>, vector<512x32xbf16>
    %c0_1 = arith.constant 0 : index
    %c0_2 = arith.constant 0 : index
    %1 = vector.load %arg5[%c0_1, %c0_2] : memref<32x32xbf16, #tpu.memory_space<vmem>>, vector<32x32xbf16>
    %cst = arith.constant dense<0.000000e+00> : vector<512x32xf32>
    %2 = tpu.matmul %0, %1, %cst {dimension_numbers = #tpu.dot_dimension_numbers<[1], [0], [0], [1], [0, 0, 1, 1], [], []>} : vector<512x32xbf16>, vector<32x32xbf16>, vector<512x32xf32> -> vector<512x32xf32>
    %c0_3 = arith.constant 0 : index
    %c0_4 = arith.constant 0 : index
    %3 = vector.load %arg6[%c0_3, %c0_4] : memref<1x32xf32, #tpu.memory_space<vmem>>, vector<1x32xf32>
    %4 = vector.broadcast %3 : vector<1x32xf32> to vector<512x32xf32>
    %5 = arith.addf %2, %4 : vector<512x32xf32>
    %cst_5 = arith.constant 0.000000e+00 : f32
    %6 = vector.broadcast %cst_5 : f32 to vector<512x32xf32>
    %7 = arith.maximumf %5, %6 : vector<512x32xf32>
    %8 = arith.truncf %7 : vector<512x32xf32> to vector<512x32xbf16>
    %c0_6 = arith.constant 0 : index
    %c0_7 = arith.constant 0 : index
    %9 = vector.load %arg3[%c0_6, %c0_7] : memref<576x256xbf16, #tpu.memory_space<vmem>>, vector<576x256xbf16>
    %10 = vector.extract_strided_slice %8 {offsets = [0, 0], sizes = [256, 32], strides = [1, 1]} : vector<512x32xbf16> to vector<256x32xbf16>
    %cst_8 = arith.constant dense<0.000000e+00> : vector<576x32xf32>
    %11 = tpu.matmul %9, %10, %cst_8 {dimension_numbers = #tpu.dot_dimension_numbers<[1], [0], [0], [1], [0, 0, 1, 1], [], []>} : vector<576x256xbf16>, vector<256x32xbf16>, vector<576x32xf32> -> vector<576x32xf32>
    %12 = arith.truncf %11 : vector<576x32xf32> to vector<576x32xbf16>
    %13 = vector.extract_strided_slice %8 {offsets = [256, 0], sizes = [256, 32], strides = [1, 1]} : vector<512x32xbf16> to vector<256x32xbf16>
    %cst_9 = arith.constant dense<0.000000e+00> : vector<576x32xf32>
    %14 = tpu.matmul %9, %13, %cst_9 {dimension_numbers = #tpu.dot_dimension_numbers<[1], [0], [0], [1], [0, 0, 1, 1], [], []>} : vector<576x256xbf16>, vector<256x32xbf16>, vector<576x32xf32> -> vector<576x32xf32>
    %15 = arith.truncf %14 : vector<576x32xf32> to vector<576x32xbf16>
    %cst_10 = arith.constant 0.000000e+00 : f32
    %16 = vector.broadcast %cst_10 : f32 to vector<128x64xf32>
    %17 = vector.extract_strided_slice %12 {offsets = [0, 0], sizes = [64, 32], strides = [1, 1]} : vector<576x32xbf16> to vector<64x32xbf16>
    %18 = vector.extract_strided_slice %15 {offsets = [0, 0], sizes = [64, 32], strides = [1, 1]} : vector<576x32xbf16> to vector<64x32xbf16>
    %19 = tpu.concatenate %17, %18 in 0 : vector<64x32xbf16>, vector<64x32xbf16> -> vector<128x32xbf16>
    %c0_11 = arith.constant 0 : index
    %c0_12 = arith.constant 0 : index
    %c0_13 = arith.constant 0 : index
    %20 = vector.load %arg7[%c0_11, %c0_12, %c0_13] : memref<9x32x64xbf16, #tpu.memory_space<vmem>>, vector<1x32x64xbf16>
    %21 = vector.shape_cast %20 : vector<1x32x64xbf16> to vector<32x64xbf16>
    %cst_14 = arith.constant dense<0.000000e+00> : vector<128x64xf32>
    %22 = tpu.matmul %19, %21, %cst_14 {dimension_numbers = #tpu.dot_dimension_numbers<[1], [0], [0], [1], [0, 0, 1, 1], [], []>} : vector<128x32xbf16>, vector<32x64xbf16>, vector<128x64xf32> -> vector<128x64xf32>
    %23 = arith.addf %16, %22 : vector<128x64xf32>
    %24 = vector.extract_strided_slice %12 {offsets = [64, 0], sizes = [64, 32], strides = [1, 1]} : vector<576x32xbf16> to vector<64x32xbf16>
    %25 = vector.extract_strided_slice %15 {offsets = [64, 0], sizes = [64, 32], strides = [1, 1]} : vector<576x32xbf16> to vector<64x32xbf16>
    %26 = tpu.concatenate %24, %25 in 0 : vector<64x32xbf16>, vector<64x32xbf16> -> vector<128x32xbf16>
    %c1 = arith.constant 1 : index
    %c0_15 = arith.constant 0 : index
    %c0_16 = arith.constant 0 : index
    %27 = vector.load %arg7[%c1, %c0_15, %c0_16] : memref<9x32x64xbf16, #tpu.memory_space<vmem>>, vector<1x32x64xbf16>
    %28 = vector.shape_cast %27 : vector<1x32x64xbf16> to vector<32x64xbf16>
    %cst_17 = arith.constant dense<0.000000e+00> : vector<128x64xf32>
    %29 = tpu.matmul %26, %28, %cst_17 {dimension_numbers = #tpu.dot_dimension_numbers<[1], [0], [0], [1], [0, 0, 1, 1], [], []>} : vector<128x32xbf16>, vector<32x64xbf16>, vector<128x64xf32> -> vector<128x64xf32>
    %30 = arith.addf %23, %29 : vector<128x64xf32>
    %31 = vector.extract_strided_slice %12 {offsets = [128, 0], sizes = [64, 32], strides = [1, 1]} : vector<576x32xbf16> to vector<64x32xbf16>
    %32 = vector.extract_strided_slice %15 {offsets = [128, 0], sizes = [64, 32], strides = [1, 1]} : vector<576x32xbf16> to vector<64x32xbf16>
    %33 = tpu.concatenate %31, %32 in 0 : vector<64x32xbf16>, vector<64x32xbf16> -> vector<128x32xbf16>
    %c2 = arith.constant 2 : index
    %c0_18 = arith.constant 0 : index
    %c0_19 = arith.constant 0 : index
    %34 = vector.load %arg7[%c2, %c0_18, %c0_19] : memref<9x32x64xbf16, #tpu.memory_space<vmem>>, vector<1x32x64xbf16>
    %35 = vector.shape_cast %34 : vector<1x32x64xbf16> to vector<32x64xbf16>
    %cst_20 = arith.constant dense<0.000000e+00> : vector<128x64xf32>
    %36 = tpu.matmul %33, %35, %cst_20 {dimension_numbers = #tpu.dot_dimension_numbers<[1], [0], [0], [1], [0, 0, 1, 1], [], []>} : vector<128x32xbf16>, vector<32x64xbf16>, vector<128x64xf32> -> vector<128x64xf32>
    %37 = arith.addf %30, %36 : vector<128x64xf32>
    %38 = vector.extract_strided_slice %12 {offsets = [192, 0], sizes = [64, 32], strides = [1, 1]} : vector<576x32xbf16> to vector<64x32xbf16>
    %39 = vector.extract_strided_slice %15 {offsets = [192, 0], sizes = [64, 32], strides = [1, 1]} : vector<576x32xbf16> to vector<64x32xbf16>
    %40 = tpu.concatenate %38, %39 in 0 : vector<64x32xbf16>, vector<64x32xbf16> -> vector<128x32xbf16>
    %c3 = arith.constant 3 : index
    %c0_21 = arith.constant 0 : index
    %c0_22 = arith.constant 0 : index
    %41 = vector.load %arg7[%c3, %c0_21, %c0_22] : memref<9x32x64xbf16, #tpu.memory_space<vmem>>, vector<1x32x64xbf16>
    %42 = vector.shape_cast %41 : vector<1x32x64xbf16> to vector<32x64xbf16>
    %cst_23 = arith.constant dense<0.000000e+00> : vector<128x64xf32>
    %43 = tpu.matmul %40, %42, %cst_23 {dimension_numbers = #tpu.dot_dimension_numbers<[1], [0], [0], [1], [0, 0, 1, 1], [], []>} : vector<128x32xbf16>, vector<32x64xbf16>, vector<128x64xf32> -> vector<128x64xf32>
    %44 = arith.addf %37, %43 : vector<128x64xf32>
    %45 = vector.extract_strided_slice %12 {offsets = [256, 0], sizes = [64, 32], strides = [1, 1]} : vector<576x32xbf16> to vector<64x32xbf16>
    %46 = vector.extract_strided_slice %15 {offsets = [256, 0], sizes = [64, 32], strides = [1, 1]} : vector<576x32xbf16> to vector<64x32xbf16>
    %47 = tpu.concatenate %45, %46 in 0 : vector<64x32xbf16>, vector<64x32xbf16> -> vector<128x32xbf16>
    %c4 = arith.constant 4 : index
    %c0_24 = arith.constant 0 : index
    %c0_25 = arith.constant 0 : index
    %48 = vector.load %arg7[%c4, %c0_24, %c0_25] : memref<9x32x64xbf16, #tpu.memory_space<vmem>>, vector<1x32x64xbf16>
    %49 = vector.shape_cast %48 : vector<1x32x64xbf16> to vector<32x64xbf16>
    %cst_26 = arith.constant dense<0.000000e+00> : vector<128x64xf32>
    %50 = tpu.matmul %47, %49, %cst_26 {dimension_numbers = #tpu.dot_dimension_numbers<[1], [0], [0], [1], [0, 0, 1, 1], [], []>} : vector<128x32xbf16>, vector<32x64xbf16>, vector<128x64xf32> -> vector<128x64xf32>
    %51 = arith.addf %44, %50 : vector<128x64xf32>
    %52 = vector.extract_strided_slice %12 {offsets = [320, 0], sizes = [64, 32], strides = [1, 1]} : vector<576x32xbf16> to vector<64x32xbf16>
    %53 = vector.extract_strided_slice %15 {offsets = [320, 0], sizes = [64, 32], strides = [1, 1]} : vector<576x32xbf16> to vector<64x32xbf16>
    %54 = tpu.concatenate %52, %53 in 0 : vector<64x32xbf16>, vector<64x32xbf16> -> vector<128x32xbf16>
    %c5 = arith.constant 5 : index
    %c0_27 = arith.constant 0 : index
    %c0_28 = arith.constant 0 : index
    %55 = vector.load %arg7[%c5, %c0_27, %c0_28] : memref<9x32x64xbf16, #tpu.memory_space<vmem>>, vector<1x32x64xbf16>
    %56 = vector.shape_cast %55 : vector<1x32x64xbf16> to vector<32x64xbf16>
    %cst_29 = arith.constant dense<0.000000e+00> : vector<128x64xf32>
    %57 = tpu.matmul %54, %56, %cst_29 {dimension_numbers = #tpu.dot_dimension_numbers<[1], [0], [0], [1], [0, 0, 1, 1], [], []>} : vector<128x32xbf16>, vector<32x64xbf16>, vector<128x64xf32> -> vector<128x64xf32>
    %58 = arith.addf %51, %57 : vector<128x64xf32>
    %59 = vector.extract_strided_slice %12 {offsets = [384, 0], sizes = [64, 32], strides = [1, 1]} : vector<576x32xbf16> to vector<64x32xbf16>
    %60 = vector.extract_strided_slice %15 {offsets = [384, 0], sizes = [64, 32], strides = [1, 1]} : vector<576x32xbf16> to vector<64x32xbf16>
    %61 = tpu.concatenate %59, %60 in 0 : vector<64x32xbf16>, vector<64x32xbf16> -> vector<128x32xbf16>
    %c6 = arith.constant 6 : index
    %c0_30 = arith.constant 0 : index
    %c0_31 = arith.constant 0 : index
    %62 = vector.load %arg7[%c6, %c0_30, %c0_31] : memref<9x32x64xbf16, #tpu.memory_space<vmem>>, vector<1x32x64xbf16>
    %63 = vector.shape_cast %62 : vector<1x32x64xbf16> to vector<32x64xbf16>
    %cst_32 = arith.constant dense<0.000000e+00> : vector<128x64xf32>
    %64 = tpu.matmul %61, %63, %cst_32 {dimension_numbers = #tpu.dot_dimension_numbers<[1], [0], [0], [1], [0, 0, 1, 1], [], []>} : vector<128x32xbf16>, vector<32x64xbf16>, vector<128x64xf32> -> vector<128x64xf32>
    %65 = arith.addf %58, %64 : vector<128x64xf32>
    %66 = vector.extract_strided_slice %12 {offsets = [448, 0], sizes = [64, 32], strides = [1, 1]} : vector<576x32xbf16> to vector<64x32xbf16>
    %67 = vector.extract_strided_slice %15 {offsets = [448, 0], sizes = [64, 32], strides = [1, 1]} : vector<576x32xbf16> to vector<64x32xbf16>
    %68 = tpu.concatenate %66, %67 in 0 : vector<64x32xbf16>, vector<64x32xbf16> -> vector<128x32xbf16>
    %c7 = arith.constant 7 : index
    %c0_33 = arith.constant 0 : index
    %c0_34 = arith.constant 0 : index
    %69 = vector.load %arg7[%c7, %c0_33, %c0_34] : memref<9x32x64xbf16, #tpu.memory_space<vmem>>, vector<1x32x64xbf16>
    %70 = vector.shape_cast %69 : vector<1x32x64xbf16> to vector<32x64xbf16>
    %cst_35 = arith.constant dense<0.000000e+00> : vector<128x64xf32>
    %71 = tpu.matmul %68, %70, %cst_35 {dimension_numbers = #tpu.dot_dimension_numbers<[1], [0], [0], [1], [0, 0, 1, 1], [], []>} : vector<128x32xbf16>, vector<32x64xbf16>, vector<128x64xf32> -> vector<128x64xf32>
    %72 = arith.addf %65, %71 : vector<128x64xf32>
    %73 = vector.extract_strided_slice %12 {offsets = [512, 0], sizes = [64, 32], strides = [1, 1]} : vector<576x32xbf16> to vector<64x32xbf16>
    %74 = vector.extract_strided_slice %15 {offsets = [512, 0], sizes = [64, 32], strides = [1, 1]} : vector<576x32xbf16> to vector<64x32xbf16>
    %75 = tpu.concatenate %73, %74 in 0 : vector<64x32xbf16>, vector<64x32xbf16> -> vector<128x32xbf16>
    %c8 = arith.constant 8 : index
    %c0_36 = arith.constant 0 : index
    %c0_37 = arith.constant 0 : index
    %76 = vector.load %arg7[%c8, %c0_36, %c0_37] : memref<9x32x64xbf16, #tpu.memory_space<vmem>>, vector<1x32x64xbf16>
    %77 = vector.shape_cast %76 : vector<1x32x64xbf16> to vector<32x64xbf16>
    %cst_38 = arith.constant dense<0.000000e+00> : vector<128x64xf32>
    %78 = tpu.matmul %75, %77, %cst_38 {dimension_numbers = #tpu.dot_dimension_numbers<[1], [0], [0], [1], [0, 0, 1, 1], [], []>} : vector<128x32xbf16>, vector<32x64xbf16>, vector<128x64xf32> -> vector<128x64xf32>
    %79 = arith.addf %72, %78 : vector<128x64xf32>
    %c0_39 = arith.constant 0 : index
    %c0_40 = arith.constant 0 : index
    %80 = vector.load %arg8[%c0_39, %c0_40] : memref<1x64xf32, #tpu.memory_space<vmem>>, vector<1x64xf32>
    %81 = vector.broadcast %80 : vector<1x64xf32> to vector<128x64xf32>
    %82 = arith.addf %79, %81 : vector<128x64xf32>
    %cst_41 = arith.constant 0.000000e+00 : f32
    %83 = vector.broadcast %cst_41 : f32 to vector<128x64xf32>
    %84 = arith.maximumf %82, %83 : vector<128x64xf32>
    %85 = arith.truncf %84 : vector<128x64xf32> to vector<128x64xbf16>
    %c0_42 = arith.constant 0 : index
    %c0_43 = arith.constant 0 : index
    %86 = vector.load %arg4[%c0_42, %c0_43] : memref<144x64xbf16, #tpu.memory_space<vmem>>, vector<144x64xbf16>
    %87 = vector.extract_strided_slice %85 {offsets = [0, 0], sizes = [64, 64], strides = [1, 1]} : vector<128x64xbf16> to vector<64x64xbf16>
    %cst_44 = arith.constant dense<0.000000e+00> : vector<144x64xf32>
    %88 = tpu.matmul %86, %87, %cst_44 {dimension_numbers = #tpu.dot_dimension_numbers<[1], [0], [0], [1], [0, 0, 1, 1], [], []>} : vector<144x64xbf16>, vector<64x64xbf16>, vector<144x64xf32> -> vector<144x64xf32>
    %89 = arith.truncf %88 : vector<144x64xf32> to vector<144x64xbf16>
    %90 = vector.extract_strided_slice %85 {offsets = [64, 0], sizes = [64, 64], strides = [1, 1]} : vector<128x64xbf16> to vector<64x64xbf16>
    %cst_45 = arith.constant dense<0.000000e+00> : vector<144x64xf32>
    %91 = tpu.matmul %86, %90, %cst_45 {dimension_numbers = #tpu.dot_dimension_numbers<[1], [0], [0], [1], [0, 0, 1, 1], [], []>} : vector<144x64xbf16>, vector<64x64xbf16>, vector<144x64xf32> -> vector<144x64xf32>
    %92 = arith.truncf %91 : vector<144x64xf32> to vector<144x64xbf16>
    %cst_46 = arith.constant 0.000000e+00 : f32
    %93 = vector.broadcast %cst_46 : f32 to vector<32x128xf32>
    %94 = vector.extract_strided_slice %89 {offsets = [0, 0], sizes = [16, 64], strides = [1, 1]} : vector<144x64xbf16> to vector<16x64xbf16>
    %95 = vector.extract_strided_slice %92 {offsets = [0, 0], sizes = [16, 64], strides = [1, 1]} : vector<144x64xbf16> to vector<16x64xbf16>
    %96 = tpu.concatenate %94, %95 in 0 : vector<16x64xbf16>, vector<16x64xbf16> -> vector<32x64xbf16>
    %c0_47 = arith.constant 0 : index
    %c0_48 = arith.constant 0 : index
    %c0_49 = arith.constant 0 : index
    %97 = vector.load %arg9[%c0_47, %c0_48, %c0_49] : memref<9x64x128xbf16, #tpu.memory_space<vmem>>, vector<1x64x128xbf16>
    %98 = vector.shape_cast %97 : vector<1x64x128xbf16> to vector<64x128xbf16>
    %cst_50 = arith.constant dense<0.000000e+00> : vector<32x128xf32>
    %99 = tpu.matmul %96, %98, %cst_50 {dimension_numbers = #tpu.dot_dimension_numbers<[1], [0], [0], [1], [0, 0, 1, 1], [], []>} : vector<32x64xbf16>, vector<64x128xbf16>, vector<32x128xf32> -> vector<32x128xf32>
    %100 = arith.addf %93, %99 : vector<32x128xf32>
    %101 = vector.extract_strided_slice %89 {offsets = [16, 0], sizes = [16, 64], strides = [1, 1]} : vector<144x64xbf16> to vector<16x64xbf16>
    %102 = vector.extract_strided_slice %92 {offsets = [16, 0], sizes = [16, 64], strides = [1, 1]} : vector<144x64xbf16> to vector<16x64xbf16>
    %103 = tpu.concatenate %101, %102 in 0 : vector<16x64xbf16>, vector<16x64xbf16> -> vector<32x64xbf16>
    %c1_51 = arith.constant 1 : index
    %c0_52 = arith.constant 0 : index
    %c0_53 = arith.constant 0 : index
    %104 = vector.load %arg9[%c1_51, %c0_52, %c0_53] : memref<9x64x128xbf16, #tpu.memory_space<vmem>>, vector<1x64x128xbf16>
    %105 = vector.shape_cast %104 : vector<1x64x128xbf16> to vector<64x128xbf16>
    %cst_54 = arith.constant dense<0.000000e+00> : vector<32x128xf32>
    %106 = tpu.matmul %103, %105, %cst_54 {dimension_numbers = #tpu.dot_dimension_numbers<[1], [0], [0], [1], [0, 0, 1, 1], [], []>} : vector<32x64xbf16>, vector<64x128xbf16>, vector<32x128xf32> -> vector<32x128xf32>
    %107 = arith.addf %100, %106 : vector<32x128xf32>
    %108 = vector.extract_strided_slice %89 {offsets = [32, 0], sizes = [16, 64], strides = [1, 1]} : vector<144x64xbf16> to vector<16x64xbf16>
    %109 = vector.extract_strided_slice %92 {offsets = [32, 0], sizes = [16, 64], strides = [1, 1]} : vector<144x64xbf16> to vector<16x64xbf16>
    %110 = tpu.concatenate %108, %109 in 0 : vector<16x64xbf16>, vector<16x64xbf16> -> vector<32x64xbf16>
    %c2_55 = arith.constant 2 : index
    %c0_56 = arith.constant 0 : index
    %c0_57 = arith.constant 0 : index
    %111 = vector.load %arg9[%c2_55, %c0_56, %c0_57] : memref<9x64x128xbf16, #tpu.memory_space<vmem>>, vector<1x64x128xbf16>
    %112 = vector.shape_cast %111 : vector<1x64x128xbf16> to vector<64x128xbf16>
    %cst_58 = arith.constant dense<0.000000e+00> : vector<32x128xf32>
    %113 = tpu.matmul %110, %112, %cst_58 {dimension_numbers = #tpu.dot_dimension_numbers<[1], [0], [0], [1], [0, 0, 1, 1], [], []>} : vector<32x64xbf16>, vector<64x128xbf16>, vector<32x128xf32> -> vector<32x128xf32>
    %114 = arith.addf %107, %113 : vector<32x128xf32>
    %115 = vector.extract_strided_slice %89 {offsets = [48, 0], sizes = [16, 64], strides = [1, 1]} : vector<144x64xbf16> to vector<16x64xbf16>
    %116 = vector.extract_strided_slice %92 {offsets = [48, 0], sizes = [16, 64], strides = [1, 1]} : vector<144x64xbf16> to vector<16x64xbf16>
    %117 = tpu.concatenate %115, %116 in 0 : vector<16x64xbf16>, vector<16x64xbf16> -> vector<32x64xbf16>
    %c3_59 = arith.constant 3 : index
    %c0_60 = arith.constant 0 : index
    %c0_61 = arith.constant 0 : index
    %118 = vector.load %arg9[%c3_59, %c0_60, %c0_61] : memref<9x64x128xbf16, #tpu.memory_space<vmem>>, vector<1x64x128xbf16>
    %119 = vector.shape_cast %118 : vector<1x64x128xbf16> to vector<64x128xbf16>
    %cst_62 = arith.constant dense<0.000000e+00> : vector<32x128xf32>
    %120 = tpu.matmul %117, %119, %cst_62 {dimension_numbers = #tpu.dot_dimension_numbers<[1], [0], [0], [1], [0, 0, 1, 1], [], []>} : vector<32x64xbf16>, vector<64x128xbf16>, vector<32x128xf32> -> vector<32x128xf32>
    %121 = arith.addf %114, %120 : vector<32x128xf32>
    %122 = vector.extract_strided_slice %89 {offsets = [64, 0], sizes = [16, 64], strides = [1, 1]} : vector<144x64xbf16> to vector<16x64xbf16>
    %123 = vector.extract_strided_slice %92 {offsets = [64, 0], sizes = [16, 64], strides = [1, 1]} : vector<144x64xbf16> to vector<16x64xbf16>
    %124 = tpu.concatenate %122, %123 in 0 : vector<16x64xbf16>, vector<16x64xbf16> -> vector<32x64xbf16>
    %c4_63 = arith.constant 4 : index
    %c0_64 = arith.constant 0 : index
    %c0_65 = arith.constant 0 : index
    %125 = vector.load %arg9[%c4_63, %c0_64, %c0_65] : memref<9x64x128xbf16, #tpu.memory_space<vmem>>, vector<1x64x128xbf16>
    %126 = vector.shape_cast %125 : vector<1x64x128xbf16> to vector<64x128xbf16>
    %cst_66 = arith.constant dense<0.000000e+00> : vector<32x128xf32>
    %127 = tpu.matmul %124, %126, %cst_66 {dimension_numbers = #tpu.dot_dimension_numbers<[1], [0], [0], [1], [0, 0, 1, 1], [], []>} : vector<32x64xbf16>, vector<64x128xbf16>, vector<32x128xf32> -> vector<32x128xf32>
    %128 = arith.addf %121, %127 : vector<32x128xf32>
    %129 = vector.extract_strided_slice %89 {offsets = [80, 0], sizes = [16, 64], strides = [1, 1]} : vector<144x64xbf16> to vector<16x64xbf16>
    %130 = vector.extract_strided_slice %92 {offsets = [80, 0], sizes = [16, 64], strides = [1, 1]} : vector<144x64xbf16> to vector<16x64xbf16>
    %131 = tpu.concatenate %129, %130 in 0 : vector<16x64xbf16>, vector<16x64xbf16> -> vector<32x64xbf16>
    %c5_67 = arith.constant 5 : index
    %c0_68 = arith.constant 0 : index
    %c0_69 = arith.constant 0 : index
    %132 = vector.load %arg9[%c5_67, %c0_68, %c0_69] : memref<9x64x128xbf16, #tpu.memory_space<vmem>>, vector<1x64x128xbf16>
    %133 = vector.shape_cast %132 : vector<1x64x128xbf16> to vector<64x128xbf16>
    %cst_70 = arith.constant dense<0.000000e+00> : vector<32x128xf32>
    %134 = tpu.matmul %131, %133, %cst_70 {dimension_numbers = #tpu.dot_dimension_numbers<[1], [0], [0], [1], [0, 0, 1, 1], [], []>} : vector<32x64xbf16>, vector<64x128xbf16>, vector<32x128xf32> -> vector<32x128xf32>
    %135 = arith.addf %128, %134 : vector<32x128xf32>
    %136 = vector.extract_strided_slice %89 {offsets = [96, 0], sizes = [16, 64], strides = [1, 1]} : vector<144x64xbf16> to vector<16x64xbf16>
    %137 = vector.extract_strided_slice %92 {offsets = [96, 0], sizes = [16, 64], strides = [1, 1]} : vector<144x64xbf16> to vector<16x64xbf16>
    %138 = tpu.concatenate %136, %137 in 0 : vector<16x64xbf16>, vector<16x64xbf16> -> vector<32x64xbf16>
    %c6_71 = arith.constant 6 : index
    %c0_72 = arith.constant 0 : index
    %c0_73 = arith.constant 0 : index
    %139 = vector.load %arg9[%c6_71, %c0_72, %c0_73] : memref<9x64x128xbf16, #tpu.memory_space<vmem>>, vector<1x64x128xbf16>
    %140 = vector.shape_cast %139 : vector<1x64x128xbf16> to vector<64x128xbf16>
    %cst_74 = arith.constant dense<0.000000e+00> : vector<32x128xf32>
    %141 = tpu.matmul %138, %140, %cst_74 {dimension_numbers = #tpu.dot_dimension_numbers<[1], [0], [0], [1], [0, 0, 1, 1], [], []>} : vector<32x64xbf16>, vector<64x128xbf16>, vector<32x128xf32> -> vector<32x128xf32>
    %142 = arith.addf %135, %141 : vector<32x128xf32>
    %143 = vector.extract_strided_slice %89 {offsets = [112, 0], sizes = [16, 64], strides = [1, 1]} : vector<144x64xbf16> to vector<16x64xbf16>
    %144 = vector.extract_strided_slice %92 {offsets = [112, 0], sizes = [16, 64], strides = [1, 1]} : vector<144x64xbf16> to vector<16x64xbf16>
    %145 = tpu.concatenate %143, %144 in 0 : vector<16x64xbf16>, vector<16x64xbf16> -> vector<32x64xbf16>
    %c7_75 = arith.constant 7 : index
    %c0_76 = arith.constant 0 : index
    %c0_77 = arith.constant 0 : index
    %146 = vector.load %arg9[%c7_75, %c0_76, %c0_77] : memref<9x64x128xbf16, #tpu.memory_space<vmem>>, vector<1x64x128xbf16>
    %147 = vector.shape_cast %146 : vector<1x64x128xbf16> to vector<64x128xbf16>
    %cst_78 = arith.constant dense<0.000000e+00> : vector<32x128xf32>
    %148 = tpu.matmul %145, %147, %cst_78 {dimension_numbers = #tpu.dot_dimension_numbers<[1], [0], [0], [1], [0, 0, 1, 1], [], []>} : vector<32x64xbf16>, vector<64x128xbf16>, vector<32x128xf32> -> vector<32x128xf32>
    %149 = arith.addf %142, %148 : vector<32x128xf32>
    %150 = vector.extract_strided_slice %89 {offsets = [128, 0], sizes = [16, 64], strides = [1, 1]} : vector<144x64xbf16> to vector<16x64xbf16>
    %151 = vector.extract_strided_slice %92 {offsets = [128, 0], sizes = [16, 64], strides = [1, 1]} : vector<144x64xbf16> to vector<16x64xbf16>
    %152 = tpu.concatenate %150, %151 in 0 : vector<16x64xbf16>, vector<16x64xbf16> -> vector<32x64xbf16>
    %c8_79 = arith.constant 8 : index
    %c0_80 = arith.constant 0 : index
    %c0_81 = arith.constant 0 : index
    %153 = vector.load %arg9[%c8_79, %c0_80, %c0_81] : memref<9x64x128xbf16, #tpu.memory_space<vmem>>, vector<1x64x128xbf16>
    %154 = vector.shape_cast %153 : vector<1x64x128xbf16> to vector<64x128xbf16>
    %cst_82 = arith.constant dense<0.000000e+00> : vector<32x128xf32>
    %155 = tpu.matmul %152, %154, %cst_82 {dimension_numbers = #tpu.dot_dimension_numbers<[1], [0], [0], [1], [0, 0, 1, 1], [], []>} : vector<32x64xbf16>, vector<64x128xbf16>, vector<32x128xf32> -> vector<32x128xf32>
    %156 = arith.addf %149, %155 : vector<32x128xf32>
    %c0_83 = arith.constant 0 : index
    %c0_84 = arith.constant 0 : index
    %157 = vector.load %arg10[%c0_83, %c0_84] : memref<1x128xf32, #tpu.memory_space<vmem>>, vector<1x128xf32>
    %158 = vector.broadcast %157 : vector<1x128xf32> to vector<32x128xf32>
    %159 = arith.addf %156, %158 : vector<32x128xf32>
    %cst_85 = arith.constant 0.000000e+00 : f32
    %160 = vector.broadcast %cst_85 : f32 to vector<32x128xf32>
    %161 = arith.maximumf %159, %160 : vector<32x128xf32>
    %162 = arith.truncf %161 : vector<32x128xf32> to vector<32x128xbf16>
    %c0_86 = arith.constant 0 : index
    %c0_87 = arith.constant 0 : index
    %163 = vector.load %arg2[%c0_86, %c0_87] : memref<32x32xbf16, #tpu.memory_space<vmem>>, vector<32x32xbf16>
    %cst_88 = arith.constant dense<0.000000e+00> : vector<32x128xf32>
    %164 = tpu.matmul %163, %162, %cst_88 {dimension_numbers = #tpu.dot_dimension_numbers<[1], [0], [0], [1], [0, 0, 1, 1], [], []>} : vector<32x32xbf16>, vector<32x128xbf16>, vector<32x128xf32> -> vector<32x128xf32>
    %165 = arith.truncf %164 : vector<32x128xf32> to vector<32x128xbf16>
    %cst_89 = arith.constant 0.000000e+00 : f32
    %166 = vector.broadcast %cst_89 : f32 to vector<2x40xf32>
    %167 = vector.extract_strided_slice %165 {offsets = [0, 0], sizes = [2, 128], strides = [1, 1]} : vector<32x128xbf16> to vector<2x128xbf16>
    %c0_90 = arith.constant 0 : index
    %c0_91 = arith.constant 0 : index
    %c0_92 = arith.constant 0 : index
    %168 = vector.load %arg11[%c0_90, %c0_91, %c0_92] : memref<16x128x40xbf16, #tpu.memory_space<vmem>>, vector<1x128x40xbf16>
    %169 = vector.shape_cast %168 : vector<1x128x40xbf16> to vector<128x40xbf16>
    %cst_93 = arith.constant dense<0.000000e+00> : vector<2x40xf32>
    %170 = tpu.matmul %167, %169, %cst_93 {dimension_numbers = #tpu.dot_dimension_numbers<[1], [0], [0], [1], [0, 0, 1, 1], [], []>} : vector<2x128xbf16>, vector<128x40xbf16>, vector<2x40xf32> -> vector<2x40xf32>
    %171 = arith.addf %166, %170 : vector<2x40xf32>
    %172 = vector.extract_strided_slice %165 {offsets = [2, 0], sizes = [2, 128], strides = [1, 1]} : vector<32x128xbf16> to vector<2x128xbf16>
    %c1_94 = arith.constant 1 : index
    %c0_95 = arith.constant 0 : index
    %c0_96 = arith.constant 0 : index
    %173 = vector.load %arg11[%c1_94, %c0_95, %c0_96] : memref<16x128x40xbf16, #tpu.memory_space<vmem>>, vector<1x128x40xbf16>
    %174 = vector.shape_cast %173 : vector<1x128x40xbf16> to vector<128x40xbf16>
    %cst_97 = arith.constant dense<0.000000e+00> : vector<2x40xf32>
    %175 = tpu.matmul %172, %174, %cst_97 {dimension_numbers = #tpu.dot_dimension_numbers<[1], [0], [0], [1], [0, 0, 1, 1], [], []>} : vector<2x128xbf16>, vector<128x40xbf16>, vector<2x40xf32> -> vector<2x40xf32>
    %176 = arith.addf %171, %175 : vector<2x40xf32>
    %177 = vector.extract_strided_slice %165 {offsets = [4, 0], sizes = [2, 128], strides = [1, 1]} : vector<32x128xbf16> to vector<2x128xbf16>
    %c2_98 = arith.constant 2 : index
    %c0_99 = arith.constant 0 : index
    %c0_100 = arith.constant 0 : index
    %178 = vector.load %arg11[%c2_98, %c0_99, %c0_100] : memref<16x128x40xbf16, #tpu.memory_space<vmem>>, vector<1x128x40xbf16>
    %179 = vector.shape_cast %178 : vector<1x128x40xbf16> to vector<128x40xbf16>
    %cst_101 = arith.constant dense<0.000000e+00> : vector<2x40xf32>
    %180 = tpu.matmul %177, %179, %cst_101 {dimension_numbers = #tpu.dot_dimension_numbers<[1], [0], [0], [1], [0, 0, 1, 1], [], []>} : vector<2x128xbf16>, vector<128x40xbf16>, vector<2x40xf32> -> vector<2x40xf32>
    %181 = arith.addf %176, %180 : vector<2x40xf32>
    %182 = vector.extract_strided_slice %165 {offsets = [6, 0], sizes = [2, 128], strides = [1, 1]} : vector<32x128xbf16> to vector<2x128xbf16>
    %c3_102 = arith.constant 3 : index
    %c0_103 = arith.constant 0 : index
    %c0_104 = arith.constant 0 : index
    %183 = vector.load %arg11[%c3_102, %c0_103, %c0_104] : memref<16x128x40xbf16, #tpu.memory_space<vmem>>, vector<1x128x40xbf16>
    %184 = vector.shape_cast %183 : vector<1x128x40xbf16> to vector<128x40xbf16>
    %cst_105 = arith.constant dense<0.000000e+00> : vector<2x40xf32>
    %185 = tpu.matmul %182, %184, %cst_105 {dimension_numbers = #tpu.dot_dimension_numbers<[1], [0], [0], [1], [0, 0, 1, 1], [], []>} : vector<2x128xbf16>, vector<128x40xbf16>, vector<2x40xf32> -> vector<2x40xf32>
    %186 = arith.addf %181, %185 : vector<2x40xf32>
    %187 = vector.extract_strided_slice %165 {offsets = [8, 0], sizes = [2, 128], strides = [1, 1]} : vector<32x128xbf16> to vector<2x128xbf16>
    %c4_106 = arith.constant 4 : index
    %c0_107 = arith.constant 0 : index
    %c0_108 = arith.constant 0 : index
    %188 = vector.load %arg11[%c4_106, %c0_107, %c0_108] : memref<16x128x40xbf16, #tpu.memory_space<vmem>>, vector<1x128x40xbf16>
    %189 = vector.shape_cast %188 : vector<1x128x40xbf16> to vector<128x40xbf16>
    %cst_109 = arith.constant dense<0.000000e+00> : vector<2x40xf32>
    %190 = tpu.matmul %187, %189, %cst_109 {dimension_numbers = #tpu.dot_dimension_numbers<[1], [0], [0], [1], [0, 0, 1, 1], [], []>} : vector<2x128xbf16>, vector<128x40xbf16>, vector<2x40xf32> -> vector<2x40xf32>
    %191 = arith.addf %186, %190 : vector<2x40xf32>
    %192 = vector.extract_strided_slice %165 {offsets = [10, 0], sizes = [2, 128], strides = [1, 1]} : vector<32x128xbf16> to vector<2x128xbf16>
    %c5_110 = arith.constant 5 : index
    %c0_111 = arith.constant 0 : index
    %c0_112 = arith.constant 0 : index
    %193 = vector.load %arg11[%c5_110, %c0_111, %c0_112] : memref<16x128x40xbf16, #tpu.memory_space<vmem>>, vector<1x128x40xbf16>
    %194 = vector.shape_cast %193 : vector<1x128x40xbf16> to vector<128x40xbf16>
    %cst_113 = arith.constant dense<0.000000e+00> : vector<2x40xf32>
    %195 = tpu.matmul %192, %194, %cst_113 {dimension_numbers = #tpu.dot_dimension_numbers<[1], [0], [0], [1], [0, 0, 1, 1], [], []>} : vector<2x128xbf16>, vector<128x40xbf16>, vector<2x40xf32> -> vector<2x40xf32>
    %196 = arith.addf %191, %195 : vector<2x40xf32>
    %197 = vector.extract_strided_slice %165 {offsets = [12, 0], sizes = [2, 128], strides = [1, 1]} : vector<32x128xbf16> to vector<2x128xbf16>
    %c6_114 = arith.constant 6 : index
    %c0_115 = arith.constant 0 : index
    %c0_116 = arith.constant 0 : index
    %198 = vector.load %arg11[%c6_114, %c0_115, %c0_116] : memref<16x128x40xbf16, #tpu.memory_space<vmem>>, vector<1x128x40xbf16>
    %199 = vector.shape_cast %198 : vector<1x128x40xbf16> to vector<128x40xbf16>
    %cst_117 = arith.constant dense<0.000000e+00> : vector<2x40xf32>
    %200 = tpu.matmul %197, %199, %cst_117 {dimension_numbers = #tpu.dot_dimension_numbers<[1], [0], [0], [1], [0, 0, 1, 1], [], []>} : vector<2x128xbf16>, vector<128x40xbf16>, vector<2x40xf32> -> vector<2x40xf32>
    %201 = arith.addf %196, %200 : vector<2x40xf32>
    %202 = vector.extract_strided_slice %165 {offsets = [14, 0], sizes = [2, 128], strides = [1, 1]} : vector<32x128xbf16> to vector<2x128xbf16>
    %c7_118 = arith.constant 7 : index
    %c0_119 = arith.constant 0 : index
    %c0_120 = arith.constant 0 : index
    %203 = vector.load %arg11[%c7_118, %c0_119, %c0_120] : memref<16x128x40xbf16, #tpu.memory_space<vmem>>, vector<1x128x40xbf16>
    %204 = vector.shape_cast %203 : vector<1x128x40xbf16> to vector<128x40xbf16>
    %cst_121 = arith.constant dense<0.000000e+00> : vector<2x40xf32>
    %205 = tpu.matmul %202, %204, %cst_121 {dimension_numbers = #tpu.dot_dimension_numbers<[1], [0], [0], [1], [0, 0, 1, 1], [], []>} : vector<2x128xbf16>, vector<128x40xbf16>, vector<2x40xf32> -> vector<2x40xf32>
    %206 = arith.addf %201, %205 : vector<2x40xf32>
    %207 = vector.extract_strided_slice %165 {offsets = [16, 0], sizes = [2, 128], strides = [1, 1]} : vector<32x128xbf16> to vector<2x128xbf16>
    %c8_122 = arith.constant 8 : index
    %c0_123 = arith.constant 0 : index
    %c0_124 = arith.constant 0 : index
    %208 = vector.load %arg11[%c8_122, %c0_123, %c0_124] : memref<16x128x40xbf16, #tpu.memory_space<vmem>>, vector<1x128x40xbf16>
    %209 = vector.shape_cast %208 : vector<1x128x40xbf16> to vector<128x40xbf16>
    %cst_125 = arith.constant dense<0.000000e+00> : vector<2x40xf32>
    %210 = tpu.matmul %207, %209, %cst_125 {dimension_numbers = #tpu.dot_dimension_numbers<[1], [0], [0], [1], [0, 0, 1, 1], [], []>} : vector<2x128xbf16>, vector<128x40xbf16>, vector<2x40xf32> -> vector<2x40xf32>
    %211 = arith.addf %206, %210 : vector<2x40xf32>
    %212 = vector.extract_strided_slice %165 {offsets = [18, 0], sizes = [2, 128], strides = [1, 1]} : vector<32x128xbf16> to vector<2x128xbf16>
    %c9 = arith.constant 9 : index
    %c0_126 = arith.constant 0 : index
    %c0_127 = arith.constant 0 : index
    %213 = vector.load %arg11[%c9, %c0_126, %c0_127] : memref<16x128x40xbf16, #tpu.memory_space<vmem>>, vector<1x128x40xbf16>
    %214 = vector.shape_cast %213 : vector<1x128x40xbf16> to vector<128x40xbf16>
    %cst_128 = arith.constant dense<0.000000e+00> : vector<2x40xf32>
    %215 = tpu.matmul %212, %214, %cst_128 {dimension_numbers = #tpu.dot_dimension_numbers<[1], [0], [0], [1], [0, 0, 1, 1], [], []>} : vector<2x128xbf16>, vector<128x40xbf16>, vector<2x40xf32> -> vector<2x40xf32>
    %216 = arith.addf %211, %215 : vector<2x40xf32>
    %217 = vector.extract_strided_slice %165 {offsets = [20, 0], sizes = [2, 128], strides = [1, 1]} : vector<32x128xbf16> to vector<2x128xbf16>
    %c10 = arith.constant 10 : index
    %c0_129 = arith.constant 0 : index
    %c0_130 = arith.constant 0 : index
    %218 = vector.load %arg11[%c10, %c0_129, %c0_130] : memref<16x128x40xbf16, #tpu.memory_space<vmem>>, vector<1x128x40xbf16>
    %219 = vector.shape_cast %218 : vector<1x128x40xbf16> to vector<128x40xbf16>
    %cst_131 = arith.constant dense<0.000000e+00> : vector<2x40xf32>
    %220 = tpu.matmul %217, %219, %cst_131 {dimension_numbers = #tpu.dot_dimension_numbers<[1], [0], [0], [1], [0, 0, 1, 1], [], []>} : vector<2x128xbf16>, vector<128x40xbf16>, vector<2x40xf32> -> vector<2x40xf32>
    %221 = arith.addf %216, %220 : vector<2x40xf32>
    %222 = vector.extract_strided_slice %165 {offsets = [22, 0], sizes = [2, 128], strides = [1, 1]} : vector<32x128xbf16> to vector<2x128xbf16>
    %c11 = arith.constant 11 : index
    %c0_132 = arith.constant 0 : index
    %c0_133 = arith.constant 0 : index
    %223 = vector.load %arg11[%c11, %c0_132, %c0_133] : memref<16x128x40xbf16, #tpu.memory_space<vmem>>, vector<1x128x40xbf16>
    %224 = vector.shape_cast %223 : vector<1x128x40xbf16> to vector<128x40xbf16>
    %cst_134 = arith.constant dense<0.000000e+00> : vector<2x40xf32>
    %225 = tpu.matmul %222, %224, %cst_134 {dimension_numbers = #tpu.dot_dimension_numbers<[1], [0], [0], [1], [0, 0, 1, 1], [], []>} : vector<2x128xbf16>, vector<128x40xbf16>, vector<2x40xf32> -> vector<2x40xf32>
    %226 = arith.addf %221, %225 : vector<2x40xf32>
    %227 = vector.extract_strided_slice %165 {offsets = [24, 0], sizes = [2, 128], strides = [1, 1]} : vector<32x128xbf16> to vector<2x128xbf16>
    %c12 = arith.constant 12 : index
    %c0_135 = arith.constant 0 : index
    %c0_136 = arith.constant 0 : index
    %228 = vector.load %arg11[%c12, %c0_135, %c0_136] : memref<16x128x40xbf16, #tpu.memory_space<vmem>>, vector<1x128x40xbf16>
    %229 = vector.shape_cast %228 : vector<1x128x40xbf16> to vector<128x40xbf16>
    %cst_137 = arith.constant dense<0.000000e+00> : vector<2x40xf32>
    %230 = tpu.matmul %227, %229, %cst_137 {dimension_numbers = #tpu.dot_dimension_numbers<[1], [0], [0], [1], [0, 0, 1, 1], [], []>} : vector<2x128xbf16>, vector<128x40xbf16>, vector<2x40xf32> -> vector<2x40xf32>
    %231 = arith.addf %226, %230 : vector<2x40xf32>
    %232 = vector.extract_strided_slice %165 {offsets = [26, 0], sizes = [2, 128], strides = [1, 1]} : vector<32x128xbf16> to vector<2x128xbf16>
    %c13 = arith.constant 13 : index
    %c0_138 = arith.constant 0 : index
    %c0_139 = arith.constant 0 : index
    %233 = vector.load %arg11[%c13, %c0_138, %c0_139] : memref<16x128x40xbf16, #tpu.memory_space<vmem>>, vector<1x128x40xbf16>
    %234 = vector.shape_cast %233 : vector<1x128x40xbf16> to vector<128x40xbf16>
    %cst_140 = arith.constant dense<0.000000e+00> : vector<2x40xf32>
    %235 = tpu.matmul %232, %234, %cst_140 {dimension_numbers = #tpu.dot_dimension_numbers<[1], [0], [0], [1], [0, 0, 1, 1], [], []>} : vector<2x128xbf16>, vector<128x40xbf16>, vector<2x40xf32> -> vector<2x40xf32>
    %236 = arith.addf %231, %235 : vector<2x40xf32>
    %237 = vector.extract_strided_slice %165 {offsets = [28, 0], sizes = [2, 128], strides = [1, 1]} : vector<32x128xbf16> to vector<2x128xbf16>
    %c14 = arith.constant 14 : index
    %c0_141 = arith.constant 0 : index
    %c0_142 = arith.constant 0 : index
    %238 = vector.load %arg11[%c14, %c0_141, %c0_142] : memref<16x128x40xbf16, #tpu.memory_space<vmem>>, vector<1x128x40xbf16>
    %239 = vector.shape_cast %238 : vector<1x128x40xbf16> to vector<128x40xbf16>
    %cst_143 = arith.constant dense<0.000000e+00> : vector<2x40xf32>
    %240 = tpu.matmul %237, %239, %cst_143 {dimension_numbers = #tpu.dot_dimension_numbers<[1], [0], [0], [1], [0, 0, 1, 1], [], []>} : vector<2x128xbf16>, vector<128x40xbf16>, vector<2x40xf32> -> vector<2x40xf32>
    %241 = arith.addf %236, %240 : vector<2x40xf32>
    %242 = vector.extract_strided_slice %165 {offsets = [30, 0], sizes = [2, 128], strides = [1, 1]} : vector<32x128xbf16> to vector<2x128xbf16>
    %c15 = arith.constant 15 : index
    %c0_144 = arith.constant 0 : index
    %c0_145 = arith.constant 0 : index
    %243 = vector.load %arg11[%c15, %c0_144, %c0_145] : memref<16x128x40xbf16, #tpu.memory_space<vmem>>, vector<1x128x40xbf16>
    %244 = vector.shape_cast %243 : vector<1x128x40xbf16> to vector<128x40xbf16>
    %cst_146 = arith.constant dense<0.000000e+00> : vector<2x40xf32>
    %245 = tpu.matmul %242, %244, %cst_146 {dimension_numbers = #tpu.dot_dimension_numbers<[1], [0], [0], [1], [0, 0, 1, 1], [], []>} : vector<2x128xbf16>, vector<128x40xbf16>, vector<2x40xf32> -> vector<2x40xf32>
    %246 = arith.addf %241, %245 : vector<2x40xf32>
    %c0_147 = arith.constant 0 : index
    %c0_148 = arith.constant 0 : index
    %247 = vector.load %arg12[%c0_147, %c0_148] : memref<1x40xf32, #tpu.memory_space<vmem>>, vector<1x40xf32>
    %248 = vector.broadcast %247 : vector<1x40xf32> to vector<2x40xf32>
    %249 = arith.addf %246, %248 : vector<2x40xf32>
    %cst_149 = arith.constant 0.000000e+00 : f32
    %250 = vector.broadcast %cst_149 : f32 to vector<2x40xf32>
    %251 = arith.maximumf %249, %250 : vector<2x40xf32>
    %252 = arith.truncf %251 : vector<2x40xf32> to vector<2x40xbf16>
    %c0_150 = arith.constant 0 : index
    %c0_151 = arith.constant 0 : index
    %253 = vector.load %arg13[%c0_150, %c0_151] : memref<40x128xbf16, #tpu.memory_space<vmem>>, vector<40x128xbf16>
    %cst_152 = arith.constant dense<0.000000e+00> : vector<2x128xf32>
    %254 = tpu.matmul %252, %253, %cst_152 {dimension_numbers = #tpu.dot_dimension_numbers<[1], [0], [0], [1], [0, 0, 1, 1], [], []>} : vector<2x40xbf16>, vector<40x128xbf16>, vector<2x128xf32> -> vector<2x128xf32>
    %c0_153 = arith.constant 0 : index
    %c0_154 = arith.constant 0 : index
    %255 = vector.load %arg14[%c0_153, %c0_154] : memref<1x128xf32, #tpu.memory_space<vmem>>, vector<1x128xf32>
    %256 = vector.broadcast %255 : vector<1x128xf32> to vector<2x128xf32>
    %257 = arith.addf %254, %256 : vector<2x128xf32>
    %c0_155 = arith.constant 0 : index
    %c0_156 = arith.constant 0 : index
    %258 = vector.load %arg15[%c0_155, %c0_156] : memref<2x128xf32, #tpu.memory_space<vmem>>, vector<2x128xf32>
    tpu.vector_store %arg15[%c0_155, %c0_156], %257 {strides = array<i32>} : memref<2x128xf32, #tpu.memory_space<vmem>>, vector<2x128xf32>,
    return
  }
  func.func @transform_0(%arg0: i32) -> (i32, i32) {
    %c0_i32 = arith.constant 0 : i32
    %c0_i32_0 = arith.constant 0 : i32
    return %arg0, %c0_i32 : i32, i32
  }
  func.func @transform_1(%arg0: i32) -> (i32, i32) {
    %c0_i32 = arith.constant 0 : i32
    %c0_i32_0 = arith.constant 0 : i32
    %c0_i32_1 = arith.constant 0 : i32
    return %c0_i32, %c0_i32_0 : i32, i32
  }
  func.func @transform_2(%arg0: i32) -> (i32, i32) {
    %c0_i32 = arith.constant 0 : i32
    %c0_i32_0 = arith.constant 0 : i32
    %c0_i32_1 = arith.constant 0 : i32
    return %c0_i32, %c0_i32_0 : i32, i32
  }
  func.func @transform_3(%arg0: i32) -> (i32, i32) {
    %c0_i32 = arith.constant 0 : i32
    %c0_i32_0 = arith.constant 0 : i32
    %c0_i32_1 = arith.constant 0 : i32
    return %c0_i32, %c0_i32_0 : i32, i32
  }
  func.func @transform_4(%arg0: i32) -> (i32, i32) {
    %c0_i32 = arith.constant 0 : i32
    %c0_i32_0 = arith.constant 0 : i32
    %c0_i32_1 = arith.constant 0 : i32
    return %c0_i32, %c0_i32_0 : i32, i32
  }
  func.func @transform_5(%arg0: i32) -> (i32, i32) {
    %c0_i32 = arith.constant 0 : i32
    %c0_i32_0 = arith.constant 0 : i32
    %c0_i32_1 = arith.constant 0 : i32
    return %c0_i32, %c0_i32_0 : i32, i32
  }
  func.func @transform_6(%arg0: i32) -> (i32, i32, i32) {
    %c0_i32 = arith.constant 0 : i32
    %c0_i32_0 = arith.constant 0 : i32
    %c0_i32_1 = arith.constant 0 : i32
    %c0_i32_2 = arith.constant 0 : i32
    return %c0_i32, %c0_i32_0, %c0_i32_1 : i32, i32, i32
  }
  func.func @transform_7(%arg0: i32) -> (i32, i32) {
    %c0_i32 = arith.constant 0 : i32
    %c0_i32_0 = arith.constant 0 : i32
    %c0_i32_1 = arith.constant 0 : i32
    return %c0_i32, %c0_i32_0 : i32, i32
  }
  func.func @transform_8(%arg0: i32) -> (i32, i32, i32) {
    %c0_i32 = arith.constant 0 : i32
    %c0_i32_0 = arith.constant 0 : i32
    %c0_i32_1 = arith.constant 0 : i32
    %c0_i32_2 = arith.constant 0 : i32
    return %c0_i32, %c0_i32_0, %c0_i32_1 : i32, i32, i32
  }
  func.func @transform_9(%arg0: i32) -> (i32, i32) {
    %c0_i32 = arith.constant 0 : i32
    %c0_i32_0 = arith.constant 0 : i32
    %c0_i32_1 = arith.constant 0 : i32
    return %c0_i32, %c0_i32_0 : i32, i32
  }
  func.func @transform_10(%arg0: i32) -> (i32, i32, i32) {
    %c0_i32 = arith.constant 0 : i32
    %c0_i32_0 = arith.constant 0 : i32
    %c0_i32_1 = arith.constant 0 : i32
    %c0_i32_2 = arith.constant 0 : i32
    return %c0_i32, %c0_i32_0, %c0_i32_1 : i32, i32, i32
  }
  func.func @transform_11(%arg0: i32) -> (i32, i32) {
    %c0_i32 = arith.constant 0 : i32
    %c0_i32_0 = arith.constant 0 : i32
    %c0_i32_1 = arith.constant 0 : i32
    return %c0_i32, %c0_i32_0 : i32, i32
  }
  func.func @transform_12(%arg0: i32) -> (i32, i32) {
    %c0_i32 = arith.constant 0 : i32
    %c0_i32_0 = arith.constant 0 : i32
    %c0_i32_1 = arith.constant 0 : i32
    return %c0_i32, %c0_i32_0 : i32, i32
  }
  func.func @transform_13(%arg0: i32) -> (i32, i32) {
    %c0_i32 = arith.constant 0 : i32
    %c0_i32_0 = arith.constant 0 : i32
    %c0_i32_1 = arith.constant 0 : i32
    return %c0_i32, %c0_i32_0 : i32, i32
  }
  func.func @transform_14(%arg0: i32) -> (i32, i32) {
    %c0_i32 = arith.constant 0 : i32
    %c0_i32_0 = arith.constant 0 : i32
    return %arg0, %c0_i32 : i32, i32
  }
}

</mosaic_0001>

<llo_original>
// kernel: example_convnet_forward.1
$region0: #{example_convnet_forward.1}
  #allocation0 [shape = 'u32[]', space=smem, size = 0x4, offset = 0x4, fixed_abs, tag = 'smem constant byte address 0x4 - core index']
  #allocation1 [shape = 'u32[144,128]{1,0:T(1,128)}', space=vmem, size = 0x12000, scoped, tag = 'internal scratch']
  %s0 = inlined_call_operand.vmem [shape: bf16[512,32], index: 0, kind: input, shape index: {}]
  %s1 = inlined_call_operand.vmem [shape: bf16[32,32], index: 1, kind: input, shape index: {}]
  %s2 = inlined_call_operand.vmem [shape: bf16[576,256], index: 2, kind: input, shape index: {}]
  %s3 = inlined_call_operand.vmem [shape: bf16[144,64], index: 3, kind: input, shape index: {}]
  %s4 = inlined_call_operand.vmem [shape: bf16[32,32], index: 4, kind: input, shape index: {}]
  %s5 = inlined_call_operand.vmem [shape: f32[1,32], index: 5, kind: input, shape index: {}]
  %s6 = inlined_call_operand.vmem [shape: bf16[9,32,64], index: 6, kind: input, shape index: {}]
  %s7 = inlined_call_operand.vmem [shape: f32[1,64], index: 7, kind: input, shape index: {}]
  %s8 = inlined_call_operand.vmem [shape: bf16[9,64,128], index: 8, kind: input, shape index: {}]
  %s9 = inlined_call_operand.vmem [shape: f32[1,128], index: 9, kind: input, shape index: {}]
  %s10 = inlined_call_operand.vmem [shape: bf16[16,128,40], index: 10, kind: input, shape index: {}]
  %s11 = inlined_call_operand.vmem [shape: f32[1,40], index: 11, kind: input, shape index: {}]
  %s12 = inlined_call_operand.vmem [shape: bf16[40,128], index: 12, kind: input, shape index: {}]
  %s13 = inlined_call_operand.vmem [shape: f32[1,128], index: 13, kind: input, shape index: {}]
  %s14 = inlined_call_operand.hbm [shape: f32[2,128], index: 14, kind: output, shape index: {}]
  %s15 = sld [smem:[#allocation0]]
  $region66: #{example_convnet_forward.1} parent=0
    _
  %s17 = ssub.s32 1, %s15
  %s18 = scalar_select 0, %s17, %s15
  $region1: #{example_convnet_forward.1} parent=0
    #allocation2 [shape = 'u8[1024]{0}', space=vmem, size = 0x400, scoped, tag = 'output window, operand 0, single buffered']
    #allocation3 [shape = 's32[1]{0}', space=sflag, size = 0x4, scoped, tag = 'scoped memory for example_convnet_forward.1']
    %19 = vsyncpa [#allocation3], 0
    // Predicated region
    $region2: #{example_convnet_forward.1} parent=1 // pred_check
      _
    $region3: #{example_convnet_forward.1} parent=1 // pred_check_branch
      %21 = sbr.rel (0) target = $region5
    $region4: #{example_convnet_forward.1} parent=1 // pred_region
      _
    $region5: #{example_convnet_forward.1} parent=1 // pred_fallthru
      _
    // Predicated region
    $region6: #{example_convnet_forward.1} parent=1 // pred_check
      _
    $region7: #{example_convnet_forward.1} parent=1 // pred_check_branch
      %23 = sbr.rel (0) target = $region9
    $region8: #{example_convnet_forward.1} parent=1 // pred_region
      _
    $region9: #{example_convnet_forward.1} parent=1 // pred_fallthru
      _
    // Predicated region
    $region10: #{example_convnet_forward.1} parent=1 // pred_check
      _
    $region11: #{example_convnet_forward.1} parent=1 // pred_check_branch
      %25 = sbr.rel (0) target = $region13
    $region12: #{example_convnet_forward.1} parent=1 // pred_region
      _
    $region13: #{example_convnet_forward.1} parent=1 // pred_fallthru
      _
    // Predicated region
    $region14: #{example_convnet_forward.1} parent=1 // pred_check
      _
    $region15: #{example_convnet_forward.1} parent=1 // pred_check_branch
      %27 = sbr.rel (0) target = $region17
    $region16: #{example_convnet_forward.1} parent=1 // pred_region
      _
    $region17: #{example_convnet_forward.1} parent=1 // pred_fallthru
      _
    // Predicated region
    $region18: #{example_convnet_forward.1} parent=1 // pred_check
      _
    $region19: #{example_convnet_forward.1} parent=1 // pred_check_branch
      %29 = sbr.rel (0) target = $region21
    $region20: #{example_convnet_forward.1} parent=1 // pred_region
      _
    $region21: #{example_convnet_forward.1} parent=1 // pred_fallthru
      _
    // Predicated region
    $region22: #{example_convnet_forward.1} parent=1 // pred_check
      _
    $region23: #{example_convnet_forward.1} parent=1 // pred_check_branch
      %31 = sbr.rel (0) target = $region25
    $region24: #{example_convnet_forward.1} parent=1 // pred_region
      _
    $region25: #{example_convnet_forward.1} parent=1 // pred_fallthru
      _
    // Predicated region
    $region26: #{example_convnet_forward.1} parent=1 // pred_check
      _
    $region27: #{example_convnet_forward.1} parent=1 // pred_check_branch
      %33 = sbr.rel (0) target = $region29
    $region28: #{example_convnet_forward.1} parent=1 // pred_region
      _
    $region29: #{example_convnet_forward.1} parent=1 // pred_fallthru
      _
    // Predicated region
    $region30: #{example_convnet_forward.1} parent=1 // pred_check
      _
    $region31: #{example_convnet_forward.1} parent=1 // pred_check_branch
      %35 = sbr.rel (0) target = $region33
    $region32: #{example_convnet_forward.1} parent=1 // pred_region
      _
    $region33: #{example_convnet_forward.1} parent=1 // pred_fallthru
      _
    // Predicated region
    $region34: #{example_convnet_forward.1} parent=1 // pred_check
      _
    $region35: #{example_convnet_forward.1} parent=1 // pred_check_branch
      %37 = sbr.rel (0) target = $region37
    $region36: #{example_convnet_forward.1} parent=1 // pred_region
      _
    $region37: #{example_convnet_forward.1} parent=1 // pred_fallthru
      _
    // Predicated region
    $region38: #{example_convnet_forward.1} parent=1 // pred_check
      _
    $region39: #{example_convnet_forward.1} parent=1 // pred_check_branch
      %39 = sbr.rel (0) target = $region41
    $region40: #{example_convnet_forward.1} parent=1 // pred_region
      _
    $region41: #{example_convnet_forward.1} parent=1 // pred_fallthru
      _
    // Predicated region
    $region42: #{example_convnet_forward.1} parent=1 // pred_check
      _
    $region43: #{example_convnet_forward.1} parent=1 // pred_check_branch
      %41 = sbr.rel (0) target = $region45
    $region44: #{example_convnet_forward.1} parent=1 // pred_region
      _
    $region45: #{example_convnet_forward.1} parent=1 // pred_fallthru
      _
    // Predicated region
    $region46: #{example_convnet_forward.1} parent=1 // pred_check
      _
    $region47: #{example_convnet_forward.1} parent=1 // pred_check_branch
      %43 = sbr.rel (0) target = $region49
    $region48: #{example_convnet_forward.1} parent=1 // pred_region
      _
    $region49: #{example_convnet_forward.1} parent=1 // pred_fallthru
      _
    // Predicated region
    $region50: #{example_convnet_forward.1} parent=1 // pred_check
      _
    $region51: #{example_convnet_forward.1} parent=1 // pred_check_branch
      %45 = sbr.rel (0) target = $region53
    $region52: #{example_convnet_forward.1} parent=1 // pred_region
      _
    $region53: #{example_convnet_forward.1} parent=1 // pred_fallthru
      _
    // Predicated region
    $region54: #{example_convnet_forward.1} parent=1 // pred_check
      _
    $region55: #{example_convnet_forward.1} parent=1 // pred_check_branch
      %47 = sbr.rel (0) target = $region57
    $region56: #{example_convnet_forward.1} parent=1 // pred_region
      _
    $region57: #{example_convnet_forward.1} parent=1 // pred_fallthru
      _
    %v49 = vld [vmem:[%s0] sm:$0xf]
    %v50 = vld [vmem:[%s0 + $0x4] sm:$0xf]
    %v51 = vld [vmem:[%s0 + $0x8] sm:$0xf]
    %v52 = vld [vmem:[%s0 + $0xc] sm:$0xf]
    %v53 = vld [vmem:[%s0 + $0x10] sm:$0xf]
    %v54 = vld [vmem:[%s0 + $0x14] sm:$0xf]
    %v55 = vld [vmem:[%s0 + $0x18] sm:$0xf]
    %v56 = vld [vmem:[%s0 + $0x1c] sm:$0xf]
    %v57 = vld [vmem:[%s0 + $0x20] sm:$0xf]
    %v58 = vld [vmem:[%s0 + $0x24] sm:$0xf]
    %v59 = vld [vmem:[%s0 + $0x28] sm:$0xf]
    %v60 = vld [vmem:[%s0 + $0x2c] sm:$0xf]
    %v61 = vld [vmem:[%s0 + $0x30] sm:$0xf]
    %v62 = vld [vmem:[%s0 + $0x34] sm:$0xf]
    %v63 = vld [vmem:[%s0 + $0x38] sm:$0xf]
    %v64 = vld [vmem:[%s0 + $0x3c] sm:$0xf]
    %v65 = vld [vmem:[%s0 + $0x40] sm:$0xf]
    %v66 = vld [vmem:[%s0 + $0x44] sm:$0xf]
    %v67 = vld [vmem:[%s0 + $0x48] sm:$0xf]
    %v68 = vld [vmem:[%s0 + $0x4c] sm:$0xf]
    %v69 = vld [vmem:[%s0 + $0x50] sm:$0xf]
    %v70 = vld [vmem:[%s0 + $0x54] sm:$0xf]
    %v71 = vld [vmem:[%s0 + $0x58] sm:$0xf]
    %v72 = vld [vmem:[%s0 + $0x5c] sm:$0xf]
    %v73 = vld [vmem:[%s0 + $0x60] sm:$0xf]
    %v74 = vld [vmem:[%s0 + $0x64] sm:$0xf]
    %v75 = vld [vmem:[%s0 + $0x68] sm:$0xf]
    %v76 = vld [vmem:[%s0 + $0x6c] sm:$0xf]
    %v77 = vld [vmem:[%s0 + $0x70] sm:$0xf]
    %v78 = vld [vmem:[%s0 + $0x74] sm:$0xf]
    %v79 = vld [vmem:[%s0 + $0x78] sm:$0xf]
    %v80 = vld [vmem:[%s0 + $0x7c] sm:$0xf]
    %v81 = vld [vmem:[%s0 + $0x80] sm:$0xf]
    %v82 = vld [vmem:[%s0 + $0x84] sm:$0xf]
    %v83 = vld [vmem:[%s0 + $0x88] sm:$0xf]
    %v84 = vld [vmem:[%s0 + $0x8c] sm:$0xf]
    %v85 = vld [vmem:[%s0 + $0x90] sm:$0xf]
    %v86 = vld [vmem:[%s0 + $0x94] sm:$0xf]
    %v87 = vld [vmem:[%s0 + $0x98] sm:$0xf]
    %v88 = vld [vmem:[%s0 + $0x9c] sm:$0xf]
    %v89 = vld [vmem:[%s0 + $0xa0] sm:$0xf]
    %v90 = vld [vmem:[%s0 + $0xa4] sm:$0xf]
    %v91 = vld [vmem:[%s0 + $0xa8] sm:$0xf]
    %v92 = vld [vmem:[%s0 + $0xac] sm:$0xf]
    %v93 = vld [vmem:[%s0 + $0xb0] sm:$0xf]
    %v94 = vld [vmem:[%s0 + $0xb4] sm:$0xf]
    %v95 = vld [vmem:[%s0 + $0xb8] sm:$0xf]
    %v96 = vld [vmem:[%s0 + $0xbc] sm:$0xf]
    %v97 = vld [vmem:[%s0 + $0xc0] sm:$0xf]
    %v98 = vld [vmem:[%s0 + $0xc4] sm:$0xf]
    %v99 = vld [vmem:[%s0 + $0xc8] sm:$0xf]
    %v100 = vld [vmem:[%s0 + $0xcc] sm:$0xf]
    %v101 = vld [vmem:[%s0 + $0xd0] sm:$0xf]
    %v102 = vld [vmem:[%s0 + $0xd4] sm:$0xf]
    %v103 = vld [vmem:[%s0 + $0xd8] sm:$0xf]
    %v104 = vld [vmem:[%s0 + $0xdc] sm:$0xf]
    %v105 = vld [vmem:[%s0 + $0xe0] sm:$0xf]
    %v106 = vld [vmem:[%s0 + $0xe4] sm:$0xf]
    %v107 = vld [vmem:[%s0 + $0xe8] sm:$0xf]
    %v108 = vld [vmem:[%s0 + $0xec] sm:$0xf]
    %v109 = vld [vmem:[%s0 + $0xf0] sm:$0xf]
    %v110 = vld [vmem:[%s0 + $0xf4] sm:$0xf]
    %v111 = vld [vmem:[%s0 + $0xf8] sm:$0xf]
    %v112 = vld [vmem:[%s0 + $0xfc] sm:$0xf]
    %v113 = vld [vmem:[%s4] sm:$0xf]
    %v114 = vld [vmem:[%s4 + $0x4] sm:$0xf]
    %v115 = vld [vmem:[%s4 + $0x8] sm:$0xf]
    %v116 = vld [vmem:[%s4 + $0xc] sm:$0xf]
    %v117 = vld [vmem:[%s5] sm:$0x1]
    %v119 = vlaneseq
    %v120 = vshrl.u32 %v119, 7
    %v121 = vsub.s32 0, %v120
    %v122 = vrot.slane %v117, %v121
    %v188 = vunpack.c.l.b16 %v49
    %v189 = vunpack.c.l.b16 %v50
    %v190 = vunpack.c.l.b16 %v51
    %v191 = vunpack.c.l.b16 %v52
    %v192 = vunpack.c.l.b16 %v53
    %v193 = vunpack.c.l.b16 %v54
    %v194 = vunpack.c.l.b16 %v55
    %v195 = vunpack.c.l.b16 %v56
    %v196 = vunpack.c.l.b16 %v57
    %v197 = vunpack.c.l.b16 %v58
    %v198 = vunpack.c.l.b16 %v59
    %v199 = vunpack.c.l.b16 %v60
    %v200 = vunpack.c.l.b16 %v61
    %v201 = vunpack.c.l.b16 %v62
    %v202 = vunpack.c.l.b16 %v63
    %v203 = vunpack.c.l.b16 %v64
    %v204 = vunpack.c.l.b16 %v65
    %v205 = vunpack.c.l.b16 %v66
    %v206 = vunpack.c.l.b16 %v67
    %v207 = vunpack.c.l.b16 %v68
    %v208 = vunpack.c.l.b16 %v69
    %v209 = vunpack.c.l.b16 %v70
    %v210 = vunpack.c.l.b16 %v71
    %v211 = vunpack.c.l.b16 %v72
    %v212 = vunpack.c.l.b16 %v73
    %v213 = vunpack.c.l.b16 %v74
    %v214 = vunpack.c.l.b16 %v75
    %v215 = vunpack.c.l.b16 %v76
    %v216 = vunpack.c.l.b16 %v77
    %v217 = vunpack.c.l.b16 %v78
    %v218 = vunpack.c.l.b16 %v79
    %v219 = vunpack.c.l.b16 %v80
    %v220 = vunpack.c.l.b16 %v81
    %v221 = vunpack.c.l.b16 %v82
    %v222 = vunpack.c.l.b16 %v83
    %v223 = vunpack.c.l.b16 %v84
    %v224 = vunpack.c.l.b16 %v85
    %v225 = vunpack.c.l.b16 %v86
    %v226 = vunpack.c.l.b16 %v87
    %v227 = vunpack.c.l.b16 %v88
    %v228 = vunpack.c.l.b16 %v89
    %v229 = vunpack.c.l.b16 %v90
    %v230 = vunpack.c.l.b16 %v91
    %v231 = vunpack.c.l.b16 %v92
    %v232 = vunpack.c.l.b16 %v93
    %v233 = vunpack.c.l.b16 %v94
    %v234 = vunpack.c.l.b16 %v95
    %v235 = vunpack.c.l.b16 %v96
    %v236 = vunpack.c.l.b16 %v97
    %v237 = vunpack.c.l.b16 %v98
    %v238 = vunpack.c.l.b16 %v99
    %v239 = vunpack.c.l.b16 %v100
    %v240 = vunpack.c.l.b16 %v101
    %v241 = vunpack.c.l.b16 %v102
    %v242 = vunpack.c.l.b16 %v103
    %v243 = vunpack.c.l.b16 %v104
    %v244 = vunpack.c.l.b16 %v105
    %v245 = vunpack.c.l.b16 %v106
    %v246 = vunpack.c.l.b16 %v107
    %v247 = vunpack.c.l.b16 %v108
    %v248 = vunpack.c.l.b16 %v109
    %v249 = vunpack.c.l.b16 %v110
    %v250 = vunpack.c.l.b16 %v111
    %v251 = vunpack.c.l.b16 %v112
    %v252 = vpack.c.b16 %v189, %v188
    %v253 = vpack.c.b16 %v191, %v190
    %v254 = vpack.c.b16 %v193, %v192
    %v255 = vpack.c.b16 %v195, %v194
    %v256 = vpack.c.b16 %v197, %v196
    %v257 = vpack.c.b16 %v199, %v198
    %v258 = vpack.c.b16 %v201, %v200
    %v259 = vpack.c.b16 %v203, %v202
    %v260 = vpack.c.b16 %v205, %v204
    %v261 = vpack.c.b16 %v207, %v206
    %v262 = vpack.c.b16 %v209, %v208
    %v263 = vpack.c.b16 %v211, %v210
    %v264 = vpack.c.b16 %v213, %v212
    %v265 = vpack.c.b16 %v215, %v214
    %v266 = vpack.c.b16 %v217, %v216
    %v267 = vpack.c.b16 %v219, %v218
    %v268 = vpack.c.b16 %v221, %v220
    %v269 = vpack.c.b16 %v223, %v222
    %v270 = vpack.c.b16 %v225, %v224
    %v271 = vpack.c.b16 %v227, %v226
    %v272 = vpack.c.b16 %v229, %v228
    %v273 = vpack.c.b16 %v231, %v230
    %v274 = vpack.c.b16 %v233, %v232
    %v275 = vpack.c.b16 %v235, %v234
    %v276 = vpack.c.b16 %v237, %v236
    %v277 = vpack.c.b16 %v239, %v238
    %v278 = vpack.c.b16 %v241, %v240
    %v279 = vpack.c.b16 %v243, %v242
    %v280 = vpack.c.b16 %v245, %v244
    %v281 = vpack.c.b16 %v247, %v246
    %v282 = vpack.c.b16 %v249, %v248
    %v283 = vpack.c.b16 %v251, %v250
    %v288 = vunpack.c.l.b16 %v113
    %v289 = vunpack.c.l.b16 %v114
    %v290 = vunpack.c.l.b16 %v115
    %v291 = vunpack.c.l.b16 %v116
    %v292 = vpack.c.b16 %v289, %v288
    %v293 = vpack.c.b16 %v291, %v290
    %vm296 = vcmask 261120
    %v298 = vsel %vm296, %v252, 0
    %v301 = vsel %vm296, %v253, 0
    %v304 = vsel %vm296, %v254, 0
    %v307 = vsel %vm296, %v255, 0
    %v310 = vsel %vm296, %v256, 0
    %v313 = vsel %vm296, %v257, 0
    %v316 = vsel %vm296, %v258, 0
    %v319 = vsel %vm296, %v259, 0
    %v322 = vsel %vm296, %v260, 0
    %v325 = vsel %vm296, %v261, 0
    %v328 = vsel %vm296, %v262, 0
    %v331 = vsel %vm296, %v263, 0
    %v334 = vsel %vm296, %v264, 0
    %v337 = vsel %vm296, %v265, 0
    %v340 = vsel %vm296, %v266, 0
    %v343 = vsel %vm296, %v267, 0
    %v346 = vsel %vm296, %v268, 0
    %v349 = vsel %vm296, %v269, 0
    %v352 = vsel %vm296, %v270, 0
    %v355 = vsel %vm296, %v271, 0
    %v358 = vsel %vm296, %v272, 0
    %v361 = vsel %vm296, %v273, 0
    %v364 = vsel %vm296, %v274, 0
    %v367 = vsel %vm296, %v275, 0
    %v370 = vsel %vm296, %v276, 0
    %v373 = vsel %vm296, %v277, 0
    %v376 = vsel %vm296, %v278, 0
    %v379 = vsel %vm296, %v279, 0
    %v382 = vsel %vm296, %v280, 0
    %v385 = vsel %vm296, %v281, 0
    %v388 = vsel %vm296, %v282, 0
    %v391 = vsel %vm296, %v283, 0
    %393 = vmatprep.subr.bf16.mxu0 0
    %394 = vmatpush1.bf16.msra.mxu0 0
    %395 = vmatprep.subr.bf16.mxu0 0
    %396 = vmatpush1.bf16.msra.mxu0 0
    %397 = vmatprep.subr.bf16.mxu0 0
    %398 = vmatpush1.bf16.msra.mxu0 0
    %399 = vmatprep.subr.bf16.mxu0 0
    %400 = vmatpush1.bf16.msra.mxu0 0
    %401 = vmatprep.subr.bf16.mxu0 0
    %402 = vmatpush1.bf16.msra.mxu0 0
    %403 = vmatprep.subr.bf16.mxu0 0
    %404 = vmatpush1.bf16.msra.mxu0 0
    %405 = vmatprep.subr.bf16.mxu0 0
    %406 = vmatpush1.bf16.msra.mxu0 %v293
    %407 = vmatprep.subr.bf16.mxu0 0
    %408 = vmatpush1.bf16.msra.mxu0 %v292
    %409 = vmatprep.subr.bf16.mxu0 0
    %410 = vmatpush2.bf16.msra.mxu0 0
    %411 = vmatprep.subr.bf16.mxu0 0
    %412 = vmatpush2.bf16.msra.mxu0 0
    %413 = vmatprep.subr.bf16.mxu0 0
    %414 = vmatpush2.bf16.msra.mxu0 0
    %415 = vmatprep.subr.bf16.mxu0 0
    %416 = vmatpush2.bf16.msra.mxu0 0
    %417 = vmatprep.subr.bf16.mxu0 0
    %418 = vmatpush2.bf16.msra.mxu0 0
    %419 = vmatprep.subr.bf16.mxu0 0
    %420 = vmatpush2.bf16.msra.mxu0 0
    %421 = vmatprep.subr.bf16.mxu0 0
    %422 = vmatpush2.bf16.msra.mxu0 0
    %423 = vmatprep.subr.bf16.mxu0 0
    %424 = vmatpush2.bf16.msra.mxu0 0
    %425 = vmatprep.mubr.bf16.mxu0 0
    %426 = vmatmul.mubr.bf16.gmra.mxu0 %v298
    %v427 = vpop.f32.mrf.mxu0
    %v428 = vadd.f32 %v122, %v427
    %v429 = vpop.f32.mrf.mxu0
    %v430 = vpop.f32.mrf.mxu0
    %v431 = vadd.f32 %v122, %v430
    %v432 = vpop.f32.mrf.mxu0
    %433 = vmatprep.mubr.bf16.mxu0 0
    %434 = vmatmul.mubr.bf16.gmra.mxu0 %v301
    %v435 = vpop.f32.mrf.mxu0
    %v436 = vadd.f32 %v122, %v435
    %v437 = vpop.f32.mrf.mxu0
    %v438 = vpop.f32.mrf.mxu0
    %v439 = vadd.f32 %v122, %v438
    %v440 = vpop.f32.mrf.mxu0
    %441 = vmatprep.mubr.bf16.mxu0 0
    %442 = vmatmul.mubr.bf16.gmra.mxu0 %v304
    %v443 = vpop.f32.mrf.mxu0
    %v444 = vadd.f32 %v122, %v443
    %v445 = vpop.f32.mrf.mxu0
    %v446 = vpop.f32.mrf.mxu0
    %v447 = vadd.f32 %v122, %v446
    %v448 = vpop.f32.mrf.mxu0
    %449 = vmatprep.mubr.bf16.mxu0 0
    %450 = vmatmul.mubr.bf16.gmra.mxu0 %v307
    %v451 = vpop.f32.mrf.mxu0
    %v452 = vadd.f32 %v122, %v451
    %v453 = vpop.f32.mrf.mxu0
    %v454 = vpop.f32.mrf.mxu0
    %v455 = vadd.f32 %v122, %v454
    %v456 = vpop.f32.mrf.mxu0
    %457 = vmatprep.mubr.bf16.mxu0 0
    %458 = vmatmul.mubr.bf16.gmra.mxu0 %v310
    %v459 = vpop.f32.mrf.mxu0
    %v460 = vadd.f32 %v122, %v459
    %v461 = vpop.f32.mrf.mxu0
    %v462 = vpop.f32.mrf.mxu0
    %v463 = vadd.f32 %v122, %v462
    %v464 = vpop.f32.mrf.mxu0
    %465 = vmatprep.mubr.bf16.mxu0 0
    %466 = vmatmul.mubr.bf16.gmra.mxu0 %v313
    %v467 = vpop.f32.mrf.mxu0
    %v468 = vadd.f32 %v122, %v467
    %v469 = vpop.f32.mrf.mxu0
    %v470 = vpop.f32.mrf.mxu0
    %v471 = vadd.f32 %v122, %v470
    %v472 = vpop.f32.mrf.mxu0
    %473 = vmatprep.mubr.bf16.mxu0 0
    %474 = vmatmul.mubr.bf16.gmra.mxu0 %v316
    %v475 = vpop.f32.mrf.mxu0
    %v476 = vadd.f32 %v122, %v475
    %v477 = vpop.f32.mrf.mxu0
    %v478 = vpop.f32.mrf.mxu0
    %v479 = vadd.f32 %v122, %v478
    %v480 = vpop.f32.mrf.mxu0
    %481 = vmatprep.mubr.bf16.mxu0 0
    %482 = vmatmul.mubr.bf16.gmra.mxu0 %v319
    %v483 = vpop.f32.mrf.mxu0
    %v484 = vadd.f32 %v122, %v483
    %v485 = vpop.f32.mrf.mxu0
    %v486 = vpop.f32.mrf.mxu0
    %v487 = vadd.f32 %v122, %v486
    %v488 = vpop.f32.mrf.mxu0
    %489 = vmatprep.mubr.bf16.mxu0 0
    %490 = vmatmul.mubr.bf16.gmra.mxu0 %v322
    %v491 = vpop.f32.mrf.mxu0
    %v492 = vadd.f32 %v122, %v491
    %v493 = vpop.f32.mrf.mxu0
    %v494 = vpop.f32.mrf.mxu0
    %v495 = vadd.f32 %v122, %v494
    %v496 = vpop.f32.mrf.mxu0
    %497 = vmatprep.mubr.bf16.mxu0 0
    %498 = vmatmul.mubr.bf16.gmra.mxu0 %v325
    %v499 = vpop.f32.mrf.mxu0
    %v500 = vadd.f32 %v122, %v499
    %v501 = vpop.f32.mrf.mxu0
    %v502 = vpop.f32.mrf.mxu0
    %v503 = vadd.f32 %v122, %v502
    %v504 = vpop.f32.mrf.mxu0
    %505 = vmatprep.mubr.bf16.mxu0 0
    %506 = vmatmul.mubr.bf16.gmra.mxu0 %v328
    %v507 = vpop.f32.mrf.mxu0
    %v508 = vadd.f32 %v122, %v507
    %v509 = vpop.f32.mrf.mxu0
    %v510 = vpop.f32.mrf.mxu0
    %v511 = vadd.f32 %v122, %v510
    %v512 = vpop.f32.mrf.mxu0
    %513 = vmatprep.mubr.bf16.mxu0 0
    %514 = vmatmul.mubr.bf16.gmra.mxu0 %v331
    %v515 = vpop.f32.mrf.mxu0
    %v516 = vadd.f32 %v122, %v515
    %v517 = vpop.f32.mrf.mxu0
    %v518 = vpop.f32.mrf.mxu0
    %v519 = vadd.f32 %v122, %v518
    %v520 = vpop.f32.mrf.mxu0
    %521 = vmatprep.mubr.bf16.mxu0 0
    %522 = vmatmul.mubr.bf16.gmra.mxu0 %v334
    %v523 = vpop.f32.mrf.mxu0
    %v524 = vadd.f32 %v122, %v523
    %v525 = vpop.f32.mrf.mxu0
    %v526 = vpop.f32.mrf.mxu0
    %v527 = vadd.f32 %v122, %v526
    %v528 = vpop.f32.mrf.mxu0
    %529 = vmatprep.mubr.bf16.mxu0 0
    %530 = vmatmul.mubr.bf16.gmra.mxu0 %v337
    %v531 = vpop.f32.mrf.mxu0
    %v532 = vadd.f32 %v122, %v531
    %v533 = vpop.f32.mrf.mxu0
    %v534 = vpop.f32.mrf.mxu0
    %v535 = vadd.f32 %v122, %v534
    %v536 = vpop.f32.mrf.mxu0
    %537 = vmatprep.mubr.bf16.mxu0 0
    %538 = vmatmul.mubr.bf16.gmra.mxu0 %v340
    %v539 = vpop.f32.mrf.mxu0
    %v540 = vadd.f32 %v122, %v539
    %v541 = vpop.f32.mrf.mxu0
    %v542 = vpop.f32.mrf.mxu0
    %v543 = vadd.f32 %v122, %v542
    %v544 = vpop.f32.mrf.mxu0
    %545 = vmatprep.mubr.bf16.mxu0 0
    %546 = vmatmul.mubr.bf16.gmra.mxu0 %v343
    %v547 = vpop.f32.mrf.mxu0
    %v548 = vadd.f32 %v122, %v547
    %v549 = vpop.f32.mrf.mxu0
    %v550 = vpop.f32.mrf.mxu0
    %v551 = vadd.f32 %v122, %v550
    %v552 = vpop.f32.mrf.mxu0
    %553 = vmatprep.mubr.bf16.mxu0 0
    %554 = vmatmul.mubr.bf16.gmra.mxu0 %v346
    %v555 = vpop.f32.mrf.mxu0
    %v556 = vadd.f32 %v122, %v555
    %v557 = vpop.f32.mrf.mxu0
    %v558 = vpop.f32.mrf.mxu0
    %v559 = vadd.f32 %v122, %v558
    %v560 = vpop.f32.mrf.mxu0
    %561 = vmatprep.mubr.bf16.mxu0 0
    %562 = vmatmul.mubr.bf16.gmra.mxu0 %v349
    %v563 = vpop.f32.mrf.mxu0
    %v564 = vadd.f32 %v122, %v563
    %v565 = vpop.f32.mrf.mxu0
    %v566 = vpop.f32.mrf.mxu0
    %v567 = vadd.f32 %v122, %v566
    %v568 = vpop.f32.mrf.mxu0
    %569 = vmatprep.mubr.bf16.mxu0 0
    %570 = vmatmul.mubr.bf16.gmra.mxu0 %v352
    %v571 = vpop.f32.mrf.mxu0
    %v572 = vadd.f32 %v122, %v571
    %v573 = vpop.f32.mrf.mxu0
    %v574 = vpop.f32.mrf.mxu0
    %v575 = vadd.f32 %v122, %v574
    %v576 = vpop.f32.mrf.mxu0
    %577 = vmatprep.mubr.bf16.mxu0 0
    %578 = vmatmul.mubr.bf16.gmra.mxu0 %v355
    %v579 = vpop.f32.mrf.mxu0
    %v580 = vadd.f32 %v122, %v579
    %v581 = vpop.f32.mrf.mxu0
    %v582 = vpop.f32.mrf.mxu0
    %v583 = vadd.f32 %v122, %v582
    %v584 = vpop.f32.mrf.mxu0
    %585 = vmatprep.mubr.bf16.mxu0 0
    %586 = vmatmul.mubr.bf16.gmra.mxu0 %v358
    %v587 = vpop.f32.mrf.mxu0
    %v588 = vadd.f32 %v122, %v587
    %v589 = vpop.f32.mrf.mxu0
    %v590 = vpop.f32.mrf.mxu0
    %v591 = vadd.f32 %v122, %v590
    %v592 = vpop.f32.mrf.mxu0
    %593 = vmatprep.mubr.bf16.mxu0 0
    %594 = vmatmul.mubr.bf16.gmra.mxu0 %v361
    %v595 = vpop.f32.mrf.mxu0
    %v596 = vadd.f32 %v122, %v595
    %v597 = vpop.f32.mrf.mxu0
    %v598 = vpop.f32.mrf.mxu0
    %v599 = vadd.f32 %v122, %v598
    %v600 = vpop.f32.mrf.mxu0
    %601 = vmatprep.mubr.bf16.mxu0 0
    %602 = vmatmul.mubr.bf16.gmra.mxu0 %v364
    %v603 = vpop.f32.mrf.mxu0
    %v604 = vadd.f32 %v122, %v603
    %v605 = vpop.f32.mrf.mxu0
    %v606 = vpop.f32.mrf.mxu0
    %v607 = vadd.f32 %v122, %v606
    %v608 = vpop.f32.mrf.mxu0
    %609 = vmatprep.mubr.bf16.mxu0 0
    %610 = vmatmul.mubr.bf16.gmra.mxu0 %v367
    %v611 = vpop.f32.mrf.mxu0
    %v612 = vadd.f32 %v122, %v611
    %v613 = vpop.f32.mrf.mxu0
    %v614 = vpop.f32.mrf.mxu0
    %v615 = vadd.f32 %v122, %v614
    %v616 = vpop.f32.mrf.mxu0
    %617 = vmatprep.mubr.bf16.mxu0 0
    %618 = vmatmul.mubr.bf16.gmra.mxu0 %v370
    %v619 = vpop.f32.mrf.mxu0
    %v620 = vadd.f32 %v122, %v619
    %v621 = vpop.f32.mrf.mxu0
    %v622 = vpop.f32.mrf.mxu0
    %v623 = vadd.f32 %v122, %v622
    %v624 = vpop.f32.mrf.mxu0
    %625 = vmatprep.mubr.bf16.mxu0 0
    %626 = vmatmul.mubr.bf16.gmra.mxu0 %v373
    %v627 = vpop.f32.mrf.mxu0
    %v628 = vadd.f32 %v122, %v627
    %v629 = vpop.f32.mrf.mxu0
    %v630 = vpop.f32.mrf.mxu0
    %v631 = vadd.f32 %v122, %v630
    %v632 = vpop.f32.mrf.mxu0
    %633 = vmatprep.mubr.bf16.mxu0 0
    %634 = vmatmul.mubr.bf16.gmra.mxu0 %v376
    %v635 = vpop.f32.mrf.mxu0
    %v636 = vadd.f32 %v122, %v635
    %v637 = vpop.f32.mrf.mxu0
    %v638 = vpop.f32.mrf.mxu0
    %v639 = vadd.f32 %v122, %v638
    %v640 = vpop.f32.mrf.mxu0
    %641 = vmatprep.mubr.bf16.mxu0 0
    %642 = vmatmul.mubr.bf16.gmra.mxu0 %v379
    %v643 = vpop.f32.mrf.mxu0
    %v644 = vadd.f32 %v122, %v643
    %v645 = vpop.f32.mrf.mxu0
    %v646 = vpop.f32.mrf.mxu0
    %v647 = vadd.f32 %v122, %v646
    %v648 = vpop.f32.mrf.mxu0
    %649 = vmatprep.mubr.bf16.mxu0 0
    %650 = vmatmul.mubr.bf16.gmra.mxu0 %v382
    %v651 = vpop.f32.mrf.mxu0
    %v652 = vadd.f32 %v122, %v651
    %v653 = vpop.f32.mrf.mxu0
    %v654 = vpop.f32.mrf.mxu0
    %v655 = vadd.f32 %v122, %v654
    %v656 = vpop.f32.mrf.mxu0
    %657 = vmatprep.mubr.bf16.mxu0 0
    %658 = vmatmul.mubr.bf16.gmra.mxu0 %v385
    %v659 = vpop.f32.mrf.mxu0
    %v660 = vadd.f32 %v122, %v659
    %v661 = vpop.f32.mrf.mxu0
    %v662 = vpop.f32.mrf.mxu0
    %v663 = vadd.f32 %v122, %v662
    %v664 = vpop.f32.mrf.mxu0
    %665 = vmatprep.mubr.bf16.mxu0 0
    %666 = vmatmul.mubr.bf16.gmra.mxu0 %v388
    %v667 = vpop.f32.mrf.mxu0
    %v668 = vadd.f32 %v122, %v667
    %v669 = vpop.f32.mrf.mxu0
    %v670 = vpop.f32.mrf.mxu0
    %v671 = vadd.f32 %v122, %v670
    %v672 = vpop.f32.mrf.mxu0
    %673 = vmatprep.mubr.bf16.mxu0 0
    %674 = vmatmul.mubr.bf16.gmra.mxu0 %v391
    %v675 = vpop.f32.mrf.mxu0
    %v676 = vadd.f32 %v122, %v675
    %v677 = vpop.f32.mrf.mxu0
    %v678 = vpop.f32.mrf.mxu0
    %v679 = vadd.f32 %v122, %v678
    %v680 = vpop.f32.mrf.mxu0
    %681 = vdwg.mxu0
    %v682 = vmax.f32 %v428, 0.0
    %v683 = vmax.f32 %v431, 0.0
    %v684 = vmax.f32 %v436, 0.0
    %v685 = vmax.f32 %v439, 0.0
    %v686 = vmax.f32 %v444, 0.0
    %v687 = vmax.f32 %v447, 0.0
    %v688 = vmax.f32 %v452, 0.0
    %v689 = vmax.f32 %v455, 0.0
    %v690 = vmax.f32 %v460, 0.0
    %v691 = vmax.f32 %v463, 0.0
    %v692 = vmax.f32 %v468, 0.0
    %v693 = vmax.f32 %v471, 0.0
    %v694 = vmax.f32 %v476, 0.0
    %v695 = vmax.f32 %v479, 0.0
    %v696 = vmax.f32 %v484, 0.0
    %v697 = vmax.f32 %v487, 0.0
    %v698 = vmax.f32 %v492, 0.0
    %v699 = vmax.f32 %v495, 0.0
    %v700 = vmax.f32 %v500, 0.0
    %v701 = vmax.f32 %v503, 0.0
    %v702 = vmax.f32 %v508, 0.0
    %v703 = vmax.f32 %v511, 0.0
    %v704 = vmax.f32 %v516, 0.0
    %v705 = vmax.f32 %v519, 0.0
    %v706 = vmax.f32 %v524, 0.0
    %v707 = vmax.f32 %v527, 0.0
    %v708 = vmax.f32 %v532, 0.0
    %v709 = vmax.f32 %v535, 0.0
    %v710 = vmax.f32 %v540, 0.0
    %v711 = vmax.f32 %v543, 0.0
    %v712 = vmax.f32 %v548, 0.0
    %v713 = vmax.f32 %v551, 0.0
    %v714 = vmax.f32 %v556, 0.0
    %v715 = vmax.f32 %v559, 0.0
    %v716 = vmax.f32 %v564, 0.0
    %v717 = vmax.f32 %v567, 0.0
    %v718 = vmax.f32 %v572, 0.0
    %v719 = vmax.f32 %v575, 0.0
    %v720 = vmax.f32 %v580, 0.0
    %v721 = vmax.f32 %v583, 0.0
    %v722 = vmax.f32 %v588, 0.0
    %v723 = vmax.f32 %v591, 0.0
    %v724 = vmax.f32 %v596, 0.0
    %v725 = vmax.f32 %v599, 0.0
    %v726 = vmax.f32 %v604, 0.0
    %v727 = vmax.f32 %v607, 0.0
    %v728 = vmax.f32 %v612, 0.0
    %v729 = vmax.f32 %v615, 0.0
    %v730 = vmax.f32 %v620, 0.0
    %v731 = vmax.f32 %v623, 0.0
    %v732 = vmax.f32 %v628, 0.0
    %v733 = vmax.f32 %v631, 0.0
    %v734 = vmax.f32 %v636, 0.0
    %v735 = vmax.f32 %v639, 0.0
    %v736 = vmax.f32 %v644, 0.0
    %v737 = vmax.f32 %v647, 0.0
    %v738 = vmax.f32 %v652, 0.0
    %v739 = vmax.f32 %v655, 0.0
    %v740 = vmax.f32 %v660, 0.0
    %v741 = vmax.f32 %v663, 0.0
    %v742 = vmax.f32 %v668, 0.0
    %v743 = vmax.f32 %v671, 0.0
    %v744 = vmax.f32 %v676, 0.0
    %v745 = vmax.f32 %v679, 0.0
    %v746 = vpack.c.bf16 %v683, %v682
    %v747 = vpack.c.bf16 %v685, %v684
    %v748 = vpack.c.bf16 %v687, %v686
    %v749 = vpack.c.bf16 %v689, %v688
    %v750 = vpack.c.bf16 %v691, %v690
    %v751 = vpack.c.bf16 %v693, %v692
    %v752 = vpack.c.bf16 %v695, %v694
    %v753 = vpack.c.bf16 %v697, %v696
    %v754 = vpack.c.bf16 %v699, %v698
    %v755 = vpack.c.bf16 %v701, %v700
    %v756 = vpack.c.bf16 %v703, %v702
    %v757 = vpack.c.bf16 %v705, %v704
    %v758 = vpack.c.bf16 %v707, %v706
    %v759 = vpack.c.bf16 %v709, %v708
    %v760 = vpack.c.bf16 %v711, %v710
    %v761 = vpack.c.bf16 %v713, %v712
    %v762 = vpack.c.bf16 %v715, %v714
    %v763 = vpack.c.bf16 %v717, %v716
    %v764 = vpack.c.bf16 %v719, %v718
    %v765 = vpack.c.bf16 %v721, %v720
    %v766 = vpack.c.bf16 %v723, %v722
    %v767 = vpack.c.bf16 %v725, %v724
    %v768 = vpack.c.bf16 %v727, %v726
    %v769 = vpack.c.bf16 %v729, %v728
    %v770 = vpack.c.bf16 %v731, %v730
    %v771 = vpack.c.bf16 %v733, %v732
    %v772 = vpack.c.bf16 %v735, %v734
    %v773 = vpack.c.bf16 %v737, %v736
    %v774 = vpack.c.bf16 %v739, %v738
    %v775 = vpack.c.bf16 %v741, %v740
    %v776 = vpack.c.bf16 %v743, %v742
    %v777 = vpack.c.bf16 %v745, %v744
    %v778 = vld [vmem:[%s2] sm:$0xff]
    %v779 = vld [vmem:[%s2 + $0x8] sm:$0xff]
    %v780 = vld [vmem:[%s2 + $0x10] sm:$0xff]
    %v781 = vld [vmem:[%s2 + $0x18] sm:$0xff]
    %v782 = vld [vmem:[%s2 + $0x20] sm:$0xff]
    %v783 = vld [vmem:[%s2 + $0x28] sm:$0xff]
    %v784 = vld [vmem:[%s2 + $0x30] sm:$0xff]
    %v785 = vld [vmem:[%s2 + $0x38] sm:$0xff]
    %v786 = vld [vmem:[%s2 + $0x40] sm:$0xff]
    %v787 = vld [vmem:[%s2 + $0x48] sm:$0xff]
    %v788 = vld [vmem:[%s2 + $0x50] sm:$0xff]
    %v789 = vld [vmem:[%s2 + $0x58] sm:$0xff]
    %v790 = vld [vmem:[%s2 + $0x60] sm:$0xff]
    %v791 = vld [vmem:[%s2 + $0x68] sm:$0xff]
    %v792 = vld [vmem:[%s2 + $0x70] sm:$0xff]
    %v793 = vld [vmem:[%s2 + $0x78] sm:$0xff]
    %v794 = vld [vmem:[%s2 + $0x80] sm:$0xff]
    %v795 = vld [vmem:[%s2 + $0x88] sm:$0xff]
    %v796 = vld [vmem:[%s2 + $0x90] sm:$0xff]
    %v797 = vld [vmem:[%s2 + $0x98] sm:$0xff]
    %v798 = vld [vmem:[%s2 + $0xa0] sm:$0xff]
    %v799 = vld [vmem:[%s2 + $0xa8] sm:$0xff]
    %v800 = vld [vmem:[%s2 + $0xb0] sm:$0xff]
    %v801 = vld [vmem:[%s2 + $0xb8] sm:$0xff]
    %v802 = vld [vmem:[%s2 + $0xc0] sm:$0xff]
    %v803 = vld [vmem:[%s2 + $0xc8] sm:$0xff]
    %v804 = vld [vmem:[%s2 + $0xd0] sm:$0xff]
    %v805 = vld [vmem:[%s2 + $0xd8] sm:$0xff]
    %v806 = vld [vmem:[%s2 + $0xe0] sm:$0xff]
    %v807 = vld [vmem:[%s2 + $0xe8] sm:$0xff]
    %v808 = vld [vmem:[%s2 + $0xf0] sm:$0xff]
    %v809 = vld [vmem:[%s2 + $0xf8] sm:$0xff]
    %v810 = vld [vmem:[%s2 + $0x100] sm:$0xff]
    %v811 = vld [vmem:[%s2 + $0x108] sm:$0xff]
    %v812 = vld [vmem:[%s2 + $0x110] sm:$0xff]
    %v813 = vld [vmem:[%s2 + $0x118] sm:$0xff]
    %v814 = vld [vmem:[%s2 + $0x120] sm:$0xff]
    %v815 = vld [vmem:[%s2 + $0x128] sm:$0xff]
    %v816 = vld [vmem:[%s2 + $0x130] sm:$0xff]
    %v817 = vld [vmem:[%s2 + $0x138] sm:$0xff]
    %v818 = vld [vmem:[%s2 + $0x140] sm:$0xff]
    %v819 = vld [vmem:[%s2 + $0x148] sm:$0xff]
    %v820 = vld [vmem:[%s2 + $0x150] sm:$0xff]
    %v821 = vld [vmem:[%s2 + $0x158] sm:$0xff]
    %v822 = vld [vmem:[%s2 + $0x160] sm:$0xff]
    %v823 = vld [vmem:[%s2 + $0x168] sm:$0xff]
    %v824 = vld [vmem:[%s2 + $0x170] sm:$0xff]
    %v825 = vld [vmem:[%s2 + $0x178] sm:$0xff]
    %v826 = vld [vmem:[%s2 + $0x180] sm:$0xff]
    %v827 = vld [vmem:[%s2 + $0x188] sm:$0xff]
    %v828 = vld [vmem:[%s2 + $0x190] sm:$0xff]
    %v829 = vld [vmem:[%s2 + $0x198] sm:$0xff]
    %v830 = vld [vmem:[%s2 + $0x1a0] sm:$0xff]
    %v831 = vld [vmem:[%s2 + $0x1a8] sm:$0xff]
    %v832 = vld [vmem:[%s2 + $0x1b0] sm:$0xff]
    %v833 = vld [vmem:[%s2 + $0x1b8] sm:$0xff]
    %v834 = vld [vmem:[%s2 + $0x1c0] sm:$0xff]
    %v835 = vld [vmem:[%s2 + $0x1c8] sm:$0xff]
    %v836 = vld [vmem:[%s2 + $0x1d0] sm:$0xff]
    %v837 = vld [vmem:[%s2 + $0x1d8] sm:$0xff]
    %v838 = vld [vmem:[%s2 + $0x1e0] sm:$0xff]
    %v839 = vld [vmem:[%s2 + $0x1e8] sm:$0xff]
    %v840 = vld [vmem:[%s2 + $0x1f0] sm:$0xff]
    %v841 = vld [vmem:[%s2 + $0x1f8] sm:$0xff]
    %v842 = vld [vmem:[%s2 + $0x200] sm:$0xff]
    %v843 = vld [vmem:[%s2 + $0x208] sm:$0xff]
    %v844 = vld [vmem:[%s2 + $0x210] sm:$0xff]
    %v845 = vld [vmem:[%s2 + $0x218] sm:$0xff]
    %v846 = vld [vmem:[%s2 + $0x220] sm:$0xff]
    %v847 = vld [vmem:[%s2 + $0x228] sm:$0xff]
    %v848 = vld [vmem:[%s2 + $0x230] sm:$0xff]
    %v849 = vld [vmem:[%s2 + $0x238] sm:$0xff]
    %v922 = vunpack.c.l.b16 %v778
    %v923 = vunpack.c.h.b16 %v778
    %v924 = vunpack.c.l.b16 %v779
    %v925 = vunpack.c.h.b16 %v779
    %v926 = vunpack.c.l.b16 %v780
    %v927 = vunpack.c.h.b16 %v780
    %v928 = vunpack.c.l.b16 %v781
    %v929 = vunpack.c.h.b16 %v781
    %v930 = vunpack.c.l.b16 %v782
    %v931 = vunpack.c.h.b16 %v782
    %v932 = vunpack.c.l.b16 %v783
    %v933 = vunpack.c.h.b16 %v783
    %v934 = vunpack.c.l.b16 %v784
    %v935 = vunpack.c.h.b16 %v784
    %v936 = vunpack.c.l.b16 %v785
    %v937 = vunpack.c.h.b16 %v785
    %v938 = vunpack.c.l.b16 %v786
    %v939 = vunpack.c.h.b16 %v786
    %v940 = vunpack.c.l.b16 %v787
    %v941 = vunpack.c.h.b16 %v787
    %v942 = vunpack.c.l.b16 %v788
    %v943 = vunpack.c.h.b16 %v788
    %v944 = vunpack.c.l.b16 %v789
    %v945 = vunpack.c.h.b16 %v789
    %v946 = vunpack.c.l.b16 %v790
    %v947 = vunpack.c.h.b16 %v790
    %v948 = vunpack.c.l.b16 %v791
    %v949 = vunpack.c.h.b16 %v791
    %v950 = vunpack.c.l.b16 %v792
    %v951 = vunpack.c.h.b16 %v792
    %v952 = vunpack.c.l.b16 %v793
    %v953 = vunpack.c.h.b16 %v793
    %v954 = vunpack.c.l.b16 %v794
    %v955 = vunpack.c.h.b16 %v794
    %v956 = vunpack.c.l.b16 %v795
    %v957 = vunpack.c.h.b16 %v795
    %v958 = vunpack.c.l.b16 %v796
    %v959 = vunpack.c.h.b16 %v796
    %v960 = vunpack.c.l.b16 %v797
    %v961 = vunpack.c.h.b16 %v797
    %v962 = vunpack.c.l.b16 %v798
    %v963 = vunpack.c.h.b16 %v798
    %v964 = vunpack.c.l.b16 %v799
    %v965 = vunpack.c.h.b16 %v799
    %v966 = vunpack.c.l.b16 %v800
    %v967 = vunpack.c.h.b16 %v800
    %v968 = vunpack.c.l.b16 %v801
    %v969 = vunpack.c.h.b16 %v801
    %v970 = vunpack.c.l.b16 %v802
    %v971 = vunpack.c.h.b16 %v802
    %v972 = vunpack.c.l.b16 %v803
    %v973 = vunpack.c.h.b16 %v803
    %v974 = vunpack.c.l.b16 %v804
    %v975 = vunpack.c.h.b16 %v804
    %v976 = vunpack.c.l.b16 %v805
    %v977 = vunpack.c.h.b16 %v805
    %v978 = vunpack.c.l.b16 %v806
    %v979 = vunpack.c.h.b16 %v806
    %v980 = vunpack.c.l.b16 %v807
    %v981 = vunpack.c.h.b16 %v807
    %v982 = vunpack.c.l.b16 %v808
    %v983 = vunpack.c.h.b16 %v808
    %v984 = vunpack.c.l.b16 %v809
    %v985 = vunpack.c.h.b16 %v809
    %v986 = vunpack.c.l.b16 %v810
    %v987 = vunpack.c.h.b16 %v810
    %v988 = vunpack.c.l.b16 %v811
    %v989 = vunpack.c.h.b16 %v811
    %v990 = vunpack.c.l.b16 %v812
    %v991 = vunpack.c.h.b16 %v812
    %v992 = vunpack.c.l.b16 %v813
    %v993 = vunpack.c.h.b16 %v813
    %v994 = vunpack.c.l.b16 %v814
    %v995 = vunpack.c.h.b16 %v814
    %v996 = vunpack.c.l.b16 %v815
    %v997 = vunpack.c.h.b16 %v815
    %v998 = vunpack.c.l.b16 %v816
    %v999 = vunpack.c.h.b16 %v816
    %v1000 = vunpack.c.l.b16 %v817
    %v1001 = vunpack.c.h.b16 %v817
    %v1002 = vunpack.c.l.b16 %v818
    %v1003 = vunpack.c.h.b16 %v818
    %v1004 = vunpack.c.l.b16 %v819
    %v1005 = vunpack.c.h.b16 %v819
    %v1006 = vunpack.c.l.b16 %v820
    %v1007 = vunpack.c.h.b16 %v820
    %v1008 = vunpack.c.l.b16 %v821
    %v1009 = vunpack.c.h.b16 %v821
    %v1010 = vunpack.c.l.b16 %v822
    %v1011 = vunpack.c.h.b16 %v822
    %v1012 = vunpack.c.l.b16 %v823
    %v1013 = vunpack.c.h.b16 %v823
    %v1014 = vunpack.c.l.b16 %v824
    %v1015 = vunpack.c.h.b16 %v824
    %v1016 = vunpack.c.l.b16 %v825
    %v1017 = vunpack.c.h.b16 %v825
    %v1018 = vunpack.c.l.b16 %v826
    %v1019 = vunpack.c.h.b16 %v826
    %v1020 = vunpack.c.l.b16 %v827
    %v1021 = vunpack.c.h.b16 %v827
    %v1022 = vunpack.c.l.b16 %v828
    %v1023 = vunpack.c.h.b16 %v828
    %v1024 = vunpack.c.l.b16 %v829
    %v1025 = vunpack.c.h.b16 %v829
    %v1026 = vunpack.c.l.b16 %v830
    %v1027 = vunpack.c.h.b16 %v830
    %v1028 = vunpack.c.l.b16 %v831
    %v1029 = vunpack.c.h.b16 %v831
    %v1030 = vunpack.c.l.b16 %v832
    %v1031 = vunpack.c.h.b16 %v832
    %v1032 = vunpack.c.l.b16 %v833
    %v1033 = vunpack.c.h.b16 %v833
    %v1034 = vunpack.c.l.b16 %v834
    %v1035 = vunpack.c.h.b16 %v834
    %v1036 = vunpack.c.l.b16 %v835
    %v1037 = vunpack.c.h.b16 %v835
    %v1038 = vunpack.c.l.b16 %v836
    %v1039 = vunpack.c.h.b16 %v836
    %v1040 = vunpack.c.l.b16 %v837
    %v1041 = vunpack.c.h.b16 %v837
    %v1042 = vunpack.c.l.b16 %v838
    %v1043 = vunpack.c.h.b16 %v838
    %v1044 = vunpack.c.l.b16 %v839
    %v1045 = vunpack.c.h.b16 %v839
    %v1046 = vunpack.c.l.b16 %v840
    %v1047 = vunpack.c.h.b16 %v840
    %v1048 = vunpack.c.l.b16 %v841
    %v1049 = vunpack.c.h.b16 %v841
    %v1050 = vunpack.c.l.b16 %v842
    %v1051 = vunpack.c.h.b16 %v842
    %v1052 = vunpack.c.l.b16 %v843
    %v1053 = vunpack.c.h.b16 %v843
    %v1054 = vunpack.c.l.b16 %v844
    %v1055 = vunpack.c.h.b16 %v844
    %v1056 = vunpack.c.l.b16 %v845
    %v1057 = vunpack.c.h.b16 %v845
    %v1058 = vunpack.c.l.b16 %v846
    %v1059 = vunpack.c.h.b16 %v846
    %v1060 = vunpack.c.l.b16 %v847
    %v1061 = vunpack.c.h.b16 %v847
    %v1062 = vunpack.c.l.b16 %v848
    %v1063 = vunpack.c.h.b16 %v848
    %v1064 = vunpack.c.l.b16 %v849
    %v1065 = vunpack.c.h.b16 %v849
    %v1066 = vpack.c.b16 %v924, %v922
    %v1067 = vpack.c.b16 %v925, %v923
    %v1068 = vpack.c.b16 %v928, %v926
    %v1069 = vpack.c.b16 %v929, %v927
    %v1070 = vpack.c.b16 %v932, %v930
    %v1071 = vpack.c.b16 %v933, %v931
    %v1072 = vpack.c.b16 %v936, %v934
    %v1073 = vpack.c.b16 %v937, %v935
    %v1074 = vpack.c.b16 %v940, %v938
    %v1075 = vpack.c.b16 %v941, %v939
    %v1076 = vpack.c.b16 %v944, %v942
    %v1077 = vpack.c.b16 %v945, %v943
    %v1078 = vpack.c.b16 %v948, %v946
    %v1079 = vpack.c.b16 %v949, %v947
    %v1080 = vpack.c.b16 %v952, %v950
    %v1081 = vpack.c.b16 %v953, %v951
    %v1082 = vpack.c.b16 %v956, %v954
    %v1083 = vpack.c.b16 %v957, %v955
    %v1084 = vpack.c.b16 %v960, %v958
    %v1085 = vpack.c.b16 %v961, %v959
    %v1086 = vpack.c.b16 %v964, %v962
    %v1087 = vpack.c.b16 %v965, %v963
    %v1088 = vpack.c.b16 %v968, %v966
    %v1089 = vpack.c.b16 %v969, %v967
    %v1090 = vpack.c.b16 %v972, %v970
    %v1091 = vpack.c.b16 %v973, %v971
    %v1092 = vpack.c.b16 %v976, %v974
    %v1093 = vpack.c.b16 %v977, %v975
    %v1094 = vpack.c.b16 %v980, %v978
    %v1095 = vpack.c.b16 %v981, %v979
    %v1096 = vpack.c.b16 %v984, %v982
    %v1097 = vpack.c.b16 %v985, %v983
    %v1098 = vpack.c.b16 %v988, %v986
    %v1099 = vpack.c.b16 %v989, %v987
    %v1100 = vpack.c.b16 %v992, %v990
    %v1101 = vpack.c.b16 %v993, %v991
    %v1102 = vpack.c.b16 %v996, %v994
    %v1103 = vpack.c.b16 %v997, %v995
    %v1104 = vpack.c.b16 %v1000, %v998
    %v1105 = vpack.c.b16 %v1001, %v999
    %v1106 = vpack.c.b16 %v1004, %v1002
    %v1107 = vpack.c.b16 %v1005, %v1003
    %v1108 = vpack.c.b16 %v1008, %v1006
    %v1109 = vpack.c.b16 %v1009, %v1007
    %v1110 = vpack.c.b16 %v1012, %v1010
    %v1111 = vpack.c.b16 %v1013, %v1011
    %v1112 = vpack.c.b16 %v1016, %v1014
    %v1113 = vpack.c.b16 %v1017, %v1015
    %v1114 = vpack.c.b16 %v1020, %v1018
    %v1115 = vpack.c.b16 %v1021, %v1019
    %v1116 = vpack.c.b16 %v1024, %v1022
    %v1117 = vpack.c.b16 %v1025, %v1023
    %v1118 = vpack.c.b16 %v1028, %v1026
    %v1119 = vpack.c.b16 %v1029, %v1027
    %v1120 = vpack.c.b16 %v1032, %v1030
    %v1121 = vpack.c.b16 %v1033, %v1031
    %v1122 = vpack.c.b16 %v1036, %v1034
    %v1123 = vpack.c.b16 %v1037, %v1035
    %v1124 = vpack.c.b16 %v1040, %v1038
    %v1125 = vpack.c.b16 %v1041, %v1039
    %v1126 = vpack.c.b16 %v1044, %v1042
    %v1127 = vpack.c.b16 %v1045, %v1043
    %v1128 = vpack.c.b16 %v1048, %v1046
    %v1129 = vpack.c.b16 %v1049, %v1047
    %v1130 = vpack.c.b16 %v1052, %v1050
    %v1131 = vpack.c.b16 %v1053, %v1051
    %v1132 = vpack.c.b16 %v1056, %v1054
    %v1133 = vpack.c.b16 %v1057, %v1055
    %v1134 = vpack.c.b16 %v1060, %v1058
    %v1135 = vpack.c.b16 %v1061, %v1059
    %v1136 = vpack.c.b16 %v1064, %v1062
    %v1137 = vpack.c.b16 %v1065, %v1063
    %1210 = vmatprep.subr.bf16.mxu0 0
    %1211 = vmatpush1.bf16.msra.mxu0 %v753
    %1212 = vmatprep.subr.bf16.mxu0 0
    %1213 = vmatpush1.bf16.msra.mxu0 %v752
    %1214 = vmatprep.subr.bf16.mxu0 0
    %1215 = vmatpush1.bf16.msra.mxu0 %v751
    %1216 = vmatprep.subr.bf16.mxu0 0
    %1217 = vmatpush1.bf16.msra.mxu0 %v750
    %1218 = vmatprep.subr.bf16.mxu0 0
    %1219 = vmatpush1.bf16.msra.mxu0 %v749
    %1220 = vmatprep.subr.bf16.mxu0 0
    %1221 = vmatpush1.bf16.msra.mxu0 %v748
    %1222 = vmatprep.subr.bf16.mxu0 0
    %1223 = vmatpush1.bf16.msra.mxu0 %v747
    %1224 = vmatprep.subr.bf16.mxu0 0
    %1225 = vmatpush1.bf16.msra.mxu0 %v746
    %1226 = vmatprep.subr.bf16.mxu0 0
    %1227 = vmatpush2.bf16.msra.mxu0 %v761
    %1228 = vmatprep.subr.bf16.mxu0 0
    %1229 = vmatpush2.bf16.msra.mxu0 %v760
    %1230 = vmatprep.subr.bf16.mxu0 0
    %1231 = vmatpush2.bf16.msra.mxu0 %v759
    %1232 = vmatprep.subr.bf16.mxu0 0
    %1233 = vmatpush2.bf16.msra.mxu0 %v758
    %1234 = vmatprep.subr.bf16.mxu0 0
    %1235 = vmatpush2.bf16.msra.mxu0 %v757
    %1236 = vmatprep.subr.bf16.mxu0 0
    %1237 = vmatpush2.bf16.msra.mxu0 %v756
    %1238 = vmatprep.subr.bf16.mxu0 0
    %1239 = vmatpush2.bf16.msra.mxu0 %v755
    %1240 = vmatprep.subr.bf16.mxu0 0
    %1241 = vmatpush2.bf16.msra.mxu0 %v754
    %1242 = vmatprep.mubr.bf16.mxu0 %v1067
    %1243 = vmatmul.mubr.bf16.gmra.mxu0 %v1066
    %v1244 = vpop.f32.mrf.mxu0
    %v1245 = vadd.f32 0.0, %v1244
    %v1246 = vpop.f32.mrf.mxu0
    %v1247 = vpop.f32.mrf.mxu0
    %v1248 = vadd.f32 0.0, %v1247
    %v1249 = vpop.f32.mrf.mxu0
    %1250 = vmatprep.mubr.bf16.mxu0 %v1069
    %1251 = vmatmul.mubr.bf16.gmra.mxu0 %v1068
    %v1252 = vpop.f32.mrf.mxu0
    %v1253 = vadd.f32 0.0, %v1252
    %v1254 = vpop.f32.mrf.mxu0
    %v1255 = vpop.f32.mrf.mxu0
    %v1256 = vadd.f32 0.0, %v1255
    %v1257 = vpop.f32.mrf.mxu0
    %1258 = vmatprep.mubr.bf16.mxu0 %v1071
    %1259 = vmatmul.mubr.bf16.gmra.mxu0 %v1070
    %v1260 = vpop.f32.mrf.mxu0
    %v1261 = vadd.f32 0.0, %v1260
    %v1262 = vpop.f32.mrf.mxu0
    %v1263 = vpop.f32.mrf.mxu0
    %v1264 = vadd.f32 0.0, %v1263
    %v1265 = vpop.f32.mrf.mxu0
    %1266 = vmatprep.mubr.bf16.mxu0 %v1073
    %1267 = vmatmul.mubr.bf16.gmra.mxu0 %v1072
    %v1268 = vpop.f32.mrf.mxu0
    %v1269 = vadd.f32 0.0, %v1268
    %v1270 = vpop.f32.mrf.mxu0
    %v1271 = vpop.f32.mrf.mxu0
    %v1272 = vadd.f32 0.0, %v1271
    %v1273 = vpop.f32.mrf.mxu0
    %1274 = vmatprep.mubr.bf16.mxu0 %v1075
    %1275 = vmatmul.mubr.bf16.gmra.mxu0 %v1074
    %v1276 = vpop.f32.mrf.mxu0
    %v1277 = vadd.f32 0.0, %v1276
    %v1278 = vpop.f32.mrf.mxu0
    %v1279 = vpop.f32.mrf.mxu0
    %v1280 = vadd.f32 0.0, %v1279
    %v1281 = vpop.f32.mrf.mxu0
    %1282 = vmatprep.mubr.bf16.mxu0 %v1077
    %1283 = vmatmul.mubr.bf16.gmra.mxu0 %v1076
    %v1284 = vpop.f32.mrf.mxu0
    %v1285 = vadd.f32 0.0, %v1284
    %v1286 = vpop.f32.mrf.mxu0
    %v1287 = vpop.f32.mrf.mxu0
    %v1288 = vadd.f32 0.0, %v1287
    %v1289 = vpop.f32.mrf.mxu0
    %1290 = vmatprep.mubr.bf16.mxu0 %v1079
    %1291 = vmatmul.mubr.bf16.gmra.mxu0 %v1078
    %v1292 = vpop.f32.mrf.mxu0
    %v1293 = vadd.f32 0.0, %v1292
    %v1294 = vpop.f32.mrf.mxu0
    %v1295 = vpop.f32.mrf.mxu0
    %v1296 = vadd.f32 0.0, %v1295
    %v1297 = vpop.f32.mrf.mxu0
    %1298 = vmatprep.mubr.bf16.mxu0 %v1081
    %1299 = vmatmul.mubr.bf16.gmra.mxu0 %v1080
    %v1300 = vpop.f32.mrf.mxu0
    %v1301 = vadd.f32 0.0, %v1300
    %v1302 = vpop.f32.mrf.mxu0
    %v1303 = vpop.f32.mrf.mxu0
    %v1304 = vadd.f32 0.0, %v1303
    %v1305 = vpop.f32.mrf.mxu0
    %1306 = vmatprep.mubr.bf16.mxu0 %v1083
    %1307 = vmatmul.mubr.bf16.gmra.mxu0 %v1082
    %v1308 = vpop.f32.mrf.mxu0
    %v1309 = vadd.f32 0.0, %v1308
    %v1310 = vpop.f32.mrf.mxu0
    %v1311 = vpop.f32.mrf.mxu0
    %v1312 = vadd.f32 0.0, %v1311
    %v1313 = vpop.f32.mrf.mxu0
    %1314 = vmatprep.mubr.bf16.mxu0 %v1085
    %1315 = vmatmul.mubr.bf16.gmra.mxu0 %v1084
    %v1316 = vpop.f32.mrf.mxu0
    %v1317 = vadd.f32 0.0, %v1316
    %v1318 = vpop.f32.mrf.mxu0
    %v1319 = vpop.f32.mrf.mxu0
    %v1320 = vadd.f32 0.0, %v1319
    %v1321 = vpop.f32.mrf.mxu0
    %1322 = vmatprep.mubr.bf16.mxu0 %v1087
    %1323 = vmatmul.mubr.bf16.gmra.mxu0 %v1086
    %v1324 = vpop.f32.mrf.mxu0
    %v1325 = vadd.f32 0.0, %v1324
    %v1326 = vpop.f32.mrf.mxu0
    %v1327 = vpop.f32.mrf.mxu0
    %v1328 = vadd.f32 0.0, %v1327
    %v1329 = vpop.f32.mrf.mxu0
    %1330 = vmatprep.mubr.bf16.mxu0 %v1089
    %1331 = vmatmul.mubr.bf16.gmra.mxu0 %v1088
    %v1332 = vpop.f32.mrf.mxu0
    %v1333 = vadd.f32 0.0, %v1332
    %v1334 = vpop.f32.mrf.mxu0
    %v1335 = vpop.f32.mrf.mxu0
    %v1336 = vadd.f32 0.0, %v1335
    %v1337 = vpop.f32.mrf.mxu0
    %1338 = vmatprep.mubr.bf16.mxu0 %v1091
    %1339 = vmatmul.mubr.bf16.gmra.mxu0 %v1090
    %v1340 = vpop.f32.mrf.mxu0
    %v1341 = vadd.f32 0.0, %v1340
    %v1342 = vpop.f32.mrf.mxu0
    %v1343 = vpop.f32.mrf.mxu0
    %v1344 = vadd.f32 0.0, %v1343
    %v1345 = vpop.f32.mrf.mxu0
    %1346 = vmatprep.mubr.bf16.mxu0 %v1093
    %1347 = vmatmul.mubr.bf16.gmra.mxu0 %v1092
    %v1348 = vpop.f32.mrf.mxu0
    %v1349 = vadd.f32 0.0, %v1348
    %v1350 = vpop.f32.mrf.mxu0
    %v1351 = vpop.f32.mrf.mxu0
    %v1352 = vadd.f32 0.0, %v1351
    %v1353 = vpop.f32.mrf.mxu0
    %1354 = vmatprep.mubr.bf16.mxu0 %v1095
    %1355 = vmatmul.mubr.bf16.gmra.mxu0 %v1094
    %v1356 = vpop.f32.mrf.mxu0
    %v1357 = vadd.f32 0.0, %v1356
    %v1358 = vpop.f32.mrf.mxu0
    %v1359 = vpop.f32.mrf.mxu0
    %v1360 = vadd.f32 0.0, %v1359
    %v1361 = vpop.f32.mrf.mxu0
    %1362 = vmatprep.mubr.bf16.mxu0 %v1097
    %1363 = vmatmul.mubr.bf16.gmra.mxu0 %v1096
    %v1364 = vpop.f32.mrf.mxu0
    %v1365 = vadd.f32 0.0, %v1364
    %v1366 = vpop.f32.mrf.mxu0
    %v1367 = vpop.f32.mrf.mxu0
    %v1368 = vadd.f32 0.0, %v1367
    %v1369 = vpop.f32.mrf.mxu0
    %1370 = vmatprep.mubr.bf16.mxu0 %v1099
    %1371 = vmatmul.mubr.bf16.gmra.mxu0 %v1098
    %v1372 = vpop.f32.mrf.mxu0
    %v1373 = vadd.f32 0.0, %v1372
    %v1374 = vpop.f32.mrf.mxu0
    %v1375 = vpop.f32.mrf.mxu0
    %v1376 = vadd.f32 0.0, %v1375
    %v1377 = vpop.f32.mrf.mxu0
    %1378 = vmatprep.mubr.bf16.mxu0 %v1101
    %1379 = vmatmul.mubr.bf16.gmra.mxu0 %v1100
    %v1380 = vpop.f32.mrf.mxu0
    %v1381 = vadd.f32 0.0, %v1380
    %v1382 = vpop.f32.mrf.mxu0
    %v1383 = vpop.f32.mrf.mxu0
    %v1384 = vadd.f32 0.0, %v1383
    %v1385 = vpop.f32.mrf.mxu0
    %1386 = vmatprep.mubr.bf16.mxu0 %v1103
    %1387 = vmatmul.mubr.bf16.gmra.mxu0 %v1102
    %v1388 = vpop.f32.mrf.mxu0
    %v1389 = vadd.f32 0.0, %v1388
    %v1390 = vpop.f32.mrf.mxu0
    %v1391 = vpop.f32.mrf.mxu0
    %v1392 = vadd.f32 0.0, %v1391
    %v1393 = vpop.f32.mrf.mxu0
    %1394 = vmatprep.mubr.bf16.mxu0 %v1105
    %1395 = vmatmul.mubr.bf16.gmra.mxu0 %v1104
    %v1396 = vpop.f32.mrf.mxu0
    %v1397 = vadd.f32 0.0, %v1396
    %v1398 = vpop.f32.mrf.mxu0
    %v1399 = vpop.f32.mrf.mxu0
    %v1400 = vadd.f32 0.0, %v1399
    %v1401 = vpop.f32.mrf.mxu0
    %1402 = vmatprep.mubr.bf16.mxu0 %v1107
    %1403 = vmatmul.mubr.bf16.gmra.mxu0 %v1106
    %v1404 = vpop.f32.mrf.mxu0
    %v1405 = vadd.f32 0.0, %v1404
    %v1406 = vpop.f32.mrf.mxu0
    %v1407 = vpop.f32.mrf.mxu0
    %v1408 = vadd.f32 0.0, %v1407
    %v1409 = vpop.f32.mrf.mxu0
    %1410 = vmatprep.mubr.bf16.mxu0 %v1109
    %1411 = vmatmul.mubr.bf16.gmra.mxu0 %v1108
    %v1412 = vpop.f32.mrf.mxu0
    %v1413 = vadd.f32 0.0, %v1412
    %v1414 = vpop.f32.mrf.mxu0
    %v1415 = vpop.f32.mrf.mxu0
    %v1416 = vadd.f32 0.0, %v1415
    %v1417 = vpop.f32.mrf.mxu0
    %1418 = vmatprep.mubr.bf16.mxu0 %v1111
    %1419 = vmatmul.mubr.bf16.gmra.mxu0 %v1110
    %v1420 = vpop.f32.mrf.mxu0
    %v1421 = vadd.f32 0.0, %v1420
    %v1422 = vpop.f32.mrf.mxu0
    %v1423 = vpop.f32.mrf.mxu0
    %v1424 = vadd.f32 0.0, %v1423
    %v1425 = vpop.f32.mrf.mxu0
    %1426 = vmatprep.mubr.bf16.mxu0 %v1113
    %1427 = vmatmul.mubr.bf16.gmra.mxu0 %v1112
    %v1428 = vpop.f32.mrf.mxu0
    %v1429 = vadd.f32 0.0, %v1428
    %v1430 = vpop.f32.mrf.mxu0
    %v1431 = vpop.f32.mrf.mxu0
    %v1432 = vadd.f32 0.0, %v1431
    %v1433 = vpop.f32.mrf.mxu0
    %1434 = vmatprep.mubr.bf16.mxu0 %v1115
    %1435 = vmatmul.mubr.bf16.gmra.mxu0 %v1114
    %v1436 = vpop.f32.mrf.mxu0
    %v1437 = vadd.f32 0.0, %v1436
    %v1438 = vpop.f32.mrf.mxu0
    %v1439 = vpop.f32.mrf.mxu0
    %v1440 = vadd.f32 0.0, %v1439
    %v1441 = vpop.f32.mrf.mxu0
    %1442 = vmatprep.mubr.bf16.mxu0 %v1117
    %1443 = vmatmul.mubr.bf16.gmra.mxu0 %v1116
    %v1444 = vpop.f32.mrf.mxu0
    %v1445 = vadd.f32 0.0, %v1444
    %v1446 = vpop.f32.mrf.mxu0
    %v1447 = vpop.f32.mrf.mxu0
    %v1448 = vadd.f32 0.0, %v1447
    %v1449 = vpop.f32.mrf.mxu0
    %1450 = vmatprep.mubr.bf16.mxu0 %v1119
    %1451 = vmatmul.mubr.bf16.gmra.mxu0 %v1118
    %v1452 = vpop.f32.mrf.mxu0
    %v1453 = vadd.f32 0.0, %v1452
    %v1454 = vpop.f32.mrf.mxu0
    %v1455 = vpop.f32.mrf.mxu0
    %v1456 = vadd.f32 0.0, %v1455
    %v1457 = vpop.f32.mrf.mxu0
    %1458 = vmatprep.mubr.bf16.mxu0 %v1121
    %1459 = vmatmul.mubr.bf16.gmra.mxu0 %v1120
    %v1460 = vpop.f32.mrf.mxu0
    %v1461 = vadd.f32 0.0, %v1460
    %v1462 = vpop.f32.mrf.mxu0
    %v1463 = vpop.f32.mrf.mxu0
    %v1464 = vadd.f32 0.0, %v1463
    %v1465 = vpop.f32.mrf.mxu0
    %1466 = vmatprep.mubr.bf16.mxu0 %v1123
    %1467 = vmatmul.mubr.bf16.gmra.mxu0 %v1122
    %v1468 = vpop.f32.mrf.mxu0
    %v1469 = vadd.f32 0.0, %v1468
    %v1470 = vpop.f32.mrf.mxu0
    %v1471 = vpop.f32.mrf.mxu0
    %v1472 = vadd.f32 0.0, %v1471
    %v1473 = vpop.f32.mrf.mxu0
    %1474 = vmatprep.mubr.bf16.mxu0 %v1125
    %1475 = vmatmul.mubr.bf16.gmra.mxu0 %v1124
    %v1476 = vpop.f32.mrf.mxu0
    %v1477 = vadd.f32 0.0, %v1476
    %v1478 = vpop.f32.mrf.mxu0
    %v1479 = vpop.f32.mrf.mxu0
    %v1480 = vadd.f32 0.0, %v1479
    %v1481 = vpop.f32.mrf.mxu0
    %1482 = vmatprep.mubr.bf16.mxu0 %v1127
    %1483 = vmatmul.mubr.bf16.gmra.mxu0 %v1126
    %v1484 = vpop.f32.mrf.mxu0
    %v1485 = vadd.f32 0.0, %v1484
    %v1486 = vpop.f32.mrf.mxu0
    %v1487 = vpop.f32.mrf.mxu0
    %v1488 = vadd.f32 0.0, %v1487
    %v1489 = vpop.f32.mrf.mxu0
    %1490 = vmatprep.mubr.bf16.mxu0 %v1129
    %1491 = vmatmul.mubr.bf16.gmra.mxu0 %v1128
    %v1492 = vpop.f32.mrf.mxu0
    %v1493 = vadd.f32 0.0, %v1492
    %v1494 = vpop.f32.mrf.mxu0
    %v1495 = vpop.f32.mrf.mxu0
    %v1496 = vadd.f32 0.0, %v1495
    %v1497 = vpop.f32.mrf.mxu0
    %1498 = vmatprep.mubr.bf16.mxu0 %v1131
    %1499 = vmatmul.mubr.bf16.gmra.mxu0 %v1130
    %v1500 = vpop.f32.mrf.mxu0
    %v1501 = vadd.f32 0.0, %v1500
    %v1502 = vpop.f32.mrf.mxu0
    %v1503 = vpop.f32.mrf.mxu0
    %v1504 = vadd.f32 0.0, %v1503
    %v1505 = vpop.f32.mrf.mxu0
    %1506 = vmatprep.mubr.bf16.mxu0 %v1133
    %1507 = vmatmul.mubr.bf16.gmra.mxu0 %v1132
    %v1508 = vpop.f32.mrf.mxu0
    %v1509 = vadd.f32 0.0, %v1508
    %v1510 = vpop.f32.mrf.mxu0
    %v1511 = vpop.f32.mrf.mxu0
    %v1512 = vadd.f32 0.0, %v1511
    %v1513 = vpop.f32.mrf.mxu0
    %1514 = vmatprep.mubr.bf16.mxu0 %v1135
    %1515 = vmatmul.mubr.bf16.gmra.mxu0 %v1134
    %v1516 = vpop.f32.mrf.mxu0
    %v1517 = vadd.f32 0.0, %v1516
    %v1518 = vpop.f32.mrf.mxu0
    %v1519 = vpop.f32.mrf.mxu0
    %v1520 = vadd.f32 0.0, %v1519
    %v1521 = vpop.f32.mrf.mxu0
    %1522 = vmatprep.mubr.bf16.mxu0 %v1137
    %1523 = vmatmul.mubr.bf16.gmra.mxu0 %v1136
    %v1524 = vpop.f32.mrf.mxu0
    %v1525 = vadd.f32 0.0, %v1524
    %v1526 = vpop.f32.mrf.mxu0
    %v1527 = vpop.f32.mrf.mxu0
    %v1528 = vadd.f32 0.0, %v1527
    %v1529 = vpop.f32.mrf.mxu0
    %1530 = vdwg.mxu0
    %v1531 = vpack.c.bf16 %v1248, %v1245
    %v1532 = vpack.c.bf16 %v1256, %v1253
    %v1533 = vpack.c.bf16 %v1264, %v1261
    %v1534 = vpack.c.bf16 %v1272, %v1269
    %v1535 = vpack.c.bf16 %v1280, %v1277
    %v1536 = vpack.c.bf16 %v1288, %v1285
    %v1537 = vpack.c.bf16 %v1296, %v1293
    %v1538 = vpack.c.bf16 %v1304, %v1301
    %v1539 = vpack.c.bf16 %v1312, %v1309
    %v1540 = vpack.c.bf16 %v1320, %v1317
    %v1541 = vpack.c.bf16 %v1328, %v1325
    %v1542 = vpack.c.bf16 %v1336, %v1333
    %v1543 = vpack.c.bf16 %v1344, %v1341
    %v1544 = vpack.c.bf16 %v1352, %v1349
    %v1545 = vpack.c.bf16 %v1360, %v1357
    %v1546 = vpack.c.bf16 %v1368, %v1365
    %v1547 = vpack.c.bf16 %v1376, %v1373
    %v1548 = vpack.c.bf16 %v1384, %v1381
    %v1549 = vpack.c.bf16 %v1392, %v1389
    %v1550 = vpack.c.bf16 %v1400, %v1397
    %v1551 = vpack.c.bf16 %v1408, %v1405
    %v1552 = vpack.c.bf16 %v1416, %v1413
    %v1553 = vpack.c.bf16 %v1424, %v1421
    %v1554 = vpack.c.bf16 %v1432, %v1429
    %v1555 = vpack.c.bf16 %v1440, %v1437
    %v1556 = vpack.c.bf16 %v1448, %v1445
    %v1557 = vpack.c.bf16 %v1456, %v1453
    %v1558 = vpack.c.bf16 %v1464, %v1461
    %v1559 = vpack.c.bf16 %v1472, %v1469
    %v1560 = vpack.c.bf16 %v1480, %v1477
    %v1561 = vpack.c.bf16 %v1488, %v1485
    %v1562 = vpack.c.bf16 %v1496, %v1493
    %v1563 = vpack.c.bf16 %v1504, %v1501
    %v1564 = vpack.c.bf16 %v1512, %v1509
    %v1565 = vpack.c.bf16 %v1520, %v1517
    %v1566 = vpack.c.bf16 %v1528, %v1525
    %1567 = vmatprep.subr.bf16.mxu0 0
    %1568 = vmatpush1.bf16.msra.mxu0 %v769
    %1569 = vmatprep.subr.bf16.mxu0 0
    %1570 = vmatpush1.bf16.msra.mxu0 %v768
    %1571 = vmatprep.subr.bf16.mxu0 0
    %1572 = vmatpush1.bf16.msra.mxu0 %v767
    %1573 = vmatprep.subr.bf16.mxu0 0
    %1574 = vmatpush1.bf16.msra.mxu0 %v766
    %1575 = vmatprep.subr.bf16.mxu0 0
    %1576 = vmatpush1.bf16.msra.mxu0 %v765
    %1577 = vmatprep.subr.bf16.mxu0 0
    %1578 = vmatpush1.bf16.msra.mxu0 %v764
    %1579 = vmatprep.subr.bf16.mxu0 0
    %1580 = vmatpush1.bf16.msra.mxu0 %v763
    %1581 = vmatprep.subr.bf16.mxu0 0
    %1582 = vmatpush1.bf16.msra.mxu0 %v762
    %1583 = vmatprep.subr.bf16.mxu0 0
    %1584 = vmatpush2.bf16.msra.mxu0 %v777
    %1585 = vmatprep.subr.bf16.mxu0 0
    %1586 = vmatpush2.bf16.msra.mxu0 %v776
    %1587 = vmatprep.subr.bf16.mxu0 0
    %1588 = vmatpush2.bf16.msra.mxu0 %v775
    %1589 = vmatprep.subr.bf16.mxu0 0
    %1590 = vmatpush2.bf16.msra.mxu0 %v774
    %1591 = vmatprep.subr.bf16.mxu0 0
    %1592 = vmatpush2.bf16.msra.mxu0 %v773
    %1593 = vmatprep.subr.bf16.mxu0 0
    %1594 = vmatpush2.bf16.msra.mxu0 %v772
    %1595 = vmatprep.subr.bf16.mxu0 0
    %1596 = vmatpush2.bf16.msra.mxu0 %v771
    %1597 = vmatprep.subr.bf16.mxu0 0
    %1598 = vmatpush2.bf16.msra.mxu0 %v770
    %1599 = vmatprep.mubr.bf16.mxu0 %v1067
    %1600 = vmatmul.mubr.bf16.gmra.mxu0 %v1066
    %v1601 = vpop.f32.mrf.mxu0
    %v1602 = vadd.f32 0.0, %v1601
    %v1603 = vpop.f32.mrf.mxu0
    %v1604 = vpop.f32.mrf.mxu0
    %v1605 = vadd.f32 0.0, %v1604
    %v1606 = vpop.f32.mrf.mxu0
    %1607 = vmatprep.mubr.bf16.mxu0 %v1069
    %1608 = vmatmul.mubr.bf16.gmra.mxu0 %v1068
    %v1609 = vpop.f32.mrf.mxu0
    %v1610 = vadd.f32 0.0, %v1609
    %v1611 = vpop.f32.mrf.mxu0
    %v1612 = vpop.f32.mrf.mxu0
    %v1613 = vadd.f32 0.0, %v1612
    %v1614 = vpop.f32.mrf.mxu0
    %1615 = vmatprep.mubr.bf16.mxu0 %v1071
    %1616 = vmatmul.mubr.bf16.gmra.mxu0 %v1070
    %v1617 = vpop.f32.mrf.mxu0
    %v1618 = vadd.f32 0.0, %v1617
    %v1619 = vpop.f32.mrf.mxu0
    %v1620 = vpop.f32.mrf.mxu0
    %v1621 = vadd.f32 0.0, %v1620
    %v1622 = vpop.f32.mrf.mxu0
    %1623 = vmatprep.mubr.bf16.mxu0 %v1073
    %1624 = vmatmul.mubr.bf16.gmra.mxu0 %v1072
    %v1625 = vpop.f32.mrf.mxu0
    %v1626 = vadd.f32 0.0, %v1625
    %v1627 = vpop.f32.mrf.mxu0
    %v1628 = vpop.f32.mrf.mxu0
    %v1629 = vadd.f32 0.0, %v1628
    %v1630 = vpop.f32.mrf.mxu0
    %1631 = vmatprep.mubr.bf16.mxu0 %v1075
    %1632 = vmatmul.mubr.bf16.gmra.mxu0 %v1074
    %v1633 = vpop.f32.mrf.mxu0
    %v1634 = vadd.f32 0.0, %v1633
    %v1635 = vpop.f32.mrf.mxu0
    %v1636 = vpop.f32.mrf.mxu0
    %v1637 = vadd.f32 0.0, %v1636
    %v1638 = vpop.f32.mrf.mxu0
    %1639 = vmatprep.mubr.bf16.mxu0 %v1077
    %1640 = vmatmul.mubr.bf16.gmra.mxu0 %v1076
    %v1641 = vpop.f32.mrf.mxu0
    %v1642 = vadd.f32 0.0, %v1641
    %v1643 = vpop.f32.mrf.mxu0
    %v1644 = vpop.f32.mrf.mxu0
    %v1645 = vadd.f32 0.0, %v1644
    %v1646 = vpop.f32.mrf.mxu0
    %1647 = vmatprep.mubr.bf16.mxu0 %v1079
    %1648 = vmatmul.mubr.bf16.gmra.mxu0 %v1078
    %v1649 = vpop.f32.mrf.mxu0
    %v1650 = vadd.f32 0.0, %v1649
    %v1651 = vpop.f32.mrf.mxu0
    %v1652 = vpop.f32.mrf.mxu0
    %v1653 = vadd.f32 0.0, %v1652
    %v1654 = vpop.f32.mrf.mxu0
    %1655 = vmatprep.mubr.bf16.mxu0 %v1081
    %1656 = vmatmul.mubr.bf16.gmra.mxu0 %v1080
    %v1657 = vpop.f32.mrf.mxu0
    %v1658 = vadd.f32 0.0, %v1657
    %v1659 = vpop.f32.mrf.mxu0
    %v1660 = vpop.f32.mrf.mxu0
    %v1661 = vadd.f32 0.0, %v1660
    %v1662 = vpop.f32.mrf.mxu0
    %1663 = vmatprep.mubr.bf16.mxu0 %v1083
    %1664 = vmatmul.mubr.bf16.gmra.mxu0 %v1082
    %v1665 = vpop.f32.mrf.mxu0
    %v1666 = vadd.f32 0.0, %v1665
    %v1667 = vpop.f32.mrf.mxu0
    %v1668 = vpop.f32.mrf.mxu0
    %v1669 = vadd.f32 0.0, %v1668
    %v1670 = vpop.f32.mrf.mxu0
    %1671 = vmatprep.mubr.bf16.mxu0 %v1085
    %1672 = vmatmul.mubr.bf16.gmra.mxu0 %v1084
    %v1673 = vpop.f32.mrf.mxu0
    %v1674 = vadd.f32 0.0, %v1673
    %v1675 = vpop.f32.mrf.mxu0
    %v1676 = vpop.f32.mrf.mxu0
    %v1677 = vadd.f32 0.0, %v1676
    %v1678 = vpop.f32.mrf.mxu0
    %1679 = vmatprep.mubr.bf16.mxu0 %v1087
    %1680 = vmatmul.mubr.bf16.gmra.mxu0 %v1086
    %v1681 = vpop.f32.mrf.mxu0
    %v1682 = vadd.f32 0.0, %v1681
    %v1683 = vpop.f32.mrf.mxu0
    %v1684 = vpop.f32.mrf.mxu0
    %v1685 = vadd.f32 0.0, %v1684
    %v1686 = vpop.f32.mrf.mxu0
    %1687 = vmatprep.mubr.bf16.mxu0 %v1089
    %1688 = vmatmul.mubr.bf16.gmra.mxu0 %v1088
    %v1689 = vpop.f32.mrf.mxu0
    %v1690 = vadd.f32 0.0, %v1689
    %v1691 = vpop.f32.mrf.mxu0
    %v1692 = vpop.f32.mrf.mxu0
    %v1693 = vadd.f32 0.0, %v1692
    %v1694 = vpop.f32.mrf.mxu0
    %1695 = vmatprep.mubr.bf16.mxu0 %v1091
    %1696 = vmatmul.mubr.bf16.gmra.mxu0 %v1090
    %v1697 = vpop.f32.mrf.mxu0
    %v1698 = vadd.f32 0.0, %v1697
    %v1699 = vpop.f32.mrf.mxu0
    %v1700 = vpop.f32.mrf.mxu0
    %v1701 = vadd.f32 0.0, %v1700
    %v1702 = vpop.f32.mrf.mxu0
    %1703 = vmatprep.mubr.bf16.mxu0 %v1093
    %1704 = vmatmul.mubr.bf16.gmra.mxu0 %v1092
    %v1705 = vpop.f32.mrf.mxu0
    %v1706 = vadd.f32 0.0, %v1705
    %v1707 = vpop.f32.mrf.mxu0
    %v1708 = vpop.f32.mrf.mxu0
    %v1709 = vadd.f32 0.0, %v1708
    %v1710 = vpop.f32.mrf.mxu0
    %1711 = vmatprep.mubr.bf16.mxu0 %v1095
    %1712 = vmatmul.mubr.bf16.gmra.mxu0 %v1094
    %v1713 = vpop.f32.mrf.mxu0
    %v1714 = vadd.f32 0.0, %v1713
    %v1715 = vpop.f32.mrf.mxu0
    %v1716 = vpop.f32.mrf.mxu0
    %v1717 = vadd.f32 0.0, %v1716
    %v1718 = vpop.f32.mrf.mxu0
    %1719 = vmatprep.mubr.bf16.mxu0 %v1097
    %1720 = vmatmul.mubr.bf16.gmra.mxu0 %v1096
    %v1721 = vpop.f32.mrf.mxu0
    %v1722 = vadd.f32 0.0, %v1721
    %v1723 = vpop.f32.mrf.mxu0
    %v1724 = vpop.f32.mrf.mxu0
    %v1725 = vadd.f32 0.0, %v1724
    %v1726 = vpop.f32.mrf.mxu0
    %1727 = vmatprep.mubr.bf16.mxu0 %v1099
    %1728 = vmatmul.mubr.bf16.gmra.mxu0 %v1098
    %v1729 = vpop.f32.mrf.mxu0
    %v1730 = vadd.f32 0.0, %v1729
    %v1731 = vpop.f32.mrf.mxu0
    %v1732 = vpop.f32.mrf.mxu0
    %v1733 = vadd.f32 0.0, %v1732
    %v1734 = vpop.f32.mrf.mxu0
    %1735 = vmatprep.mubr.bf16.mxu0 %v1101
    %1736 = vmatmul.mubr.bf16.gmra.mxu0 %v1100
    %v1737 = vpop.f32.mrf.mxu0
    %v1738 = vadd.f32 0.0, %v1737
    %v1739 = vpop.f32.mrf.mxu0
    %v1740 = vpop.f32.mrf.mxu0
    %v1741 = vadd.f32 0.0, %v1740
    %v1742 = vpop.f32.mrf.mxu0
    %1743 = vmatprep.mubr.bf16.mxu0 %v1103
    %1744 = vmatmul.mubr.bf16.gmra.mxu0 %v1102
    %v1745 = vpop.f32.mrf.mxu0
    %v1746 = vadd.f32 0.0, %v1745
    %v1747 = vpop.f32.mrf.mxu0
    %v1748 = vpop.f32.mrf.mxu0
    %v1749 = vadd.f32 0.0, %v1748
    %v1750 = vpop.f32.mrf.mxu0
    %1751 = vmatprep.mubr.bf16.mxu0 %v1105
    %1752 = vmatmul.mubr.bf16.gmra.mxu0 %v1104
    %v1753 = vpop.f32.mrf.mxu0
    %v1754 = vadd.f32 0.0, %v1753
    %v1755 = vpop.f32.mrf.mxu0
    %v1756 = vpop.f32.mrf.mxu0
    %v1757 = vadd.f32 0.0, %v1756
    %v1758 = vpop.f32.mrf.mxu0
    %1759 = vmatprep.mubr.bf16.mxu0 %v1107
    %1760 = vmatmul.mubr.bf16.gmra.mxu0 %v1106
    %v1761 = vpop.f32.mrf.mxu0
    %v1762 = vadd.f32 0.0, %v1761
    %v1763 = vpop.f32.mrf.mxu0
    %v1764 = vpop.f32.mrf.mxu0
    %v1765 = vadd.f32 0.0, %v1764
    %v1766 = vpop.f32.mrf.mxu0
    %1767 = vmatprep.mubr.bf16.mxu0 %v1109
    %1768 = vmatmul.mubr.bf16.gmra.mxu0 %v1108
    %v1769 = vpop.f32.mrf.mxu0
    %v1770 = vadd.f32 0.0, %v1769
    %v1771 = vpop.f32.mrf.mxu0
    %v1772 = vpop.f32.mrf.mxu0
    %v1773 = vadd.f32 0.0, %v1772
    %v1774 = vpop.f32.mrf.mxu0
    %1775 = vmatprep.mubr.bf16.mxu0 %v1111
    %1776 = vmatmul.mubr.bf16.gmra.mxu0 %v1110
    %v1777 = vpop.f32.mrf.mxu0
    %v1778 = vadd.f32 0.0, %v1777
    %v1779 = vpop.f32.mrf.mxu0
    %v1780 = vpop.f32.mrf.mxu0
    %v1781 = vadd.f32 0.0, %v1780
    %v1782 = vpop.f32.mrf.mxu0
    %1783 = vmatprep.mubr.bf16.mxu0 %v1113
    %1784 = vmatmul.mubr.bf16.gmra.mxu0 %v1112
    %v1785 = vpop.f32.mrf.mxu0
    %v1786 = vadd.f32 0.0, %v1785
    %v1787 = vpop.f32.mrf.mxu0
    %v1788 = vpop.f32.mrf.mxu0
    %v1789 = vadd.f32 0.0, %v1788
    %v1790 = vpop.f32.mrf.mxu0
    %1791 = vmatprep.mubr.bf16.mxu0 %v1115
    %1792 = vmatmul.mubr.bf16.gmra.mxu0 %v1114
    %v1793 = vpop.f32.mrf.mxu0
    %v1794 = vadd.f32 0.0, %v1793
    %v1795 = vpop.f32.mrf.mxu0
    %v1796 = vpop.f32.mrf.mxu0
    %v1797 = vadd.f32 0.0, %v1796
    %v1798 = vpop.f32.mrf.mxu0
    %1799 = vmatprep.mubr.bf16.mxu0 %v1117
    %1800 = vmatmul.mubr.bf16.gmra.mxu0 %v1116
    %v1801 = vpop.f32.mrf.mxu0
    %v1802 = vadd.f32 0.0, %v1801
    %v1803 = vpop.f32.mrf.mxu0
    %v1804 = vpop.f32.mrf.mxu0
    %v1805 = vadd.f32 0.0, %v1804
    %v1806 = vpop.f32.mrf.mxu0
    %1807 = vmatprep.mubr.bf16.mxu0 %v1119
    %1808 = vmatmul.mubr.bf16.gmra.mxu0 %v1118
    %v1809 = vpop.f32.mrf.mxu0
    %v1810 = vadd.f32 0.0, %v1809
    %v1811 = vpop.f32.mrf.mxu0
    %v1812 = vpop.f32.mrf.mxu0
    %v1813 = vadd.f32 0.0, %v1812
    %v1814 = vpop.f32.mrf.mxu0
    %1815 = vmatprep.mubr.bf16.mxu0 %v1121
    %1816 = vmatmul.mubr.bf16.gmra.mxu0 %v1120
    %v1817 = vpop.f32.mrf.mxu0
    %v1818 = vadd.f32 0.0, %v1817
    %v1819 = vpop.f32.mrf.mxu0
    %v1820 = vpop.f32.mrf.mxu0
    %v1821 = vadd.f32 0.0, %v1820
    %v1822 = vpop.f32.mrf.mxu0
    %1823 = vmatprep.mubr.bf16.mxu0 %v1123
    %1824 = vmatmul.mubr.bf16.gmra.mxu0 %v1122
    %v1825 = vpop.f32.mrf.mxu0
    %v1826 = vadd.f32 0.0, %v1825
    %v1827 = vpop.f32.mrf.mxu0
    %v1828 = vpop.f32.mrf.mxu0
    %v1829 = vadd.f32 0.0, %v1828
    %v1830 = vpop.f32.mrf.mxu0
    %1831 = vmatprep.mubr.bf16.mxu0 %v1125
    %1832 = vmatmul.mubr.bf16.gmra.mxu0 %v1124
    %v1833 = vpop.f32.mrf.mxu0
    %v1834 = vadd.f32 0.0, %v1833
    %v1835 = vpop.f32.mrf.mxu0
    %v1836 = vpop.f32.mrf.mxu0
    %v1837 = vadd.f32 0.0, %v1836
    %v1838 = vpop.f32.mrf.mxu0
    %1839 = vmatprep.mubr.bf16.mxu0 %v1127
    %1840 = vmatmul.mubr.bf16.gmra.mxu0 %v1126
    %v1841 = vpop.f32.mrf.mxu0
    %v1842 = vadd.f32 0.0, %v1841
    %v1843 = vpop.f32.mrf.mxu0
    %v1844 = vpop.f32.mrf.mxu0
    %v1845 = vadd.f32 0.0, %v1844
    %v1846 = vpop.f32.mrf.mxu0
    %1847 = vmatprep.mubr.bf16.mxu0 %v1129
    %1848 = vmatmul.mubr.bf16.gmra.mxu0 %v1128
    %v1849 = vpop.f32.mrf.mxu0
    %v1850 = vadd.f32 0.0, %v1849
    %v1851 = vpop.f32.mrf.mxu0
    %v1852 = vpop.f32.mrf.mxu0
    %v1853 = vadd.f32 0.0, %v1852
    %v1854 = vpop.f32.mrf.mxu0
    %1855 = vmatprep.mubr.bf16.mxu0 %v1131
    %1856 = vmatmul.mubr.bf16.gmra.mxu0 %v1130
    %v1857 = vpop.f32.mrf.mxu0
    %v1858 = vadd.f32 0.0, %v1857
    %v1859 = vpop.f32.mrf.mxu0
    %v1860 = vpop.f32.mrf.mxu0
    %v1861 = vadd.f32 0.0, %v1860
    %v1862 = vpop.f32.mrf.mxu0
    %1863 = vmatprep.mubr.bf16.mxu0 %v1133
    %1864 = vmatmul.mubr.bf16.gmra.mxu0 %v1132
    %v1865 = vpop.f32.mrf.mxu0
    %v1866 = vadd.f32 0.0, %v1865
    %v1867 = vpop.f32.mrf.mxu0
    %v1868 = vpop.f32.mrf.mxu0
    %v1869 = vadd.f32 0.0, %v1868
    %v1870 = vpop.f32.mrf.mxu0
    %1871 = vmatprep.mubr.bf16.mxu0 %v1135
    %1872 = vmatmul.mubr.bf16.gmra.mxu0 %v1134
    %v1873 = vpop.f32.mrf.mxu0
    %v1874 = vadd.f32 0.0, %v1873
    %v1875 = vpop.f32.mrf.mxu0
    %v1876 = vpop.f32.mrf.mxu0
    %v1877 = vadd.f32 0.0, %v1876
    %v1878 = vpop.f32.mrf.mxu0
    %1879 = vmatprep.mubr.bf16.mxu0 %v1137
    %1880 = vmatmul.mubr.bf16.gmra.mxu0 %v1136
    %v1881 = vpop.f32.mrf.mxu0
    %v1882 = vadd.f32 0.0, %v1881
    %v1883 = vpop.f32.mrf.mxu0
    %v1884 = vpop.f32.mrf.mxu0
    %v1885 = vadd.f32 0.0, %v1884
    %v1886 = vpop.f32.mrf.mxu0
    %1887 = vdwg.mxu0
    %v1888 = vpack.c.bf16 %v1605, %v1602
    %v1889 = vpack.c.bf16 %v1613, %v1610
    %v1890 = vpack.c.bf16 %v1621, %v1618
    %v1891 = vpack.c.bf16 %v1629, %v1626
    %v1892 = vpack.c.bf16 %v1637, %v1634
    %v1893 = vpack.c.bf16 %v1645, %v1642
    %v1894 = vpack.c.bf16 %v1653, %v1650
    %v1895 = vpack.c.bf16 %v1661, %v1658
    %v1896 = vpack.c.bf16 %v1669, %v1666
    %v1897 = vpack.c.bf16 %v1677, %v1674
    %v1898 = vpack.c.bf16 %v1685, %v1682
    %v1899 = vpack.c.bf16 %v1693, %v1690
    %v1900 = vpack.c.bf16 %v1701, %v1698
    %v1901 = vpack.c.bf16 %v1709, %v1706
    %v1902 = vpack.c.bf16 %v1717, %v1714
    %v1903 = vpack.c.bf16 %v1725, %v1722
    %v1904 = vpack.c.bf16 %v1733, %v1730
    %v1905 = vpack.c.bf16 %v1741, %v1738
    %v1906 = vpack.c.bf16 %v1749, %v1746
    %v1907 = vpack.c.bf16 %v1757, %v1754
    %v1908 = vpack.c.bf16 %v1765, %v1762
    %v1909 = vpack.c.bf16 %v1773, %v1770
    %v1910 = vpack.c.bf16 %v1781, %v1778
    %v1911 = vpack.c.bf16 %v1789, %v1786
    %v1912 = vpack.c.bf16 %v1797, %v1794
    %v1913 = vpack.c.bf16 %v1805, %v1802
    %v1914 = vpack.c.bf16 %v1813, %v1810
    %v1915 = vpack.c.bf16 %v1821, %v1818
    %v1916 = vpack.c.bf16 %v1829, %v1826
    %v1917 = vpack.c.bf16 %v1837, %v1834
    %v1918 = vpack.c.bf16 %v1845, %v1842
    %v1919 = vpack.c.bf16 %v1853, %v1850
    %v1920 = vpack.c.bf16 %v1861, %v1858
    %v1921 = vpack.c.bf16 %v1869, %v1866
    %v1922 = vpack.c.bf16 %v1877, %v1874
    %v1923 = vpack.c.bf16 %v1885, %v1882
    %v1924 = vld [vmem:[%s6] sm:$0xf]
    %v1925 = vld [vmem:[%s6 + $0x4] sm:$0xf]
    %v1926 = vld [vmem:[%s6 + $0x8] sm:$0xf]
    %v1927 = vld [vmem:[%s6 + $0xc] sm:$0xf]
    %s1928 = scalar_lea.vmem %s6, 16
    %v1929 = vld [vmem:[%s1928] sm:$0xf]
    %v1930 = vld [vmem:[%s1928 + $0x4] sm:$0xf]
    %v1931 = vld [vmem:[%s1928 + $0x8] sm:$0xf]
    %v1932 = vld [vmem:[%s1928 + $0xc] sm:$0xf]
    %v1937 = vunpack.c.l.b16 %v1929
    %v1938 = vunpack.c.l.b16 %v1930
    %v1939 = vunpack.c.l.b16 %v1931
    %v1940 = vunpack.c.l.b16 %v1932
    %v1941 = vpack.c.b16 %v1938, %v1937
    %v1942 = vpack.c.b16 %v1940, %v1939
    %v1946 = vsel %vm296, %v1535, 0
    %v1949 = vsel %vm296, %v1536, 0
    %v1952 = vsel %vm296, %v1537, 0
    %v1955 = vsel %vm296, %v1538, 0
    %v1958 = vsel %vm296, %v1892, 0
    %v1961 = vsel %vm296, %v1893, 0
    %v1964 = vsel %vm296, %v1894, 0
    %v1967 = vsel %vm296, %v1895, 0
    %1969 = vmatprep.subr.bf16.mxu0 0
    %1970 = vmatpush1.bf16.msra.mxu0 0
    %1971 = vmatprep.subr.bf16.mxu0 0
    %1972 = vmatpush1.bf16.msra.mxu0 0
    %1973 = vmatprep.subr.bf16.mxu0 0
    %1974 = vmatpush1.bf16.msra.mxu0 0
    %1975 = vmatprep.subr.bf16.mxu0 0
    %1976 = vmatpush1.bf16.msra.mxu0 0
    %1977 = vmatprep.subr.bf16.mxu0 0
    %1978 = vmatpush1.bf16.msra.mxu0 0
    %1979 = vmatprep.subr.bf16.mxu0 0
    %1980 = vmatpush1.bf16.msra.mxu0 0
    %1981 = vmatprep.subr.bf16.mxu0 0
    %1982 = vmatpush1.bf16.msra.mxu0 %v1942
    %1983 = vmatprep.subr.bf16.mxu0 0
    %1984 = vmatpush1.bf16.msra.mxu0 %v1941
    %1985 = vmatprep.subr.bf16.mxu0 0
    %1986 = vmatpush2.bf16.msra.mxu0 0
    %1987 = vmatprep.subr.bf16.mxu0 0
    %1988 = vmatpush2.bf16.msra.mxu0 0
    %1989 = vmatprep.subr.bf16.mxu0 0
    %1990 = vmatpush2.bf16.msra.mxu0 0
    %1991 = vmatprep.subr.bf16.mxu0 0
    %1992 = vmatpush2.bf16.msra.mxu0 0
    %1993 = vmatprep.subr.bf16.mxu0 0
    %1994 = vmatpush2.bf16.msra.mxu0 0
    %1995 = vmatprep.subr.bf16.mxu0 0
    %1996 = vmatpush2.bf16.msra.mxu0 0
    %1997 = vmatprep.subr.bf16.mxu0 0
    %1998 = vmatpush2.bf16.msra.mxu0 0
    %1999 = vmatprep.subr.bf16.mxu0 0
    %2000 = vmatpush2.bf16.msra.mxu0 0
    %2001 = vmatprep.mubr.bf16.mxu0 0
    %2002 = vmatmul.mubr.bf16.gmra.mxu0 %v1946
    %v2003 = vpop.f32.mrf.mxu0
    %v2004 = vadd.f32 0.0, %v2003
    %v2005 = vpop.f32.mrf.mxu0
    %v2006 = vpop.f32.mrf.mxu0
    %v2007 = vadd.f32 0.0, %v2006
    %v2008 = vpop.f32.mrf.mxu0
    %2009 = vmatprep.mubr.bf16.mxu0 0
    %2010 = vmatmul.mubr.bf16.gmra.mxu0 %v1949
    %v2011 = vpop.f32.mrf.mxu0
    %v2012 = vadd.f32 0.0, %v2011
    %v2013 = vpop.f32.mrf.mxu0
    %v2014 = vpop.f32.mrf.mxu0
    %v2015 = vadd.f32 0.0, %v2014
    %v2016 = vpop.f32.mrf.mxu0
    %2017 = vmatprep.mubr.bf16.mxu0 0
    %2018 = vmatmul.mubr.bf16.gmra.mxu0 %v1952
    %v2019 = vpop.f32.mrf.mxu0
    %v2020 = vadd.f32 0.0, %v2019
    %v2021 = vpop.f32.mrf.mxu0
    %v2022 = vpop.f32.mrf.mxu0
    %v2023 = vadd.f32 0.0, %v2022
    %v2024 = vpop.f32.mrf.mxu0
    %2025 = vmatprep.mubr.bf16.mxu0 0
    %2026 = vmatmul.mubr.bf16.gmra.mxu0 %v1955
    %v2027 = vpop.f32.mrf.mxu0
    %v2028 = vadd.f32 0.0, %v2027
    %v2029 = vpop.f32.mrf.mxu0
    %v2030 = vpop.f32.mrf.mxu0
    %v2031 = vadd.f32 0.0, %v2030
    %v2032 = vpop.f32.mrf.mxu0
    %2033 = vmatprep.mubr.bf16.mxu0 0
    %2034 = vmatmul.mubr.bf16.gmra.mxu0 %v1958
    %v2035 = vpop.f32.mrf.mxu0
    %v2036 = vadd.f32 0.0, %v2035
    %v2037 = vpop.f32.mrf.mxu0
    %v2038 = vpop.f32.mrf.mxu0
    %v2039 = vadd.f32 0.0, %v2038
    %v2040 = vpop.f32.mrf.mxu0
    %2041 = vmatprep.mubr.bf16.mxu0 0
    %2042 = vmatmul.mubr.bf16.gmra.mxu0 %v1961
    %v2043 = vpop.f32.mrf.mxu0
    %v2044 = vadd.f32 0.0, %v2043
    %v2045 = vpop.f32.mrf.mxu0
    %v2046 = vpop.f32.mrf.mxu0
    %v2047 = vadd.f32 0.0, %v2046
    %v2048 = vpop.f32.mrf.mxu0
    %2049 = vmatprep.mubr.bf16.mxu0 0
    %2050 = vmatmul.mubr.bf16.gmra.mxu0 %v1964
    %v2051 = vpop.f32.mrf.mxu0
    %v2052 = vadd.f32 0.0, %v2051
    %v2053 = vpop.f32.mrf.mxu0
    %v2054 = vpop.f32.mrf.mxu0
    %v2055 = vadd.f32 0.0, %v2054
    %v2056 = vpop.f32.mrf.mxu0
    %2057 = vmatprep.mubr.bf16.mxu0 0
    %2058 = vmatmul.mubr.bf16.gmra.mxu0 %v1967
    %v2059 = vpop.f32.mrf.mxu0
    %v2060 = vadd.f32 0.0, %v2059
    %v2061 = vpop.f32.mrf.mxu0
    %v2062 = vpop.f32.mrf.mxu0
    %v2063 = vadd.f32 0.0, %v2062
    %v2064 = vpop.f32.mrf.mxu0
    %2065 = vdwg.mxu0
    %v2070 = vunpack.c.l.b16 %v1924
    %v2071 = vunpack.c.l.b16 %v1925
    %v2072 = vunpack.c.l.b16 %v1926
    %v2073 = vunpack.c.l.b16 %v1927
    %v2074 = vpack.c.b16 %v2071, %v2070
    %v2075 = vpack.c.b16 %v2073, %v2072
    %v2079 = vsel %vm296, %v1531, 0
    %v2082 = vsel %vm296, %v1532, 0
    %v2085 = vsel %vm296, %v1533, 0
    %v2088 = vsel %vm296, %v1534, 0
    %v2091 = vsel %vm296, %v1888, 0
    %v2094 = vsel %vm296, %v1889, 0
    %v2097 = vsel %vm296, %v1890, 0
    %v2100 = vsel %vm296, %v1891, 0
    %2102 = vmatprep.subr.bf16.mxu0 0
    %2103 = vmatpush1.bf16.msra.mxu0 0
    %2104 = vmatprep.subr.bf16.mxu0 0
    %2105 = vmatpush1.bf16.msra.mxu0 0
    %2106 = vmatprep.subr.bf16.mxu0 0
    %2107 = vmatpush1.bf16.msra.mxu0 0
    %2108 = vmatprep.subr.bf16.mxu0 0
    %2109 = vmatpush1.bf16.msra.mxu0 0
    %2110 = vmatprep.subr.bf16.mxu0 0
    %2111 = vmatpush1.bf16.msra.mxu0 0
    %2112 = vmatprep.subr.bf16.mxu0 0
    %2113 = vmatpush1.bf16.msra.mxu0 0
    %2114 = vmatprep.subr.bf16.mxu0 0
    %2115 = vmatpush1.bf16.msra.mxu0 %v2075
    %2116 = vmatprep.subr.bf16.mxu0 0
    %2117 = vmatpush1.bf16.msra.mxu0 %v2074
    %2118 = vmatprep.subr.bf16.mxu0 0
    %2119 = vmatpush2.bf16.msra.mxu0 0
    %2120 = vmatprep.subr.bf16.mxu0 0
    %2121 = vmatpush2.bf16.msra.mxu0 0
    %2122 = vmatprep.subr.bf16.mxu0 0
    %2123 = vmatpush2.bf16.msra.mxu0 0
    %2124 = vmatprep.subr.bf16.mxu0 0
    %2125 = vmatpush2.bf16.msra.mxu0 0
    %2126 = vmatprep.subr.bf16.mxu0 0
    %2127 = vmatpush2.bf16.msra.mxu0 0
    %2128 = vmatprep.subr.bf16.mxu0 0
    %2129 = vmatpush2.bf16.msra.mxu0 0
    %2130 = vmatprep.subr.bf16.mxu0 0
    %2131 = vmatpush2.bf16.msra.mxu0 0
    %2132 = vmatprep.subr.bf16.mxu0 0
    %2133 = vmatpush2.bf16.msra.mxu0 0
    %2134 = vmatprep.mubr.bf16.mxu0 0
    %2135 = vmatmul.mubr.bf16.gmra.mxu0 %v2079
    %v2136 = vpop.f32.mrf.mxu0
    %v2137 = vadd.f32 %v2004, %v2136
    %v2138 = vpop.f32.mrf.mxu0
    %v2139 = vpop.f32.mrf.mxu0
    %v2140 = vadd.f32 %v2007, %v2139
    %v2141 = vpop.f32.mrf.mxu0
    %2142 = vmatprep.mubr.bf16.mxu0 0
    %2143 = vmatmul.mubr.bf16.gmra.mxu0 %v2082
    %v2144 = vpop.f32.mrf.mxu0
    %v2145 = vadd.f32 %v2012, %v2144
    %v2146 = vpop.f32.mrf.mxu0
    %v2147 = vpop.f32.mrf.mxu0
    %v2148 = vadd.f32 %v2015, %v2147
    %v2149 = vpop.f32.mrf.mxu0
    %2150 = vmatprep.mubr.bf16.mxu0 0
    %2151 = vmatmul.mubr.bf16.gmra.mxu0 %v2085
    %v2152 = vpop.f32.mrf.mxu0
    %v2153 = vadd.f32 %v2020, %v2152
    %v2154 = vpop.f32.mrf.mxu0
    %v2155 = vpop.f32.mrf.mxu0
    %v2156 = vadd.f32 %v2023, %v2155
    %v2157 = vpop.f32.mrf.mxu0
    %2158 = vmatprep.mubr.bf16.mxu0 0
    %2159 = vmatmul.mubr.bf16.gmra.mxu0 %v2088
    %v2160 = vpop.f32.mrf.mxu0
    %v2161 = vadd.f32 %v2028, %v2160
    %v2162 = vpop.f32.mrf.mxu0
    %v2163 = vpop.f32.mrf.mxu0
    %v2164 = vadd.f32 %v2031, %v2163
    %v2165 = vpop.f32.mrf.mxu0
    %2166 = vmatprep.mubr.bf16.mxu0 0
    %2167 = vmatmul.mubr.bf16.gmra.mxu0 %v2091
    %v2168 = vpop.f32.mrf.mxu0
    %v2169 = vadd.f32 %v2036, %v2168
    %v2170 = vpop.f32.mrf.mxu0
    %v2171 = vpop.f32.mrf.mxu0
    %v2172 = vadd.f32 %v2039, %v2171
    %v2173 = vpop.f32.mrf.mxu0
    %2174 = vmatprep.mubr.bf16.mxu0 0
    %2175 = vmatmul.mubr.bf16.gmra.mxu0 %v2094
    %v2176 = vpop.f32.mrf.mxu0
    %v2177 = vadd.f32 %v2044, %v2176
    %v2178 = vpop.f32.mrf.mxu0
    %v2179 = vpop.f32.mrf.mxu0
    %v2180 = vadd.f32 %v2047, %v2179
    %v2181 = vpop.f32.mrf.mxu0
    %2182 = vmatprep.mubr.bf16.mxu0 0
    %2183 = vmatmul.mubr.bf16.gmra.mxu0 %v2097
    %v2184 = vpop.f32.mrf.mxu0
    %v2185 = vadd.f32 %v2052, %v2184
    %v2186 = vpop.f32.mrf.mxu0
    %v2187 = vpop.f32.mrf.mxu0
    %v2188 = vadd.f32 %v2055, %v2187
    %v2189 = vpop.f32.mrf.mxu0
    %2190 = vmatprep.mubr.bf16.mxu0 0
    %2191 = vmatmul.mubr.bf16.gmra.mxu0 %v2100
    %v2192 = vpop.f32.mrf.mxu0
    %v2193 = vadd.f32 %v2060, %v2192
    %v2194 = vpop.f32.mrf.mxu0
    %v2195 = vpop.f32.mrf.mxu0
    %v2196 = vadd.f32 %v2063, %v2195
    %v2197 = vpop.f32.mrf.mxu0
    %2198 = vdwg.mxu0
    %s2199 = scalar_lea.vmem %s6, 32
    %v2200 = vld [vmem:[%s2199] sm:$0xf]
    %v2201 = vld [vmem:[%s2199 + $0x4] sm:$0xf]
    %v2202 = vld [vmem:[%s2199 + $0x8] sm:$0xf]
    %v2203 = vld [vmem:[%s2199 + $0xc] sm:$0xf]
    %v2208 = vunpack.c.l.b16 %v2200
    %v2209 = vunpack.c.l.b16 %v2201
    %v2210 = vunpack.c.l.b16 %v2202
    %v2211 = vunpack.c.l.b16 %v2203
    %v2212 = vpack.c.b16 %v2209, %v2208
    %v2213 = vpack.c.b16 %v2211, %v2210
    %v2217 = vsel %vm296, %v1539, 0
    %v2220 = vsel %vm296, %v1540, 0
    %v2223 = vsel %vm296, %v1541, 0
    %v2226 = vsel %vm296, %v1542, 0
    %v2229 = vsel %vm296, %v1896, 0
    %v2232 = vsel %vm296, %v1897, 0
    %v2235 = vsel %vm296, %v1898, 0
    %v2238 = vsel %vm296, %v1899, 0
    %2240 = vmatprep.subr.bf16.mxu0 0
    %2241 = vmatpush1.bf16.msra.mxu0 0
    %2242 = vmatprep.subr.bf16.mxu0 0
    %2243 = vmatpush1.bf16.msra.mxu0 0
    %2244 = vmatprep.subr.bf16.mxu0 0
    %2245 = vmatpush1.bf16.msra.mxu0 0
    %2246 = vmatprep.subr.bf16.mxu0 0
    %2247 = vmatpush1.bf16.msra.mxu0 0
    %2248 = vmatprep.subr.bf16.mxu0 0
    %2249 = vmatpush1.bf16.msra.mxu0 0
    %2250 = vmatprep.subr.bf16.mxu0 0
    %2251 = vmatpush1.bf16.msra.mxu0 0
    %2252 = vmatprep.subr.bf16.mxu0 0
    %2253 = vmatpush1.bf16.msra.mxu0 %v2213
    %2254 = vmatprep.subr.bf16.mxu0 0
    %2255 = vmatpush1.bf16.msra.mxu0 %v2212
    %2256 = vmatprep.subr.bf16.mxu0 0
    %2257 = vmatpush2.bf16.msra.mxu0 0
    %2258 = vmatprep.subr.bf16.mxu0 0
    %2259 = vmatpush2.bf16.msra.mxu0 0
    %2260 = vmatprep.subr.bf16.mxu0 0
    %2261 = vmatpush2.bf16.msra.mxu0 0
    %2262 = vmatprep.subr.bf16.mxu0 0
    %2263 = vmatpush2.bf16.msra.mxu0 0
    %2264 = vmatprep.subr.bf16.mxu0 0
    %2265 = vmatpush2.bf16.msra.mxu0 0
    %2266 = vmatprep.subr.bf16.mxu0 0
    %2267 = vmatpush2.bf16.msra.mxu0 0
    %2268 = vmatprep.subr.bf16.mxu0 0
    %2269 = vmatpush2.bf16.msra.mxu0 0
    %2270 = vmatprep.subr.bf16.mxu0 0
    %2271 = vmatpush2.bf16.msra.mxu0 0
    %2272 = vmatprep.mubr.bf16.mxu0 0
    %2273 = vmatmul.mubr.bf16.gmra.mxu0 %v2217
    %v2274 = vpop.f32.mrf.mxu0
    %v2275 = vadd.f32 0.0, %v2274
    %v2276 = vpop.f32.mrf.mxu0
    %v2277 = vpop.f32.mrf.mxu0
    %v2278 = vadd.f32 0.0, %v2277
    %v2279 = vpop.f32.mrf.mxu0
    %2280 = vmatprep.mubr.bf16.mxu0 0
    %2281 = vmatmul.mubr.bf16.gmra.mxu0 %v2220
    %v2282 = vpop.f32.mrf.mxu0
    %v2283 = vadd.f32 0.0, %v2282
    %v2284 = vpop.f32.mrf.mxu0
    %v2285 = vpop.f32.mrf.mxu0
    %v2286 = vadd.f32 0.0, %v2285
    %v2287 = vpop.f32.mrf.mxu0
    %2288 = vmatprep.mubr.bf16.mxu0 0
    %2289 = vmatmul.mubr.bf16.gmra.mxu0 %v2223
    %v2290 = vpop.f32.mrf.mxu0
    %v2291 = vadd.f32 0.0, %v2290
    %v2292 = vpop.f32.mrf.mxu0
    %v2293 = vpop.f32.mrf.mxu0
    %v2294 = vadd.f32 0.0, %v2293
    %v2295 = vpop.f32.mrf.mxu0
    %2296 = vmatprep.mubr.bf16.mxu0 0
    %2297 = vmatmul.mubr.bf16.gmra.mxu0 %v2226
    %v2298 = vpop.f32.mrf.mxu0
    %v2299 = vadd.f32 0.0, %v2298
    %v2300 = vpop.f32.mrf.mxu0
    %v2301 = vpop.f32.mrf.mxu0
    %v2302 = vadd.f32 0.0, %v2301
    %v2303 = vpop.f32.mrf.mxu0
    %2304 = vmatprep.mubr.bf16.mxu0 0
    %2305 = vmatmul.mubr.bf16.gmra.mxu0 %v2229
    %v2306 = vpop.f32.mrf.mxu0
    %v2307 = vadd.f32 0.0, %v2306
    %v2308 = vpop.f32.mrf.mxu0
    %v2309 = vpop.f32.mrf.mxu0
    %v2310 = vadd.f32 0.0, %v2309
    %v2311 = vpop.f32.mrf.mxu0
    %2312 = vmatprep.mubr.bf16.mxu0 0
    %2313 = vmatmul.mubr.bf16.gmra.mxu0 %v2232
    %v2314 = vpop.f32.mrf.mxu0
    %v2315 = vadd.f32 0.0, %v2314
    %v2316 = vpop.f32.mrf.mxu0
    %v2317 = vpop.f32.mrf.mxu0
    %v2318 = vadd.f32 0.0, %v2317
    %v2319 = vpop.f32.mrf.mxu0
    %2320 = vmatprep.mubr.bf16.mxu0 0
    %2321 = vmatmul.mubr.bf16.gmra.mxu0 %v2235
    %v2322 = vpop.f32.mrf.mxu0
    %v2323 = vadd.f32 0.0, %v2322
    %v2324 = vpop.f32.mrf.mxu0
    %v2325 = vpop.f32.mrf.mxu0
    %v2326 = vadd.f32 0.0, %v2325
    %v2327 = vpop.f32.mrf.mxu0
    %2328 = vmatprep.mubr.bf16.mxu0 0
    %2329 = vmatmul.mubr.bf16.gmra.mxu0 %v2238
    %v2330 = vpop.f32.mrf.mxu0
    %v2331 = vadd.f32 0.0, %v2330
    %v2332 = vpop.f32.mrf.mxu0
    %v2333 = vpop.f32.mrf.mxu0
    %v2334 = vadd.f32 0.0, %v2333
    %v2335 = vpop.f32.mrf.mxu0
    %2336 = vdwg.mxu0
    %v2337 = vadd.f32 %v2137, %v2275
    %v2338 = vadd.f32 %v2140, %v2278
    %v2339 = vadd.f32 %v2145, %v2283
    %v2340 = vadd.f32 %v2148, %v2286
    %v2341 = vadd.f32 %v2153, %v2291
    %v2342 = vadd.f32 %v2156, %v2294
    %v2343 = vadd.f32 %v2161, %v2299
    %v2344 = vadd.f32 %v2164, %v2302
    %v2345 = vadd.f32 %v2169, %v2307
    %v2346 = vadd.f32 %v2172, %v2310
    %v2347 = vadd.f32 %v2177, %v2315
    %v2348 = vadd.f32 %v2180, %v2318
    %v2349 = vadd.f32 %v2185, %v2323
    %v2350 = vadd.f32 %v2188, %v2326
    %v2351 = vadd.f32 %v2193, %v2331
    %v2352 = vadd.f32 %v2196, %v2334
    %s2353 = scalar_lea.vmem %s6, 48
    %v2354 = vld [vmem:[%s2353] sm:$0xf]
    %v2355 = vld [vmem:[%s2353 + $0x4] sm:$0xf]
    %v2356 = vld [vmem:[%s2353 + $0x8] sm:$0xf]
    %v2357 = vld [vmem:[%s2353 + $0xc] sm:$0xf]
    %v2362 = vunpack.c.l.b16 %v2354
    %v2363 = vunpack.c.l.b16 %v2355
    %v2364 = vunpack.c.l.b16 %v2356
    %v2365 = vunpack.c.l.b16 %v2357
    %v2366 = vpack.c.b16 %v2363, %v2362
    %v2367 = vpack.c.b16 %v2365, %v2364
    %v2371 = vsel %vm296, %v1543, 0
    %v2374 = vsel %vm296, %v1544, 0
    %v2377 = vsel %vm296, %v1545, 0
    %v2380 = vsel %vm296, %v1546, 0
    %v2383 = vsel %vm296, %v1900, 0
    %v2386 = vsel %vm296, %v1901, 0
    %v2389 = vsel %vm296, %v1902, 0
    %v2392 = vsel %vm296, %v1903, 0
    %2394 = vmatprep.subr.bf16.mxu0 0
    %2395 = vmatpush1.bf16.msra.mxu0 0
    %2396 = vmatprep.subr.bf16.mxu0 0
    %2397 = vmatpush1.bf16.msra.mxu0 0
    %2398 = vmatprep.subr.bf16.mxu0 0
    %2399 = vmatpush1.bf16.msra.mxu0 0
    %2400 = vmatprep.subr.bf16.mxu0 0
    %2401 = vmatpush1.bf16.msra.mxu0 0
    %2402 = vmatprep.subr.bf16.mxu0 0
    %2403 = vmatpush1.bf16.msra.mxu0 0
    %2404 = vmatprep.subr.bf16.mxu0 0
    %2405 = vmatpush1.bf16.msra.mxu0 0
    %2406 = vmatprep.subr.bf16.mxu0 0
    %2407 = vmatpush1.bf16.msra.mxu0 %v2367
    %2408 = vmatprep.subr.bf16.mxu0 0
    %2409 = vmatpush1.bf16.msra.mxu0 %v2366
    %2410 = vmatprep.subr.bf16.mxu0 0
    %2411 = vmatpush2.bf16.msra.mxu0 0
    %2412 = vmatprep.subr.bf16.mxu0 0
    %2413 = vmatpush2.bf16.msra.mxu0 0
    %2414 = vmatprep.subr.bf16.mxu0 0
    %2415 = vmatpush2.bf16.msra.mxu0 0
    %2416 = vmatprep.subr.bf16.mxu0 0
    %2417 = vmatpush2.bf16.msra.mxu0 0
    %2418 = vmatprep.subr.bf16.mxu0 0
    %2419 = vmatpush2.bf16.msra.mxu0 0
    %2420 = vmatprep.subr.bf16.mxu0 0
    %2421 = vmatpush2.bf16.msra.mxu0 0
    %2422 = vmatprep.subr.bf16.mxu0 0
    %2423 = vmatpush2.bf16.msra.mxu0 0
    %2424 = vmatprep.subr.bf16.mxu0 0
    %2425 = vmatpush2.bf16.msra.mxu0 0
    %2426 = vmatprep.mubr.bf16.mxu0 0
    %2427 = vmatmul.mubr.bf16.gmra.mxu0 %v2371
    %v2428 = vpop.f32.mrf.mxu0
    %v2429 = vadd.f32 0.0, %v2428
    %v2430 = vpop.f32.mrf.mxu0
    %v2431 = vpop.f32.mrf.mxu0
    %v2432 = vadd.f32 0.0, %v2431
    %v2433 = vpop.f32.mrf.mxu0
    %2434 = vmatprep.mubr.bf16.mxu0 0
    %2435 = vmatmul.mubr.bf16.gmra.mxu0 %v2374
    %v2436 = vpop.f32.mrf.mxu0
    %v2437 = vadd.f32 0.0, %v2436
    %v2438 = vpop.f32.mrf.mxu0
    %v2439 = vpop.f32.mrf.mxu0
    %v2440 = vadd.f32 0.0, %v2439
    %v2441 = vpop.f32.mrf.mxu0
    %2442 = vmatprep.mubr.bf16.mxu0 0
    %2443 = vmatmul.mubr.bf16.gmra.mxu0 %v2377
    %v2444 = vpop.f32.mrf.mxu0
    %v2445 = vadd.f32 0.0, %v2444
    %v2446 = vpop.f32.mrf.mxu0
    %v2447 = vpop.f32.mrf.mxu0
    %v2448 = vadd.f32 0.0, %v2447
    %v2449 = vpop.f32.mrf.mxu0
    %2450 = vmatprep.mubr.bf16.mxu0 0
    %2451 = vmatmul.mubr.bf16.gmra.mxu0 %v2380
    %v2452 = vpop.f32.mrf.mxu0
    %v2453 = vadd.f32 0.0, %v2452
    %v2454 = vpop.f32.mrf.mxu0
    %v2455 = vpop.f32.mrf.mxu0
    %v2456 = vadd.f32 0.0, %v2455
    %v2457 = vpop.f32.mrf.mxu0
    %2458 = vmatprep.mubr.bf16.mxu0 0
    %2459 = vmatmul.mubr.bf16.gmra.mxu0 %v2383
    %v2460 = vpop.f32.mrf.mxu0
    %v2461 = vadd.f32 0.0, %v2460
    %v2462 = vpop.f32.mrf.mxu0
    %v2463 = vpop.f32.mrf.mxu0
    %v2464 = vadd.f32 0.0, %v2463
    %v2465 = vpop.f32.mrf.mxu0
    %2466 = vmatprep.mubr.bf16.mxu0 0
    %2467 = vmatmul.mubr.bf16.gmra.mxu0 %v2386
    %v2468 = vpop.f32.mrf.mxu0
    %v2469 = vadd.f32 0.0, %v2468
    %v2470 = vpop.f32.mrf.mxu0
    %v2471 = vpop.f32.mrf.mxu0
    %v2472 = vadd.f32 0.0, %v2471
    %v2473 = vpop.f32.mrf.mxu0
    %2474 = vmatprep.mubr.bf16.mxu0 0
    %2475 = vmatmul.mubr.bf16.gmra.mxu0 %v2389
    %v2476 = vpop.f32.mrf.mxu0
    %v2477 = vadd.f32 0.0, %v2476
    %v2478 = vpop.f32.mrf.mxu0
    %v2479 = vpop.f32.mrf.mxu0
    %v2480 = vadd.f32 0.0, %v2479
    %v2481 = vpop.f32.mrf.mxu0
    %2482 = vmatprep.mubr.bf16.mxu0 0
    %2483 = vmatmul.mubr.bf16.gmra.mxu0 %v2392
    %v2484 = vpop.f32.mrf.mxu0
    %v2485 = vadd.f32 0.0, %v2484
    %v2486 = vpop.f32.mrf.mxu0
    %v2487 = vpop.f32.mrf.mxu0
    %v2488 = vadd.f32 0.0, %v2487
    %v2489 = vpop.f32.mrf.mxu0
    %2490 = vdwg.mxu0
    %v2491 = vadd.f32 %v2337, %v2429
    %v2492 = vadd.f32 %v2338, %v2432
    %v2493 = vadd.f32 %v2339, %v2437
    %v2494 = vadd.f32 %v2340, %v2440
    %v2495 = vadd.f32 %v2341, %v2445
    %v2496 = vadd.f32 %v2342, %v2448
    %v2497 = vadd.f32 %v2343, %v2453
    %v2498 = vadd.f32 %v2344, %v2456
    %v2499 = vadd.f32 %v2345, %v2461
    %v2500 = vadd.f32 %v2346, %v2464
    %v2501 = vadd.f32 %v2347, %v2469
    %v2502 = vadd.f32 %v2348, %v2472
    %v2503 = vadd.f32 %v2349, %v2477
    %v2504 = vadd.f32 %v2350, %v2480
    %v2505 = vadd.f32 %v2351, %v2485
    %v2506 = vadd.f32 %v2352, %v2488
    %s2507 = scalar_lea.vmem %s6, 64
    %v2508 = vld [vmem:[%s2507] sm:$0xf]
    %v2509 = vld [vmem:[%s2507 + $0x4] sm:$0xf]
    %v2510 = vld [vmem:[%s2507 + $0x8] sm:$0xf]
    %v2511 = vld [vmem:[%s2507 + $0xc] sm:$0xf]
    %v2516 = vunpack.c.l.b16 %v2508
    %v2517 = vunpack.c.l.b16 %v2509
    %v2518 = vunpack.c.l.b16 %v2510
    %v2519 = vunpack.c.l.b16 %v2511
    %v2520 = vpack.c.b16 %v2517, %v2516
    %v2521 = vpack.c.b16 %v2519, %v2518
    %v2525 = vsel %vm296, %v1547, 0
    %v2528 = vsel %vm296, %v1548, 0
    %v2531 = vsel %vm296, %v1549, 0
    %v2534 = vsel %vm296, %v1550, 0
    %v2537 = vsel %vm296, %v1904, 0
    %v2540 = vsel %vm296, %v1905, 0
    %v2543 = vsel %vm296, %v1906, 0
    %v2546 = vsel %vm296, %v1907, 0
    %2548 = vmatprep.subr.bf16.mxu0 0
    %2549 = vmatpush1.bf16.msra.mxu0 0
    %2550 = vmatprep.subr.bf16.mxu0 0
    %2551 = vmatpush1.bf16.msra.mxu0 0
    %2552 = vmatprep.subr.bf16.mxu0 0
    %2553 = vmatpush1.bf16.msra.mxu0 0
    %2554 = vmatprep.subr.bf16.mxu0 0
    %2555 = vmatpush1.bf16.msra.mxu0 0
    %2556 = vmatprep.subr.bf16.mxu0 0
    %2557 = vmatpush1.bf16.msra.mxu0 0
    %2558 = vmatprep.subr.bf16.mxu0 0
    %2559 = vmatpush1.bf16.msra.mxu0 0
    %2560 = vmatprep.subr.bf16.mxu0 0
    %2561 = vmatpush1.bf16.msra.mxu0 %v2521
    %2562 = vmatprep.subr.bf16.mxu0 0
    %2563 = vmatpush1.bf16.msra.mxu0 %v2520
    %2564 = vmatprep.subr.bf16.mxu0 0
    %2565 = vmatpush2.bf16.msra.mxu0 0
    %2566 = vmatprep.subr.bf16.mxu0 0
    %2567 = vmatpush2.bf16.msra.mxu0 0
    %2568 = vmatprep.subr.bf16.mxu0 0
    %2569 = vmatpush2.bf16.msra.mxu0 0
    %2570 = vmatprep.subr.bf16.mxu0 0
    %2571 = vmatpush2.bf16.msra.mxu0 0
    %2572 = vmatprep.subr.bf16.mxu0 0
    %2573 = vmatpush2.bf16.msra.mxu0 0
    %2574 = vmatprep.subr.bf16.mxu0 0
    %2575 = vmatpush2.bf16.msra.mxu0 0
    %2576 = vmatprep.subr.bf16.mxu0 0
    %2577 = vmatpush2.bf16.msra.mxu0 0
    %2578 = vmatprep.subr.bf16.mxu0 0
    %2579 = vmatpush2.bf16.msra.mxu0 0
    %2580 = vmatprep.mubr.bf16.mxu0 0
    %2581 = vmatmul.mubr.bf16.gmra.mxu0 %v2525
    %v2582 = vpop.f32.mrf.mxu0
    %v2583 = vadd.f32 0.0, %v2582
    %v2584 = vpop.f32.mrf.mxu0
    %v2585 = vpop.f32.mrf.mxu0
    %v2586 = vadd.f32 0.0, %v2585
    %v2587 = vpop.f32.mrf.mxu0
    %2588 = vmatprep.mubr.bf16.mxu0 0
    %2589 = vmatmul.mubr.bf16.gmra.mxu0 %v2528
    %v2590 = vpop.f32.mrf.mxu0
    %v2591 = vadd.f32 0.0, %v2590
    %v2592 = vpop.f32.mrf.mxu0
    %v2593 = vpop.f32.mrf.mxu0
    %v2594 = vadd.f32 0.0, %v2593
    %v2595 = vpop.f32.mrf.mxu0
    %2596 = vmatprep.mubr.bf16.mxu0 0
    %2597 = vmatmul.mubr.bf16.gmra.mxu0 %v2531
    %v2598 = vpop.f32.mrf.mxu0
    %v2599 = vadd.f32 0.0, %v2598
    %v2600 = vpop.f32.mrf.mxu0
    %v2601 = vpop.f32.mrf.mxu0
    %v2602 = vadd.f32 0.0, %v2601
    %v2603 = vpop.f32.mrf.mxu0
    %2604 = vmatprep.mubr.bf16.mxu0 0
    %2605 = vmatmul.mubr.bf16.gmra.mxu0 %v2534
    %v2606 = vpop.f32.mrf.mxu0
    %v2607 = vadd.f32 0.0, %v2606
    %v2608 = vpop.f32.mrf.mxu0
    %v2609 = vpop.f32.mrf.mxu0
    %v2610 = vadd.f32 0.0, %v2609
    %v2611 = vpop.f32.mrf.mxu0
    %2612 = vmatprep.mubr.bf16.mxu0 0
    %2613 = vmatmul.mubr.bf16.gmra.mxu0 %v2537
    %v2614 = vpop.f32.mrf.mxu0
    %v2615 = vadd.f32 0.0, %v2614
    %v2616 = vpop.f32.mrf.mxu0
    %v2617 = vpop.f32.mrf.mxu0
    %v2618 = vadd.f32 0.0, %v2617
    %v2619 = vpop.f32.mrf.mxu0
    %2620 = vmatprep.mubr.bf16.mxu0 0
    %2621 = vmatmul.mubr.bf16.gmra.mxu0 %v2540
    %v2622 = vpop.f32.mrf.mxu0
    %v2623 = vadd.f32 0.0, %v2622
    %v2624 = vpop.f32.mrf.mxu0
    %v2625 = vpop.f32.mrf.mxu0
    %v2626 = vadd.f32 0.0, %v2625
    %v2627 = vpop.f32.mrf.mxu0
    %2628 = vmatprep.mubr.bf16.mxu0 0
    %2629 = vmatmul.mubr.bf16.gmra.mxu0 %v2543
    %v2630 = vpop.f32.mrf.mxu0
    %v2631 = vadd.f32 0.0, %v2630
    %v2632 = vpop.f32.mrf.mxu0
    %v2633 = vpop.f32.mrf.mxu0
    %v2634 = vadd.f32 0.0, %v2633
    %v2635 = vpop.f32.mrf.mxu0
    %2636 = vmatprep.mubr.bf16.mxu0 0
    %2637 = vmatmul.mubr.bf16.gmra.mxu0 %v2546
    %v2638 = vpop.f32.mrf.mxu0
    %v2639 = vadd.f32 0.0, %v2638
    %v2640 = vpop.f32.mrf.mxu0
    %v2641 = vpop.f32.mrf.mxu0
    %v2642 = vadd.f32 0.0, %v2641
    %v2643 = vpop.f32.mrf.mxu0
    %2644 = vdwg.mxu0
    %v2645 = vadd.f32 %v2491, %v2583
    %v2646 = vadd.f32 %v2492, %v2586
    %v2647 = vadd.f32 %v2493, %v2591
    %v2648 = vadd.f32 %v2494, %v2594
    %v2649 = vadd.f32 %v2495, %v2599
    %v2650 = vadd.f32 %v2496, %v2602
    %v2651 = vadd.f32 %v2497, %v2607
    %v2652 = vadd.f32 %v2498, %v2610
    %v2653 = vadd.f32 %v2499, %v2615
    %v2654 = vadd.f32 %v2500, %v2618
    %v2655 = vadd.f32 %v2501, %v2623
    %v2656 = vadd.f32 %v2502, %v2626
    %v2657 = vadd.f32 %v2503, %v2631
    %v2658 = vadd.f32 %v2504, %v2634
    %v2659 = vadd.f32 %v2505, %v2639
    %v2660 = vadd.f32 %v2506, %v2642
    %s2661 = scalar_lea.vmem %s6, 80
    %v2662 = vld [vmem:[%s2661] sm:$0xf]
    %v2663 = vld [vmem:[%s2661 + $0x4] sm:$0xf]
    %v2664 = vld [vmem:[%s2661 + $0x8] sm:$0xf]
    %v2665 = vld [vmem:[%s2661 + $0xc] sm:$0xf]
    %v2670 = vunpack.c.l.b16 %v2662
    %v2671 = vunpack.c.l.b16 %v2663
    %v2672 = vunpack.c.l.b16 %v2664
    %v2673 = vunpack.c.l.b16 %v2665
    %v2674 = vpack.c.b16 %v2671, %v2670
    %v2675 = vpack.c.b16 %v2673, %v2672
    %v2679 = vsel %vm296, %v1551, 0
    %v2682 = vsel %vm296, %v1552, 0
    %v2685 = vsel %vm296, %v1553, 0
    %v2688 = vsel %vm296, %v1554, 0
    %v2691 = vsel %vm296, %v1908, 0
    %v2694 = vsel %vm296, %v1909, 0
    %v2697 = vsel %vm296, %v1910, 0
    %v2700 = vsel %vm296, %v1911, 0
    %2702 = vmatprep.subr.bf16.mxu0 0
    %2703 = vmatpush1.bf16.msra.mxu0 0
    %2704 = vmatprep.subr.bf16.mxu0 0
    %2705 = vmatpush1.bf16.msra.mxu0 0
    %2706 = vmatprep.subr.bf16.mxu0 0
    %2707 = vmatpush1.bf16.msra.mxu0 0
    %2708 = vmatprep.subr.bf16.mxu0 0
    %2709 = vmatpush1.bf16.msra.mxu0 0
    %2710 = vmatprep.subr.bf16.mxu0 0
    %2711 = vmatpush1.bf16.msra.mxu0 0
    %2712 = vmatprep.subr.bf16.mxu0 0
    %2713 = vmatpush1.bf16.msra.mxu0 0
    %2714 = vmatprep.subr.bf16.mxu0 0
    %2715 = vmatpush1.bf16.msra.mxu0 %v2675
    %2716 = vmatprep.subr.bf16.mxu0 0
    %2717 = vmatpush1.bf16.msra.mxu0 %v2674
    %2718 = vmatprep.subr.bf16.mxu0 0
    %2719 = vmatpush2.bf16.msra.mxu0 0
    %2720 = vmatprep.subr.bf16.mxu0 0
    %2721 = vmatpush2.bf16.msra.mxu0 0
    %2722 = vmatprep.subr.bf16.mxu0 0
    %2723 = vmatpush2.bf16.msra.mxu0 0
    %2724 = vmatprep.subr.bf16.mxu0 0
    %2725 = vmatpush2.bf16.msra.mxu0 0
    %2726 = vmatprep.subr.bf16.mxu0 0
    %2727 = vmatpush2.bf16.msra.mxu0 0
    %2728 = vmatprep.subr.bf16.mxu0 0
    %2729 = vmatpush2.bf16.msra.mxu0 0
    %2730 = vmatprep.subr.bf16.mxu0 0
    %2731 = vmatpush2.bf16.msra.mxu0 0
    %2732 = vmatprep.subr.bf16.mxu0 0
    %2733 = vmatpush2.bf16.msra.mxu0 0
    %2734 = vmatprep.mubr.bf16.mxu0 0
    %2735 = vmatmul.mubr.bf16.gmra.mxu0 %v2679
    %v2736 = vpop.f32.mrf.mxu0
    %v2737 = vadd.f32 0.0, %v2736
    %v2738 = vpop.f32.mrf.mxu0
    %v2739 = vpop.f32.mrf.mxu0
    %v2740 = vadd.f32 0.0, %v2739
    %v2741 = vpop.f32.mrf.mxu0
    %2742 = vmatprep.mubr.bf16.mxu0 0
    %2743 = vmatmul.mubr.bf16.gmra.mxu0 %v2682
    %v2744 = vpop.f32.mrf.mxu0
    %v2745 = vadd.f32 0.0, %v2744
    %v2746 = vpop.f32.mrf.mxu0
    %v2747 = vpop.f32.mrf.mxu0
    %v2748 = vadd.f32 0.0, %v2747
    %v2749 = vpop.f32.mrf.mxu0
    %2750 = vmatprep.mubr.bf16.mxu0 0
    %2751 = vmatmul.mubr.bf16.gmra.mxu0 %v2685
    %v2752 = vpop.f32.mrf.mxu0
    %v2753 = vadd.f32 0.0, %v2752
    %v2754 = vpop.f32.mrf.mxu0
    %v2755 = vpop.f32.mrf.mxu0
    %v2756 = vadd.f32 0.0, %v2755
    %v2757 = vpop.f32.mrf.mxu0
    %2758 = vmatprep.mubr.bf16.mxu0 0
    %2759 = vmatmul.mubr.bf16.gmra.mxu0 %v2688
    %v2760 = vpop.f32.mrf.mxu0
    %v2761 = vadd.f32 0.0, %v2760
    %v2762 = vpop.f32.mrf.mxu0
    %v2763 = vpop.f32.mrf.mxu0
    %v2764 = vadd.f32 0.0, %v2763
    %v2765 = vpop.f32.mrf.mxu0
    %2766 = vmatprep.mubr.bf16.mxu0 0
    %2767 = vmatmul.mubr.bf16.gmra.mxu0 %v2691
    %v2768 = vpop.f32.mrf.mxu0
    %v2769 = vadd.f32 0.0, %v2768
    %v2770 = vpop.f32.mrf.mxu0
    %v2771 = vpop.f32.mrf.mxu0
    %v2772 = vadd.f32 0.0, %v2771
    %v2773 = vpop.f32.mrf.mxu0
    %2774 = vmatprep.mubr.bf16.mxu0 0
    %2775 = vmatmul.mubr.bf16.gmra.mxu0 %v2694
    %v2776 = vpop.f32.mrf.mxu0
    %v2777 = vadd.f32 0.0, %v2776
    %v2778 = vpop.f32.mrf.mxu0
    %v2779 = vpop.f32.mrf.mxu0
    %v2780 = vadd.f32 0.0, %v2779
    %v2781 = vpop.f32.mrf.mxu0
    %2782 = vmatprep.mubr.bf16.mxu0 0
    %2783 = vmatmul.mubr.bf16.gmra.mxu0 %v2697
    %v2784 = vpop.f32.mrf.mxu0
    %v2785 = vadd.f32 0.0, %v2784
    %v2786 = vpop.f32.mrf.mxu0
    %v2787 = vpop.f32.mrf.mxu0
    %v2788 = vadd.f32 0.0, %v2787
    %v2789 = vpop.f32.mrf.mxu0
    %2790 = vmatprep.mubr.bf16.mxu0 0
    %2791 = vmatmul.mubr.bf16.gmra.mxu0 %v2700
    %v2792 = vpop.f32.mrf.mxu0
    %v2793 = vadd.f32 0.0, %v2792
    %v2794 = vpop.f32.mrf.mxu0
    %v2795 = vpop.f32.mrf.mxu0
    %v2796 = vadd.f32 0.0, %v2795
    %v2797 = vpop.f32.mrf.mxu0
    %2798 = vdwg.mxu0
    %v2799 = vadd.f32 %v2645, %v2737
    %v2800 = vadd.f32 %v2646, %v2740
    %v2801 = vadd.f32 %v2647, %v2745
    %v2802 = vadd.f32 %v2648, %v2748
    %v2803 = vadd.f32 %v2649, %v2753
    %v2804 = vadd.f32 %v2650, %v2756
    %v2805 = vadd.f32 %v2651, %v2761
    %v2806 = vadd.f32 %v2652, %v2764
    %v2807 = vadd.f32 %v2653, %v2769
    %v2808 = vadd.f32 %v2654, %v2772
    %v2809 = vadd.f32 %v2655, %v2777
    %v2810 = vadd.f32 %v2656, %v2780
    %v2811 = vadd.f32 %v2657, %v2785
    %v2812 = vadd.f32 %v2658, %v2788
    %v2813 = vadd.f32 %v2659, %v2793
    %v2814 = vadd.f32 %v2660, %v2796
    %s2815 = scalar_lea.vmem %s6, 96
    %v2816 = vld [vmem:[%s2815] sm:$0xf]
    %v2817 = vld [vmem:[%s2815 + $0x4] sm:$0xf]
    %v2818 = vld [vmem:[%s2815 + $0x8] sm:$0xf]
    %v2819 = vld [vmem:[%s2815 + $0xc] sm:$0xf]
    %v2824 = vunpack.c.l.b16 %v2816
    %v2825 = vunpack.c.l.b16 %v2817
    %v2826 = vunpack.c.l.b16 %v2818
    %v2827 = vunpack.c.l.b16 %v2819
    %v2828 = vpack.c.b16 %v2825, %v2824
    %v2829 = vpack.c.b16 %v2827, %v2826
    %v2833 = vsel %vm296, %v1555, 0
    %v2836 = vsel %vm296, %v1556, 0
    %v2839 = vsel %vm296, %v1557, 0
    %v2842 = vsel %vm296, %v1558, 0
    %v2845 = vsel %vm296, %v1912, 0
    %v2848 = vsel %vm296, %v1913, 0
    %v2851 = vsel %vm296, %v1914, 0
    %v2854 = vsel %vm296, %v1915, 0
    %2856 = vmatprep.subr.bf16.mxu0 0
    %2857 = vmatpush1.bf16.msra.mxu0 0
    %2858 = vmatprep.subr.bf16.mxu0 0
    %2859 = vmatpush1.bf16.msra.mxu0 0
    %2860 = vmatprep.subr.bf16.mxu0 0
    %2861 = vmatpush1.bf16.msra.mxu0 0
    %2862 = vmatprep.subr.bf16.mxu0 0
    %2863 = vmatpush1.bf16.msra.mxu0 0
    %2864 = vmatprep.subr.bf16.mxu0 0
    %2865 = vmatpush1.bf16.msra.mxu0 0
    %2866 = vmatprep.subr.bf16.mxu0 0
    %2867 = vmatpush1.bf16.msra.mxu0 0
    %2868 = vmatprep.subr.bf16.mxu0 0
    %2869 = vmatpush1.bf16.msra.mxu0 %v2829
    %2870 = vmatprep.subr.bf16.mxu0 0
    %2871 = vmatpush1.bf16.msra.mxu0 %v2828
    %2872 = vmatprep.subr.bf16.mxu0 0
    %2873 = vmatpush2.bf16.msra.mxu0 0
    %2874 = vmatprep.subr.bf16.mxu0 0
    %2875 = vmatpush2.bf16.msra.mxu0 0
    %2876 = vmatprep.subr.bf16.mxu0 0
    %2877 = vmatpush2.bf16.msra.mxu0 0
    %2878 = vmatprep.subr.bf16.mxu0 0
    %2879 = vmatpush2.bf16.msra.mxu0 0
    %2880 = vmatprep.subr.bf16.mxu0 0
    %2881 = vmatpush2.bf16.msra.mxu0 0
    %2882 = vmatprep.subr.bf16.mxu0 0
    %2883 = vmatpush2.bf16.msra.mxu0 0
    %2884 = vmatprep.subr.bf16.mxu0 0
    %2885 = vmatpush2.bf16.msra.mxu0 0
    %2886 = vmatprep.subr.bf16.mxu0 0
    %2887 = vmatpush2.bf16.msra.mxu0 0
    %2888 = vmatprep.mubr.bf16.mxu0 0
    %2889 = vmatmul.mubr.bf16.gmra.mxu0 %v2833
    %v2890 = vpop.f32.mrf.mxu0
    %v2891 = vadd.f32 0.0, %v2890
    %v2892 = vpop.f32.mrf.mxu0
    %v2893 = vpop.f32.mrf.mxu0
    %v2894 = vadd.f32 0.0, %v2893
    %v2895 = vpop.f32.mrf.mxu0
    %2896 = vmatprep.mubr.bf16.mxu0 0
    %2897 = vmatmul.mubr.bf16.gmra.mxu0 %v2836
    %v2898 = vpop.f32.mrf.mxu0
    %v2899 = vadd.f32 0.0, %v2898
    %v2900 = vpop.f32.mrf.mxu0
    %v2901 = vpop.f32.mrf.mxu0
    %v2902 = vadd.f32 0.0, %v2901
    %v2903 = vpop.f32.mrf.mxu0
    %2904 = vmatprep.mubr.bf16.mxu0 0
    %2905 = vmatmul.mubr.bf16.gmra.mxu0 %v2839
    %v2906 = vpop.f32.mrf.mxu0
    %v2907 = vadd.f32 0.0, %v2906
    %v2908 = vpop.f32.mrf.mxu0
    %v2909 = vpop.f32.mrf.mxu0
    %v2910 = vadd.f32 0.0, %v2909
    %v2911 = vpop.f32.mrf.mxu0
    %2912 = vmatprep.mubr.bf16.mxu0 0
    %2913 = vmatmul.mubr.bf16.gmra.mxu0 %v2842
    %v2914 = vpop.f32.mrf.mxu0
    %v2915 = vadd.f32 0.0, %v2914
    %v2916 = vpop.f32.mrf.mxu0
    %v2917 = vpop.f32.mrf.mxu0
    %v2918 = vadd.f32 0.0, %v2917
    %v2919 = vpop.f32.mrf.mxu0
    %2920 = vmatprep.mubr.bf16.mxu0 0
    %2921 = vmatmul.mubr.bf16.gmra.mxu0 %v2845
    %v2922 = vpop.f32.mrf.mxu0
    %v2923 = vadd.f32 0.0, %v2922
    %v2924 = vpop.f32.mrf.mxu0
    %v2925 = vpop.f32.mrf.mxu0
    %v2926 = vadd.f32 0.0, %v2925
    %v2927 = vpop.f32.mrf.mxu0
    %2928 = vmatprep.mubr.bf16.mxu0 0
    %2929 = vmatmul.mubr.bf16.gmra.mxu0 %v2848
    %v2930 = vpop.f32.mrf.mxu0
    %v2931 = vadd.f32 0.0, %v2930
    %v2932 = vpop.f32.mrf.mxu0
    %v2933 = vpop.f32.mrf.mxu0
    %v2934 = vadd.f32 0.0, %v2933
    %v2935 = vpop.f32.mrf.mxu0
    %2936 = vmatprep.mubr.bf16.mxu0 0
    %2937 = vmatmul.mubr.bf16.gmra.mxu0 %v2851
    %v2938 = vpop.f32.mrf.mxu0
    %v2939 = vadd.f32 0.0, %v2938
    %v2940 = vpop.f32.mrf.mxu0
    %v2941 = vpop.f32.mrf.mxu0
    %v2942 = vadd.f32 0.0, %v2941
    %v2943 = vpop.f32.mrf.mxu0
    %2944 = vmatprep.mubr.bf16.mxu0 0
    %2945 = vmatmul.mubr.bf16.gmra.mxu0 %v2854
    %v2946 = vpop.f32.mrf.mxu0
    %v2947 = vadd.f32 0.0, %v2946
    %v2948 = vpop.f32.mrf.mxu0
    %v2949 = vpop.f32.mrf.mxu0
    %v2950 = vadd.f32 0.0, %v2949
    %v2951 = vpop.f32.mrf.mxu0
    %2952 = vdwg.mxu0
    %v2953 = vadd.f32 %v2799, %v2891
    %v2954 = vadd.f32 %v2800, %v2894
    %v2955 = vadd.f32 %v2801, %v2899
    %v2956 = vadd.f32 %v2802, %v2902
    %v2957 = vadd.f32 %v2803, %v2907
    %v2958 = vadd.f32 %v2804, %v2910
    %v2959 = vadd.f32 %v2805, %v2915
    %v2960 = vadd.f32 %v2806, %v2918
    %v2961 = vadd.f32 %v2807, %v2923
    %v2962 = vadd.f32 %v2808, %v2926
    %v2963 = vadd.f32 %v2809, %v2931
    %v2964 = vadd.f32 %v2810, %v2934
    %v2965 = vadd.f32 %v2811, %v2939
    %v2966 = vadd.f32 %v2812, %v2942
    %v2967 = vadd.f32 %v2813, %v2947
    %v2968 = vadd.f32 %v2814, %v2950
    %s2969 = scalar_lea.vmem %s6, 112
    %v2970 = vld [vmem:[%s2969] sm:$0xf]
    %v2971 = vld [vmem:[%s2969 + $0x4] sm:$0xf]
    %v2972 = vld [vmem:[%s2969 + $0x8] sm:$0xf]
    %v2973 = vld [vmem:[%s2969 + $0xc] sm:$0xf]
    %v2978 = vunpack.c.l.b16 %v2970
    %v2979 = vunpack.c.l.b16 %v2971
    %v2980 = vunpack.c.l.b16 %v2972
    %v2981 = vunpack.c.l.b16 %v2973
    %v2982 = vpack.c.b16 %v2979, %v2978
    %v2983 = vpack.c.b16 %v2981, %v2980
    %v2987 = vsel %vm296, %v1559, 0
    %v2990 = vsel %vm296, %v1560, 0
    %v2993 = vsel %vm296, %v1561, 0
    %v2996 = vsel %vm296, %v1562, 0
    %v2999 = vsel %vm296, %v1916, 0
    %v3002 = vsel %vm296, %v1917, 0
    %v3005 = vsel %vm296, %v1918, 0
    %v3008 = vsel %vm296, %v1919, 0
    %3010 = vmatprep.subr.bf16.mxu0 0
    %3011 = vmatpush1.bf16.msra.mxu0 0
    %3012 = vmatprep.subr.bf16.mxu0 0
    %3013 = vmatpush1.bf16.msra.mxu0 0
    %3014 = vmatprep.subr.bf16.mxu0 0
    %3015 = vmatpush1.bf16.msra.mxu0 0
    %3016 = vmatprep.subr.bf16.mxu0 0
    %3017 = vmatpush1.bf16.msra.mxu0 0
    %3018 = vmatprep.subr.bf16.mxu0 0
    %3019 = vmatpush1.bf16.msra.mxu0 0
    %3020 = vmatprep.subr.bf16.mxu0 0
    %3021 = vmatpush1.bf16.msra.mxu0 0
    %3022 = vmatprep.subr.bf16.mxu0 0
    %3023 = vmatpush1.bf16.msra.mxu0 %v2983
    %3024 = vmatprep.subr.bf16.mxu0 0
    %3025 = vmatpush1.bf16.msra.mxu0 %v2982
    %3026 = vmatprep.subr.bf16.mxu0 0
    %3027 = vmatpush2.bf16.msra.mxu0 0
    %3028 = vmatprep.subr.bf16.mxu0 0
    %3029 = vmatpush2.bf16.msra.mxu0 0
    %3030 = vmatprep.subr.bf16.mxu0 0
    %3031 = vmatpush2.bf16.msra.mxu0 0
    %3032 = vmatprep.subr.bf16.mxu0 0
    %3033 = vmatpush2.bf16.msra.mxu0 0
    %3034 = vmatprep.subr.bf16.mxu0 0
    %3035 = vmatpush2.bf16.msra.mxu0 0
    %3036 = vmatprep.subr.bf16.mxu0 0
    %3037 = vmatpush2.bf16.msra.mxu0 0
    %3038 = vmatprep.subr.bf16.mxu0 0
    %3039 = vmatpush2.bf16.msra.mxu0 0
    %3040 = vmatprep.subr.bf16.mxu0 0
    %3041 = vmatpush2.bf16.msra.mxu0 0
    %3042 = vmatprep.mubr.bf16.mxu0 0
    %3043 = vmatmul.mubr.bf16.gmra.mxu0 %v2987
    %v3044 = vpop.f32.mrf.mxu0
    %v3045 = vadd.f32 0.0, %v3044
    %v3046 = vpop.f32.mrf.mxu0
    %v3047 = vpop.f32.mrf.mxu0
    %v3048 = vadd.f32 0.0, %v3047
    %v3049 = vpop.f32.mrf.mxu0
    %3050 = vmatprep.mubr.bf16.mxu0 0
    %3051 = vmatmul.mubr.bf16.gmra.mxu0 %v2990
    %v3052 = vpop.f32.mrf.mxu0
    %v3053 = vadd.f32 0.0, %v3052
    %v3054 = vpop.f32.mrf.mxu0
    %v3055 = vpop.f32.mrf.mxu0
    %v3056 = vadd.f32 0.0, %v3055
    %v3057 = vpop.f32.mrf.mxu0
    %3058 = vmatprep.mubr.bf16.mxu0 0
    %3059 = vmatmul.mubr.bf16.gmra.mxu0 %v2993
    %v3060 = vpop.f32.mrf.mxu0
    %v3061 = vadd.f32 0.0, %v3060
    %v3062 = vpop.f32.mrf.mxu0
    %v3063 = vpop.f32.mrf.mxu0
    %v3064 = vadd.f32 0.0, %v3063
    %v3065 = vpop.f32.mrf.mxu0
    %3066 = vmatprep.mubr.bf16.mxu0 0
    %3067 = vmatmul.mubr.bf16.gmra.mxu0 %v2996
    %v3068 = vpop.f32.mrf.mxu0
    %v3069 = vadd.f32 0.0, %v3068
    %v3070 = vpop.f32.mrf.mxu0
    %v3071 = vpop.f32.mrf.mxu0
    %v3072 = vadd.f32 0.0, %v3071
    %v3073 = vpop.f32.mrf.mxu0
    %3074 = vmatprep.mubr.bf16.mxu0 0
    %3075 = vmatmul.mubr.bf16.gmra.mxu0 %v2999
    %v3076 = vpop.f32.mrf.mxu0
    %v3077 = vadd.f32 0.0, %v3076
    %v3078 = vpop.f32.mrf.mxu0
    %v3079 = vpop.f32.mrf.mxu0
    %v3080 = vadd.f32 0.0, %v3079
    %v3081 = vpop.f32.mrf.mxu0
    %3082 = vmatprep.mubr.bf16.mxu0 0
    %3083 = vmatmul.mubr.bf16.gmra.mxu0 %v3002
    %v3084 = vpop.f32.mrf.mxu0
    %v3085 = vadd.f32 0.0, %v3084
    %v3086 = vpop.f32.mrf.mxu0
    %v3087 = vpop.f32.mrf.mxu0
    %v3088 = vadd.f32 0.0, %v3087
    %v3089 = vpop.f32.mrf.mxu0
    %3090 = vmatprep.mubr.bf16.mxu0 0
    %3091 = vmatmul.mubr.bf16.gmra.mxu0 %v3005
    %v3092 = vpop.f32.mrf.mxu0
    %v3093 = vadd.f32 0.0, %v3092
    %v3094 = vpop.f32.mrf.mxu0
    %v3095 = vpop.f32.mrf.mxu0
    %v3096 = vadd.f32 0.0, %v3095
    %v3097 = vpop.f32.mrf.mxu0
    %3098 = vmatprep.mubr.bf16.mxu0 0
    %3099 = vmatmul.mubr.bf16.gmra.mxu0 %v3008
    %v3100 = vpop.f32.mrf.mxu0
    %v3101 = vadd.f32 0.0, %v3100
    %v3102 = vpop.f32.mrf.mxu0
    %v3103 = vpop.f32.mrf.mxu0
    %v3104 = vadd.f32 0.0, %v3103
    %v3105 = vpop.f32.mrf.mxu0
    %3106 = vdwg.mxu0
    %v3107 = vadd.f32 %v2953, %v3045
    %v3108 = vadd.f32 %v2954, %v3048
    %v3109 = vadd.f32 %v2955, %v3053
    %v3110 = vadd.f32 %v2956, %v3056
    %v3111 = vadd.f32 %v2957, %v3061
    %v3112 = vadd.f32 %v2958, %v3064
    %v3113 = vadd.f32 %v2959, %v3069
    %v3114 = vadd.f32 %v2960, %v3072
    %v3115 = vadd.f32 %v2961, %v3077
    %v3116 = vadd.f32 %v2962, %v3080
    %v3117 = vadd.f32 %v2963, %v3085
    %v3118 = vadd.f32 %v2964, %v3088
    %v3119 = vadd.f32 %v2965, %v3093
    %v3120 = vadd.f32 %v2966, %v3096
    %v3121 = vadd.f32 %v2967, %v3101
    %v3122 = vadd.f32 %v2968, %v3104
    %s3123 = scalar_lea.vmem %s6, 128
    %v3124 = vld [vmem:[%s3123] sm:$0xf]
    %v3125 = vld [vmem:[%s3123 + $0x4] sm:$0xf]
    %v3126 = vld [vmem:[%s3123 + $0x8] sm:$0xf]
    %v3127 = vld [vmem:[%s3123 + $0xc] sm:$0xf]
    %v3132 = vunpack.c.l.b16 %v3124
    %v3133 = vunpack.c.l.b16 %v3125
    %v3134 = vunpack.c.l.b16 %v3126
    %v3135 = vunpack.c.l.b16 %v3127
    %v3136 = vpack.c.b16 %v3133, %v3132
    %v3137 = vpack.c.b16 %v3135, %v3134
    %v3141 = vsel %vm296, %v1563, 0
    %v3144 = vsel %vm296, %v1564, 0
    %v3147 = vsel %vm296, %v1565, 0
    %v3150 = vsel %vm296, %v1566, 0
    %v3153 = vsel %vm296, %v1920, 0
    %v3156 = vsel %vm296, %v1921, 0
    %v3159 = vsel %vm296, %v1922, 0
    %v3162 = vsel %vm296, %v1923, 0
    %3164 = vmatprep.subr.bf16.mxu0 0
    %3165 = vmatpush1.bf16.msra.mxu0 0
    %3166 = vmatprep.subr.bf16.mxu0 0
    %3167 = vmatpush1.bf16.msra.mxu0 0
    %3168 = vmatprep.subr.bf16.mxu0 0
    %3169 = vmatpush1.bf16.msra.mxu0 0
    %3170 = vmatprep.subr.bf16.mxu0 0
    %3171 = vmatpush1.bf16.msra.mxu0 0
    %3172 = vmatprep.subr.bf16.mxu0 0
    %3173 = vmatpush1.bf16.msra.mxu0 0
    %3174 = vmatprep.subr.bf16.mxu0 0
    %3175 = vmatpush1.bf16.msra.mxu0 0
    %3176 = vmatprep.subr.bf16.mxu0 0
    %3177 = vmatpush1.bf16.msra.mxu0 %v3137
    %3178 = vmatprep.subr.bf16.mxu0 0
    %3179 = vmatpush1.bf16.msra.mxu0 %v3136
    %3180 = vmatprep.subr.bf16.mxu0 0
    %3181 = vmatpush2.bf16.msra.mxu0 0
    %3182 = vmatprep.subr.bf16.mxu0 0
    %3183 = vmatpush2.bf16.msra.mxu0 0
    %3184 = vmatprep.subr.bf16.mxu0 0
    %3185 = vmatpush2.bf16.msra.mxu0 0
    %3186 = vmatprep.subr.bf16.mxu0 0
    %3187 = vmatpush2.bf16.msra.mxu0 0
    %3188 = vmatprep.subr.bf16.mxu0 0
    %3189 = vmatpush2.bf16.msra.mxu0 0
    %3190 = vmatprep.subr.bf16.mxu0 0
    %3191 = vmatpush2.bf16.msra.mxu0 0
    %3192 = vmatprep.subr.bf16.mxu0 0
    %3193 = vmatpush2.bf16.msra.mxu0 0
    %3194 = vmatprep.subr.bf16.mxu0 0
    %3195 = vmatpush2.bf16.msra.mxu0 0
    %3196 = vmatprep.mubr.bf16.mxu0 0
    %3197 = vmatmul.mubr.bf16.gmra.mxu0 %v3141
    %v3198 = vpop.f32.mrf.mxu0
    %v3199 = vadd.f32 0.0, %v3198
    %v3200 = vpop.f32.mrf.mxu0
    %v3201 = vpop.f32.mrf.mxu0
    %v3202 = vadd.f32 0.0, %v3201
    %v3203 = vpop.f32.mrf.mxu0
    %3204 = vmatprep.mubr.bf16.mxu0 0
    %3205 = vmatmul.mubr.bf16.gmra.mxu0 %v3144
    %v3206 = vpop.f32.mrf.mxu0
    %v3207 = vadd.f32 0.0, %v3206
    %v3208 = vpop.f32.mrf.mxu0
    %v3209 = vpop.f32.mrf.mxu0
    %v3210 = vadd.f32 0.0, %v3209
    %v3211 = vpop.f32.mrf.mxu0
    %3212 = vmatprep.mubr.bf16.mxu0 0
    %3213 = vmatmul.mubr.bf16.gmra.mxu0 %v3147
    %v3214 = vpop.f32.mrf.mxu0
    %v3215 = vadd.f32 0.0, %v3214
    %v3216 = vpop.f32.mrf.mxu0
    %v3217 = vpop.f32.mrf.mxu0
    %v3218 = vadd.f32 0.0, %v3217
    %v3219 = vpop.f32.mrf.mxu0
    %3220 = vmatprep.mubr.bf16.mxu0 0
    %3221 = vmatmul.mubr.bf16.gmra.mxu0 %v3150
    %v3222 = vpop.f32.mrf.mxu0
    %v3223 = vadd.f32 0.0, %v3222
    %v3224 = vpop.f32.mrf.mxu0
    %v3225 = vpop.f32.mrf.mxu0
    %v3226 = vadd.f32 0.0, %v3225
    %v3227 = vpop.f32.mrf.mxu0
    %3228 = vmatprep.mubr.bf16.mxu0 0
    %3229 = vmatmul.mubr.bf16.gmra.mxu0 %v3153
    %v3230 = vpop.f32.mrf.mxu0
    %v3231 = vadd.f32 0.0, %v3230
    %v3232 = vpop.f32.mrf.mxu0
    %v3233 = vpop.f32.mrf.mxu0
    %v3234 = vadd.f32 0.0, %v3233
    %v3235 = vpop.f32.mrf.mxu0
    %3236 = vmatprep.mubr.bf16.mxu0 0
    %3237 = vmatmul.mubr.bf16.gmra.mxu0 %v3156
    %v3238 = vpop.f32.mrf.mxu0
    %v3239 = vadd.f32 0.0, %v3238
    %v3240 = vpop.f32.mrf.mxu0
    %v3241 = vpop.f32.mrf.mxu0
    %v3242 = vadd.f32 0.0, %v3241
    %v3243 = vpop.f32.mrf.mxu0
    %3244 = vmatprep.mubr.bf16.mxu0 0
    %3245 = vmatmul.mubr.bf16.gmra.mxu0 %v3159
    %v3246 = vpop.f32.mrf.mxu0
    %v3247 = vadd.f32 0.0, %v3246
    %v3248 = vpop.f32.mrf.mxu0
    %v3249 = vpop.f32.mrf.mxu0
    %v3250 = vadd.f32 0.0, %v3249
    %v3251 = vpop.f32.mrf.mxu0
    %3252 = vmatprep.mubr.bf16.mxu0 0
    %3253 = vmatmul.mubr.bf16.gmra.mxu0 %v3162
    %v3254 = vpop.f32.mrf.mxu0
    %v3255 = vadd.f32 0.0, %v3254
    %v3256 = vpop.f32.mrf.mxu0
    %v3257 = vpop.f32.mrf.mxu0
    %v3258 = vadd.f32 0.0, %v3257
    %v3259 = vpop.f32.mrf.mxu0
    %3260 = vdwg.mxu0
    %v3261 = vadd.f32 %v3107, %v3199
    %v3262 = vadd.f32 %v3108, %v3202
    %v3263 = vadd.f32 %v3109, %v3207
    %v3264 = vadd.f32 %v3110, %v3210
    %v3265 = vadd.f32 %v3111, %v3215
    %v3266 = vadd.f32 %v3112, %v3218
    %v3267 = vadd.f32 %v3113, %v3223
    %v3268 = vadd.f32 %v3114, %v3226
    %v3269 = vadd.f32 %v3115, %v3231
    %v3270 = vadd.f32 %v3116, %v3234
    %v3271 = vadd.f32 %v3117, %v3239
    %v3272 = vadd.f32 %v3118, %v3242
    %v3273 = vadd.f32 %v3119, %v3247
    %v3274 = vadd.f32 %v3120, %v3250
    %v3275 = vadd.f32 %v3121, %v3255
    %v3276 = vadd.f32 %v3122, %v3258
    %v3277 = vld [vmem:[%s7] sm:$0x1]
    %v3279 = vlaneseq
    %v3280 = vshrl.u32 %v3279, 7
    %v3281 = vsub.s32 0, %v3280
    %v3282 = vrot.slane %v3277, %v3281
    %v3284 = vadd.f32 %v3261, %v3282
    %v3285 = vadd.f32 %v3262, %v3282
    %v3286 = vadd.f32 %v3263, %v3282
    %v3287 = vadd.f32 %v3264, %v3282
    %v3288 = vadd.f32 %v3265, %v3282
    %v3289 = vadd.f32 %v3266, %v3282
    %v3290 = vadd.f32 %v3267, %v3282
    %v3291 = vadd.f32 %v3268, %v3282
    %v3292 = vadd.f32 %v3269, %v3282
    %v3293 = vadd.f32 %v3270, %v3282
    %v3294 = vadd.f32 %v3271, %v3282
    %v3295 = vadd.f32 %v3272, %v3282
    %v3296 = vadd.f32 %v3273, %v3282
    %v3297 = vadd.f32 %v3274, %v3282
    %v3298 = vadd.f32 %v3275, %v3282
    %v3299 = vadd.f32 %v3276, %v3282
    %v3300 = vmax.f32 %v3284, 0.0
    %v3301 = vmax.f32 %v3285, 0.0
    %v3302 = vmax.f32 %v3286, 0.0
    %v3303 = vmax.f32 %v3287, 0.0
    %v3304 = vmax.f32 %v3288, 0.0
    %v3305 = vmax.f32 %v3289, 0.0
    %v3306 = vmax.f32 %v3290, 0.0
    %v3307 = vmax.f32 %v3291, 0.0
    %v3308 = vmax.f32 %v3292, 0.0
    %v3309 = vmax.f32 %v3293, 0.0
    %v3310 = vmax.f32 %v3294, 0.0
    %v3311 = vmax.f32 %v3295, 0.0
    %v3312 = vmax.f32 %v3296, 0.0
    %v3313 = vmax.f32 %v3297, 0.0
    %v3314 = vmax.f32 %v3298, 0.0
    %v3315 = vmax.f32 %v3299, 0.0
    %v3316 = vpack.c.bf16 %v3301, %v3300
    %v3317 = vpack.c.bf16 %v3303, %v3302
    %v3318 = vpack.c.bf16 %v3305, %v3304
    %v3319 = vpack.c.bf16 %v3307, %v3306
    %v3320 = vpack.c.bf16 %v3309, %v3308
    %v3321 = vpack.c.bf16 %v3311, %v3310
    %v3322 = vpack.c.bf16 %v3313, %v3312
    %v3323 = vpack.c.bf16 %v3315, %v3314
    %v3324 = vld [vmem:[%s3] sm:$0xf]
    %v3325 = vld [vmem:[%s3 + $0x4] sm:$0xf]
    %v3326 = vld [vmem:[%s3 + $0x8] sm:$0xf]
    %v3327 = vld [vmem:[%s3 + $0xc] sm:$0xf]
    %v3328 = vld [vmem:[%s3 + $0x10] sm:$0xf]
    %v3329 = vld [vmem:[%s3 + $0x14] sm:$0xf]
    %v3330 = vld [vmem:[%s3 + $0x18] sm:$0xf]
    %v3331 = vld [vmem:[%s3 + $0x1c] sm:$0xf]
    %v3332 = vld [vmem:[%s3 + $0x20] sm:$0xf]
    %v3333 = vld [vmem:[%s3 + $0x24] sm:$0xf]
    %v3334 = vld [vmem:[%s3 + $0x28] sm:$0xf]
    %v3335 = vld [vmem:[%s3 + $0x2c] sm:$0xf]
    %v3336 = vld [vmem:[%s3 + $0x30] sm:$0xf]
    %v3337 = vld [vmem:[%s3 + $0x34] sm:$0xf]
    %v3338 = vld [vmem:[%s3 + $0x38] sm:$0xf]
    %v3339 = vld [vmem:[%s3 + $0x3c] sm:$0xf]
    %v3340 = vld [vmem:[%s3 + $0x40] sm:$0xf]
    %v3341 = vld [vmem:[%s3 + $0x44] sm:$0xf]
    %v3360 = vunpack.c.l.b16 %v3324
    %v3361 = vunpack.c.l.b16 %v3325
    %v3362 = vunpack.c.l.b16 %v3326
    %v3363 = vunpack.c.l.b16 %v3327
    %v3364 = vunpack.c.l.b16 %v3328
    %v3365 = vunpack.c.l.b16 %v3329
    %v3366 = vunpack.c.l.b16 %v3330
    %v3367 = vunpack.c.l.b16 %v3331
    %v3368 = vunpack.c.l.b16 %v3332
    %v3369 = vunpack.c.l.b16 %v3333
    %v3370 = vunpack.c.l.b16 %v3334
    %v3371 = vunpack.c.l.b16 %v3335
    %v3372 = vunpack.c.l.b16 %v3336
    %v3373 = vunpack.c.l.b16 %v3337
    %v3374 = vunpack.c.l.b16 %v3338
    %v3375 = vunpack.c.l.b16 %v3339
    %v3376 = vunpack.c.l.b16 %v3340
    %v3377 = vunpack.c.l.b16 %v3341
    %v3378 = vpack.c.b16 %v3361, %v3360
    %v3379 = vpack.c.b16 %v3363, %v3362
    %v3380 = vpack.c.b16 %v3365, %v3364
    %v3381 = vpack.c.b16 %v3367, %v3366
    %v3382 = vpack.c.b16 %v3369, %v3368
    %v3383 = vpack.c.b16 %v3371, %v3370
    %v3384 = vpack.c.b16 %v3373, %v3372
    %v3385 = vpack.c.b16 %v3375, %v3374
    %v3386 = vpack.c.b16 %v3377, %v3376
    %vm3387 = vcmask 523264
    %v3389 = vsel %vm3387, %v3378, 0
    %v3392 = vsel %vm3387, %v3379, 0
    %v3395 = vsel %vm3387, %v3380, 0
    %v3398 = vsel %vm3387, %v3381, 0
    %v3401 = vsel %vm3387, %v3382, 0
    %v3404 = vsel %vm3387, %v3383, 0
    %v3407 = vsel %vm3387, %v3384, 0
    %v3410 = vsel %vm3387, %v3385, 0
    %v3413 = vsel %vm3387, %v3386, 0
    %3415 = vmatprep.subr.bf16.mxu0 0
    %3416 = vmatpush1.bf16.msra.mxu0 0
    %3417 = vmatprep.subr.bf16.mxu0 0
    %3418 = vmatpush1.bf16.msra.mxu0 0
    %3419 = vmatprep.subr.bf16.mxu0 0
    %3420 = vmatpush1.bf16.msra.mxu0 0
    %3421 = vmatprep.subr.bf16.mxu0 0
    %3422 = vmatpush1.bf16.msra.mxu0 0
    %3423 = vmatprep.subr.bf16.mxu0 0
    %3424 = vmatpush1.bf16.msra.mxu0 %v3319
    %3425 = vmatprep.subr.bf16.mxu0 0
    %3426 = vmatpush1.bf16.msra.mxu0 %v3318
    %3427 = vmatprep.subr.bf16.mxu0 0
    %3428 = vmatpush1.bf16.msra.mxu0 %v3317
    %3429 = vmatprep.subr.bf16.mxu0 0
    %3430 = vmatpush1.bf16.msra.mxu0 %v3316
    %3431 = vmatprep.subr.bf16.mxu0 0
    %3432 = vmatpush2.bf16.msra.mxu0 0
    %3433 = vmatprep.subr.bf16.mxu0 0
    %3434 = vmatpush2.bf16.msra.mxu0 0
    %3435 = vmatprep.subr.bf16.mxu0 0
    %3436 = vmatpush2.bf16.msra.mxu0 0
    %3437 = vmatprep.subr.bf16.mxu0 0
    %3438 = vmatpush2.bf16.msra.mxu0 0
    %3439 = vmatprep.subr.bf16.mxu0 0
    %3440 = vmatpush2.bf16.msra.mxu0 0
    %3441 = vmatprep.subr.bf16.mxu0 0
    %3442 = vmatpush2.bf16.msra.mxu0 0
    %3443 = vmatprep.subr.bf16.mxu0 0
    %3444 = vmatpush2.bf16.msra.mxu0 0
    %3445 = vmatprep.subr.bf16.mxu0 0
    %3446 = vmatpush2.bf16.msra.mxu0 0
    %3447 = vmatprep.mubr.bf16.mxu0 0
    %3448 = vmatmul.mubr.bf16.gmra.mxu0 %v3389
    %v3449 = vpop.f32.mrf.mxu0
    %v3450 = vadd.f32 0.0, %v3449
    %v3451 = vpop.f32.mrf.mxu0
    %v3452 = vpop.f32.mrf.mxu0
    %v3453 = vadd.f32 0.0, %v3452
    %v3454 = vpop.f32.mrf.mxu0
    %3455 = vmatprep.mubr.bf16.mxu0 0
    %3456 = vmatmul.mubr.bf16.gmra.mxu0 %v3392
    %v3457 = vpop.f32.mrf.mxu0
    %v3458 = vadd.f32 0.0, %v3457
    %v3459 = vpop.f32.mrf.mxu0
    %v3460 = vpop.f32.mrf.mxu0
    %v3461 = vadd.f32 0.0, %v3460
    %v3462 = vpop.f32.mrf.mxu0
    %3463 = vmatprep.mubr.bf16.mxu0 0
    %3464 = vmatmul.mubr.bf16.gmra.mxu0 %v3395
    %v3465 = vpop.f32.mrf.mxu0
    %v3466 = vadd.f32 0.0, %v3465
    %v3467 = vpop.f32.mrf.mxu0
    %v3468 = vpop.f32.mrf.mxu0
    %v3469 = vadd.f32 0.0, %v3468
    %v3470 = vpop.f32.mrf.mxu0
    %3471 = vmatprep.mubr.bf16.mxu0 0
    %3472 = vmatmul.mubr.bf16.gmra.mxu0 %v3398
    %v3473 = vpop.f32.mrf.mxu0
    %v3474 = vadd.f32 0.0, %v3473
    %v3475 = vpop.f32.mrf.mxu0
    %v3476 = vpop.f32.mrf.mxu0
    %v3477 = vadd.f32 0.0, %v3476
    %v3478 = vpop.f32.mrf.mxu0
    %3479 = vmatprep.mubr.bf16.mxu0 0
    %3480 = vmatmul.mubr.bf16.gmra.mxu0 %v3401
    %v3481 = vpop.f32.mrf.mxu0
    %v3482 = vadd.f32 0.0, %v3481
    %v3483 = vpop.f32.mrf.mxu0
    %v3484 = vpop.f32.mrf.mxu0
    %v3485 = vadd.f32 0.0, %v3484
    %v3486 = vpop.f32.mrf.mxu0
    %3487 = vmatprep.mubr.bf16.mxu0 0
    %3488 = vmatmul.mubr.bf16.gmra.mxu0 %v3404
    %v3489 = vpop.f32.mrf.mxu0
    %v3490 = vadd.f32 0.0, %v3489
    %v3491 = vpop.f32.mrf.mxu0
    %v3492 = vpop.f32.mrf.mxu0
    %v3493 = vadd.f32 0.0, %v3492
    %v3494 = vpop.f32.mrf.mxu0
    %3495 = vmatprep.mubr.bf16.mxu0 0
    %3496 = vmatmul.mubr.bf16.gmra.mxu0 %v3407
    %v3497 = vpop.f32.mrf.mxu0
    %v3498 = vadd.f32 0.0, %v3497
    %v3499 = vpop.f32.mrf.mxu0
    %v3500 = vpop.f32.mrf.mxu0
    %v3501 = vadd.f32 0.0, %v3500
    %v3502 = vpop.f32.mrf.mxu0
    %3503 = vmatprep.mubr.bf16.mxu0 0
    %3504 = vmatmul.mubr.bf16.gmra.mxu0 %v3410
    %v3505 = vpop.f32.mrf.mxu0
    %v3506 = vadd.f32 0.0, %v3505
    %v3507 = vpop.f32.mrf.mxu0
    %v3508 = vpop.f32.mrf.mxu0
    %v3509 = vadd.f32 0.0, %v3508
    %v3510 = vpop.f32.mrf.mxu0
    %3511 = vmatprep.mubr.bf16.mxu0 0
    %3512 = vmatmul.mubr.bf16.gmra.mxu0 %v3413
    %v3513 = vpop.f32.mrf.mxu0
    %v3514 = vadd.f32 0.0, %v3513
    %v3515 = vpop.f32.mrf.mxu0
    %v3516 = vpop.f32.mrf.mxu0
    %v3517 = vadd.f32 0.0, %v3516
    %v3518 = vpop.f32.mrf.mxu0
    %3519 = vdwg.mxu0
    %v3520 = vpack.c.bf16 %v3453, %v3450
    %v3521 = vpack.c.bf16 %v3461, %v3458
    %v3522 = vpack.c.bf16 %v3469, %v3466
    %v3523 = vpack.c.bf16 %v3477, %v3474
    %v3524 = vpack.c.bf16 %v3485, %v3482
    %v3525 = vpack.c.bf16 %v3493, %v3490
    %v3526 = vpack.c.bf16 %v3501, %v3498
    %v3527 = vpack.c.bf16 %v3509, %v3506
    %v3528 = vpack.c.bf16 %v3517, %v3514
    %3529 = vmatprep.subr.bf16.mxu0 0
    %3530 = vmatpush1.bf16.msra.mxu0 0
    %3531 = vmatprep.subr.bf16.mxu0 0
    %3532 = vmatpush1.bf16.msra.mxu0 0
    %3533 = vmatprep.subr.bf16.mxu0 0
    %3534 = vmatpush1.bf16.msra.mxu0 0
    %3535 = vmatprep.subr.bf16.mxu0 0
    %3536 = vmatpush1.bf16.msra.mxu0 0
    %3537 = vmatprep.subr.bf16.mxu0 0
    %3538 = vmatpush1.bf16.msra.mxu0 %v3323
    %3539 = vmatprep.subr.bf16.mxu0 0
    %3540 = vmatpush1.bf16.msra.mxu0 %v3322
    %3541 = vmatprep.subr.bf16.mxu0 0
    %3542 = vmatpush1.bf16.msra.mxu0 %v3321
    %3543 = vmatprep.subr.bf16.mxu0 0
    %3544 = vmatpush1.bf16.msra.mxu0 %v3320
    %3545 = vmatprep.subr.bf16.mxu0 0
    %3546 = vmatpush2.bf16.msra.mxu0 0
    %3547 = vmatprep.subr.bf16.mxu0 0
    %3548 = vmatpush2.bf16.msra.mxu0 0
    %3549 = vmatprep.subr.bf16.mxu0 0
    %3550 = vmatpush2.bf16.msra.mxu0 0
    %3551 = vmatprep.subr.bf16.mxu0 0
    %3552 = vmatpush2.bf16.msra.mxu0 0
    %3553 = vmatprep.subr.bf16.mxu0 0
    %3554 = vmatpush2.bf16.msra.mxu0 0
    %3555 = vmatprep.subr.bf16.mxu0 0
    %3556 = vmatpush2.bf16.msra.mxu0 0
    %3557 = vmatprep.subr.bf16.mxu0 0
    %3558 = vmatpush2.bf16.msra.mxu0 0
    %3559 = vmatprep.subr.bf16.mxu0 0
    %3560 = vmatpush2.bf16.msra.mxu0 0
    %3561 = vmatprep.mubr.bf16.mxu0 0
    %3562 = vmatmul.mubr.bf16.gmra.mxu0 %v3389
    %v3563 = vpop.f32.mrf.mxu0
    %v3564 = vadd.f32 0.0, %v3563
    %v3565 = vpop.f32.mrf.mxu0
    %v3566 = vpop.f32.mrf.mxu0
    %v3567 = vadd.f32 0.0, %v3566
    %v3568 = vpop.f32.mrf.mxu0
    %3569 = vmatprep.mubr.bf16.mxu0 0
    %3570 = vmatmul.mubr.bf16.gmra.mxu0 %v3392
    %v3571 = vpop.f32.mrf.mxu0
    %v3572 = vadd.f32 0.0, %v3571
    %v3573 = vpop.f32.mrf.mxu0
    %v3574 = vpop.f32.mrf.mxu0
    %v3575 = vadd.f32 0.0, %v3574
    %v3576 = vpop.f32.mrf.mxu0
    %3577 = vmatprep.mubr.bf16.mxu0 0
    %3578 = vmatmul.mubr.bf16.gmra.mxu0 %v3395
    %v3579 = vpop.f32.mrf.mxu0
    %v3580 = vadd.f32 0.0, %v3579
    %v3581 = vpop.f32.mrf.mxu0
    %v3582 = vpop.f32.mrf.mxu0
    %v3583 = vadd.f32 0.0, %v3582
    %v3584 = vpop.f32.mrf.mxu0
    %3585 = vmatprep.mubr.bf16.mxu0 0
    %3586 = vmatmul.mubr.bf16.gmra.mxu0 %v3398
    %v3587 = vpop.f32.mrf.mxu0
    %v3588 = vadd.f32 0.0, %v3587
    %v3589 = vpop.f32.mrf.mxu0
    %v3590 = vpop.f32.mrf.mxu0
    %v3591 = vadd.f32 0.0, %v3590
    %v3592 = vpop.f32.mrf.mxu0
    %3593 = vmatprep.mubr.bf16.mxu0 0
    %3594 = vmatmul.mubr.bf16.gmra.mxu0 %v3401
    %v3595 = vpop.f32.mrf.mxu0
    %v3596 = vadd.f32 0.0, %v3595
    %v3597 = vpop.f32.mrf.mxu0
    %v3598 = vpop.f32.mrf.mxu0
    %v3599 = vadd.f32 0.0, %v3598
    %v3600 = vpop.f32.mrf.mxu0
    %3601 = vmatprep.mubr.bf16.mxu0 0
    %3602 = vmatmul.mubr.bf16.gmra.mxu0 %v3404
    %v3603 = vpop.f32.mrf.mxu0
    %v3604 = vadd.f32 0.0, %v3603
    %v3605 = vpop.f32.mrf.mxu0
    %v3606 = vpop.f32.mrf.mxu0
    %v3607 = vadd.f32 0.0, %v3606
    %v3608 = vpop.f32.mrf.mxu0
    %3609 = vmatprep.mubr.bf16.mxu0 0
    %3610 = vmatmul.mubr.bf16.gmra.mxu0 %v3407
    %v3611 = vpop.f32.mrf.mxu0
    %v3612 = vadd.f32 0.0, %v3611
    %v3613 = vpop.f32.mrf.mxu0
    %v3614 = vpop.f32.mrf.mxu0
    %v3615 = vadd.f32 0.0, %v3614
    %v3616 = vpop.f32.mrf.mxu0
    %3617 = vmatprep.mubr.bf16.mxu0 0
    %3618 = vmatmul.mubr.bf16.gmra.mxu0 %v3410
    %v3619 = vpop.f32.mrf.mxu0
    %v3620 = vadd.f32 0.0, %v3619
    %v3621 = vpop.f32.mrf.mxu0
    %v3622 = vpop.f32.mrf.mxu0
    %v3623 = vadd.f32 0.0, %v3622
    %v3624 = vpop.f32.mrf.mxu0
    %3625 = vmatprep.mubr.bf16.mxu0 0
    %3626 = vmatmul.mubr.bf16.gmra.mxu0 %v3413
    %v3627 = vpop.f32.mrf.mxu0
    %v3628 = vadd.f32 0.0, %v3627
    %v3629 = vpop.f32.mrf.mxu0
    %v3630 = vpop.f32.mrf.mxu0
    %v3631 = vadd.f32 0.0, %v3630
    %v3632 = vpop.f32.mrf.mxu0
    %3633 = vdwg.mxu0
    %v3634 = vpack.c.bf16 %v3567, %v3564
    %v3635 = vpack.c.bf16 %v3575, %v3572
    %v3636 = vpack.c.bf16 %v3583, %v3580
    %v3637 = vpack.c.bf16 %v3591, %v3588
    %v3638 = vpack.c.bf16 %v3599, %v3596
    %v3639 = vpack.c.bf16 %v3607, %v3604
    %v3640 = vpack.c.bf16 %v3615, %v3612
    %v3641 = vpack.c.bf16 %v3623, %v3620
    %v3642 = vpack.c.bf16 %v3631, %v3628
    %v3643 = vld [vmem:[%s8] sm:$0xf]
    %v3644 = vld [vmem:[%s8 + $0x4] sm:$0xf]
    %v3645 = vld [vmem:[%s8 + $0x8] sm:$0xf]
    %v3646 = vld [vmem:[%s8 + $0xc] sm:$0xf]
    %v3647 = vld [vmem:[%s8 + $0x10] sm:$0xf]
    %v3648 = vld [vmem:[%s8 + $0x14] sm:$0xf]
    %v3649 = vld [vmem:[%s8 + $0x18] sm:$0xf]
    %v3650 = vld [vmem:[%s8 + $0x1c] sm:$0xf]
    %s3651 = scalar_lea.vmem %s8, 32
    %v3652 = vld [vmem:[%s3651] sm:$0xf]
    %v3653 = vld [vmem:[%s3651 + $0x4] sm:$0xf]
    %v3654 = vld [vmem:[%s3651 + $0x8] sm:$0xf]
    %v3655 = vld [vmem:[%s3651 + $0xc] sm:$0xf]
    %v3656 = vld [vmem:[%s3651 + $0x10] sm:$0xf]
    %v3657 = vld [vmem:[%s3651 + $0x14] sm:$0xf]
    %v3658 = vld [vmem:[%s3651 + $0x18] sm:$0xf]
    %v3659 = vld [vmem:[%s3651 + $0x1c] sm:$0xf]
    %v3668 = vunpack.c.l.b16 %v3652
    %v3669 = vunpack.c.l.b16 %v3653
    %v3670 = vunpack.c.l.b16 %v3654
    %v3671 = vunpack.c.l.b16 %v3655
    %v3672 = vunpack.c.l.b16 %v3656
    %v3673 = vunpack.c.l.b16 %v3657
    %v3674 = vunpack.c.l.b16 %v3658
    %v3675 = vunpack.c.l.b16 %v3659
    %v3676 = vpack.c.b16 %v3669, %v3668
    %v3677 = vpack.c.b16 %v3671, %v3670
    %v3678 = vpack.c.b16 %v3673, %v3672
    %v3679 = vpack.c.b16 %v3675, %v3674
    %v3685 = vsel %vm3387, %v3521, 0
    %v3688 = vsel %vm3387, %v3635, 0
    %3690 = vmatprep.subr.bf16.mxu0 0
    %3691 = vmatpush1.bf16.msra.mxu0 0
    %3692 = vmatprep.subr.bf16.mxu0 0
    %3693 = vmatpush1.bf16.msra.mxu0 0
    %3694 = vmatprep.subr.bf16.mxu0 0
    %3695 = vmatpush1.bf16.msra.mxu0 0
    %3696 = vmatprep.subr.bf16.mxu0 0
    %3697 = vmatpush1.bf16.msra.mxu0 0
    %3698 = vmatprep.subr.bf16.mxu0 0
    %3699 = vmatpush1.bf16.msra.mxu0 %v3679
    %3700 = vmatprep.subr.bf16.mxu0 0
    %3701 = vmatpush1.bf16.msra.mxu0 %v3678
    %3702 = vmatprep.subr.bf16.mxu0 0
    %3703 = vmatpush1.bf16.msra.mxu0 %v3677
    %3704 = vmatprep.subr.bf16.mxu0 0
    %3705 = vmatpush1.bf16.msra.mxu0 %v3676
    %3706 = vmatprep.subr.bf16.mxu0 0
    %3707 = vmatpush2.bf16.msra.mxu0 0
    %3708 = vmatprep.subr.bf16.mxu0 0
    %3709 = vmatpush2.bf16.msra.mxu0 0
    %3710 = vmatprep.subr.bf16.mxu0 0
    %3711 = vmatpush2.bf16.msra.mxu0 0
    %3712 = vmatprep.subr.bf16.mxu0 0
    %3713 = vmatpush2.bf16.msra.mxu0 0
    %3714 = vmatprep.subr.bf16.mxu0 0
    %3715 = vmatpush2.bf16.msra.mxu0 0
    %3716 = vmatprep.subr.bf16.mxu0 0
    %3717 = vmatpush2.bf16.msra.mxu0 0
    %3718 = vmatprep.subr.bf16.mxu0 0
    %3719 = vmatpush2.bf16.msra.mxu0 0
    %3720 = vmatprep.subr.bf16.mxu0 0
    %3721 = vmatpush2.bf16.msra.mxu0 0
    %3722 = vmatprep.mubr.bf16.mxu0 0
    %3723 = vmatmul.mubr.bf16.gmra.mxu0 %v3685
    %v3724 = vpop.f32.mrf.mxu0
    %v3725 = vadd.f32 0.0, %v3724
    %v3726 = vpop.f32.mrf.mxu0
    %v3727 = vpop.f32.mrf.mxu0
    %v3728 = vadd.f32 0.0, %v3727
    %v3729 = vpop.f32.mrf.mxu0
    %3730 = vmatprep.mubr.bf16.mxu0 0
    %3731 = vmatmul.mubr.bf16.gmra.mxu0 %v3688
    %v3732 = vpop.f32.mrf.mxu0
    %v3733 = vadd.f32 0.0, %v3732
    %v3734 = vpop.f32.mrf.mxu0
    %v3735 = vpop.f32.mrf.mxu0
    %v3736 = vadd.f32 0.0, %v3735
    %v3737 = vpop.f32.mrf.mxu0
    %3738 = vdwg.mxu0
    %v3747 = vunpack.c.l.b16 %v3643
    %v3748 = vunpack.c.l.b16 %v3644
    %v3749 = vunpack.c.l.b16 %v3645
    %v3750 = vunpack.c.l.b16 %v3646
    %v3751 = vunpack.c.l.b16 %v3647
    %v3752 = vunpack.c.l.b16 %v3648
    %v3753 = vunpack.c.l.b16 %v3649
    %v3754 = vunpack.c.l.b16 %v3650
    %v3755 = vpack.c.b16 %v3748, %v3747
    %v3756 = vpack.c.b16 %v3750, %v3749
    %v3757 = vpack.c.b16 %v3752, %v3751
    %v3758 = vpack.c.b16 %v3754, %v3753
    %v3764 = vsel %vm3387, %v3520, 0
    %v3767 = vsel %vm3387, %v3634, 0
    %3769 = vmatprep.subr.bf16.mxu0 0
    %3770 = vmatpush1.bf16.msra.mxu0 0
    %3771 = vmatprep.subr.bf16.mxu0 0
    %3772 = vmatpush1.bf16.msra.mxu0 0
    %3773 = vmatprep.subr.bf16.mxu0 0
    %3774 = vmatpush1.bf16.msra.mxu0 0
    %3775 = vmatprep.subr.bf16.mxu0 0
    %3776 = vmatpush1.bf16.msra.mxu0 0
    %3777 = vmatprep.subr.bf16.mxu0 0
    %3778 = vmatpush1.bf16.msra.mxu0 %v3758
    %3779 = vmatprep.subr.bf16.mxu0 0
    %3780 = vmatpush1.bf16.msra.mxu0 %v3757
    %3781 = vmatprep.subr.bf16.mxu0 0
    %3782 = vmatpush1.bf16.msra.mxu0 %v3756
    %3783 = vmatprep.subr.bf16.mxu0 0
    %3784 = vmatpush1.bf16.msra.mxu0 %v3755
    %3785 = vmatprep.subr.bf16.mxu0 0
    %3786 = vmatpush2.bf16.msra.mxu0 0
    %3787 = vmatprep.subr.bf16.mxu0 0
    %3788 = vmatpush2.bf16.msra.mxu0 0
    %3789 = vmatprep.subr.bf16.mxu0 0
    %3790 = vmatpush2.bf16.msra.mxu0 0
    %3791 = vmatprep.subr.bf16.mxu0 0
    %3792 = vmatpush2.bf16.msra.mxu0 0
    %3793 = vmatprep.subr.bf16.mxu0 0
    %3794 = vmatpush2.bf16.msra.mxu0 0
    %3795 = vmatprep.subr.bf16.mxu0 0
    %3796 = vmatpush2.bf16.msra.mxu0 0
    %3797 = vmatprep.subr.bf16.mxu0 0
    %3798 = vmatpush2.bf16.msra.mxu0 0
    %3799 = vmatprep.subr.bf16.mxu0 0
    %3800 = vmatpush2.bf16.msra.mxu0 0
    %3801 = vmatprep.mubr.bf16.mxu0 0
    %3802 = vmatmul.mubr.bf16.gmra.mxu0 %v3764
    %v3803 = vpop.f32.mrf.mxu0
    %v3804 = vadd.f32 %v3725, %v3803
    %v3805 = vpop.f32.mrf.mxu0
    %v3806 = vpop.f32.mrf.mxu0
    %v3807 = vadd.f32 %v3728, %v3806
    %v3808 = vpop.f32.mrf.mxu0
    %3809 = vmatprep.mubr.bf16.mxu0 0
    %3810 = vmatmul.mubr.bf16.gmra.mxu0 %v3767
    %v3811 = vpop.f32.mrf.mxu0
    %v3812 = vadd.f32 %v3733, %v3811
    %v3813 = vpop.f32.mrf.mxu0
    %v3814 = vpop.f32.mrf.mxu0
    %v3815 = vadd.f32 %v3736, %v3814
    %v3816 = vpop.f32.mrf.mxu0
    %3817 = vdwg.mxu0
    %s3818 = scalar_lea.vmem %s8, 64
    %v3819 = vld [vmem:[%s3818] sm:$0xf]
    %v3820 = vld [vmem:[%s3818 + $0x4] sm:$0xf]
    %v3821 = vld [vmem:[%s3818 + $0x8] sm:$0xf]
    %v3822 = vld [vmem:[%s3818 + $0xc] sm:$0xf]
    %v3823 = vld [vmem:[%s3818 + $0x10] sm:$0xf]
    %v3824 = vld [vmem:[%s3818 + $0x14] sm:$0xf]
    %v3825 = vld [vmem:[%s3818 + $0x18] sm:$0xf]
    %v3826 = vld [vmem:[%s3818 + $0x1c] sm:$0xf]
    %v3835 = vunpack.c.l.b16 %v3819
    %v3836 = vunpack.c.l.b16 %v3820
    %v3837 = vunpack.c.l.b16 %v3821
    %v3838 = vunpack.c.l.b16 %v3822
    %v3839 = vunpack.c.l.b16 %v3823
    %v3840 = vunpack.c.l.b16 %v3824
    %v3841 = vunpack.c.l.b16 %v3825
    %v3842 = vunpack.c.l.b16 %v3826
    %v3843 = vpack.c.b16 %v3836, %v3835
    %v3844 = vpack.c.b16 %v3838, %v3837
    %v3845 = vpack.c.b16 %v3840, %v3839
    %v3846 = vpack.c.b16 %v3842, %v3841
    %v3852 = vsel %vm3387, %v3522, 0
    %v3855 = vsel %vm3387, %v3636, 0
    %3857 = vmatprep.subr.bf16.mxu0 0
    %3858 = vmatpush1.bf16.msra.mxu0 0
    %3859 = vmatprep.subr.bf16.mxu0 0
    %3860 = vmatpush1.bf16.msra.mxu0 0
    %3861 = vmatprep.subr.bf16.mxu0 0
    %3862 = vmatpush1.bf16.msra.mxu0 0
    %3863 = vmatprep.subr.bf16.mxu0 0
    %3864 = vmatpush1.bf16.msra.mxu0 0
    %3865 = vmatprep.subr.bf16.mxu0 0
    %3866 = vmatpush1.bf16.msra.mxu0 %v3846
    %3867 = vmatprep.subr.bf16.mxu0 0
    %3868 = vmatpush1.bf16.msra.mxu0 %v3845
    %3869 = vmatprep.subr.bf16.mxu0 0
    %3870 = vmatpush1.bf16.msra.mxu0 %v3844
    %3871 = vmatprep.subr.bf16.mxu0 0
    %3872 = vmatpush1.bf16.msra.mxu0 %v3843
    %3873 = vmatprep.subr.bf16.mxu0 0
    %3874 = vmatpush2.bf16.msra.mxu0 0
    %3875 = vmatprep.subr.bf16.mxu0 0
    %3876 = vmatpush2.bf16.msra.mxu0 0
    %3877 = vmatprep.subr.bf16.mxu0 0
    %3878 = vmatpush2.bf16.msra.mxu0 0
    %3879 = vmatprep.subr.bf16.mxu0 0
    %3880 = vmatpush2.bf16.msra.mxu0 0
    %3881 = vmatprep.subr.bf16.mxu0 0
    %3882 = vmatpush2.bf16.msra.mxu0 0
    %3883 = vmatprep.subr.bf16.mxu0 0
    %3884 = vmatpush2.bf16.msra.mxu0 0
    %3885 = vmatprep.subr.bf16.mxu0 0
    %3886 = vmatpush2.bf16.msra.mxu0 0
    %3887 = vmatprep.subr.bf16.mxu0 0
    %3888 = vmatpush2.bf16.msra.mxu0 0
    %3889 = vmatprep.mubr.bf16.mxu0 0
    %3890 = vmatmul.mubr.bf16.gmra.mxu0 %v3852
    %v3891 = vpop.f32.mrf.mxu0
    %v3892 = vadd.f32 0.0, %v3891
    %v3893 = vpop.f32.mrf.mxu0
    %v3894 = vpop.f32.mrf.mxu0
    %v3895 = vadd.f32 0.0, %v3894
    %v3896 = vpop.f32.mrf.mxu0
    %3897 = vmatprep.mubr.bf16.mxu0 0
    %3898 = vmatmul.mubr.bf16.gmra.mxu0 %v3855
    %v3899 = vpop.f32.mrf.mxu0
    %v3900 = vadd.f32 0.0, %v3899
    %v3901 = vpop.f32.mrf.mxu0
    %v3902 = vpop.f32.mrf.mxu0
    %v3903 = vadd.f32 0.0, %v3902
    %v3904 = vpop.f32.mrf.mxu0
    %3905 = vdwg.mxu0
    %v3906 = vadd.f32 %v3804, %v3892
    %v3907 = vadd.f32 %v3807, %v3895
    %v3908 = vadd.f32 %v3812, %v3900
    %v3909 = vadd.f32 %v3815, %v3903
    %s3910 = scalar_lea.vmem %s8, 96
    %v3911 = vld [vmem:[%s3910] sm:$0xf]
    %v3912 = vld [vmem:[%s3910 + $0x4] sm:$0xf]
    %v3913 = vld [vmem:[%s3910 + $0x8] sm:$0xf]
    %v3914 = vld [vmem:[%s3910 + $0xc] sm:$0xf]
    %v3915 = vld [vmem:[%s3910 + $0x10] sm:$0xf]
    %v3916 = vld [vmem:[%s3910 + $0x14] sm:$0xf]
    %v3917 = vld [vmem:[%s3910 + $0x18] sm:$0xf]
    %v3918 = vld [vmem:[%s3910 + $0x1c] sm:$0xf]
    %v3927 = vunpack.c.l.b16 %v3911
    %v3928 = vunpack.c.l.b16 %v3912
    %v3929 = vunpack.c.l.b16 %v3913
    %v3930 = vunpack.c.l.b16 %v3914
    %v3931 = vunpack.c.l.b16 %v3915
    %v3932 = vunpack.c.l.b16 %v3916
    %v3933 = vunpack.c.l.b16 %v3917
    %v3934 = vunpack.c.l.b16 %v3918
    %v3935 = vpack.c.b16 %v3928, %v3927
    %v3936 = vpack.c.b16 %v3930, %v3929
    %v3937 = vpack.c.b16 %v3932, %v3931
    %v3938 = vpack.c.b16 %v3934, %v3933
    %v3944 = vsel %vm3387, %v3523, 0
    %v3947 = vsel %vm3387, %v3637, 0
    %3949 = vmatprep.subr.bf16.mxu0 0
    %3950 = vmatpush1.bf16.msra.mxu0 0
    %3951 = vmatprep.subr.bf16.mxu0 0
    %3952 = vmatpush1.bf16.msra.mxu0 0
    %3953 = vmatprep.subr.bf16.mxu0 0
    %3954 = vmatpush1.bf16.msra.mxu0 0
    %3955 = vmatprep.subr.bf16.mxu0 0
    %3956 = vmatpush1.bf16.msra.mxu0 0
    %3957 = vmatprep.subr.bf16.mxu0 0
    %3958 = vmatpush1.bf16.msra.mxu0 %v3938
    %3959 = vmatprep.subr.bf16.mxu0 0
    %3960 = vmatpush1.bf16.msra.mxu0 %v3937
    %3961 = vmatprep.subr.bf16.mxu0 0
    %3962 = vmatpush1.bf16.msra.mxu0 %v3936
    %3963 = vmatprep.subr.bf16.mxu0 0
    %3964 = vmatpush1.bf16.msra.mxu0 %v3935
    %3965 = vmatprep.subr.bf16.mxu0 0
    %3966 = vmatpush2.bf16.msra.mxu0 0
    %3967 = vmatprep.subr.bf16.mxu0 0
    %3968 = vmatpush2.bf16.msra.mxu0 0
    %3969 = vmatprep.subr.bf16.mxu0 0
    %3970 = vmatpush2.bf16.msra.mxu0 0
    %3971 = vmatprep.subr.bf16.mxu0 0
    %3972 = vmatpush2.bf16.msra.mxu0 0
    %3973 = vmatprep.subr.bf16.mxu0 0
    %3974 = vmatpush2.bf16.msra.mxu0 0
    %3975 = vmatprep.subr.bf16.mxu0 0
    %3976 = vmatpush2.bf16.msra.mxu0 0
    %3977 = vmatprep.subr.bf16.mxu0 0
    %3978 = vmatpush2.bf16.msra.mxu0 0
    %3979 = vmatprep.subr.bf16.mxu0 0
    %3980 = vmatpush2.bf16.msra.mxu0 0
    %3981 = vmatprep.mubr.bf16.mxu0 0
    %3982 = vmatmul.mubr.bf16.gmra.mxu0 %v3944
    %v3983 = vpop.f32.mrf.mxu0
    %v3984 = vadd.f32 0.0, %v3983
    %v3985 = vpop.f32.mrf.mxu0
    %v3986 = vpop.f32.mrf.mxu0
    %v3987 = vadd.f32 0.0, %v3986
    %v3988 = vpop.f32.mrf.mxu0
    %3989 = vmatprep.mubr.bf16.mxu0 0
    %3990 = vmatmul.mubr.bf16.gmra.mxu0 %v3947
    %v3991 = vpop.f32.mrf.mxu0
    %v3992 = vadd.f32 0.0, %v3991
    %v3993 = vpop.f32.mrf.mxu0
    %v3994 = vpop.f32.mrf.mxu0
    %v3995 = vadd.f32 0.0, %v3994
    %v3996 = vpop.f32.mrf.mxu0
    %3997 = vdwg.mxu0
    %v3998 = vadd.f32 %v3906, %v3984
    %v3999 = vadd.f32 %v3907, %v3987
    %v4000 = vadd.f32 %v3908, %v3992
    %v4001 = vadd.f32 %v3909, %v3995
    %s4002 = scalar_lea.vmem %s8, 128
    %v4003 = vld [vmem:[%s4002] sm:$0xf]
    %v4004 = vld [vmem:[%s4002 + $0x4] sm:$0xf]
    %v4005 = vld [vmem:[%s4002 + $0x8] sm:$0xf]
    %v4006 = vld [vmem:[%s4002 + $0xc] sm:$0xf]
    %v4007 = vld [vmem:[%s4002 + $0x10] sm:$0xf]
    %v4008 = vld [vmem:[%s4002 + $0x14] sm:$0xf]
    %v4009 = vld [vmem:[%s4002 + $0x18] sm:$0xf]
    %v4010 = vld [vmem:[%s4002 + $0x1c] sm:$0xf]
    %v4019 = vunpack.c.l.b16 %v4003
    %v4020 = vunpack.c.l.b16 %v4004
    %v4021 = vunpack.c.l.b16 %v4005
    %v4022 = vunpack.c.l.b16 %v4006
    %v4023 = vunpack.c.l.b16 %v4007
    %v4024 = vunpack.c.l.b16 %v4008
    %v4025 = vunpack.c.l.b16 %v4009
    %v4026 = vunpack.c.l.b16 %v4010
    %v4027 = vpack.c.b16 %v4020, %v4019
    %v4028 = vpack.c.b16 %v4022, %v4021
    %v4029 = vpack.c.b16 %v4024, %v4023
    %v4030 = vpack.c.b16 %v4026, %v4025
    %v4036 = vsel %vm3387, %v3524, 0
    %v4039 = vsel %vm3387, %v3638, 0
    %4041 = vmatprep.subr.bf16.mxu0 0
    %4042 = vmatpush1.bf16.msra.mxu0 0
    %4043 = vmatprep.subr.bf16.mxu0 0
    %4044 = vmatpush1.bf16.msra.mxu0 0
    %4045 = vmatprep.subr.bf16.mxu0 0
    %4046 = vmatpush1.bf16.msra.mxu0 0
    %4047 = vmatprep.subr.bf16.mxu0 0
    %4048 = vmatpush1.bf16.msra.mxu0 0
    %4049 = vmatprep.subr.bf16.mxu0 0
    %4050 = vmatpush1.bf16.msra.mxu0 %v4030
    %4051 = vmatprep.subr.bf16.mxu0 0
    %4052 = vmatpush1.bf16.msra.mxu0 %v4029
    %4053 = vmatprep.subr.bf16.mxu0 0
    %4054 = vmatpush1.bf16.msra.mxu0 %v4028
    %4055 = vmatprep.subr.bf16.mxu0 0
    %4056 = vmatpush1.bf16.msra.mxu0 %v4027
    %4057 = vmatprep.subr.bf16.mxu0 0
    %4058 = vmatpush2.bf16.msra.mxu0 0
    %4059 = vmatprep.subr.bf16.mxu0 0
    %4060 = vmatpush2.bf16.msra.mxu0 0
    %4061 = vmatprep.subr.bf16.mxu0 0
    %4062 = vmatpush2.bf16.msra.mxu0 0
    %4063 = vmatprep.subr.bf16.mxu0 0
    %4064 = vmatpush2.bf16.msra.mxu0 0
    %4065 = vmatprep.subr.bf16.mxu0 0
    %4066 = vmatpush2.bf16.msra.mxu0 0
    %4067 = vmatprep.subr.bf16.mxu0 0
    %4068 = vmatpush2.bf16.msra.mxu0 0
    %4069 = vmatprep.subr.bf16.mxu0 0
    %4070 = vmatpush2.bf16.msra.mxu0 0
    %4071 = vmatprep.subr.bf16.mxu0 0
    %4072 = vmatpush2.bf16.msra.mxu0 0
    %4073 = vmatprep.mubr.bf16.mxu0 0
    %4074 = vmatmul.mubr.bf16.gmra.mxu0 %v4036
    %v4075 = vpop.f32.mrf.mxu0
    %v4076 = vadd.f32 0.0, %v4075
    %v4077 = vpop.f32.mrf.mxu0
    %v4078 = vpop.f32.mrf.mxu0
    %v4079 = vadd.f32 0.0, %v4078
    %v4080 = vpop.f32.mrf.mxu0
    %4081 = vmatprep.mubr.bf16.mxu0 0
    %4082 = vmatmul.mubr.bf16.gmra.mxu0 %v4039
    %v4083 = vpop.f32.mrf.mxu0
    %v4084 = vadd.f32 0.0, %v4083
    %v4085 = vpop.f32.mrf.mxu0
    %v4086 = vpop.f32.mrf.mxu0
    %v4087 = vadd.f32 0.0, %v4086
    %v4088 = vpop.f32.mrf.mxu0
    %4089 = vdwg.mxu0
    %v4090 = vadd.f32 %v3998, %v4076
    %v4091 = vadd.f32 %v3999, %v4079
    %v4092 = vadd.f32 %v4000, %v4084
    %v4093 = vadd.f32 %v4001, %v4087
    %s4094 = scalar_lea.vmem %s8, 160
    %v4095 = vld [vmem:[%s4094] sm:$0xf]
    %v4096 = vld [vmem:[%s4094 + $0x4] sm:$0xf]
    %v4097 = vld [vmem:[%s4094 + $0x8] sm:$0xf]
    %v4098 = vld [vmem:[%s4094 + $0xc] sm:$0xf]
    %v4099 = vld [vmem:[%s4094 + $0x10] sm:$0xf]
    %v4100 = vld [vmem:[%s4094 + $0x14] sm:$0xf]
    %v4101 = vld [vmem:[%s4094 + $0x18] sm:$0xf]
    %v4102 = vld [vmem:[%s4094 + $0x1c] sm:$0xf]
    %v4111 = vunpack.c.l.b16 %v4095
    %v4112 = vunpack.c.l.b16 %v4096
    %v4113 = vunpack.c.l.b16 %v4097
    %v4114 = vunpack.c.l.b16 %v4098
    %v4115 = vunpack.c.l.b16 %v4099
    %v4116 = vunpack.c.l.b16 %v4100
    %v4117 = vunpack.c.l.b16 %v4101
    %v4118 = vunpack.c.l.b16 %v4102
    %v4119 = vpack.c.b16 %v4112, %v4111
    %v4120 = vpack.c.b16 %v4114, %v4113
    %v4121 = vpack.c.b16 %v4116, %v4115
    %v4122 = vpack.c.b16 %v4118, %v4117
    %v4128 = vsel %vm3387, %v3525, 0
    %v4131 = vsel %vm3387, %v3639, 0
    %4133 = vmatprep.subr.bf16.mxu0 0
    %4134 = vmatpush1.bf16.msra.mxu0 0
    %4135 = vmatprep.subr.bf16.mxu0 0
    %4136 = vmatpush1.bf16.msra.mxu0 0
    %4137 = vmatprep.subr.bf16.mxu0 0
    %4138 = vmatpush1.bf16.msra.mxu0 0
    %4139 = vmatprep.subr.bf16.mxu0 0
    %4140 = vmatpush1.bf16.msra.mxu0 0
    %4141 = vmatprep.subr.bf16.mxu0 0
    %4142 = vmatpush1.bf16.msra.mxu0 %v4122
    %4143 = vmatprep.subr.bf16.mxu0 0
    %4144 = vmatpush1.bf16.msra.mxu0 %v4121
    %4145 = vmatprep.subr.bf16.mxu0 0
    %4146 = vmatpush1.bf16.msra.mxu0 %v4120
    %4147 = vmatprep.subr.bf16.mxu0 0
    %4148 = vmatpush1.bf16.msra.mxu0 %v4119
    %4149 = vmatprep.subr.bf16.mxu0 0
    %4150 = vmatpush2.bf16.msra.mxu0 0
    %4151 = vmatprep.subr.bf16.mxu0 0
    %4152 = vmatpush2.bf16.msra.mxu0 0
    %4153 = vmatprep.subr.bf16.mxu0 0
    %4154 = vmatpush2.bf16.msra.mxu0 0
    %4155 = vmatprep.subr.bf16.mxu0 0
    %4156 = vmatpush2.bf16.msra.mxu0 0
    %4157 = vmatprep.subr.bf16.mxu0 0
    %4158 = vmatpush2.bf16.msra.mxu0 0
    %4159 = vmatprep.subr.bf16.mxu0 0
    %4160 = vmatpush2.bf16.msra.mxu0 0
    %4161 = vmatprep.subr.bf16.mxu0 0
    %4162 = vmatpush2.bf16.msra.mxu0 0
    %4163 = vmatprep.subr.bf16.mxu0 0
    %4164 = vmatpush2.bf16.msra.mxu0 0
    %4165 = vmatprep.mubr.bf16.mxu0 0
    %4166 = vmatmul.mubr.bf16.gmra.mxu0 %v4128
    %v4167 = vpop.f32.mrf.mxu0
    %v4168 = vadd.f32 0.0, %v4167
    %v4169 = vpop.f32.mrf.mxu0
    %v4170 = vpop.f32.mrf.mxu0
    %v4171 = vadd.f32 0.0, %v4170
    %v4172 = vpop.f32.mrf.mxu0
    %4173 = vmatprep.mubr.bf16.mxu0 0
    %4174 = vmatmul.mubr.bf16.gmra.mxu0 %v4131
    %v4175 = vpop.f32.mrf.mxu0
    %v4176 = vadd.f32 0.0, %v4175
    %v4177 = vpop.f32.mrf.mxu0
    %v4178 = vpop.f32.mrf.mxu0
    %v4179 = vadd.f32 0.0, %v4178
    %v4180 = vpop.f32.mrf.mxu0
    %4181 = vdwg.mxu0
    %v4182 = vadd.f32 %v4090, %v4168
    %v4183 = vadd.f32 %v4091, %v4171
    %v4184 = vadd.f32 %v4092, %v4176
    %v4185 = vadd.f32 %v4093, %v4179
    %s4186 = scalar_lea.vmem %s8, 192
    %v4187 = vld [vmem:[%s4186] sm:$0xf]
    %v4188 = vld [vmem:[%s4186 + $0x4] sm:$0xf]
    %v4189 = vld [vmem:[%s4186 + $0x8] sm:$0xf]
    %v4190 = vld [vmem:[%s4186 + $0xc] sm:$0xf]
    %v4191 = vld [vmem:[%s4186 + $0x10] sm:$0xf]
    %v4192 = vld [vmem:[%s4186 + $0x14] sm:$0xf]
    %v4193 = vld [vmem:[%s4186 + $0x18] sm:$0xf]
    %v4194 = vld [vmem:[%s4186 + $0x1c] sm:$0xf]
    %v4203 = vunpack.c.l.b16 %v4187
    %v4204 = vunpack.c.l.b16 %v4188
    %v4205 = vunpack.c.l.b16 %v4189
    %v4206 = vunpack.c.l.b16 %v4190
    %v4207 = vunpack.c.l.b16 %v4191
    %v4208 = vunpack.c.l.b16 %v4192
    %v4209 = vunpack.c.l.b16 %v4193
    %v4210 = vunpack.c.l.b16 %v4194
    %v4211 = vpack.c.b16 %v4204, %v4203
    %v4212 = vpack.c.b16 %v4206, %v4205
    %v4213 = vpack.c.b16 %v4208, %v4207
    %v4214 = vpack.c.b16 %v4210, %v4209
    %v4220 = vsel %vm3387, %v3526, 0
    %v4223 = vsel %vm3387, %v3640, 0
    %4225 = vmatprep.subr.bf16.mxu0 0
    %4226 = vmatpush1.bf16.msra.mxu0 0
    %4227 = vmatprep.subr.bf16.mxu0 0
    %4228 = vmatpush1.bf16.msra.mxu0 0
    %4229 = vmatprep.subr.bf16.mxu0 0
    %4230 = vmatpush1.bf16.msra.mxu0 0
    %4231 = vmatprep.subr.bf16.mxu0 0
    %4232 = vmatpush1.bf16.msra.mxu0 0
    %4233 = vmatprep.subr.bf16.mxu0 0
    %4234 = vmatpush1.bf16.msra.mxu0 %v4214
    %4235 = vmatprep.subr.bf16.mxu0 0
    %4236 = vmatpush1.bf16.msra.mxu0 %v4213
    %4237 = vmatprep.subr.bf16.mxu0 0
    %4238 = vmatpush1.bf16.msra.mxu0 %v4212
    %4239 = vmatprep.subr.bf16.mxu0 0
    %4240 = vmatpush1.bf16.msra.mxu0 %v4211
    %4241 = vmatprep.subr.bf16.mxu0 0
    %4242 = vmatpush2.bf16.msra.mxu0 0
    %4243 = vmatprep.subr.bf16.mxu0 0
    %4244 = vmatpush2.bf16.msra.mxu0 0
    %4245 = vmatprep.subr.bf16.mxu0 0
    %4246 = vmatpush2.bf16.msra.mxu0 0
    %4247 = vmatprep.subr.bf16.mxu0 0
    %4248 = vmatpush2.bf16.msra.mxu0 0
    %4249 = vmatprep.subr.bf16.mxu0 0
    %4250 = vmatpush2.bf16.msra.mxu0 0
    %4251 = vmatprep.subr.bf16.mxu0 0
    %4252 = vmatpush2.bf16.msra.mxu0 0
    %4253 = vmatprep.subr.bf16.mxu0 0
    %4254 = vmatpush2.bf16.msra.mxu0 0
    %4255 = vmatprep.subr.bf16.mxu0 0
    %4256 = vmatpush2.bf16.msra.mxu0 0
    %4257 = vmatprep.mubr.bf16.mxu0 0
    %4258 = vmatmul.mubr.bf16.gmra.mxu0 %v4220
    %v4259 = vpop.f32.mrf.mxu0
    %v4260 = vadd.f32 0.0, %v4259
    %v4261 = vpop.f32.mrf.mxu0
    %v4262 = vpop.f32.mrf.mxu0
    %v4263 = vadd.f32 0.0, %v4262
    %v4264 = vpop.f32.mrf.mxu0
    %4265 = vmatprep.mubr.bf16.mxu0 0
    %4266 = vmatmul.mubr.bf16.gmra.mxu0 %v4223
    %v4267 = vpop.f32.mrf.mxu0
    %v4268 = vadd.f32 0.0, %v4267
    %v4269 = vpop.f32.mrf.mxu0
    %v4270 = vpop.f32.mrf.mxu0
    %v4271 = vadd.f32 0.0, %v4270
    %v4272 = vpop.f32.mrf.mxu0
    %4273 = vdwg.mxu0
    %v4274 = vadd.f32 %v4182, %v4260
    %v4275 = vadd.f32 %v4183, %v4263
    %v4276 = vadd.f32 %v4184, %v4268
    %v4277 = vadd.f32 %v4185, %v4271
    %s4278 = scalar_lea.vmem %s8, 224
    %v4279 = vld [vmem:[%s4278] sm:$0xf]
    %v4280 = vld [vmem:[%s4278 + $0x4] sm:$0xf]
    %v4281 = vld [vmem:[%s4278 + $0x8] sm:$0xf]
    %v4282 = vld [vmem:[%s4278 + $0xc] sm:$0xf]
    %v4283 = vld [vmem:[%s4278 + $0x10] sm:$0xf]
    %v4284 = vld [vmem:[%s4278 + $0x14] sm:$0xf]
    %v4285 = vld [vmem:[%s4278 + $0x18] sm:$0xf]
    %v4286 = vld [vmem:[%s4278 + $0x1c] sm:$0xf]
    %v4295 = vunpack.c.l.b16 %v4279
    %v4296 = vunpack.c.l.b16 %v4280
    %v4297 = vunpack.c.l.b16 %v4281
    %v4298 = vunpack.c.l.b16 %v4282
    %v4299 = vunpack.c.l.b16 %v4283
    %v4300 = vunpack.c.l.b16 %v4284
    %v4301 = vunpack.c.l.b16 %v4285
    %v4302 = vunpack.c.l.b16 %v4286
    %v4303 = vpack.c.b16 %v4296, %v4295
    %v4304 = vpack.c.b16 %v4298, %v4297
    %v4305 = vpack.c.b16 %v4300, %v4299
    %v4306 = vpack.c.b16 %v4302, %v4301
    %v4312 = vsel %vm3387, %v3527, 0
    %v4315 = vsel %vm3387, %v3641, 0
    %4317 = vmatprep.subr.bf16.mxu0 0
    %4318 = vmatpush1.bf16.msra.mxu0 0
    %4319 = vmatprep.subr.bf16.mxu0 0
    %4320 = vmatpush1.bf16.msra.mxu0 0
    %4321 = vmatprep.subr.bf16.mxu0 0
    %4322 = vmatpush1.bf16.msra.mxu0 0
    %4323 = vmatprep.subr.bf16.mxu0 0
    %4324 = vmatpush1.bf16.msra.mxu0 0
    %4325 = vmatprep.subr.bf16.mxu0 0
    %4326 = vmatpush1.bf16.msra.mxu0 %v4306
    %4327 = vmatprep.subr.bf16.mxu0 0
    %4328 = vmatpush1.bf16.msra.mxu0 %v4305
    %4329 = vmatprep.subr.bf16.mxu0 0
    %4330 = vmatpush1.bf16.msra.mxu0 %v4304
    %4331 = vmatprep.subr.bf16.mxu0 0
    %4332 = vmatpush1.bf16.msra.mxu0 %v4303
    %4333 = vmatprep.subr.bf16.mxu0 0
    %4334 = vmatpush2.bf16.msra.mxu0 0
    %4335 = vmatprep.subr.bf16.mxu0 0
    %4336 = vmatpush2.bf16.msra.mxu0 0
    %4337 = vmatprep.subr.bf16.mxu0 0
    %4338 = vmatpush2.bf16.msra.mxu0 0
    %4339 = vmatprep.subr.bf16.mxu0 0
    %4340 = vmatpush2.bf16.msra.mxu0 0
    %4341 = vmatprep.subr.bf16.mxu0 0
    %4342 = vmatpush2.bf16.msra.mxu0 0
    %4343 = vmatprep.subr.bf16.mxu0 0
    %4344 = vmatpush2.bf16.msra.mxu0 0
    %4345 = vmatprep.subr.bf16.mxu0 0
    %4346 = vmatpush2.bf16.msra.mxu0 0
    %4347 = vmatprep.subr.bf16.mxu0 0
    %4348 = vmatpush2.bf16.msra.mxu0 0
    %4349 = vmatprep.mubr.bf16.mxu0 0
    %4350 = vmatmul.mubr.bf16.gmra.mxu0 %v4312
    %v4351 = vpop.f32.mrf.mxu0
    %v4352 = vadd.f32 0.0, %v4351
    %v4353 = vpop.f32.mrf.mxu0
    %v4354 = vpop.f32.mrf.mxu0
    %v4355 = vadd.f32 0.0, %v4354
    %v4356 = vpop.f32.mrf.mxu0
    %4357 = vmatprep.mubr.bf16.mxu0 0
    %4358 = vmatmul.mubr.bf16.gmra.mxu0 %v4315
    %v4359 = vpop.f32.mrf.mxu0
    %v4360 = vadd.f32 0.0, %v4359
    %v4361 = vpop.f32.mrf.mxu0
    %v4362 = vpop.f32.mrf.mxu0
    %v4363 = vadd.f32 0.0, %v4362
    %v4364 = vpop.f32.mrf.mxu0
    %4365 = vdwg.mxu0
    %v4366 = vadd.f32 %v4274, %v4352
    %v4367 = vadd.f32 %v4275, %v4355
    %v4368 = vadd.f32 %v4276, %v4360
    %v4369 = vadd.f32 %v4277, %v4363
    %s4370 = scalar_lea.vmem %s8, 256
    %v4371 = vld [vmem:[%s4370] sm:$0xf]
    %v4372 = vld [vmem:[%s4370 + $0x4] sm:$0xf]
    %v4373 = vld [vmem:[%s4370 + $0x8] sm:$0xf]
    %v4374 = vld [vmem:[%s4370 + $0xc] sm:$0xf]
    %v4375 = vld [vmem:[%s4370 + $0x10] sm:$0xf]
    %v4376 = vld [vmem:[%s4370 + $0x14] sm:$0xf]
    %v4377 = vld [vmem:[%s4370 + $0x18] sm:$0xf]
    %v4378 = vld [vmem:[%s4370 + $0x1c] sm:$0xf]
    %v4387 = vunpack.c.l.b16 %v4371
    %v4388 = vunpack.c.l.b16 %v4372
    %v4389 = vunpack.c.l.b16 %v4373
    %v4390 = vunpack.c.l.b16 %v4374
    %v4391 = vunpack.c.l.b16 %v4375
    %v4392 = vunpack.c.l.b16 %v4376
    %v4393 = vunpack.c.l.b16 %v4377
    %v4394 = vunpack.c.l.b16 %v4378
    %v4395 = vpack.c.b16 %v4388, %v4387
    %v4396 = vpack.c.b16 %v4390, %v4389
    %v4397 = vpack.c.b16 %v4392, %v4391
    %v4398 = vpack.c.b16 %v4394, %v4393
    %v4404 = vsel %vm3387, %v3528, 0
    %v4407 = vsel %vm3387, %v3642, 0
    %4409 = vmatprep.subr.bf16.mxu0 0
    %4410 = vmatpush1.bf16.msra.mxu0 0
    %4411 = vmatprep.subr.bf16.mxu0 0
    %4412 = vmatpush1.bf16.msra.mxu0 0
    %4413 = vmatprep.subr.bf16.mxu0 0
    %4414 = vmatpush1.bf16.msra.mxu0 0
    %4415 = vmatprep.subr.bf16.mxu0 0
    %4416 = vmatpush1.bf16.msra.mxu0 0
    %4417 = vmatprep.subr.bf16.mxu0 0
    %4418 = vmatpush1.bf16.msra.mxu0 %v4398
    %4419 = vmatprep.subr.bf16.mxu0 0
    %4420 = vmatpush1.bf16.msra.mxu0 %v4397
    %4421 = vmatprep.subr.bf16.mxu0 0
    %4422 = vmatpush1.bf16.msra.mxu0 %v4396
    %4423 = vmatprep.subr.bf16.mxu0 0
    %4424 = vmatpush1.bf16.msra.mxu0 %v4395
    %4425 = vmatprep.subr.bf16.mxu0 0
    %4426 = vmatpush2.bf16.msra.mxu0 0
    %4427 = vmatprep.subr.bf16.mxu0 0
    %4428 = vmatpush2.bf16.msra.mxu0 0
    %4429 = vmatprep.subr.bf16.mxu0 0
    %4430 = vmatpush2.bf16.msra.mxu0 0
    %4431 = vmatprep.subr.bf16.mxu0 0
    %4432 = vmatpush2.bf16.msra.mxu0 0
    %4433 = vmatprep.subr.bf16.mxu0 0
    %4434 = vmatpush2.bf16.msra.mxu0 0
    %4435 = vmatprep.subr.bf16.mxu0 0
    %4436 = vmatpush2.bf16.msra.mxu0 0
    %4437 = vmatprep.subr.bf16.mxu0 0
    %4438 = vmatpush2.bf16.msra.mxu0 0
    %4439 = vmatprep.subr.bf16.mxu0 0
    %4440 = vmatpush2.bf16.msra.mxu0 0
    %4441 = vmatprep.mubr.bf16.mxu0 0
    %4442 = vmatmul.mubr.bf16.gmra.mxu0 %v4404
    %v4443 = vpop.f32.mrf.mxu0
    %v4444 = vadd.f32 0.0, %v4443
    %v4445 = vpop.f32.mrf.mxu0
    %v4446 = vpop.f32.mrf.mxu0
    %v4447 = vadd.f32 0.0, %v4446
    %v4448 = vpop.f32.mrf.mxu0
    %4449 = vmatprep.mubr.bf16.mxu0 0
    %4450 = vmatmul.mubr.bf16.gmra.mxu0 %v4407
    %v4451 = vpop.f32.mrf.mxu0
    %v4452 = vadd.f32 0.0, %v4451
    %v4453 = vpop.f32.mrf.mxu0
    %v4454 = vpop.f32.mrf.mxu0
    %v4455 = vadd.f32 0.0, %v4454
    %v4456 = vpop.f32.mrf.mxu0
    %4457 = vdwg.mxu0
    %v4458 = vadd.f32 %v4366, %v4444
    %v4459 = vadd.f32 %v4367, %v4447
    %v4460 = vadd.f32 %v4368, %v4452
    %v4461 = vadd.f32 %v4369, %v4455
    %v4462 = vld [vmem:[%s9] sm:$0x1]
    %v4464 = vlaneseq
    %v4465 = vshrl.u32 %v4464, 7
    %v4466 = vsub.s32 0, %v4465
    %v4467 = vrot.slane %v4462, %v4466
    %v4469 = vadd.f32 %v4458, %v4467
    %v4470 = vadd.f32 %v4459, %v4467
    %v4471 = vadd.f32 %v4460, %v4467
    %v4472 = vadd.f32 %v4461, %v4467
    %v4473 = vmax.f32 %v4469, 0.0
    %v4474 = vmax.f32 %v4470, 0.0
    %v4475 = vmax.f32 %v4471, 0.0
    %v4476 = vmax.f32 %v4472, 0.0
    %v4477 = vpack.c.bf16 %v4474, %v4473
    %v4478 = vpack.c.bf16 %v4476, %v4475
    %v4479 = vld [vmem:[%s1] sm:$0xf]
    %v4480 = vld [vmem:[%s1 + $0x4] sm:$0xf]
    %v4481 = vld [vmem:[%s1 + $0x8] sm:$0xf]
    %v4482 = vld [vmem:[%s1 + $0xc] sm:$0xf]
    %v4487 = vunpack.c.l.b16 %v4479
    %v4488 = vunpack.c.l.b16 %v4480
    %v4489 = vunpack.c.l.b16 %v4481
    %v4490 = vunpack.c.l.b16 %v4482
    %v4491 = vpack.c.b16 %v4488, %v4487
    %v4492 = vpack.c.b16 %v4490, %v4489
    %v4494 = vsel %vm296, %v4491, 0
    %v4497 = vsel %vm296, %v4492, 0
    %4499 = vmatprep.subr.bf16.mxu0 0
    %4500 = vmatpush1.bf16.msra.mxu0 0
    %4501 = vmatprep.subr.bf16.mxu0 0
    %4502 = vmatpush1.bf16.msra.mxu0 0
    %4503 = vmatprep.subr.bf16.mxu0 0
    %4504 = vmatpush1.bf16.msra.mxu0 0
    %4505 = vmatprep.subr.bf16.mxu0 0
    %4506 = vmatpush1.bf16.msra.mxu0 0
    %4507 = vmatprep.subr.bf16.mxu0 0
    %4508 = vmatpush1.bf16.msra.mxu0 0
    %4509 = vmatprep.subr.bf16.mxu0 0
    %4510 = vmatpush1.bf16.msra.mxu0 0
    %4511 = vmatprep.subr.bf16.mxu0 0
    %4512 = vmatpush1.bf16.msra.mxu0 %v4478
    %4513 = vmatprep.subr.bf16.mxu0 0
    %4514 = vmatpush1.bf16.msra.mxu0 %v4477
    %4515 = vmatprep.subr.bf16.mxu0 0
    %4516 = vmatpush2.bf16.msra.mxu0 0
    %4517 = vmatprep.subr.bf16.mxu0 0
    %4518 = vmatpush2.bf16.msra.mxu0 0
    %4519 = vmatprep.subr.bf16.mxu0 0
    %4520 = vmatpush2.bf16.msra.mxu0 0
    %4521 = vmatprep.subr.bf16.mxu0 0
    %4522 = vmatpush2.bf16.msra.mxu0 0
    %4523 = vmatprep.subr.bf16.mxu0 0
    %4524 = vmatpush2.bf16.msra.mxu0 0
    %4525 = vmatprep.subr.bf16.mxu0 0
    %4526 = vmatpush2.bf16.msra.mxu0 0
    %4527 = vmatprep.subr.bf16.mxu0 0
    %4528 = vmatpush2.bf16.msra.mxu0 0
    %4529 = vmatprep.subr.bf16.mxu0 0
    %4530 = vmatpush2.bf16.msra.mxu0 0
    %4531 = vmatprep.mubr.bf16.mxu0 0
    %4532 = vmatmul.mubr.bf16.gmra.mxu0 %v4494
    %v4533 = vpop.f32.mrf.mxu0
    %v4534 = vadd.f32 0.0, %v4533
    %v4535 = vpop.f32.mrf.mxu0
    %v4536 = vpop.f32.mrf.mxu0
    %v4537 = vadd.f32 0.0, %v4536
    %v4538 = vpop.f32.mrf.mxu0
    %4539 = vmatprep.mubr.bf16.mxu0 0
    %4540 = vmatmul.mubr.bf16.gmra.mxu0 %v4497
    %v4541 = vpop.f32.mrf.mxu0
    %v4542 = vadd.f32 0.0, %v4541
    %v4543 = vpop.f32.mrf.mxu0
    %v4544 = vpop.f32.mrf.mxu0
    %v4545 = vadd.f32 0.0, %v4544
    %v4546 = vpop.f32.mrf.mxu0
    %4547 = vdwg.mxu0
    %v4548 = vpack.c.bf16 %v4537, %v4534
    %v4549 = vpack.c.bf16 %v4545, %v4542
    %v4550 = vld [vmem:[%s10] sm:$0xf]
    %v4551 = vld [vmem:[%s10 + $0x4] sm:$0xf]
    %v4552 = vld [vmem:[%s10 + $0x8] sm:$0xf]
    %v4553 = vld [vmem:[%s10 + $0xc] sm:$0xf]
    %v4554 = vld [vmem:[%s10 + $0x10] sm:$0xf]
    %v4555 = vld [vmem:[%s10 + $0x14] sm:$0xf]
    %v4556 = vld [vmem:[%s10 + $0x18] sm:$0xf]
    %v4557 = vld [vmem:[%s10 + $0x1c] sm:$0xf]
    %v4558 = vld [vmem:[%s10 + $0x20] sm:$0xf]
    %v4559 = vld [vmem:[%s10 + $0x24] sm:$0xf]
    %v4560 = vld [vmem:[%s10 + $0x28] sm:$0xf]
    %v4561 = vld [vmem:[%s10 + $0x2c] sm:$0xf]
    %v4562 = vld [vmem:[%s10 + $0x30] sm:$0xf]
    %v4563 = vld [vmem:[%s10 + $0x34] sm:$0xf]
    %v4564 = vld [vmem:[%s10 + $0x38] sm:$0xf]
    %v4565 = vld [vmem:[%s10 + $0x3c] sm:$0xf]
    %s4566 = scalar_lea.vmem %s10, 64
    %v4567 = vld [vmem:[%s4566] sm:$0xf]
    %v4568 = vld [vmem:[%s4566 + $0x4] sm:$0xf]
    %v4569 = vld [vmem:[%s4566 + $0x8] sm:$0xf]
    %v4570 = vld [vmem:[%s4566 + $0xc] sm:$0xf]
    %v4571 = vld [vmem:[%s4566 + $0x10] sm:$0xf]
    %v4572 = vld [vmem:[%s4566 + $0x14] sm:$0xf]
    %v4573 = vld [vmem:[%s4566 + $0x18] sm:$0xf]
    %v4574 = vld [vmem:[%s4566 + $0x1c] sm:$0xf]
    %v4575 = vld [vmem:[%s4566 + $0x20] sm:$0xf]
    %v4576 = vld [vmem:[%s4566 + $0x24] sm:$0xf]
    %v4577 = vld [vmem:[%s4566 + $0x28] sm:$0xf]
    %v4578 = vld [vmem:[%s4566 + $0x2c] sm:$0xf]
    %v4579 = vld [vmem:[%s4566 + $0x30] sm:$0xf]
    %v4580 = vld [vmem:[%s4566 + $0x34] sm:$0xf]
    %v4581 = vld [vmem:[%s4566 + $0x38] sm:$0xf]
    %v4582 = vld [vmem:[%s4566 + $0x3c] sm:$0xf]
    %v4584 = vrot.slane %v4548, 1
    %v4602 = vunpack.c.l.b16 %v4567
    %v4603 = vunpack.c.l.b16 %v4568
    %v4604 = vunpack.c.l.b16 %v4569
    %v4605 = vunpack.c.l.b16 %v4570
    %v4606 = vunpack.c.l.b16 %v4571
    %v4607 = vunpack.c.l.b16 %v4572
    %v4608 = vunpack.c.l.b16 %v4573
    %v4609 = vunpack.c.l.b16 %v4574
    %v4610 = vunpack.c.l.b16 %v4575
    %v4611 = vunpack.c.l.b16 %v4576
    %v4612 = vunpack.c.l.b16 %v4577
    %v4613 = vunpack.c.l.b16 %v4578
    %v4614 = vunpack.c.l.b16 %v4579
    %v4615 = vunpack.c.l.b16 %v4580
    %v4616 = vunpack.c.l.b16 %v4581
    %v4617 = vunpack.c.l.b16 %v4582
    %v4618 = vpack.c.b16 %v4603, %v4602
    %v4619 = vpack.c.b16 %v4605, %v4604
    %v4620 = vpack.c.b16 %v4607, %v4606
    %v4621 = vpack.c.b16 %v4609, %v4608
    %v4622 = vpack.c.b16 %v4611, %v4610
    %v4623 = vpack.c.b16 %v4613, %v4612
    %v4624 = vpack.c.b16 %v4615, %v4614
    %v4625 = vpack.c.b16 %v4617, %v4616
    %4634 = vmatprep.subr.bf16.mxu0 0
    %4635 = vmatpush1.bf16.msra.mxu0 %v4625
    %4636 = vmatprep.subr.bf16.mxu0 0
    %4637 = vmatpush1.bf16.msra.mxu0 %v4624
    %4638 = vmatprep.subr.bf16.mxu0 0
    %4639 = vmatpush1.bf16.msra.mxu0 %v4623
    %4640 = vmatprep.subr.bf16.mxu0 0
    %4641 = vmatpush1.bf16.msra.mxu0 %v4622
    %4642 = vmatprep.subr.bf16.mxu0 0
    %4643 = vmatpush1.bf16.msra.mxu0 %v4621
    %4644 = vmatprep.subr.bf16.mxu0 0
    %4645 = vmatpush1.bf16.msra.mxu0 %v4620
    %4646 = vmatprep.subr.bf16.mxu0 0
    %4647 = vmatpush1.bf16.msra.mxu0 %v4619
    %4648 = vmatprep.subr.bf16.mxu0 0
    %4649 = vmatpush1.bf16.msra.mxu0 %v4618
    %4650 = vmatprep.subr.bf16.mxu0 0
    %4651 = vmatpush2.bf16.msra.mxu0 0
    %4652 = vmatprep.subr.bf16.mxu0 0
    %4653 = vmatpush2.bf16.msra.mxu0 0
    %4654 = vmatprep.subr.bf16.mxu0 0
    %4655 = vmatpush2.bf16.msra.mxu0 0
    %4656 = vmatprep.subr.bf16.mxu0 0
    %4657 = vmatpush2.bf16.msra.mxu0 0
    %4658 = vmatprep.subr.bf16.mxu0 0
    %4659 = vmatpush2.bf16.msra.mxu0 0
    %4660 = vmatprep.subr.bf16.mxu0 0
    %4661 = vmatpush2.bf16.msra.mxu0 0
    %4662 = vmatprep.subr.bf16.mxu0 0
    %4663 = vmatpush2.bf16.msra.mxu0 0
    %4664 = vmatprep.subr.bf16.mxu0 0
    %4665 = vmatpush2.bf16.msra.mxu0 0
    %4666 = vmatprep.mubr.bf16.mxu0 0
    %4667 = vmatmul.mubr.bf16.gmra.mxu0 %v4584
    %v4668 = vpop.f32.mrf.mxu0
    %v4669 = vadd.f32 0.0, %v4668
    %v4670 = vpop.f32.mrf.mxu0
    %v4671 = vpop.f32.mrf.mxu0
    %v4672 = vpop.f32.mrf.mxu0
    %4673 = vdwg.mxu0
    %v4690 = vunpack.c.l.b16 %v4550
    %v4691 = vunpack.c.l.b16 %v4551
    %v4692 = vunpack.c.l.b16 %v4552
    %v4693 = vunpack.c.l.b16 %v4553
    %v4694 = vunpack.c.l.b16 %v4554
    %v4695 = vunpack.c.l.b16 %v4555
    %v4696 = vunpack.c.l.b16 %v4556
    %v4697 = vunpack.c.l.b16 %v4557
    %v4698 = vunpack.c.l.b16 %v4558
    %v4699 = vunpack.c.l.b16 %v4559
    %v4700 = vunpack.c.l.b16 %v4560
    %v4701 = vunpack.c.l.b16 %v4561
    %v4702 = vunpack.c.l.b16 %v4562
    %v4703 = vunpack.c.l.b16 %v4563
    %v4704 = vunpack.c.l.b16 %v4564
    %v4705 = vunpack.c.l.b16 %v4565
    %v4706 = vpack.c.b16 %v4691, %v4690
    %v4707 = vpack.c.b16 %v4693, %v4692
    %v4708 = vpack.c.b16 %v4695, %v4694
    %v4709 = vpack.c.b16 %v4697, %v4696
    %v4710 = vpack.c.b16 %v4699, %v4698
    %v4711 = vpack.c.b16 %v4701, %v4700
    %v4712 = vpack.c.b16 %v4703, %v4702
    %v4713 = vpack.c.b16 %v4705, %v4704
    %4722 = vmatprep.subr.bf16.mxu0 0
    %4723 = vmatpush1.bf16.msra.mxu0 %v4713
    %4724 = vmatprep.subr.bf16.mxu0 0
    %4725 = vmatpush1.bf16.msra.mxu0 %v4712
    %4726 = vmatprep.subr.bf16.mxu0 0
    %4727 = vmatpush1.bf16.msra.mxu0 %v4711
    %4728 = vmatprep.subr.bf16.mxu0 0
    %4729 = vmatpush1.bf16.msra.mxu0 %v4710
    %4730 = vmatprep.subr.bf16.mxu0 0
    %4731 = vmatpush1.bf16.msra.mxu0 %v4709
    %4732 = vmatprep.subr.bf16.mxu0 0
    %4733 = vmatpush1.bf16.msra.mxu0 %v4708
    %4734 = vmatprep.subr.bf16.mxu0 0
    %4735 = vmatpush1.bf16.msra.mxu0 %v4707
    %4736 = vmatprep.subr.bf16.mxu0 0
    %4737 = vmatpush1.bf16.msra.mxu0 %v4706
    %4738 = vmatprep.subr.bf16.mxu0 0
    %4739 = vmatpush2.bf16.msra.mxu0 0
    %4740 = vmatprep.subr.bf16.mxu0 0
    %4741 = vmatpush2.bf16.msra.mxu0 0
    %4742 = vmatprep.subr.bf16.mxu0 0
    %4743 = vmatpush2.bf16.msra.mxu0 0
    %4744 = vmatprep.subr.bf16.mxu0 0
    %4745 = vmatpush2.bf16.msra.mxu0 0
    %4746 = vmatprep.subr.bf16.mxu0 0
    %4747 = vmatpush2.bf16.msra.mxu0 0
    %4748 = vmatprep.subr.bf16.mxu0 0
    %4749 = vmatpush2.bf16.msra.mxu0 0
    %4750 = vmatprep.subr.bf16.mxu0 0
    %4751 = vmatpush2.bf16.msra.mxu0 0
    %4752 = vmatprep.subr.bf16.mxu0 0
    %4753 = vmatpush2.bf16.msra.mxu0 0
    %4754 = vmatprep.mubr.bf16.mxu0 0
    %4755 = vmatmul.mubr.bf16.gmra.mxu0 %v4548
    %v4756 = vpop.f32.mrf.mxu0
    %v4757 = vadd.f32 %v4669, %v4756
    %v4758 = vpop.f32.mrf.mxu0
    %v4759 = vpop.f32.mrf.mxu0
    %v4760 = vpop.f32.mrf.mxu0
    %4761 = vdwg.mxu0
    %s4762 = scalar_lea.vmem %s10, 128
    %v4763 = vld [vmem:[%s4762] sm:$0xf]
    %v4764 = vld [vmem:[%s4762 + $0x4] sm:$0xf]
    %v4765 = vld [vmem:[%s4762 + $0x8] sm:$0xf]
    %v4766 = vld [vmem:[%s4762 + $0xc] sm:$0xf]
    %v4767 = vld [vmem:[%s4762 + $0x10] sm:$0xf]
    %v4768 = vld [vmem:[%s4762 + $0x14] sm:$0xf]
    %v4769 = vld [vmem:[%s4762 + $0x18] sm:$0xf]
    %v4770 = vld [vmem:[%s4762 + $0x1c] sm:$0xf]
    %v4771 = vld [vmem:[%s4762 + $0x20] sm:$0xf]
    %v4772 = vld [vmem:[%s4762 + $0x24] sm:$0xf]
    %v4773 = vld [vmem:[%s4762 + $0x28] sm:$0xf]
    %v4774 = vld [vmem:[%s4762 + $0x2c] sm:$0xf]
    %v4775 = vld [vmem:[%s4762 + $0x30] sm:$0xf]
    %v4776 = vld [vmem:[%s4762 + $0x34] sm:$0xf]
    %v4777 = vld [vmem:[%s4762 + $0x38] sm:$0xf]
    %v4778 = vld [vmem:[%s4762 + $0x3c] sm:$0xf]
    %v4779 = vrot.slane %v4548, 2
    %v4797 = vunpack.c.l.b16 %v4763
    %v4798 = vunpack.c.l.b16 %v4764
    %v4799 = vunpack.c.l.b16 %v4765
    %v4800 = vunpack.c.l.b16 %v4766
    %v4801 = vunpack.c.l.b16 %v4767
    %v4802 = vunpack.c.l.b16 %v4768
    %v4803 = vunpack.c.l.b16 %v4769
    %v4804 = vunpack.c.l.b16 %v4770
    %v4805 = vunpack.c.l.b16 %v4771
    %v4806 = vunpack.c.l.b16 %v4772
    %v4807 = vunpack.c.l.b16 %v4773
    %v4808 = vunpack.c.l.b16 %v4774
    %v4809 = vunpack.c.l.b16 %v4775
    %v4810 = vunpack.c.l.b16 %v4776
    %v4811 = vunpack.c.l.b16 %v4777
    %v4812 = vunpack.c.l.b16 %v4778
    %v4813 = vpack.c.b16 %v4798, %v4797
    %v4814 = vpack.c.b16 %v4800, %v4799
    %v4815 = vpack.c.b16 %v4802, %v4801
    %v4816 = vpack.c.b16 %v4804, %v4803
    %v4817 = vpack.c.b16 %v4806, %v4805
    %v4818 = vpack.c.b16 %v4808, %v4807
    %v4819 = vpack.c.b16 %v4810, %v4809
    %v4820 = vpack.c.b16 %v4812, %v4811
    %4829 = vmatprep.subr.bf16.mxu0 0
    %4830 = vmatpush1.bf16.msra.mxu0 %v4820
    %4831 = vmatprep.subr.bf16.mxu0 0
    %4832 = vmatpush1.bf16.msra.mxu0 %v4819
    %4833 = vmatprep.subr.bf16.mxu0 0
    %4834 = vmatpush1.bf16.msra.mxu0 %v4818
    %4835 = vmatprep.subr.bf16.mxu0 0
    %4836 = vmatpush1.bf16.msra.mxu0 %v4817
    %4837 = vmatprep.subr.bf16.mxu0 0
    %4838 = vmatpush1.bf16.msra.mxu0 %v4816
    %4839 = vmatprep.subr.bf16.mxu0 0
    %4840 = vmatpush1.bf16.msra.mxu0 %v4815
    %4841 = vmatprep.subr.bf16.mxu0 0
    %4842 = vmatpush1.bf16.msra.mxu0 %v4814
    %4843 = vmatprep.subr.bf16.mxu0 0
    %4844 = vmatpush1.bf16.msra.mxu0 %v4813
    %4845 = vmatprep.subr.bf16.mxu0 0
    %4846 = vmatpush2.bf16.msra.mxu0 0
    %4847 = vmatprep.subr.bf16.mxu0 0
    %4848 = vmatpush2.bf16.msra.mxu0 0
    %4849 = vmatprep.subr.bf16.mxu0 0
    %4850 = vmatpush2.bf16.msra.mxu0 0
    %4851 = vmatprep.subr.bf16.mxu0 0
    %4852 = vmatpush2.bf16.msra.mxu0 0
    %4853 = vmatprep.subr.bf16.mxu0 0
    %4854 = vmatpush2.bf16.msra.mxu0 0
    %4855 = vmatprep.subr.bf16.mxu0 0
    %4856 = vmatpush2.bf16.msra.mxu0 0
    %4857 = vmatprep.subr.bf16.mxu0 0
    %4858 = vmatpush2.bf16.msra.mxu0 0
    %4859 = vmatprep.subr.bf16.mxu0 0
    %4860 = vmatpush2.bf16.msra.mxu0 0
    %4861 = vmatprep.mubr.bf16.mxu0 0
    %4862 = vmatmul.mubr.bf16.gmra.mxu0 %v4779
    %v4863 = vpop.f32.mrf.mxu0
    %v4864 = vadd.f32 0.0, %v4863
    %v4865 = vpop.f32.mrf.mxu0
    %v4866 = vpop.f32.mrf.mxu0
    %v4867 = vpop.f32.mrf.mxu0
    %4868 = vdwg.mxu0
    %v4869 = vadd.f32 %v4757, %v4864
    %s4870 = scalar_lea.vmem %s10, 192
    %v4871 = vld [vmem:[%s4870] sm:$0xf]
    %v4872 = vld [vmem:[%s4870 + $0x4] sm:$0xf]
    %v4873 = vld [vmem:[%s4870 + $0x8] sm:$0xf]
    %v4874 = vld [vmem:[%s4870 + $0xc] sm:$0xf]
    %v4875 = vld [vmem:[%s4870 + $0x10] sm:$0xf]
    %v4876 = vld [vmem:[%s4870 + $0x14] sm:$0xf]
    %v4877 = vld [vmem:[%s4870 + $0x18] sm:$0xf]
    %v4878 = vld [vmem:[%s4870 + $0x1c] sm:$0xf]
    %v4879 = vld [vmem:[%s4870 + $0x20] sm:$0xf]
    %v4880 = vld [vmem:[%s4870 + $0x24] sm:$0xf]
    %v4881 = vld [vmem:[%s4870 + $0x28] sm:$0xf]
    %v4882 = vld [vmem:[%s4870 + $0x2c] sm:$0xf]
    %v4883 = vld [vmem:[%s4870 + $0x30] sm:$0xf]
    %v4884 = vld [vmem:[%s4870 + $0x34] sm:$0xf]
    %v4885 = vld [vmem:[%s4870 + $0x38] sm:$0xf]
    %v4886 = vld [vmem:[%s4870 + $0x3c] sm:$0xf]
    %v4887 = vrot.slane %v4548, 3
    %v4905 = vunpack.c.l.b16 %v4871
    %v4906 = vunpack.c.l.b16 %v4872
    %v4907 = vunpack.c.l.b16 %v4873
    %v4908 = vunpack.c.l.b16 %v4874
    %v4909 = vunpack.c.l.b16 %v4875
    %v4910 = vunpack.c.l.b16 %v4876
    %v4911 = vunpack.c.l.b16 %v4877
    %v4912 = vunpack.c.l.b16 %v4878
    %v4913 = vunpack.c.l.b16 %v4879
    %v4914 = vunpack.c.l.b16 %v4880
    %v4915 = vunpack.c.l.b16 %v4881
    %v4916 = vunpack.c.l.b16 %v4882
    %v4917 = vunpack.c.l.b16 %v4883
    %v4918 = vunpack.c.l.b16 %v4884
    %v4919 = vunpack.c.l.b16 %v4885
    %v4920 = vunpack.c.l.b16 %v4886
    %v4921 = vpack.c.b16 %v4906, %v4905
    %v4922 = vpack.c.b16 %v4908, %v4907
    %v4923 = vpack.c.b16 %v4910, %v4909
    %v4924 = vpack.c.b16 %v4912, %v4911
    %v4925 = vpack.c.b16 %v4914, %v4913
    %v4926 = vpack.c.b16 %v4916, %v4915
    %v4927 = vpack.c.b16 %v4918, %v4917
    %v4928 = vpack.c.b16 %v4920, %v4919
    %4937 = vmatprep.subr.bf16.mxu0 0
    %4938 = vmatpush1.bf16.msra.mxu0 %v4928
    %4939 = vmatprep.subr.bf16.mxu0 0
    %4940 = vmatpush1.bf16.msra.mxu0 %v4927
    %4941 = vmatprep.subr.bf16.mxu0 0
    %4942 = vmatpush1.bf16.msra.mxu0 %v4926
    %4943 = vmatprep.subr.bf16.mxu0 0
    %4944 = vmatpush1.bf16.msra.mxu0 %v4925
    %4945 = vmatprep.subr.bf16.mxu0 0
    %4946 = vmatpush1.bf16.msra.mxu0 %v4924
    %4947 = vmatprep.subr.bf16.mxu0 0
    %4948 = vmatpush1.bf16.msra.mxu0 %v4923
    %4949 = vmatprep.subr.bf16.mxu0 0
    %4950 = vmatpush1.bf16.msra.mxu0 %v4922
    %4951 = vmatprep.subr.bf16.mxu0 0
    %4952 = vmatpush1.bf16.msra.mxu0 %v4921
    %4953 = vmatprep.subr.bf16.mxu0 0
    %4954 = vmatpush2.bf16.msra.mxu0 0
    %4955 = vmatprep.subr.bf16.mxu0 0
    %4956 = vmatpush2.bf16.msra.mxu0 0
    %4957 = vmatprep.subr.bf16.mxu0 0
    %4958 = vmatpush2.bf16.msra.mxu0 0
    %4959 = vmatprep.subr.bf16.mxu0 0
    %4960 = vmatpush2.bf16.msra.mxu0 0
    %4961 = vmatprep.subr.bf16.mxu0 0
    %4962 = vmatpush2.bf16.msra.mxu0 0
    %4963 = vmatprep.subr.bf16.mxu0 0
    %4964 = vmatpush2.bf16.msra.mxu0 0
    %4965 = vmatprep.subr.bf16.mxu0 0
    %4966 = vmatpush2.bf16.msra.mxu0 0
    %4967 = vmatprep.subr.bf16.mxu0 0
    %4968 = vmatpush2.bf16.msra.mxu0 0
    %4969 = vmatprep.mubr.bf16.mxu0 0
    %4970 = vmatmul.mubr.bf16.gmra.mxu0 %v4887
    %v4971 = vpop.f32.mrf.mxu0
    %v4972 = vadd.f32 0.0, %v4971
    %v4973 = vpop.f32.mrf.mxu0
    %v4974 = vpop.f32.mrf.mxu0
    %v4975 = vpop.f32.mrf.mxu0
    %4976 = vdwg.mxu0
    %v4977 = vadd.f32 %v4869, %v4972
    %s4978 = scalar_lea.vmem %s10, 256
    %v4979 = vld [vmem:[%s4978] sm:$0xf]
    %v4980 = vld [vmem:[%s4978 + $0x4] sm:$0xf]
    %v4981 = vld [vmem:[%s4978 + $0x8] sm:$0xf]
    %v4982 = vld [vmem:[%s4978 + $0xc] sm:$0xf]
    %v4983 = vld [vmem:[%s4978 + $0x10] sm:$0xf]
    %v4984 = vld [vmem:[%s4978 + $0x14] sm:$0xf]
    %v4985 = vld [vmem:[%s4978 + $0x18] sm:$0xf]
    %v4986 = vld [vmem:[%s4978 + $0x1c] sm:$0xf]
    %v4987 = vld [vmem:[%s4978 + $0x20] sm:$0xf]
    %v4988 = vld [vmem:[%s4978 + $0x24] sm:$0xf]
    %v4989 = vld [vmem:[%s4978 + $0x28] sm:$0xf]
    %v4990 = vld [vmem:[%s4978 + $0x2c] sm:$0xf]
    %v4991 = vld [vmem:[%s4978 + $0x30] sm:$0xf]
    %v4992 = vld [vmem:[%s4978 + $0x34] sm:$0xf]
    %v4993 = vld [vmem:[%s4978 + $0x38] sm:$0xf]
    %v4994 = vld [vmem:[%s4978 + $0x3c] sm:$0xf]
    %v4995 = vrot.slane %v4548, 4
    %v5013 = vunpack.c.l.b16 %v4979
    %v5014 = vunpack.c.l.b16 %v4980
    %v5015 = vunpack.c.l.b16 %v4981
    %v5016 = vunpack.c.l.b16 %v4982
    %v5017 = vunpack.c.l.b16 %v4983
    %v5018 = vunpack.c.l.b16 %v4984
    %v5019 = vunpack.c.l.b16 %v4985
    %v5020 = vunpack.c.l.b16 %v4986
    %v5021 = vunpack.c.l.b16 %v4987
    %v5022 = vunpack.c.l.b16 %v4988
    %v5023 = vunpack.c.l.b16 %v4989
    %v5024 = vunpack.c.l.b16 %v4990
    %v5025 = vunpack.c.l.b16 %v4991
    %v5026 = vunpack.c.l.b16 %v4992
    %v5027 = vunpack.c.l.b16 %v4993
    %v5028 = vunpack.c.l.b16 %v4994
    %v5029 = vpack.c.b16 %v5014, %v5013
    %v5030 = vpack.c.b16 %v5016, %v5015
    %v5031 = vpack.c.b16 %v5018, %v5017
    %v5032 = vpack.c.b16 %v5020, %v5019
    %v5033 = vpack.c.b16 %v5022, %v5021
    %v5034 = vpack.c.b16 %v5024, %v5023
    %v5035 = vpack.c.b16 %v5026, %v5025
    %v5036 = vpack.c.b16 %v5028, %v5027
    %5045 = vmatprep.subr.bf16.mxu0 0
    %5046 = vmatpush1.bf16.msra.mxu0 %v5036
    %5047 = vmatprep.subr.bf16.mxu0 0
    %5048 = vmatpush1.bf16.msra.mxu0 %v5035
    %5049 = vmatprep.subr.bf16.mxu0 0
    %5050 = vmatpush1.bf16.msra.mxu0 %v5034
    %5051 = vmatprep.subr.bf16.mxu0 0
    %5052 = vmatpush1.bf16.msra.mxu0 %v5033
    %5053 = vmatprep.subr.bf16.mxu0 0
    %5054 = vmatpush1.bf16.msra.mxu0 %v5032
    %5055 = vmatprep.subr.bf16.mxu0 0
    %5056 = vmatpush1.bf16.msra.mxu0 %v5031
    %5057 = vmatprep.subr.bf16.mxu0 0
    %5058 = vmatpush1.bf16.msra.mxu0 %v5030
    %5059 = vmatprep.subr.bf16.mxu0 0
    %5060 = vmatpush1.bf16.msra.mxu0 %v5029
    %5061 = vmatprep.subr.bf16.mxu0 0
    %5062 = vmatpush2.bf16.msra.mxu0 0
    %5063 = vmatprep.subr.bf16.mxu0 0
    %5064 = vmatpush2.bf16.msra.mxu0 0
    %5065 = vmatprep.subr.bf16.mxu0 0
    %5066 = vmatpush2.bf16.msra.mxu0 0
    %5067 = vmatprep.subr.bf16.mxu0 0
    %5068 = vmatpush2.bf16.msra.mxu0 0
    %5069 = vmatprep.subr.bf16.mxu0 0
    %5070 = vmatpush2.bf16.msra.mxu0 0
    %5071 = vmatprep.subr.bf16.mxu0 0
    %5072 = vmatpush2.bf16.msra.mxu0 0
    %5073 = vmatprep.subr.bf16.mxu0 0
    %5074 = vmatpush2.bf16.msra.mxu0 0
    %5075 = vmatprep.subr.bf16.mxu0 0
    %5076 = vmatpush2.bf16.msra.mxu0 0
    %5077 = vmatprep.mubr.bf16.mxu0 0
    %5078 = vmatmul.mubr.bf16.gmra.mxu0 %v4995
    %v5079 = vpop.f32.mrf.mxu0
    %v5080 = vadd.f32 0.0, %v5079
    %v5081 = vpop.f32.mrf.mxu0
    %v5082 = vpop.f32.mrf.mxu0
    %v5083 = vpop.f32.mrf.mxu0
    %5084 = vdwg.mxu0
    %v5085 = vadd.f32 %v4977, %v5080
    %s5086 = scalar_lea.vmem %s10, 320
    %v5087 = vld [vmem:[%s5086] sm:$0xf]
    %v5088 = vld [vmem:[%s5086 + $0x4] sm:$0xf]
    %v5089 = vld [vmem:[%s5086 + $0x8] sm:$0xf]
    %v5090 = vld [vmem:[%s5086 + $0xc] sm:$0xf]
    %v5091 = vld [vmem:[%s5086 + $0x10] sm:$0xf]
    %v5092 = vld [vmem:[%s5086 + $0x14] sm:$0xf]
    %v5093 = vld [vmem:[%s5086 + $0x18] sm:$0xf]
    %v5094 = vld [vmem:[%s5086 + $0x1c] sm:$0xf]
    %v5095 = vld [vmem:[%s5086 + $0x20] sm:$0xf]
    %v5096 = vld [vmem:[%s5086 + $0x24] sm:$0xf]
    %v5097 = vld [vmem:[%s5086 + $0x28] sm:$0xf]
    %v5098 = vld [vmem:[%s5086 + $0x2c] sm:$0xf]
    %v5099 = vld [vmem:[%s5086 + $0x30] sm:$0xf]
    %v5100 = vld [vmem:[%s5086 + $0x34] sm:$0xf]
    %v5101 = vld [vmem:[%s5086 + $0x38] sm:$0xf]
    %v5102 = vld [vmem:[%s5086 + $0x3c] sm:$0xf]
    %v5103 = vrot.slane %v4548, 5
    %v5121 = vunpack.c.l.b16 %v5087
    %v5122 = vunpack.c.l.b16 %v5088
    %v5123 = vunpack.c.l.b16 %v5089
    %v5124 = vunpack.c.l.b16 %v5090
    %v5125 = vunpack.c.l.b16 %v5091
    %v5126 = vunpack.c.l.b16 %v5092
    %v5127 = vunpack.c.l.b16 %v5093
    %v5128 = vunpack.c.l.b16 %v5094
    %v5129 = vunpack.c.l.b16 %v5095
    %v5130 = vunpack.c.l.b16 %v5096
    %v5131 = vunpack.c.l.b16 %v5097
    %v5132 = vunpack.c.l.b16 %v5098
    %v5133 = vunpack.c.l.b16 %v5099
    %v5134 = vunpack.c.l.b16 %v5100
    %v5135 = vunpack.c.l.b16 %v5101
    %v5136 = vunpack.c.l.b16 %v5102
    %v5137 = vpack.c.b16 %v5122, %v5121
    %v5138 = vpack.c.b16 %v5124, %v5123
    %v5139 = vpack.c.b16 %v5126, %v5125
    %v5140 = vpack.c.b16 %v5128, %v5127
    %v5141 = vpack.c.b16 %v5130, %v5129
    %v5142 = vpack.c.b16 %v5132, %v5131
    %v5143 = vpack.c.b16 %v5134, %v5133
    %v5144 = vpack.c.b16 %v5136, %v5135
    %5153 = vmatprep.subr.bf16.mxu0 0
    %5154 = vmatpush1.bf16.msra.mxu0 %v5144
    %5155 = vmatprep.subr.bf16.mxu0 0
    %5156 = vmatpush1.bf16.msra.mxu0 %v5143
    %5157 = vmatprep.subr.bf16.mxu0 0
    %5158 = vmatpush1.bf16.msra.mxu0 %v5142
    %5159 = vmatprep.subr.bf16.mxu0 0
    %5160 = vmatpush1.bf16.msra.mxu0 %v5141
    %5161 = vmatprep.subr.bf16.mxu0 0
    %5162 = vmatpush1.bf16.msra.mxu0 %v5140
    %5163 = vmatprep.subr.bf16.mxu0 0
    %5164 = vmatpush1.bf16.msra.mxu0 %v5139
    %5165 = vmatprep.subr.bf16.mxu0 0
    %5166 = vmatpush1.bf16.msra.mxu0 %v5138
    %5167 = vmatprep.subr.bf16.mxu0 0
    %5168 = vmatpush1.bf16.msra.mxu0 %v5137
    %5169 = vmatprep.subr.bf16.mxu0 0
    %5170 = vmatpush2.bf16.msra.mxu0 0
    %5171 = vmatprep.subr.bf16.mxu0 0
    %5172 = vmatpush2.bf16.msra.mxu0 0
    %5173 = vmatprep.subr.bf16.mxu0 0
    %5174 = vmatpush2.bf16.msra.mxu0 0
    %5175 = vmatprep.subr.bf16.mxu0 0
    %5176 = vmatpush2.bf16.msra.mxu0 0
    %5177 = vmatprep.subr.bf16.mxu0 0
    %5178 = vmatpush2.bf16.msra.mxu0 0
    %5179 = vmatprep.subr.bf16.mxu0 0
    %5180 = vmatpush2.bf16.msra.mxu0 0
    %5181 = vmatprep.subr.bf16.mxu0 0
    %5182 = vmatpush2.bf16.msra.mxu0 0
    %5183 = vmatprep.subr.bf16.mxu0 0
    %5184 = vmatpush2.bf16.msra.mxu0 0
    %5185 = vmatprep.mubr.bf16.mxu0 0
    %5186 = vmatmul.mubr.bf16.gmra.mxu0 %v5103
    %v5187 = vpop.f32.mrf.mxu0
    %v5188 = vadd.f32 0.0, %v5187
    %v5189 = vpop.f32.mrf.mxu0
    %v5190 = vpop.f32.mrf.mxu0
    %v5191 = vpop.f32.mrf.mxu0
    %5192 = vdwg.mxu0
    %v5193 = vadd.f32 %v5085, %v5188
    %s5194 = scalar_lea.vmem %s10, 384
    %v5195 = vld [vmem:[%s5194] sm:$0xf]
    %v5196 = vld [vmem:[%s5194 + $0x4] sm:$0xf]
    %v5197 = vld [vmem:[%s5194 + $0x8] sm:$0xf]
    %v5198 = vld [vmem:[%s5194 + $0xc] sm:$0xf]
    %v5199 = vld [vmem:[%s5194 + $0x10] sm:$0xf]
    %v5200 = vld [vmem:[%s5194 + $0x14] sm:$0xf]
    %v5201 = vld [vmem:[%s5194 + $0x18] sm:$0xf]
    %v5202 = vld [vmem:[%s5194 + $0x1c] sm:$0xf]
    %v5203 = vld [vmem:[%s5194 + $0x20] sm:$0xf]
    %v5204 = vld [vmem:[%s5194 + $0x24] sm:$0xf]
    %v5205 = vld [vmem:[%s5194 + $0x28] sm:$0xf]
    %v5206 = vld [vmem:[%s5194 + $0x2c] sm:$0xf]
    %v5207 = vld [vmem:[%s5194 + $0x30] sm:$0xf]
    %v5208 = vld [vmem:[%s5194 + $0x34] sm:$0xf]
    %v5209 = vld [vmem:[%s5194 + $0x38] sm:$0xf]
    %v5210 = vld [vmem:[%s5194 + $0x3c] sm:$0xf]
    %v5211 = vrot.slane %v4548, 6
    %v5229 = vunpack.c.l.b16 %v5195
    %v5230 = vunpack.c.l.b16 %v5196
    %v5231 = vunpack.c.l.b16 %v5197
    %v5232 = vunpack.c.l.b16 %v5198
    %v5233 = vunpack.c.l.b16 %v5199
    %v5234 = vunpack.c.l.b16 %v5200
    %v5235 = vunpack.c.l.b16 %v5201
    %v5236 = vunpack.c.l.b16 %v5202
    %v5237 = vunpack.c.l.b16 %v5203
    %v5238 = vunpack.c.l.b16 %v5204
    %v5239 = vunpack.c.l.b16 %v5205
    %v5240 = vunpack.c.l.b16 %v5206
    %v5241 = vunpack.c.l.b16 %v5207
    %v5242 = vunpack.c.l.b16 %v5208
    %v5243 = vunpack.c.l.b16 %v5209
    %v5244 = vunpack.c.l.b16 %v5210
    %v5245 = vpack.c.b16 %v5230, %v5229
    %v5246 = vpack.c.b16 %v5232, %v5231
    %v5247 = vpack.c.b16 %v5234, %v5233
    %v5248 = vpack.c.b16 %v5236, %v5235
    %v5249 = vpack.c.b16 %v5238, %v5237
    %v5250 = vpack.c.b16 %v5240, %v5239
    %v5251 = vpack.c.b16 %v5242, %v5241
    %v5252 = vpack.c.b16 %v5244, %v5243
    %5261 = vmatprep.subr.bf16.mxu0 0
    %5262 = vmatpush1.bf16.msra.mxu0 %v5252
    %5263 = vmatprep.subr.bf16.mxu0 0
    %5264 = vmatpush1.bf16.msra.mxu0 %v5251
    %5265 = vmatprep.subr.bf16.mxu0 0
    %5266 = vmatpush1.bf16.msra.mxu0 %v5250
    %5267 = vmatprep.subr.bf16.mxu0 0
    %5268 = vmatpush1.bf16.msra.mxu0 %v5249
    %5269 = vmatprep.subr.bf16.mxu0 0
    %5270 = vmatpush1.bf16.msra.mxu0 %v5248
    %5271 = vmatprep.subr.bf16.mxu0 0
    %5272 = vmatpush1.bf16.msra.mxu0 %v5247
    %5273 = vmatprep.subr.bf16.mxu0 0
    %5274 = vmatpush1.bf16.msra.mxu0 %v5246
    %5275 = vmatprep.subr.bf16.mxu0 0
    %5276 = vmatpush1.bf16.msra.mxu0 %v5245
    %5277 = vmatprep.subr.bf16.mxu0 0
    %5278 = vmatpush2.bf16.msra.mxu0 0
    %5279 = vmatprep.subr.bf16.mxu0 0
    %5280 = vmatpush2.bf16.msra.mxu0 0
    %5281 = vmatprep.subr.bf16.mxu0 0
    %5282 = vmatpush2.bf16.msra.mxu0 0
    %5283 = vmatprep.subr.bf16.mxu0 0
    %5284 = vmatpush2.bf16.msra.mxu0 0
    %5285 = vmatprep.subr.bf16.mxu0 0
    %5286 = vmatpush2.bf16.msra.mxu0 0
    %5287 = vmatprep.subr.bf16.mxu0 0
    %5288 = vmatpush2.bf16.msra.mxu0 0
    %5289 = vmatprep.subr.bf16.mxu0 0
    %5290 = vmatpush2.bf16.msra.mxu0 0
    %5291 = vmatprep.subr.bf16.mxu0 0
    %5292 = vmatpush2.bf16.msra.mxu0 0
    %5293 = vmatprep.mubr.bf16.mxu0 0
    %5294 = vmatmul.mubr.bf16.gmra.mxu0 %v5211
    %v5295 = vpop.f32.mrf.mxu0
    %v5296 = vadd.f32 0.0, %v5295
    %v5297 = vpop.f32.mrf.mxu0
    %v5298 = vpop.f32.mrf.mxu0
    %v5299 = vpop.f32.mrf.mxu0
    %5300 = vdwg.mxu0
    %v5301 = vadd.f32 %v5193, %v5296
    %s5302 = scalar_lea.vmem %s10, 448
    %v5303 = vld [vmem:[%s5302] sm:$0xf]
    %v5304 = vld [vmem:[%s5302 + $0x4] sm:$0xf]
    %v5305 = vld [vmem:[%s5302 + $0x8] sm:$0xf]
    %v5306 = vld [vmem:[%s5302 + $0xc] sm:$0xf]
    %v5307 = vld [vmem:[%s5302 + $0x10] sm:$0xf]
    %v5308 = vld [vmem:[%s5302 + $0x14] sm:$0xf]
    %v5309 = vld [vmem:[%s5302 + $0x18] sm:$0xf]
    %v5310 = vld [vmem:[%s5302 + $0x1c] sm:$0xf]
    %v5311 = vld [vmem:[%s5302 + $0x20] sm:$0xf]
    %v5312 = vld [vmem:[%s5302 + $0x24] sm:$0xf]
    %v5313 = vld [vmem:[%s5302 + $0x28] sm:$0xf]
    %v5314 = vld [vmem:[%s5302 + $0x2c] sm:$0xf]
    %v5315 = vld [vmem:[%s5302 + $0x30] sm:$0xf]
    %v5316 = vld [vmem:[%s5302 + $0x34] sm:$0xf]
    %v5317 = vld [vmem:[%s5302 + $0x38] sm:$0xf]
    %v5318 = vld [vmem:[%s5302 + $0x3c] sm:$0xf]
    %v5319 = vrot.slane %v4548, 7
    %v5337 = vunpack.c.l.b16 %v5303
    %v5338 = vunpack.c.l.b16 %v5304
    %v5339 = vunpack.c.l.b16 %v5305
    %v5340 = vunpack.c.l.b16 %v5306
    %v5341 = vunpack.c.l.b16 %v5307
    %v5342 = vunpack.c.l.b16 %v5308
    %v5343 = vunpack.c.l.b16 %v5309
    %v5344 = vunpack.c.l.b16 %v5310
    %v5345 = vunpack.c.l.b16 %v5311
    %v5346 = vunpack.c.l.b16 %v5312
    %v5347 = vunpack.c.l.b16 %v5313
    %v5348 = vunpack.c.l.b16 %v5314
    %v5349 = vunpack.c.l.b16 %v5315
    %v5350 = vunpack.c.l.b16 %v5316
    %v5351 = vunpack.c.l.b16 %v5317
    %v5352 = vunpack.c.l.b16 %v5318
    %v5353 = vpack.c.b16 %v5338, %v5337
    %v5354 = vpack.c.b16 %v5340, %v5339
    %v5355 = vpack.c.b16 %v5342, %v5341
    %v5356 = vpack.c.b16 %v5344, %v5343
    %v5357 = vpack.c.b16 %v5346, %v5345
    %v5358 = vpack.c.b16 %v5348, %v5347
    %v5359 = vpack.c.b16 %v5350, %v5349
    %v5360 = vpack.c.b16 %v5352, %v5351
    %5369 = vmatprep.subr.bf16.mxu0 0
    %5370 = vmatpush1.bf16.msra.mxu0 %v5360
    %5371 = vmatprep.subr.bf16.mxu0 0
    %5372 = vmatpush1.bf16.msra.mxu0 %v5359
    %5373 = vmatprep.subr.bf16.mxu0 0
    %5374 = vmatpush1.bf16.msra.mxu0 %v5358
    %5375 = vmatprep.subr.bf16.mxu0 0
    %5376 = vmatpush1.bf16.msra.mxu0 %v5357
    %5377 = vmatprep.subr.bf16.mxu0 0
    %5378 = vmatpush1.bf16.msra.mxu0 %v5356
    %5379 = vmatprep.subr.bf16.mxu0 0
    %5380 = vmatpush1.bf16.msra.mxu0 %v5355
    %5381 = vmatprep.subr.bf16.mxu0 0
    %5382 = vmatpush1.bf16.msra.mxu0 %v5354
    %5383 = vmatprep.subr.bf16.mxu0 0
    %5384 = vmatpush1.bf16.msra.mxu0 %v5353
    %5385 = vmatprep.subr.bf16.mxu0 0
    %5386 = vmatpush2.bf16.msra.mxu0 0
    %5387 = vmatprep.subr.bf16.mxu0 0
    %5388 = vmatpush2.bf16.msra.mxu0 0
    %5389 = vmatprep.subr.bf16.mxu0 0
    %5390 = vmatpush2.bf16.msra.mxu0 0
    %5391 = vmatprep.subr.bf16.mxu0 0
    %5392 = vmatpush2.bf16.msra.mxu0 0
    %5393 = vmatprep.subr.bf16.mxu0 0
    %5394 = vmatpush2.bf16.msra.mxu0 0
    %5395 = vmatprep.subr.bf16.mxu0 0
    %5396 = vmatpush2.bf16.msra.mxu0 0
    %5397 = vmatprep.subr.bf16.mxu0 0
    %5398 = vmatpush2.bf16.msra.mxu0 0
    %5399 = vmatprep.subr.bf16.mxu0 0
    %5400 = vmatpush2.bf16.msra.mxu0 0
    %5401 = vmatprep.mubr.bf16.mxu0 0
    %5402 = vmatmul.mubr.bf16.gmra.mxu0 %v5319
    %v5403 = vpop.f32.mrf.mxu0
    %v5404 = vadd.f32 0.0, %v5403
    %v5405 = vpop.f32.mrf.mxu0
    %v5406 = vpop.f32.mrf.mxu0
    %v5407 = vpop.f32.mrf.mxu0
    %5408 = vdwg.mxu0
    %v5409 = vadd.f32 %v5301, %v5404
    %s5410 = scalar_lea.vmem %s10, 512
    %v5411 = vld [vmem:[%s5410] sm:$0xf]
    %v5412 = vld [vmem:[%s5410 + $0x4] sm:$0xf]
    %v5413 = vld [vmem:[%s5410 + $0x8] sm:$0xf]
    %v5414 = vld [vmem:[%s5410 + $0xc] sm:$0xf]
    %v5415 = vld [vmem:[%s5410 + $0x10] sm:$0xf]
    %v5416 = vld [vmem:[%s5410 + $0x14] sm:$0xf]
    %v5417 = vld [vmem:[%s5410 + $0x18] sm:$0xf]
    %v5418 = vld [vmem:[%s5410 + $0x1c] sm:$0xf]
    %v5419 = vld [vmem:[%s5410 + $0x20] sm:$0xf]
    %v5420 = vld [vmem:[%s5410 + $0x24] sm:$0xf]
    %v5421 = vld [vmem:[%s5410 + $0x28] sm:$0xf]
    %v5422 = vld [vmem:[%s5410 + $0x2c] sm:$0xf]
    %v5423 = vld [vmem:[%s5410 + $0x30] sm:$0xf]
    %v5424 = vld [vmem:[%s5410 + $0x34] sm:$0xf]
    %v5425 = vld [vmem:[%s5410 + $0x38] sm:$0xf]
    %v5426 = vld [vmem:[%s5410 + $0x3c] sm:$0xf]
    %v5443 = vunpack.c.l.b16 %v5411
    %v5444 = vunpack.c.l.b16 %v5412
    %v5445 = vunpack.c.l.b16 %v5413
    %v5446 = vunpack.c.l.b16 %v5414
    %v5447 = vunpack.c.l.b16 %v5415
    %v5448 = vunpack.c.l.b16 %v5416
    %v5449 = vunpack.c.l.b16 %v5417
    %v5450 = vunpack.c.l.b16 %v5418
    %v5451 = vunpack.c.l.b16 %v5419
    %v5452 = vunpack.c.l.b16 %v5420
    %v5453 = vunpack.c.l.b16 %v5421
    %v5454 = vunpack.c.l.b16 %v5422
    %v5455 = vunpack.c.l.b16 %v5423
    %v5456 = vunpack.c.l.b16 %v5424
    %v5457 = vunpack.c.l.b16 %v5425
    %v5458 = vunpack.c.l.b16 %v5426
    %v5459 = vpack.c.b16 %v5444, %v5443
    %v5460 = vpack.c.b16 %v5446, %v5445
    %v5461 = vpack.c.b16 %v5448, %v5447
    %v5462 = vpack.c.b16 %v5450, %v5449
    %v5463 = vpack.c.b16 %v5452, %v5451
    %v5464 = vpack.c.b16 %v5454, %v5453
    %v5465 = vpack.c.b16 %v5456, %v5455
    %v5466 = vpack.c.b16 %v5458, %v5457
    %5475 = vmatprep.subr.bf16.mxu0 0
    %5476 = vmatpush1.bf16.msra.mxu0 %v5466
    %5477 = vmatprep.subr.bf16.mxu0 0
    %5478 = vmatpush1.bf16.msra.mxu0 %v5465
    %5479 = vmatprep.subr.bf16.mxu0 0
    %5480 = vmatpush1.bf16.msra.mxu0 %v5464
    %5481 = vmatprep.subr.bf16.mxu0 0
    %5482 = vmatpush1.bf16.msra.mxu0 %v5463
    %5483 = vmatprep.subr.bf16.mxu0 0
    %5484 = vmatpush1.bf16.msra.mxu0 %v5462
    %5485 = vmatprep.subr.bf16.mxu0 0
    %5486 = vmatpush1.bf16.msra.mxu0 %v5461
    %5487 = vmatprep.subr.bf16.mxu0 0
    %5488 = vmatpush1.bf16.msra.mxu0 %v5460
    %5489 = vmatprep.subr.bf16.mxu0 0
    %5490 = vmatpush1.bf16.msra.mxu0 %v5459
    %5491 = vmatprep.subr.bf16.mxu0 0
    %5492 = vmatpush2.bf16.msra.mxu0 0
    %5493 = vmatprep.subr.bf16.mxu0 0
    %5494 = vmatpush2.bf16.msra.mxu0 0
    %5495 = vmatprep.subr.bf16.mxu0 0
    %5496 = vmatpush2.bf16.msra.mxu0 0
    %5497 = vmatprep.subr.bf16.mxu0 0
    %5498 = vmatpush2.bf16.msra.mxu0 0
    %5499 = vmatprep.subr.bf16.mxu0 0
    %5500 = vmatpush2.bf16.msra.mxu0 0
    %5501 = vmatprep.subr.bf16.mxu0 0
    %5502 = vmatpush2.bf16.msra.mxu0 0
    %5503 = vmatprep.subr.bf16.mxu0 0
    %5504 = vmatpush2.bf16.msra.mxu0 0
    %5505 = vmatprep.subr.bf16.mxu0 0
    %5506 = vmatpush2.bf16.msra.mxu0 0
    %5507 = vmatprep.mubr.bf16.mxu0 0
    %5508 = vmatmul.mubr.bf16.gmra.mxu0 %v4549
    %v5509 = vpop.f32.mrf.mxu0
    %v5510 = vadd.f32 0.0, %v5509
    %v5511 = vpop.f32.mrf.mxu0
    %v5512 = vpop.f32.mrf.mxu0
    %v5513 = vpop.f32.mrf.mxu0
    %5514 = vdwg.mxu0
    %v5515 = vadd.f32 %v5409, %v5510
    %s5516 = scalar_lea.vmem %s10, 576
    %v5517 = vld [vmem:[%s5516] sm:$0xf]
    %v5518 = vld [vmem:[%s5516 + $0x4] sm:$0xf]
    %v5519 = vld [vmem:[%s5516 + $0x8] sm:$0xf]
    %v5520 = vld [vmem:[%s5516 + $0xc] sm:$0xf]
    %v5521 = vld [vmem:[%s5516 + $0x10] sm:$0xf]
    %v5522 = vld [vmem:[%s5516 + $0x14] sm:$0xf]
    %v5523 = vld [vmem:[%s5516 + $0x18] sm:$0xf]
    %v5524 = vld [vmem:[%s5516 + $0x1c] sm:$0xf]
    %v5525 = vld [vmem:[%s5516 + $0x20] sm:$0xf]
    %v5526 = vld [vmem:[%s5516 + $0x24] sm:$0xf]
    %v5527 = vld [vmem:[%s5516 + $0x28] sm:$0xf]
    %v5528 = vld [vmem:[%s5516 + $0x2c] sm:$0xf]
    %v5529 = vld [vmem:[%s5516 + $0x30] sm:$0xf]
    %v5530 = vld [vmem:[%s5516 + $0x34] sm:$0xf]
    %v5531 = vld [vmem:[%s5516 + $0x38] sm:$0xf]
    %v5532 = vld [vmem:[%s5516 + $0x3c] sm:$0xf]
    %v5534 = vrot.slane %v4549, 1
    %v5552 = vunpack.c.l.b16 %v5517
    %v5553 = vunpack.c.l.b16 %v5518
    %v5554 = vunpack.c.l.b16 %v5519
    %v5555 = vunpack.c.l.b16 %v5520
    %v5556 = vunpack.c.l.b16 %v5521
    %v5557 = vunpack.c.l.b16 %v5522
    %v5558 = vunpack.c.l.b16 %v5523
    %v5559 = vunpack.c.l.b16 %v5524
    %v5560 = vunpack.c.l.b16 %v5525
    %v5561 = vunpack.c.l.b16 %v5526
    %v5562 = vunpack.c.l.b16 %v5527
    %v5563 = vunpack.c.l.b16 %v5528
    %v5564 = vunpack.c.l.b16 %v5529
    %v5565 = vunpack.c.l.b16 %v5530
    %v5566 = vunpack.c.l.b16 %v5531
    %v5567 = vunpack.c.l.b16 %v5532
    %v5568 = vpack.c.b16 %v5553, %v5552
    %v5569 = vpack.c.b16 %v5555, %v5554
    %v5570 = vpack.c.b16 %v5557, %v5556
    %v5571 = vpack.c.b16 %v5559, %v5558
    %v5572 = vpack.c.b16 %v5561, %v5560
    %v5573 = vpack.c.b16 %v5563, %v5562
    %v5574 = vpack.c.b16 %v5565, %v5564
    %v5575 = vpack.c.b16 %v5567, %v5566
    %5584 = vmatprep.subr.bf16.mxu0 0
    %5585 = vmatpush1.bf16.msra.mxu0 %v5575
    %5586 = vmatprep.subr.bf16.mxu0 0
    %5587 = vmatpush1.bf16.msra.mxu0 %v5574
    %5588 = vmatprep.subr.bf16.mxu0 0
    %5589 = vmatpush1.bf16.msra.mxu0 %v5573
    %5590 = vmatprep.subr.bf16.mxu0 0
    %5591 = vmatpush1.bf16.msra.mxu0 %v5572
    %5592 = vmatprep.subr.bf16.mxu0 0
    %5593 = vmatpush1.bf16.msra.mxu0 %v5571
    %5594 = vmatprep.subr.bf16.mxu0 0
    %5595 = vmatpush1.bf16.msra.mxu0 %v5570
    %5596 = vmatprep.subr.bf16.mxu0 0
    %5597 = vmatpush1.bf16.msra.mxu0 %v5569
    %5598 = vmatprep.subr.bf16.mxu0 0
    %5599 = vmatpush1.bf16.msra.mxu0 %v5568
    %5600 = vmatprep.subr.bf16.mxu0 0
    %5601 = vmatpush2.bf16.msra.mxu0 0
    %5602 = vmatprep.subr.bf16.mxu0 0
    %5603 = vmatpush2.bf16.msra.mxu0 0
    %5604 = vmatprep.subr.bf16.mxu0 0
    %5605 = vmatpush2.bf16.msra.mxu0 0
    %5606 = vmatprep.subr.bf16.mxu0 0
    %5607 = vmatpush2.bf16.msra.mxu0 0
    %5608 = vmatprep.subr.bf16.mxu0 0
    %5609 = vmatpush2.bf16.msra.mxu0 0
    %5610 = vmatprep.subr.bf16.mxu0 0
    %5611 = vmatpush2.bf16.msra.mxu0 0
    %5612 = vmatprep.subr.bf16.mxu0 0
    %5613 = vmatpush2.bf16.msra.mxu0 0
    %5614 = vmatprep.subr.bf16.mxu0 0
    %5615 = vmatpush2.bf16.msra.mxu0 0
    %5616 = vmatprep.mubr.bf16.mxu0 0
    %5617 = vmatmul.mubr.bf16.gmra.mxu0 %v5534
    %v5618 = vpop.f32.mrf.mxu0
    %v5619 = vadd.f32 0.0, %v5618
    %v5620 = vpop.f32.mrf.mxu0
    %v5621 = vpop.f32.mrf.mxu0
    %v5622 = vpop.f32.mrf.mxu0
    %5623 = vdwg.mxu0
    %v5624 = vadd.f32 %v5515, %v5619
    %s5625 = scalar_lea.vmem %s10, 640
    %v5626 = vld [vmem:[%s5625] sm:$0xf]
    %v5627 = vld [vmem:[%s5625 + $0x4] sm:$0xf]
    %v5628 = vld [vmem:[%s5625 + $0x8] sm:$0xf]
    %v5629 = vld [vmem:[%s5625 + $0xc] sm:$0xf]
    %v5630 = vld [vmem:[%s5625 + $0x10] sm:$0xf]
    %v5631 = vld [vmem:[%s5625 + $0x14] sm:$0xf]
    %v5632 = vld [vmem:[%s5625 + $0x18] sm:$0xf]
    %v5633 = vld [vmem:[%s5625 + $0x1c] sm:$0xf]
    %v5634 = vld [vmem:[%s5625 + $0x20] sm:$0xf]
    %v5635 = vld [vmem:[%s5625 + $0x24] sm:$0xf]
    %v5636 = vld [vmem:[%s5625 + $0x28] sm:$0xf]
    %v5637 = vld [vmem:[%s5625 + $0x2c] sm:$0xf]
    %v5638 = vld [vmem:[%s5625 + $0x30] sm:$0xf]
    %v5639 = vld [vmem:[%s5625 + $0x34] sm:$0xf]
    %v5640 = vld [vmem:[%s5625 + $0x38] sm:$0xf]
    %v5641 = vld [vmem:[%s5625 + $0x3c] sm:$0xf]
    %v5642 = vrot.slane %v4549, 2
    %v5660 = vunpack.c.l.b16 %v5626
    %v5661 = vunpack.c.l.b16 %v5627
    %v5662 = vunpack.c.l.b16 %v5628
    %v5663 = vunpack.c.l.b16 %v5629
    %v5664 = vunpack.c.l.b16 %v5630
    %v5665 = vunpack.c.l.b16 %v5631
    %v5666 = vunpack.c.l.b16 %v5632
    %v5667 = vunpack.c.l.b16 %v5633
    %v5668 = vunpack.c.l.b16 %v5634
    %v5669 = vunpack.c.l.b16 %v5635
    %v5670 = vunpack.c.l.b16 %v5636
    %v5671 = vunpack.c.l.b16 %v5637
    %v5672 = vunpack.c.l.b16 %v5638
    %v5673 = vunpack.c.l.b16 %v5639
    %v5674 = vunpack.c.l.b16 %v5640
    %v5675 = vunpack.c.l.b16 %v5641
    %v5676 = vpack.c.b16 %v5661, %v5660
    %v5677 = vpack.c.b16 %v5663, %v5662
    %v5678 = vpack.c.b16 %v5665, %v5664
    %v5679 = vpack.c.b16 %v5667, %v5666
    %v5680 = vpack.c.b16 %v5669, %v5668
    %v5681 = vpack.c.b16 %v5671, %v5670
    %v5682 = vpack.c.b16 %v5673, %v5672
    %v5683 = vpack.c.b16 %v5675, %v5674
    %5692 = vmatprep.subr.bf16.mxu0 0
    %5693 = vmatpush1.bf16.msra.mxu0 %v5683
    %5694 = vmatprep.subr.bf16.mxu0 0
    %5695 = vmatpush1.bf16.msra.mxu0 %v5682
    %5696 = vmatprep.subr.bf16.mxu0 0
    %5697 = vmatpush1.bf16.msra.mxu0 %v5681
    %5698 = vmatprep.subr.bf16.mxu0 0
    %5699 = vmatpush1.bf16.msra.mxu0 %v5680
    %5700 = vmatprep.subr.bf16.mxu0 0
    %5701 = vmatpush1.bf16.msra.mxu0 %v5679
    %5702 = vmatprep.subr.bf16.mxu0 0
    %5703 = vmatpush1.bf16.msra.mxu0 %v5678
    %5704 = vmatprep.subr.bf16.mxu0 0
    %5705 = vmatpush1.bf16.msra.mxu0 %v5677
    %5706 = vmatprep.subr.bf16.mxu0 0
    %5707 = vmatpush1.bf16.msra.mxu0 %v5676
    %5708 = vmatprep.subr.bf16.mxu0 0
    %5709 = vmatpush2.bf16.msra.mxu0 0
    %5710 = vmatprep.subr.bf16.mxu0 0
    %5711 = vmatpush2.bf16.msra.mxu0 0
    %5712 = vmatprep.subr.bf16.mxu0 0
    %5713 = vmatpush2.bf16.msra.mxu0 0
    %5714 = vmatprep.subr.bf16.mxu0 0
    %5715 = vmatpush2.bf16.msra.mxu0 0
    %5716 = vmatprep.subr.bf16.mxu0 0
    %5717 = vmatpush2.bf16.msra.mxu0 0
    %5718 = vmatprep.subr.bf16.mxu0 0
    %5719 = vmatpush2.bf16.msra.mxu0 0
    %5720 = vmatprep.subr.bf16.mxu0 0
    %5721 = vmatpush2.bf16.msra.mxu0 0
    %5722 = vmatprep.subr.bf16.mxu0 0
    %5723 = vmatpush2.bf16.msra.mxu0 0
    %5724 = vmatprep.mubr.bf16.mxu0 0
    %5725 = vmatmul.mubr.bf16.gmra.mxu0 %v5642
    %v5726 = vpop.f32.mrf.mxu0
    %v5727 = vadd.f32 0.0, %v5726
    %v5728 = vpop.f32.mrf.mxu0
    %v5729 = vpop.f32.mrf.mxu0
    %v5730 = vpop.f32.mrf.mxu0
    %5731 = vdwg.mxu0
    %v5732 = vadd.f32 %v5624, %v5727
    %s5733 = scalar_lea.vmem %s10, 704
    %v5734 = vld [vmem:[%s5733] sm:$0xf]
    %v5735 = vld [vmem:[%s5733 + $0x4] sm:$0xf]
    %v5736 = vld [vmem:[%s5733 + $0x8] sm:$0xf]
    %v5737 = vld [vmem:[%s5733 + $0xc] sm:$0xf]
    %v5738 = vld [vmem:[%s5733 + $0x10] sm:$0xf]
    %v5739 = vld [vmem:[%s5733 + $0x14] sm:$0xf]
    %v5740 = vld [vmem:[%s5733 + $0x18] sm:$0xf]
    %v5741 = vld [vmem:[%s5733 + $0x1c] sm:$0xf]
    %v5742 = vld [vmem:[%s5733 + $0x20] sm:$0xf]
    %v5743 = vld [vmem:[%s5733 + $0x24] sm:$0xf]
    %v5744 = vld [vmem:[%s5733 + $0x28] sm:$0xf]
    %v5745 = vld [vmem:[%s5733 + $0x2c] sm:$0xf]
    %v5746 = vld [vmem:[%s5733 + $0x30] sm:$0xf]
    %v5747 = vld [vmem:[%s5733 + $0x34] sm:$0xf]
    %v5748 = vld [vmem:[%s5733 + $0x38] sm:$0xf]
    %v5749 = vld [vmem:[%s5733 + $0x3c] sm:$0xf]
    %v5750 = vrot.slane %v4549, 3
    %v5768 = vunpack.c.l.b16 %v5734
    %v5769 = vunpack.c.l.b16 %v5735
    %v5770 = vunpack.c.l.b16 %v5736
    %v5771 = vunpack.c.l.b16 %v5737
    %v5772 = vunpack.c.l.b16 %v5738
    %v5773 = vunpack.c.l.b16 %v5739
    %v5774 = vunpack.c.l.b16 %v5740
    %v5775 = vunpack.c.l.b16 %v5741
    %v5776 = vunpack.c.l.b16 %v5742
    %v5777 = vunpack.c.l.b16 %v5743
    %v5778 = vunpack.c.l.b16 %v5744
    %v5779 = vunpack.c.l.b16 %v5745
    %v5780 = vunpack.c.l.b16 %v5746
    %v5781 = vunpack.c.l.b16 %v5747
    %v5782 = vunpack.c.l.b16 %v5748
    %v5783 = vunpack.c.l.b16 %v5749
    %v5784 = vpack.c.b16 %v5769, %v5768
    %v5785 = vpack.c.b16 %v5771, %v5770
    %v5786 = vpack.c.b16 %v5773, %v5772
    %v5787 = vpack.c.b16 %v5775, %v5774
    %v5788 = vpack.c.b16 %v5777, %v5776
    %v5789 = vpack.c.b16 %v5779, %v5778
    %v5790 = vpack.c.b16 %v5781, %v5780
    %v5791 = vpack.c.b16 %v5783, %v5782
    %5800 = vmatprep.subr.bf16.mxu0 0
    %5801 = vmatpush1.bf16.msra.mxu0 %v5791
    %5802 = vmatprep.subr.bf16.mxu0 0
    %5803 = vmatpush1.bf16.msra.mxu0 %v5790
    %5804 = vmatprep.subr.bf16.mxu0 0
    %5805 = vmatpush1.bf16.msra.mxu0 %v5789
    %5806 = vmatprep.subr.bf16.mxu0 0
    %5807 = vmatpush1.bf16.msra.mxu0 %v5788
    %5808 = vmatprep.subr.bf16.mxu0 0
    %5809 = vmatpush1.bf16.msra.mxu0 %v5787
    %5810 = vmatprep.subr.bf16.mxu0 0
    %5811 = vmatpush1.bf16.msra.mxu0 %v5786
    %5812 = vmatprep.subr.bf16.mxu0 0
    %5813 = vmatpush1.bf16.msra.mxu0 %v5785
    %5814 = vmatprep.subr.bf16.mxu0 0
    %5815 = vmatpush1.bf16.msra.mxu0 %v5784
    %5816 = vmatprep.subr.bf16.mxu0 0
    %5817 = vmatpush2.bf16.msra.mxu0 0
    %5818 = vmatprep.subr.bf16.mxu0 0
    %5819 = vmatpush2.bf16.msra.mxu0 0
    %5820 = vmatprep.subr.bf16.mxu0 0
    %5821 = vmatpush2.bf16.msra.mxu0 0
    %5822 = vmatprep.subr.bf16.mxu0 0
    %5823 = vmatpush2.bf16.msra.mxu0 0
    %5824 = vmatprep.subr.bf16.mxu0 0
    %5825 = vmatpush2.bf16.msra.mxu0 0
    %5826 = vmatprep.subr.bf16.mxu0 0
    %5827 = vmatpush2.bf16.msra.mxu0 0
    %5828 = vmatprep.subr.bf16.mxu0 0
    %5829 = vmatpush2.bf16.msra.mxu0 0
    %5830 = vmatprep.subr.bf16.mxu0 0
    %5831 = vmatpush2.bf16.msra.mxu0 0
    %5832 = vmatprep.mubr.bf16.mxu0 0
    %5833 = vmatmul.mubr.bf16.gmra.mxu0 %v5750
    %v5834 = vpop.f32.mrf.mxu0
    %v5835 = vadd.f32 0.0, %v5834
    %v5836 = vpop.f32.mrf.mxu0
    %v5837 = vpop.f32.mrf.mxu0
    %v5838 = vpop.f32.mrf.mxu0
    %5839 = vdwg.mxu0
    %v5840 = vadd.f32 %v5732, %v5835
    %s5841 = scalar_lea.vmem %s10, 768
    %v5842 = vld [vmem:[%s5841] sm:$0xf]
    %v5843 = vld [vmem:[%s5841 + $0x4] sm:$0xf]
    %v5844 = vld [vmem:[%s5841 + $0x8] sm:$0xf]
    %v5845 = vld [vmem:[%s5841 + $0xc] sm:$0xf]
    %v5846 = vld [vmem:[%s5841 + $0x10] sm:$0xf]
    %v5847 = vld [vmem:[%s5841 + $0x14] sm:$0xf]
    %v5848 = vld [vmem:[%s5841 + $0x18] sm:$0xf]
    %v5849 = vld [vmem:[%s5841 + $0x1c] sm:$0xf]
    %v5850 = vld [vmem:[%s5841 + $0x20] sm:$0xf]
    %v5851 = vld [vmem:[%s5841 + $0x24] sm:$0xf]
    %v5852 = vld [vmem:[%s5841 + $0x28] sm:$0xf]
    %v5853 = vld [vmem:[%s5841 + $0x2c] sm:$0xf]
    %v5854 = vld [vmem:[%s5841 + $0x30] sm:$0xf]
    %v5855 = vld [vmem:[%s5841 + $0x34] sm:$0xf]
    %v5856 = vld [vmem:[%s5841 + $0x38] sm:$0xf]
    %v5857 = vld [vmem:[%s5841 + $0x3c] sm:$0xf]
    %v5858 = vrot.slane %v4549, 4
    %v5876 = vunpack.c.l.b16 %v5842
    %v5877 = vunpack.c.l.b16 %v5843
    %v5878 = vunpack.c.l.b16 %v5844
    %v5879 = vunpack.c.l.b16 %v5845
    %v5880 = vunpack.c.l.b16 %v5846
    %v5881 = vunpack.c.l.b16 %v5847
    %v5882 = vunpack.c.l.b16 %v5848
    %v5883 = vunpack.c.l.b16 %v5849
    %v5884 = vunpack.c.l.b16 %v5850
    %v5885 = vunpack.c.l.b16 %v5851
    %v5886 = vunpack.c.l.b16 %v5852
    %v5887 = vunpack.c.l.b16 %v5853
    %v5888 = vunpack.c.l.b16 %v5854
    %v5889 = vunpack.c.l.b16 %v5855
    %v5890 = vunpack.c.l.b16 %v5856
    %v5891 = vunpack.c.l.b16 %v5857
    %v5892 = vpack.c.b16 %v5877, %v5876
    %v5893 = vpack.c.b16 %v5879, %v5878
    %v5894 = vpack.c.b16 %v5881, %v5880
    %v5895 = vpack.c.b16 %v5883, %v5882
    %v5896 = vpack.c.b16 %v5885, %v5884
    %v5897 = vpack.c.b16 %v5887, %v5886
    %v5898 = vpack.c.b16 %v5889, %v5888
    %v5899 = vpack.c.b16 %v5891, %v5890
    %5908 = vmatprep.subr.bf16.mxu0 0
    %5909 = vmatpush1.bf16.msra.mxu0 %v5899
    %5910 = vmatprep.subr.bf16.mxu0 0
    %5911 = vmatpush1.bf16.msra.mxu0 %v5898
    %5912 = vmatprep.subr.bf16.mxu0 0
    %5913 = vmatpush1.bf16.msra.mxu0 %v5897
    %5914 = vmatprep.subr.bf16.mxu0 0
    %5915 = vmatpush1.bf16.msra.mxu0 %v5896
    %5916 = vmatprep.subr.bf16.mxu0 0
    %5917 = vmatpush1.bf16.msra.mxu0 %v5895
    %5918 = vmatprep.subr.bf16.mxu0 0
    %5919 = vmatpush1.bf16.msra.mxu0 %v5894
    %5920 = vmatprep.subr.bf16.mxu0 0
    %5921 = vmatpush1.bf16.msra.mxu0 %v5893
    %5922 = vmatprep.subr.bf16.mxu0 0
    %5923 = vmatpush1.bf16.msra.mxu0 %v5892
    %5924 = vmatprep.subr.bf16.mxu0 0
    %5925 = vmatpush2.bf16.msra.mxu0 0
    %5926 = vmatprep.subr.bf16.mxu0 0
    %5927 = vmatpush2.bf16.msra.mxu0 0
    %5928 = vmatprep.subr.bf16.mxu0 0
    %5929 = vmatpush2.bf16.msra.mxu0 0
    %5930 = vmatprep.subr.bf16.mxu0 0
    %5931 = vmatpush2.bf16.msra.mxu0 0
    %5932 = vmatprep.subr.bf16.mxu0 0
    %5933 = vmatpush2.bf16.msra.mxu0 0
    %5934 = vmatprep.subr.bf16.mxu0 0
    %5935 = vmatpush2.bf16.msra.mxu0 0
    %5936 = vmatprep.subr.bf16.mxu0 0
    %5937 = vmatpush2.bf16.msra.mxu0 0
    %5938 = vmatprep.subr.bf16.mxu0 0
    %5939 = vmatpush2.bf16.msra.mxu0 0
    %5940 = vmatprep.mubr.bf16.mxu0 0
    %5941 = vmatmul.mubr.bf16.gmra.mxu0 %v5858
    %v5942 = vpop.f32.mrf.mxu0
    %v5943 = vadd.f32 0.0, %v5942
    %v5944 = vpop.f32.mrf.mxu0
    %v5945 = vpop.f32.mrf.mxu0
    %v5946 = vpop.f32.mrf.mxu0
    %5947 = vdwg.mxu0
    %v5948 = vadd.f32 %v5840, %v5943
    %s5949 = scalar_lea.vmem %s10, 832
    %v5950 = vld [vmem:[%s5949] sm:$0xf]
    %v5951 = vld [vmem:[%s5949 + $0x4] sm:$0xf]
    %v5952 = vld [vmem:[%s5949 + $0x8] sm:$0xf]
    %v5953 = vld [vmem:[%s5949 + $0xc] sm:$0xf]
    %v5954 = vld [vmem:[%s5949 + $0x10] sm:$0xf]
    %v5955 = vld [vmem:[%s5949 + $0x14] sm:$0xf]
    %v5956 = vld [vmem:[%s5949 + $0x18] sm:$0xf]
    %v5957 = vld [vmem:[%s5949 + $0x1c] sm:$0xf]
    %v5958 = vld [vmem:[%s5949 + $0x20] sm:$0xf]
    %v5959 = vld [vmem:[%s5949 + $0x24] sm:$0xf]
    %v5960 = vld [vmem:[%s5949 + $0x28] sm:$0xf]
    %v5961 = vld [vmem:[%s5949 + $0x2c] sm:$0xf]
    %v5962 = vld [vmem:[%s5949 + $0x30] sm:$0xf]
    %v5963 = vld [vmem:[%s5949 + $0x34] sm:$0xf]
    %v5964 = vld [vmem:[%s5949 + $0x38] sm:$0xf]
    %v5965 = vld [vmem:[%s5949 + $0x3c] sm:$0xf]
    %v5966 = vrot.slane %v4549, 5
    %v5984 = vunpack.c.l.b16 %v5950
    %v5985 = vunpack.c.l.b16 %v5951
    %v5986 = vunpack.c.l.b16 %v5952
    %v5987 = vunpack.c.l.b16 %v5953
    %v5988 = vunpack.c.l.b16 %v5954
    %v5989 = vunpack.c.l.b16 %v5955
    %v5990 = vunpack.c.l.b16 %v5956
    %v5991 = vunpack.c.l.b16 %v5957
    %v5992 = vunpack.c.l.b16 %v5958
    %v5993 = vunpack.c.l.b16 %v5959
    %v5994 = vunpack.c.l.b16 %v5960
    %v5995 = vunpack.c.l.b16 %v5961
    %v5996 = vunpack.c.l.b16 %v5962
    %v5997 = vunpack.c.l.b16 %v5963
    %v5998 = vunpack.c.l.b16 %v5964
    %v5999 = vunpack.c.l.b16 %v5965
    %v6000 = vpack.c.b16 %v5985, %v5984
    %v6001 = vpack.c.b16 %v5987, %v5986
    %v6002 = vpack.c.b16 %v5989, %v5988
    %v6003 = vpack.c.b16 %v5991, %v5990
    %v6004 = vpack.c.b16 %v5993, %v5992
    %v6005 = vpack.c.b16 %v5995, %v5994
    %v6006 = vpack.c.b16 %v5997, %v5996
    %v6007 = vpack.c.b16 %v5999, %v5998
    %6016 = vmatprep.subr.bf16.mxu0 0
    %6017 = vmatpush1.bf16.msra.mxu0 %v6007
    %6018 = vmatprep.subr.bf16.mxu0 0
    %6019 = vmatpush1.bf16.msra.mxu0 %v6006
    %6020 = vmatprep.subr.bf16.mxu0 0
    %6021 = vmatpush1.bf16.msra.mxu0 %v6005
    %6022 = vmatprep.subr.bf16.mxu0 0
    %6023 = vmatpush1.bf16.msra.mxu0 %v6004
    %6024 = vmatprep.subr.bf16.mxu0 0
    %6025 = vmatpush1.bf16.msra.mxu0 %v6003
    %6026 = vmatprep.subr.bf16.mxu0 0
    %6027 = vmatpush1.bf16.msra.mxu0 %v6002
    %6028 = vmatprep.subr.bf16.mxu0 0
    %6029 = vmatpush1.bf16.msra.mxu0 %v6001
    %6030 = vmatprep.subr.bf16.mxu0 0
    %6031 = vmatpush1.bf16.msra.mxu0 %v6000
    %6032 = vmatprep.subr.bf16.mxu0 0
    %6033 = vmatpush2.bf16.msra.mxu0 0
    %6034 = vmatprep.subr.bf16.mxu0 0
    %6035 = vmatpush2.bf16.msra.mxu0 0
    %6036 = vmatprep.subr.bf16.mxu0 0
    %6037 = vmatpush2.bf16.msra.mxu0 0
    %6038 = vmatprep.subr.bf16.mxu0 0
    %6039 = vmatpush2.bf16.msra.mxu0 0
    %6040 = vmatprep.subr.bf16.mxu0 0
    %6041 = vmatpush2.bf16.msra.mxu0 0
    %6042 = vmatprep.subr.bf16.mxu0 0
    %6043 = vmatpush2.bf16.msra.mxu0 0
    %6044 = vmatprep.subr.bf16.mxu0 0
    %6045 = vmatpush2.bf16.msra.mxu0 0
    %6046 = vmatprep.subr.bf16.mxu0 0
    %6047 = vmatpush2.bf16.msra.mxu0 0
    %6048 = vmatprep.mubr.bf16.mxu0 0
    %6049 = vmatmul.mubr.bf16.gmra.mxu0 %v5966
    %v6050 = vpop.f32.mrf.mxu0
    %v6051 = vadd.f32 0.0, %v6050
    %v6052 = vpop.f32.mrf.mxu0
    %v6053 = vpop.f32.mrf.mxu0
    %v6054 = vpop.f32.mrf.mxu0
    %6055 = vdwg.mxu0
    %v6056 = vadd.f32 %v5948, %v6051
    %s6057 = scalar_lea.vmem %s10, 896
    %v6058 = vld [vmem:[%s6057] sm:$0xf]
    %v6059 = vld [vmem:[%s6057 + $0x4] sm:$0xf]
    %v6060 = vld [vmem:[%s6057 + $0x8] sm:$0xf]
    %v6061 = vld [vmem:[%s6057 + $0xc] sm:$0xf]
    %v6062 = vld [vmem:[%s6057 + $0x10] sm:$0xf]
    %v6063 = vld [vmem:[%s6057 + $0x14] sm:$0xf]
    %v6064 = vld [vmem:[%s6057 + $0x18] sm:$0xf]
    %v6065 = vld [vmem:[%s6057 + $0x1c] sm:$0xf]
    %v6066 = vld [vmem:[%s6057 + $0x20] sm:$0xf]
    %v6067 = vld [vmem:[%s6057 + $0x24] sm:$0xf]
    %v6068 = vld [vmem:[%s6057 + $0x28] sm:$0xf]
    %v6069 = vld [vmem:[%s6057 + $0x2c] sm:$0xf]
    %v6070 = vld [vmem:[%s6057 + $0x30] sm:$0xf]
    %v6071 = vld [vmem:[%s6057 + $0x34] sm:$0xf]
    %v6072 = vld [vmem:[%s6057 + $0x38] sm:$0xf]
    %v6073 = vld [vmem:[%s6057 + $0x3c] sm:$0xf]
    %v6074 = vrot.slane %v4549, 6
    %v6092 = vunpack.c.l.b16 %v6058
    %v6093 = vunpack.c.l.b16 %v6059
    %v6094 = vunpack.c.l.b16 %v6060
    %v6095 = vunpack.c.l.b16 %v6061
    %v6096 = vunpack.c.l.b16 %v6062
    %v6097 = vunpack.c.l.b16 %v6063
    %v6098 = vunpack.c.l.b16 %v6064
    %v6099 = vunpack.c.l.b16 %v6065
    %v6100 = vunpack.c.l.b16 %v6066
    %v6101 = vunpack.c.l.b16 %v6067
    %v6102 = vunpack.c.l.b16 %v6068
    %v6103 = vunpack.c.l.b16 %v6069
    %v6104 = vunpack.c.l.b16 %v6070
    %v6105 = vunpack.c.l.b16 %v6071
    %v6106 = vunpack.c.l.b16 %v6072
    %v6107 = vunpack.c.l.b16 %v6073
    %v6108 = vpack.c.b16 %v6093, %v6092
    %v6109 = vpack.c.b16 %v6095, %v6094
    %v6110 = vpack.c.b16 %v6097, %v6096
    %v6111 = vpack.c.b16 %v6099, %v6098
    %v6112 = vpack.c.b16 %v6101, %v6100
    %v6113 = vpack.c.b16 %v6103, %v6102
    %v6114 = vpack.c.b16 %v6105, %v6104
    %v6115 = vpack.c.b16 %v6107, %v6106
    %6124 = vmatprep.subr.bf16.mxu0 0
    %6125 = vmatpush1.bf16.msra.mxu0 %v6115
    %6126 = vmatprep.subr.bf16.mxu0 0
    %6127 = vmatpush1.bf16.msra.mxu0 %v6114
    %6128 = vmatprep.subr.bf16.mxu0 0
    %6129 = vmatpush1.bf16.msra.mxu0 %v6113
    %6130 = vmatprep.subr.bf16.mxu0 0
    %6131 = vmatpush1.bf16.msra.mxu0 %v6112
    %6132 = vmatprep.subr.bf16.mxu0 0
    %6133 = vmatpush1.bf16.msra.mxu0 %v6111
    %6134 = vmatprep.subr.bf16.mxu0 0
    %6135 = vmatpush1.bf16.msra.mxu0 %v6110
    %6136 = vmatprep.subr.bf16.mxu0 0
    %6137 = vmatpush1.bf16.msra.mxu0 %v6109
    %6138 = vmatprep.subr.bf16.mxu0 0
    %6139 = vmatpush1.bf16.msra.mxu0 %v6108
    %6140 = vmatprep.subr.bf16.mxu0 0
    %6141 = vmatpush2.bf16.msra.mxu0 0
    %6142 = vmatprep.subr.bf16.mxu0 0
    %6143 = vmatpush2.bf16.msra.mxu0 0
    %6144 = vmatprep.subr.bf16.mxu0 0
    %6145 = vmatpush2.bf16.msra.mxu0 0
    %6146 = vmatprep.subr.bf16.mxu0 0
    %6147 = vmatpush2.bf16.msra.mxu0 0
    %6148 = vmatprep.subr.bf16.mxu0 0
    %6149 = vmatpush2.bf16.msra.mxu0 0
    %6150 = vmatprep.subr.bf16.mxu0 0
    %6151 = vmatpush2.bf16.msra.mxu0 0
    %6152 = vmatprep.subr.bf16.mxu0 0
    %6153 = vmatpush2.bf16.msra.mxu0 0
    %6154 = vmatprep.subr.bf16.mxu0 0
    %6155 = vmatpush2.bf16.msra.mxu0 0
    %6156 = vmatprep.mubr.bf16.mxu0 0
    %6157 = vmatmul.mubr.bf16.gmra.mxu0 %v6074
    %v6158 = vpop.f32.mrf.mxu0
    %v6159 = vadd.f32 0.0, %v6158
    %v6160 = vpop.f32.mrf.mxu0
    %v6161 = vpop.f32.mrf.mxu0
    %v6162 = vpop.f32.mrf.mxu0
    %6163 = vdwg.mxu0
    %v6164 = vadd.f32 %v6056, %v6159
    %s6165 = scalar_lea.vmem %s10, 960
    %v6166 = vld [vmem:[%s6165] sm:$0xf]
    %v6167 = vld [vmem:[%s6165 + $0x4] sm:$0xf]
    %v6168 = vld [vmem:[%s6165 + $0x8] sm:$0xf]
    %v6169 = vld [vmem:[%s6165 + $0xc] sm:$0xf]
    %v6170 = vld [vmem:[%s6165 + $0x10] sm:$0xf]
    %v6171 = vld [vmem:[%s6165 + $0x14] sm:$0xf]
    %v6172 = vld [vmem:[%s6165 + $0x18] sm:$0xf]
    %v6173 = vld [vmem:[%s6165 + $0x1c] sm:$0xf]
    %v6174 = vld [vmem:[%s6165 + $0x20] sm:$0xf]
    %v6175 = vld [vmem:[%s6165 + $0x24] sm:$0xf]
    %v6176 = vld [vmem:[%s6165 + $0x28] sm:$0xf]
    %v6177 = vld [vmem:[%s6165 + $0x2c] sm:$0xf]
    %v6178 = vld [vmem:[%s6165 + $0x30] sm:$0xf]
    %v6179 = vld [vmem:[%s6165 + $0x34] sm:$0xf]
    %v6180 = vld [vmem:[%s6165 + $0x38] sm:$0xf]
    %v6181 = vld [vmem:[%s6165 + $0x3c] sm:$0xf]
    %v6182 = vrot.slane %v4549, 7
    %v6200 = vunpack.c.l.b16 %v6166
    %v6201 = vunpack.c.l.b16 %v6167
    %v6202 = vunpack.c.l.b16 %v6168
    %v6203 = vunpack.c.l.b16 %v6169
    %v6204 = vunpack.c.l.b16 %v6170
    %v6205 = vunpack.c.l.b16 %v6171
    %v6206 = vunpack.c.l.b16 %v6172
    %v6207 = vunpack.c.l.b16 %v6173
    %v6208 = vunpack.c.l.b16 %v6174
    %v6209 = vunpack.c.l.b16 %v6175
    %v6210 = vunpack.c.l.b16 %v6176
    %v6211 = vunpack.c.l.b16 %v6177
    %v6212 = vunpack.c.l.b16 %v6178
    %v6213 = vunpack.c.l.b16 %v6179
    %v6214 = vunpack.c.l.b16 %v6180
    %v6215 = vunpack.c.l.b16 %v6181
    %v6216 = vpack.c.b16 %v6201, %v6200
    %v6217 = vpack.c.b16 %v6203, %v6202
    %v6218 = vpack.c.b16 %v6205, %v6204
    %v6219 = vpack.c.b16 %v6207, %v6206
    %v6220 = vpack.c.b16 %v6209, %v6208
    %v6221 = vpack.c.b16 %v6211, %v6210
    %v6222 = vpack.c.b16 %v6213, %v6212
    %v6223 = vpack.c.b16 %v6215, %v6214
    %6232 = vmatprep.subr.bf16.mxu0 0
    %6233 = vmatpush1.bf16.msra.mxu0 %v6223
    %6234 = vmatprep.subr.bf16.mxu0 0
    %6235 = vmatpush1.bf16.msra.mxu0 %v6222
    %6236 = vmatprep.subr.bf16.mxu0 0
    %6237 = vmatpush1.bf16.msra.mxu0 %v6221
    %6238 = vmatprep.subr.bf16.mxu0 0
    %6239 = vmatpush1.bf16.msra.mxu0 %v6220
    %6240 = vmatprep.subr.bf16.mxu0 0
    %6241 = vmatpush1.bf16.msra.mxu0 %v6219
    %6242 = vmatprep.subr.bf16.mxu0 0
    %6243 = vmatpush1.bf16.msra.mxu0 %v6218
    %6244 = vmatprep.subr.bf16.mxu0 0
    %6245 = vmatpush1.bf16.msra.mxu0 %v6217
    %6246 = vmatprep.subr.bf16.mxu0 0
    %6247 = vmatpush1.bf16.msra.mxu0 %v6216
    %6248 = vmatprep.subr.bf16.mxu0 0
    %6249 = vmatpush2.bf16.msra.mxu0 0
    %6250 = vmatprep.subr.bf16.mxu0 0
    %6251 = vmatpush2.bf16.msra.mxu0 0
    %6252 = vmatprep.subr.bf16.mxu0 0
    %6253 = vmatpush2.bf16.msra.mxu0 0
    %6254 = vmatprep.subr.bf16.mxu0 0
    %6255 = vmatpush2.bf16.msra.mxu0 0
    %6256 = vmatprep.subr.bf16.mxu0 0
    %6257 = vmatpush2.bf16.msra.mxu0 0
    %6258 = vmatprep.subr.bf16.mxu0 0
    %6259 = vmatpush2.bf16.msra.mxu0 0
    %6260 = vmatprep.subr.bf16.mxu0 0
    %6261 = vmatpush2.bf16.msra.mxu0 0
    %6262 = vmatprep.subr.bf16.mxu0 0
    %6263 = vmatpush2.bf16.msra.mxu0 0
    %6264 = vmatprep.mubr.bf16.mxu0 0
    %6265 = vmatmul.mubr.bf16.gmra.mxu0 %v6182
    %v6266 = vpop.f32.mrf.mxu0
    %v6267 = vadd.f32 0.0, %v6266
    %v6268 = vpop.f32.mrf.mxu0
    %v6269 = vpop.f32.mrf.mxu0
    %v6270 = vpop.f32.mrf.mxu0
    %6271 = vdwg.mxu0
    %v6272 = vadd.f32 %v6164, %v6267
    %v6273 = vld [vmem:[%s11] sm:$0x1]
    %v6275 = vlaneseq
    %v6276 = vshrl.u32 %v6275, 7
    %v6277 = vsub.s32 0, %v6276
    %v6278 = vrot.slane %v6273, %v6277
    %v6280 = vadd.f32 %v6272, %v6278
    %v6281 = vmax.f32 %v6280, 0.0
    %v6282 = vpack.c.bf16 %v6281, %v6281
    %v6283 = vld [vmem:[%s12] sm:$0xf]
    %v6284 = vld [vmem:[%s12 + $0x4] sm:$0xf]
    %v6285 = vld [vmem:[%s12 + $0x8] sm:$0xf]
    %v6286 = vld [vmem:[%s12 + $0xc] sm:$0xf]
    %v6287 = vld [vmem:[%s12 + $0x10] sm:$0xf]
    %v6288 = vld [vmem:[%s13] sm:$0x1]
    %v6290 = vlaneseq
    %v6291 = vshrl.u32 %v6290, 7
    %v6292 = vsub.s32 0, %v6291
    %v6293 = vrot.slane %v6288, %v6292
    %v6300 = vunpack.c.l.b16 %v6283
    %v6301 = vunpack.c.l.b16 %v6284
    %v6302 = vunpack.c.l.b16 %v6285
    %v6303 = vunpack.c.l.b16 %v6286
    %v6304 = vunpack.c.l.b16 %v6287
    %v6305 = vpack.c.b16 %v6301, %v6300
    %v6306 = vpack.c.b16 %v6303, %v6302
    %v6307 = vpack.c.b16 %v6304, %v6304
    %vm6310 = vcmask 326656
    %v6312 = vsel %vm6310, %v6282, 0
    %vm6314 = vcmask 1043456
    %v6316 = vsel %vm6314, %v6307, 0
    %6318 = vmatprep.subr.bf16.mxu0 0
    %6319 = vmatpush1.bf16.msra.mxu0 0
    %6320 = vmatprep.subr.bf16.mxu0 0
    %6321 = vmatpush1.bf16.msra.mxu0 0
    %6322 = vmatprep.subr.bf16.mxu0 0
    %6323 = vmatpush1.bf16.msra.mxu0 0
    %6324 = vmatprep.subr.bf16.mxu0 0
    %6325 = vmatpush1.bf16.msra.mxu0 0
    %6326 = vmatprep.subr.bf16.mxu0 0
    %6327 = vmatpush1.bf16.msra.mxu0 0
    %6328 = vmatprep.subr.bf16.mxu0 0
    %6329 = vmatpush1.bf16.msra.mxu0 %v6316
    %6330 = vmatprep.subr.bf16.mxu0 0
    %6331 = vmatpush1.bf16.msra.mxu0 %v6306
    %6332 = vmatprep.subr.bf16.mxu0 0
    %6333 = vmatpush1.bf16.msra.mxu0 %v6305
    %6334 = vmatprep.subr.bf16.mxu0 0
    %6335 = vmatpush2.bf16.msra.mxu0 0
    %6336 = vmatprep.subr.bf16.mxu0 0
    %6337 = vmatpush2.bf16.msra.mxu0 0
    %6338 = vmatprep.subr.bf16.mxu0 0
    %6339 = vmatpush2.bf16.msra.mxu0 0
    %6340 = vmatprep.subr.bf16.mxu0 0
    %6341 = vmatpush2.bf16.msra.mxu0 0
    %6342 = vmatprep.subr.bf16.mxu0 0
    %6343 = vmatpush2.bf16.msra.mxu0 0
    %6344 = vmatprep.subr.bf16.mxu0 0
    %6345 = vmatpush2.bf16.msra.mxu0 0
    %6346 = vmatprep.subr.bf16.mxu0 0
    %6347 = vmatpush2.bf16.msra.mxu0 0
    %6348 = vmatprep.subr.bf16.mxu0 0
    %6349 = vmatpush2.bf16.msra.mxu0 0
    %6350 = vmatprep.mubr.bf16.mxu0 0
    %6351 = vmatmul.mubr.bf16.gmra.mxu0 %v6312
    %v6352 = vpop.f32.mrf.mxu0
    %v6353 = vadd.f32 %v6293, %v6352
    %v6354 = vpop.f32.mrf.mxu0
    %v6355 = vpop.f32.mrf.mxu0
    %v6356 = vpop.f32.mrf.mxu0
    %6357 = vdwg.mxu0
    %6358 = vst [vmem:[#allocation2] sm:$0x3] %v6353
    // Predicated region
    $region58: #{example_convnet_forward.1} parent=1 // pred_check
      _
    $region59: #{example_convnet_forward.1} parent=1 // pred_check_branch
      %6360 = sbr.rel (0) target = $region61
    $region60: #{example_convnet_forward.1} parent=1 // pred_region
      %s6362 = ssub.s32 32, 32
      %6363 = vsyncadd [#allocation3], %s6362
      %s6365 = sshll.u32 [#allocation2], 4
      %s6366 = int_to_ptr.vmem [resolvable:$true] %s6365
      %6368 = dma.vmem_to_hbm [thread:$0]  %s6366, 32, %s14, [#allocation3]
    $region61: #{example_convnet_forward.1} parent=1 // pred_fallthru
      _
    // Predicated region
    $region62: #{example_convnet_forward.1} parent=1 // pred_check
      _
    $region63: #{example_convnet_forward.1} parent=1 // pred_check_branch
      %6370 = sbr.rel (0) target = $region65
    $region64: #{example_convnet_forward.1} parent=1 // pred_region
      %6371 = dma.done [#allocation3], 32
    $region65: #{example_convnet_forward.1} parent=1 // pred_fallthru
      _
    %6372 = vsyncpa [#allocation3], 1

</llo_original>
